<compile_context>
chip_gen: v7x
topology: tpu7x:2x2x1
jax: 0.10.0
libtpu: 0.0.40
codegen_flags: <defaults>
</compile_context>

<pallas_src>
import functools

import jax
import jax.numpy as jnp
from jax.experimental import pallas as pl
from jax.experimental.pallas import tpu as pltpu

LANE = 128              # channel dims padded to a multiple of this (lane quantum)
MAX_ROW_TILE = 512      # row-tile cap for the GEMM / elementwise kernels
_VMEM_LIMIT = 48 * 1024 * 1024


def _round_up(x, m):
    return (x + m - 1) // m * m


def _row_tiles(m):
    tm = min(MAX_ROW_TILE, _round_up(m, 8))
    return tm, _round_up(m, tm)


# ----------------------------------------------------------------------------
# Pallas kernels
# ----------------------------------------------------------------------------
def _gemm_bias_act_kernel(p_ref, w_ref, b_ref, y_ref, *, leaky):
    acc = jnp.dot(p_ref[...], w_ref[...], preferred_element_type=jnp.float32)
    y = acc + b_ref[...]
    if leaky:
        y = jnp.where(y > 0, y, 0.1 * y)
    y_ref[...] = y


def _gemm_stats_kernel(p_ref, w_ref, y_ref, stat_ref):
    """Raw conv GEMM + fused per-channel sum / sum-of-squares (for BatchNorm)."""
    acc = jnp.dot(p_ref[...], w_ref[...], preferred_element_type=jnp.float32)
    y_ref[...] = acc

    @pl.when(pl.program_id(0) == 0)
    def _():
        stat_ref[...] = jnp.zeros_like(stat_ref)

    s = jnp.sum(acc, axis=0, keepdims=True)
    ss = jnp.sum(acc * acc, axis=0, keepdims=True)
    stat_ref[...] += jnp.concatenate([s, ss], axis=0)


def _affine_act_kernel(y_ref, s_ref, b_ref, o_ref, *, leaky):
    y = y_ref[...] * s_ref[...] + b_ref[...]
    if leaky:
        y = jnp.where(y > 0, y, 0.1 * y)
    o_ref[...] = y


def _add_kernel(a_ref, b_ref, o_ref):
    o_ref[...] = a_ref[...] + b_ref[...]


def _yolo_kernel(p_ref, aux_ref, o_ref, *, stride):
    p = p_ref[...]          # (A, R): R (= G*G*na) is the lane dimension
    aux = aux_ref[...]      # (4, R): grid-x, grid-y, anchor_w/stride, anchor_h/stride
    A = p.shape[0]
    o_ref[pl.ds(0, 2), :] = (jax.nn.sigmoid(p[0:2, :]) + aux[0:2, :]) * stride
    o_ref[pl.ds(2, 2), :] = jnp.exp(p[2:4, :]) * (aux[2:4, :] * stride)
    o_ref[pl.ds(4, A - 4), :] = jax.nn.sigmoid(p[4:, :])


# ----------------------------------------------------------------------------
# Pallas wrappers
# ----------------------------------------------------------------------------
def gemm_bias_act(p, w_bf16, bias, *, leaky):
    """(M,K)@(K,Npad) + bias (1,Npad), optional LeakyReLU(0.1). bf16 MXU, f32 accum."""
    m, k = p.shape
    n = w_bf16.shape[1]
    tm, mp = _row_tiles(m)
    if mp != m:
        p = jnp.pad(p, ((0, mp - m), (0, 0)))
    out = pl.pallas_call(
        functools.partial(_gemm_bias_act_kernel, leaky=leaky),
        out_shape=jax.ShapeDtypeStruct((mp, n), jnp.float32),
        grid_spec=pltpu.PrefetchScalarGridSpec(
            num_scalar_prefetch=0,
            grid=(mp // tm,),
            in_specs=[
                pl.BlockSpec((tm, k), lambda i: (i, 0)),
                pl.BlockSpec((k, n), lambda i: (0, 0)),
                pl.BlockSpec((1, n), lambda i: (0, 0)),
            ],
            out_specs=pl.BlockSpec((tm, n), lambda i: (i, 0)),
        ),
        compiler_params=pltpu.CompilerParams(
            dimension_semantics=("parallel",), vmem_limit_bytes=_VMEM_LIMIT),
    )(p.astype(jnp.bfloat16), w_bf16, bias)
    return out[:m] if mp != m else out


def gemm_with_stats(p, w_bf16):
    """Raw conv GEMM; also returns per-column (sum, sum-of-squares) as a (2,Npad) array."""
    m, k = p.shape
    n = w_bf16.shape[1]
    tm, mp = _row_tiles(m)
    if mp != m:
        p = jnp.pad(p, ((0, mp - m), (0, 0)))   # zero rows contribute 0 to sum/sumsq
    y, stats = pl.pallas_call(
        _gemm_stats_kernel,
        out_shape=(jax.ShapeDtypeStruct((mp, n), jnp.float32),
                   jax.ShapeDtypeStruct((2, n), jnp.float32)),
        grid_spec=pltpu.PrefetchScalarGridSpec(
            num_scalar_prefetch=0,
            grid=(mp // tm,),
            in_specs=[
                pl.BlockSpec((tm, k), lambda i: (i, 0)),
                pl.BlockSpec((k, n), lambda i: (0, 0)),
            ],
            out_specs=(pl.BlockSpec((tm, n), lambda i: (i, 0)),
                       pl.BlockSpec((2, n), lambda i: (0, 0))),   # resident accumulator
        ),
        compiler_params=pltpu.CompilerParams(
            dimension_semantics=("arbitrary",), vmem_limit_bytes=_VMEM_LIMIT),
    )(p.astype(jnp.bfloat16), w_bf16)
    return (y[:m] if mp != m else y), stats


def affine_act(y, scale, bias, *, leaky):
    """y * scale + bias with per-column (1,Npad) scale/bias, optional LeakyReLU(0.1)."""
    m, n = y.shape
    tm, mp = _row_tiles(m)
    if mp != m:
        y = jnp.pad(y, ((0, mp - m), (0, 0)))
    out = pl.pallas_call(
        functools.partial(_affine_act_kernel, leaky=leaky),
        out_shape=jax.ShapeDtypeStruct((mp, n), jnp.float32),
        grid_spec=pltpu.PrefetchScalarGridSpec(
            num_scalar_prefetch=0,
            grid=(mp // tm,),
            in_specs=[
                pl.BlockSpec((tm, n), lambda i: (i, 0)),
                pl.BlockSpec((1, n), lambda i: (0, 0)),
                pl.BlockSpec((1, n), lambda i: (0, 0)),
            ],
            out_specs=pl.BlockSpec((tm, n), lambda i: (i, 0)),
        ),
        compiler_params=pltpu.CompilerParams(dimension_semantics=("parallel",)),
    )(y, scale, bias)
    return out[:m] if mp != m else out


def pallas_add(a, b):
    """Elementwise add for the 'shortcut' layer (NHWC, lane-dense last dim)."""
    shape = a.shape
    a2 = a.reshape(-1, shape[-1])
    b2 = b.reshape(-1, shape[-1])
    m, n = a2.shape
    tm, mp = _row_tiles(m)
    if mp != m:
        a2 = jnp.pad(a2, ((0, mp - m), (0, 0)))
        b2 = jnp.pad(b2, ((0, mp - m), (0, 0)))
    out = pl.pallas_call(
        _add_kernel,
        out_shape=jax.ShapeDtypeStruct((mp, n), jnp.float32),
        grid_spec=pltpu.PrefetchScalarGridSpec(
            num_scalar_prefetch=0,
            grid=(mp // tm,),
            in_specs=[pl.BlockSpec((tm, n), lambda i: (i, 0)),
                      pl.BlockSpec((tm, n), lambda i: (i, 0))],
            out_specs=pl.BlockSpec((tm, n), lambda i: (i, 0)),
        ),
        compiler_params=pltpu.CompilerParams(dimension_semantics=("parallel",)),
    )(a2, b2)
    out = out[:m] if mp != m else out
    return out.reshape(shape)


def predict_transform(x, inp_dim, anchors, num_classes):
    """Darknet predict_transform. x: (B, G, G, na*(5+C)) NHWC. Returns (B, G*G*na, 5+C)."""
    B, G = x.shape[0], x.shape[1]
    na = len(anchors)
    A = 5 + num_classes
    stride = inp_dim // G
    R = G * G * na

    p = x.reshape(B, R, A)                       # row r = cell*na + a (matches darknet)
    pt = jnp.transpose(p, (0, 2, 1))             # (B, A, R): lane-dense along R

    cell = jnp.arange(G * G)
    gx = jnp.repeat((cell % G).astype(jnp.float32), na)
    gy = jnp.repeat((cell // G).astype(jnp.float32), na)
    anc = jnp.asarray(anchors, jnp.float32) / float(stride)
    aw = jnp.tile(anc[:, 0], G * G)
    ah = jnp.tile(anc[:, 1], G * G)
    aux = jnp.stack([gx, gy, aw, ah], axis=0)    # (4, R)

    out = pl.pallas_call(
        functools.partial(_yolo_kernel, stride=float(stride)),
        out_shape=jax.ShapeDtypeStruct((B, A, R), jnp.float32),
        grid_spec=pltpu.PrefetchScalarGridSpec(
            num_scalar_prefetch=0,
            grid=(B,),
            in_specs=[
                pl.BlockSpec((None, A, R), lambda b: (b, 0, 0)),
                pl.BlockSpec((4, R), lambda b: (0, 0)),
            ],
            out_specs=pl.BlockSpec((None, A, R), lambda b: (b, 0, 0)),
        ),
        compiler_params=pltpu.CompilerParams(dimension_semantics=("parallel",)),
    )(pt, aux)
    return jnp.transpose(out, (0, 2, 1))         # (B, R, A) — reference output layout


# ----------------------------------------------------------------------------
# Glue: im2col, conv layer, config, forward
# ----------------------------------------------------------------------------
def im2col_nhwc(x, k, stride, pad):
    """x: (B, H, W, C) -> (B*Ho*Wo, k*k*C) with feature order (kh, kw, c)."""
    # TODO(synk): replace with implicit-GEMM conv (shifted blocks inside the kernel).
    B, H, W, C = x.shape
    xp = jnp.pad(x, ((0, 0), (pad, pad), (pad, pad), (0, 0)))
    Ho = (H + 2 * pad - k) // stride + 1
    Wo = (W + 2 * pad - k) // stride + 1
    cols = []
    for kh in range(k):
        for kw in range(k):
            cols.append(xp[:, kh:kh + stride * Ho:stride, kw:kw + stride * Wo:stride, :])
    col = jnp.stack(cols, axis=3)                     # (B, Ho, Wo, k*k, C)
    col = col.reshape(B * Ho * Wo, k * k * C)
    return col, Ho, Wo


def conv_forward(x, p, block):
    """x: (B, H, W, Cs) NHWC; Cs may exceed the weight's Cin (extra channels get 0 weight)."""
    k = int(block['size'])
    stride = int(block['stride'])
    pad = (k - 1) // 2 if int(block['pad']) else 0
    bn = 'batch_normalize' in block
    leaky = block['activation'] == 'leaky'

    B, H, W, Cs = x.shape
    cout, cin = p['weight'].shape[0], p['weight'].shape[1]
    npad = _round_up(cout, LANE)

    cols, Ho, Wo = im2col_nhwc(x, k, stride, pad)
    M = B * Ho * Wo

    # (Cout, Cin, kh, kw) -> (kh, kw, Cin, Cout); zero-pad Cin -> Cs and Cout -> npad
    w = jnp.transpose(p['weight'], (2, 3, 1, 0))
    w = jnp.pad(w, ((0, 0), (0, 0), (0, Cs - cin), (0, npad - cout)))
    w2 = w.reshape(k * k * Cs, npad).astype(jnp.bfloat16)

    if bn:
        # raw conv GEMM with fused per-channel sum/sumsq, then one affine+activation pass.
        y, stats = gemm_with_stats(cols, w2)
        mean = stats[0:1, :] / M
        var = jnp.maximum(stats[1:2, :] / M - mean * mean, 0.0)   # biased var (train mode)
        gamma = jnp.pad(p['gamma'], (0, npad - cout))[None, :]
        beta = jnp.pad(p['beta'], (0, npad - cout))[None, :]
        scale = gamma / jnp.sqrt(var + 1e-5)
        bias = beta - mean * scale
        y = affine_act(y, scale, bias, leaky=leaky)
    else:
        bias = jnp.pad(p['bias'], (0, npad - cout))[None, :]
        y = gemm_bias_act(cols, w2, bias, leaky=leaky)

    return y.reshape(B, Ho, Wo, npad), cout


def make_blocks():
    # Synthetic tiny YOLO-v3-style config (stands in for parse_yolo_config on a cfg file).
    return [
        {'type': 'net', 'height': '16', 'width': '16', 'channels': '3'},
        {'type': 'convolutional', 'batch_normalize': '1', 'filters': '8', 'size': '3',
         'stride': '1', 'pad': '1', 'activation': 'leaky'},
        {'type': 'convolutional', 'batch_normalize': '1', 'filters': '16', 'size': '3',
         'stride': '2', 'pad': '1', 'activation': 'leaky'},
        {'type': 'convolutional', 'batch_normalize': '1', 'filters': '16', 'size': '3',
         'stride': '1', 'pad': '1', 'activation': 'leaky'},
        {'type': 'shortcut', 'from': '-2', 'activation': 'linear'},
        {'type': 'convolutional', 'filters': '21', 'size': '1', 'stride': '1',
         'pad': '1', 'activation': 'linear'},
        {'type': 'yolo', 'mask': '0,1,2', 'anchors': '10,13,16,30,33,23',
         'classes': '2', 'num': '3'},
        {'type': 'route', 'layers': '-3'},
        {'type': 'upsample', 'stride': '2'},
        {'type': 'route', 'layers': '-1,-8'},
        {'type': 'convolutional', 'batch_normalize': '1', 'filters': '16', 'size': '3',
         'stride': '1', 'pad': '1', 'activation': 'leaky'},
        {'type': 'convolutional', 'filters': '21', 'size': '1', 'stride': '1',
         'pad': '1', 'activation': 'linear'},
        {'type': 'yolo', 'mask': '0,1,2', 'anchors': '10,13,16,30,33,23',
         'classes': '2', 'num': '3'},
    ]


def init_params(blocks, key):
    """Deterministic parameter init mirroring create_modules' shape bookkeeping."""
    prev = int(blocks[0]['channels'])
    params, output_filters = [], []
    for i, b in enumerate(blocks[1:]):
        p = None
        filters = prev
        if b['type'] == 'convolutional':
            filters = int(b['filters'])
            k = int(b['size'])
            key, kw, kb, kg, kbt = jax.random.split(key, 5)
            p = {'weight': jax.random.normal(kw, (filters, prev, k, k), jnp.float32)
                 * (1.0 / (prev * k * k) ** 0.5)}
            if 'batch_normalize' in b:
                p['gamma'] = 1.0 + 0.1 * jax.random.normal(kg, (filters,), jnp.float32)
                p['beta'] = 0.1 * jax.random.normal(kbt, (filters,), jnp.float32)
            else:
                p['bias'] = 0.1 * jax.random.normal(kb, (filters,), jnp.float32)
        elif b['type'] == 'route':
            layers = [int(a) for a in b['layers'].split(',')]
            start = layers[0] - i if layers[0] > 0 else layers[0]
            end = (layers[1] if len(layers) > 1 else 0)
            end = end - i if end > 0 else end
            if end < 0:
                filters = output_filters[i + start] + output_filters[i + end]
            else:
                filters = output_filters[i + start]
        # upsample / shortcut / yolo: filters unchanged
        params.append(p)
        output_filters.append(filters)
        prev = filters
    return params


def yolo_forward(x_nchw, blocks, params):
    net = blocks[0]
    modules = blocks[1:]
    x = jnp.transpose(x_nchw, (0, 2, 3, 1))      # NHWC end-to-end
    c = x.shape[-1]                              # real (unpadded) channel count
    outputs = {}
    detections = None
    for i, module in enumerate(modules):
        t = module['type']
        if t == 'convolutional':
            x, c = conv_forward(x, params[i], module)
        elif t == 'upsample':
            s = int(module['stride'])
            # TODO(synk): nearest upsample is pure data movement; left to XLA.
            x = jnp.repeat(jnp.repeat(x, s, axis=1), s, axis=2)
        elif t == 'route':
            layers = [int(a) for a in module['layers'].split(',')]
            if layers[0] > 0:
                layers[0] -= i
            if len(layers) == 1:
                x, c = outputs[i + layers[0]]
            else:
                if layers[1] > 0:
                    layers[1] -= i
                a1, c1 = outputs[i + layers[0]]
                a2, c2 = outputs[i + layers[1]]
                x = jnp.concatenate([a1[..., :c1], a2[..., :c2]], axis=-1)
                c = c1 + c2
        elif t == 'shortcut':
            feed = int(module['from'])
            a1, c1 = outputs[i - 1]
            a2, _ = outputs[i + feed]
            x = pallas_add(a1, a2)
            c = c1
        elif t == 'yolo':
            mask = [int(m) for m in module['mask'].split(',')]
            av = [int(v) for v in module['anchors'].split(',')]
            anchors_all = [(av[j], av[j + 1]) for j in range(0, len(av), 2)]
            anchors = [anchors_all[m] for m in mask]
            inp_dim = int(net['height'])
            num_classes = int(module['classes'])
            na, A = len(anchors), 5 + num_classes
            x = predict_transform(x[..., :na * A], inp_dim, anchors, num_classes)
            c = A
            detections = x if detections is None else jnp.concatenate([detections, x], axis=1)
        outputs[i] = (x, c)
    return detections


if __name__ == "__main__":
    key = jax.random.PRNGKey(0)
    k_param, k_x = jax.random.split(key)

    blocks = make_blocks()
    params = init_params(blocks, k_param)

    x = jax.random.normal(k_x, (2, 3, 16, 16), jnp.float32)   # NCHW, matches net cfg

    forward = jax.jit(lambda inp: yolo_forward(inp, blocks, params))
    det = jax.block_until_ready(forward(x))

    # yolo head 1: 8*8*3 = 192 boxes, yolo head 2: 16*16*3 = 768 boxes, 5+2 attrs each
    assert det.shape == (2, 960, 7), det.shape
    assert bool(jnp.all(jnp.isfinite(det)))
    print("KERNEL_OK")
</pallas_src>

<mosaic_0001>
module attributes {stable_mosaic.version = 11 : i64} {
  func.func @_gemm_stats_kernel(%arg0: i32, %arg1: memref<512x27xbf16, #tpu.memory_space<vmem>>, %arg2: memref<27x128xbf16, #tpu.memory_space<vmem>>, %arg3: memref<512x128xf32, #tpu.memory_space<vmem>>, %arg4: memref<2x128xf32, #tpu.memory_space<vmem>>) attributes {dimension_semantics = [#tpu.dimension_semantics<arbitrary>], iteration_bounds = array<i64: 1>, scalar_prefetch = 0 : i64, scratch_operands = 0 : i64, tpu.core_type = #tpu.core_type<tc>, window_params = [{transform_indices = @transform_0, window_bounds = array<i64: 512, 27>}, {pipeline_mode = #tpu.pipeline_mode<synchronous>, transform_indices = @transform_1, window_bounds = array<i64: 27, 128>}, {transform_indices = @transform_2, window_bounds = array<i64: 512, 128>}, {pipeline_mode = #tpu.pipeline_mode<synchronous>, transform_indices = @transform_3, window_bounds = array<i64: 2, 128>}]} {
    %c0 = arith.constant 0 : index
    %c0_0 = arith.constant 0 : index
    %0 = vector.load %arg1[%c0, %c0_0] : memref<512x27xbf16, #tpu.memory_space<vmem>>, vector<512x27xbf16>
    %c0_1 = arith.constant 0 : index
    %c0_2 = arith.constant 0 : index
    %1 = vector.load %arg2[%c0_1, %c0_2] : memref<27x128xbf16, #tpu.memory_space<vmem>>, vector<27x128xbf16>
    %cst = arith.constant dense<0.000000e+00> : vector<512x128xf32>
    %2 = tpu.matmul %0, %1, %cst {dimension_numbers = #tpu.dot_dimension_numbers<[1], [0], [0], [1], [0, 0, 1, 1], [], []>} : vector<512x27xbf16>, vector<27x128xbf16>, vector<512x128xf32> -> vector<512x128xf32>
    %c0_3 = arith.constant 0 : index
    %c0_4 = arith.constant 0 : index
    %3 = vector.load %arg3[%c0_3, %c0_4] : memref<512x128xf32, #tpu.memory_space<vmem>>, vector<512x128xf32>
    tpu.vector_store %arg3[%c0_3, %c0_4], %2 {strides = array<i32>} : memref<512x128xf32, #tpu.memory_space<vmem>>, vector<512x128xf32>,
    %c0_i32 = arith.constant 0 : i32
    %4 = arith.cmpi eq, %arg0, %c0_i32 : i32
    %5 = arith.extui %4 : i1 to i32
    %c0_i32_5 = arith.constant 0 : i32
    %6 = arith.cmpi ne, %5, %c0_i32_5 : i32
    scf.if %6 {
      %cst_12 = arith.constant 0.000000e+00 : f32
      %16 = vector.broadcast %cst_12 : f32 to vector<2x128xf32>
      %c0_13 = arith.constant 0 : index
      %c0_14 = arith.constant 0 : index
      %17 = vector.load %arg4[%c0_13, %c0_14] : memref<2x128xf32, #tpu.memory_space<vmem>>, vector<2x128xf32>
      tpu.vector_store %arg4[%c0_13, %c0_14], %16 {strides = array<i32>} : memref<2x128xf32, #tpu.memory_space<vmem>>, vector<2x128xf32>,
    } else {
    }
    %cst_6 = arith.constant dense<0.000000e+00> : vector<128xf32>
    %7 = vector.multi_reduction <add>, %2, %cst_6 [0] : vector<512x128xf32> to vector<128xf32>
    %8 = vector.shape_cast %7 : vector<128xf32> to vector<1x128xf32>
    %9 = arith.mulf %2, %2 : vector<512x128xf32>
    %cst_7 = arith.constant dense<0.000000e+00> : vector<128xf32>
    %10 = vector.multi_reduction <add>, %9, %cst_7 [0] : vector<512x128xf32> to vector<128xf32>
    %11 = vector.shape_cast %10 : vector<128xf32> to vector<1x128xf32>
    %c0_8 = arith.constant 0 : index
    %c0_9 = arith.constant 0 : index
    %12 = vector.load %arg4[%c0_8, %c0_9] : memref<2x128xf32, #tpu.memory_space<vmem>>, vector<2x128xf32>
    %13 = tpu.concatenate %8, %11 in 0 : vector<1x128xf32>, vector<1x128xf32> -> vector<2x128xf32>
    %14 = arith.addf %12, %13 : vector<2x128xf32>
    %c0_10 = arith.constant 0 : index
    %c0_11 = arith.constant 0 : index
    %15 = vector.load %arg4[%c0_10, %c0_11] : memref<2x128xf32, #tpu.memory_space<vmem>>, vector<2x128xf32>
    tpu.vector_store %arg4[%c0_10, %c0_11], %14 {strides = array<i32>} : memref<2x128xf32, #tpu.memory_space<vmem>>, vector<2x128xf32>,
    return
  }
  func.func @transform_0(%arg0: i32) -> (i32, i32) {
    %c0_i32 = arith.constant 0 : i32
    %c0_i32_0 = arith.constant 0 : i32
    return %arg0, %c0_i32 : i32, i32
  }
  func.func @transform_1(%arg0: i32) -> (i32, i32) {
    %c0_i32 = arith.constant 0 : i32
    %c0_i32_0 = arith.constant 0 : i32
    %c0_i32_1 = arith.constant 0 : i32
    return %c0_i32, %c0_i32_0 : i32, i32
  }
  func.func @transform_2(%arg0: i32) -> (i32, i32) {
    %c0_i32 = arith.constant 0 : i32
    %c0_i32_0 = arith.constant 0 : i32
    return %arg0, %c0_i32 : i32, i32
  }
  func.func @transform_3(%arg0: i32) -> (i32, i32) {
    %c0_i32 = arith.constant 0 : i32
    %c0_i32_0 = arith.constant 0 : i32
    %c0_i32_1 = arith.constant 0 : i32
    return %c0_i32, %c0_i32_0 : i32, i32
  }
}

module attributes {stable_mosaic.version = 11 : i64} {
  func.func @_affine_act_kernel(%arg0: i32, %arg1: memref<512x128xf32, #tpu.memory_space<vmem>>, %arg2: memref<1x128xf32, #tpu.memory_space<vmem>>, %arg3: memref<1x128xf32, #tpu.memory_space<vmem>>, %arg4: memref<512x128xf32, #tpu.memory_space<vmem>>) attributes {dimension_semantics = [#tpu.dimension_semantics<parallel>], iteration_bounds = array<i64: 1>, scalar_prefetch = 0 : i64, scratch_operands = 0 : i64, tpu.core_type = #tpu.core_type<tc>, window_params = [{transform_indices = @transform_0, window_bounds = array<i64: 512, 128>}, {pipeline_mode = #tpu.pipeline_mode<synchronous>, transform_indices = @transform_1, window_bounds = array<i64: 1, 128>}, {pipeline_mode = #tpu.pipeline_mode<synchronous>, transform_indices = @transform_2, window_bounds = array<i64: 1, 128>}, {transform_indices = @transform_3, window_bounds = array<i64: 512, 128>}]} {
    %c0 = arith.constant 0 : index
    %c0_0 = arith.constant 0 : index
    %0 = vector.load %arg1[%c0, %c0_0] : memref<512x128xf32, #tpu.memory_space<vmem>>, vector<512x128xf32>
    %c0_1 = arith.constant 0 : index
    %c0_2 = arith.constant 0 : index
    %1 = vector.load %arg2[%c0_1, %c0_2] : memref<1x128xf32, #tpu.memory_space<vmem>>, vector<1x128xf32>
    %2 = vector.broadcast %1 : vector<1x128xf32> to vector<512x128xf32>
    %3 = arith.mulf %0, %2 : vector<512x128xf32>
    %c0_3 = arith.constant 0 : index
    %c0_4 = arith.constant 0 : index
    %4 = vector.load %arg3[%c0_3, %c0_4] : memref<1x128xf32, #tpu.memory_space<vmem>>, vector<1x128xf32>
    %5 = vector.broadcast %4 : vector<1x128xf32> to vector<512x128xf32>
    %6 = arith.addf %3, %5 : vector<512x128xf32>
    %cst = arith.constant 0.000000e+00 : f32
    %7 = vector.broadcast %cst : f32 to vector<512x128xf32>
    %8 = arith.cmpf ogt, %6, %7 : vector<512x128xf32>
    %cst_5 = arith.constant 1.000000e-01 : f32
    %9 = vector.broadcast %cst_5 : f32 to vector<512x128xf32>
    %10 = arith.mulf %9, %6 : vector<512x128xf32>
    %11 = arith.select %8, %6, %10 : vector<512x128xi1>, vector<512x128xf32>
    %c0_6 = arith.constant 0 : index
    %c0_7 = arith.constant 0 : index
    %12 = vector.load %arg4[%c0_6, %c0_7] : memref<512x128xf32, #tpu.memory_space<vmem>>, vector<512x128xf32>
    tpu.vector_store %arg4[%c0_6, %c0_7], %11 {strides = array<i32>} : memref<512x128xf32, #tpu.memory_space<vmem>>, vector<512x128xf32>,
    return
  }
  func.func @transform_0(%arg0: i32) -> (i32, i32) {
    %c0_i32 = arith.constant 0 : i32
    %c0_i32_0 = arith.constant 0 : i32
    return %arg0, %c0_i32 : i32, i32
  }
  func.func @transform_1(%arg0: i32) -> (i32, i32) {
    %c0_i32 = arith.constant 0 : i32
    %c0_i32_0 = arith.constant 0 : i32
    %c0_i32_1 = arith.constant 0 : i32
    return %c0_i32, %c0_i32_0 : i32, i32
  }
  func.func @transform_2(%arg0: i32) -> (i32, i32) {
    %c0_i32 = arith.constant 0 : i32
    %c0_i32_0 = arith.constant 0 : i32
    %c0_i32_1 = arith.constant 0 : i32
    return %c0_i32, %c0_i32_0 : i32, i32
  }
  func.func @transform_3(%arg0: i32) -> (i32, i32) {
    %c0_i32 = arith.constant 0 : i32
    %c0_i32_0 = arith.constant 0 : i32
    return %arg0, %c0_i32 : i32, i32
  }
}

module attributes {stable_mosaic.version = 11 : i64} {
  func.func @_affine_act_kernel(%arg0: i32, %arg1: memref<128x128xf32, #tpu.memory_space<vmem>>, %arg2: memref<1x128xf32, #tpu.memory_space<vmem>>, %arg3: memref<1x128xf32, #tpu.memory_space<vmem>>, %arg4: memref<128x128xf32, #tpu.memory_space<vmem>>) attributes {dimension_semantics = [#tpu.dimension_semantics<parallel>], iteration_bounds = array<i64: 1>, scalar_prefetch = 0 : i64, scratch_operands = 0 : i64, tpu.core_type = #tpu.core_type<tc>, window_params = [{transform_indices = @transform_0, window_bounds = array<i64: 128, 128>}, {pipeline_mode = #tpu.pipeline_mode<synchronous>, transform_indices = @transform_1, window_bounds = array<i64: 1, 128>}, {pipeline_mode = #tpu.pipeline_mode<synchronous>, transform_indices = @transform_2, window_bounds = array<i64: 1, 128>}, {transform_indices = @transform_3, window_bounds = array<i64: 128, 128>}]} {
    %c0 = arith.constant 0 : index
    %c0_0 = arith.constant 0 : index
    %0 = vector.load %arg1[%c0, %c0_0] : memref<128x128xf32, #tpu.memory_space<vmem>>, vector<128x128xf32>
    %c0_1 = arith.constant 0 : index
    %c0_2 = arith.constant 0 : index
    %1 = vector.load %arg2[%c0_1, %c0_2] : memref<1x128xf32, #tpu.memory_space<vmem>>, vector<1x128xf32>
    %2 = vector.broadcast %1 : vector<1x128xf32> to vector<128x128xf32>
    %3 = arith.mulf %0, %2 : vector<128x128xf32>
    %c0_3 = arith.constant 0 : index
    %c0_4 = arith.constant 0 : index
    %4 = vector.load %arg3[%c0_3, %c0_4] : memref<1x128xf32, #tpu.memory_space<vmem>>, vector<1x128xf32>
    %5 = vector.broadcast %4 : vector<1x128xf32> to vector<128x128xf32>
    %6 = arith.addf %3, %5 : vector<128x128xf32>
    %cst = arith.constant 0.000000e+00 : f32
    %7 = vector.broadcast %cst : f32 to vector<128x128xf32>
    %8 = arith.cmpf ogt, %6, %7 : vector<128x128xf32>
    %cst_5 = arith.constant 1.000000e-01 : f32
    %9 = vector.broadcast %cst_5 : f32 to vector<128x128xf32>
    %10 = arith.mulf %9, %6 : vector<128x128xf32>
    %11 = arith.select %8, %6, %10 : vector<128x128xi1>, vector<128x128xf32>
    %c0_6 = arith.constant 0 : index
    %c0_7 = arith.constant 0 : index
    %12 = vector.load %arg4[%c0_6, %c0_7] : memref<128x128xf32, #tpu.memory_space<vmem>>, vector<128x128xf32>
    tpu.vector_store %arg4[%c0_6, %c0_7], %11 {strides = array<i32>} : memref<128x128xf32, #tpu.memory_space<vmem>>, vector<128x128xf32>,
    return
  }
  func.func @transform_0(%arg0: i32) -> (i32, i32) {
    %c0_i32 = arith.constant 0 : i32
    %c0_i32_0 = arith.constant 0 : i32
    return %arg0, %c0_i32 : i32, i32
  }
  func.func @transform_1(%arg0: i32) -> (i32, i32) {
    %c0_i32 = arith.constant 0 : i32
    %c0_i32_0 = arith.constant 0 : i32
    %c0_i32_1 = arith.constant 0 : i32
    return %c0_i32, %c0_i32_0 : i32, i32
  }
  func.func @transform_2(%arg0: i32) -> (i32, i32) {
    %c0_i32 = arith.constant 0 : i32
    %c0_i32_0 = arith.constant 0 : i32
    %c0_i32_1 = arith.constant 0 : i32
    return %c0_i32, %c0_i32_0 : i32, i32
  }
  func.func @transform_3(%arg0: i32) -> (i32, i32) {
    %c0_i32 = arith.constant 0 : i32
    %c0_i32_0 = arith.constant 0 : i32
    return %arg0, %c0_i32 : i32, i32
  }
}

module attributes {stable_mosaic.version = 11 : i64} {
  func.func @_gemm_stats_kernel(%arg0: i32, %arg1: memref<128x1152xbf16, #tpu.memory_space<vmem>>, %arg2: memref<1152x128xbf16, #tpu.memory_space<vmem>>, %arg3: memref<128x128xf32, #tpu.memory_space<vmem>>, %arg4: memref<2x128xf32, #tpu.memory_space<vmem>>) attributes {dimension_semantics = [#tpu.dimension_semantics<arbitrary>], iteration_bounds = array<i64: 1>, scalar_prefetch = 0 : i64, scratch_operands = 0 : i64, tpu.core_type = #tpu.core_type<tc>, window_params = [{transform_indices = @transform_0, window_bounds = array<i64: 128, 1152>}, {pipeline_mode = #tpu.pipeline_mode<synchronous>, transform_indices = @transform_1, window_bounds = array<i64: 1152, 128>}, {transform_indices = @transform_2, window_bounds = array<i64: 128, 128>}, {pipeline_mode = #tpu.pipeline_mode<synchronous>, transform_indices = @transform_3, window_bounds = array<i64: 2, 128>}]} {
    %c0 = arith.constant 0 : index
    %c0_0 = arith.constant 0 : index
    %0 = vector.load %arg1[%c0, %c0_0] : memref<128x1152xbf16, #tpu.memory_space<vmem>>, vector<128x1152xbf16>
    %c0_1 = arith.constant 0 : index
    %c0_2 = arith.constant 0 : index
    %1 = vector.load %arg2[%c0_1, %c0_2] : memref<1152x128xbf16, #tpu.memory_space<vmem>>, vector<1152x128xbf16>
    %cst = arith.constant dense<0.000000e+00> : vector<128x128xf32>
    %2 = tpu.matmul %0, %1, %cst {dimension_numbers = #tpu.dot_dimension_numbers<[1], [0], [0], [1], [0, 0, 1, 1], [], []>} : vector<128x1152xbf16>, vector<1152x128xbf16>, vector<128x128xf32> -> vector<128x128xf32>
    %c0_3 = arith.constant 0 : index
    %c0_4 = arith.constant 0 : index
    %3 = vector.load %arg3[%c0_3, %c0_4] : memref<128x128xf32, #tpu.memory_space<vmem>>, vector<128x128xf32>
    tpu.vector_store %arg3[%c0_3, %c0_4], %2 {strides = array<i32>} : memref<128x128xf32, #tpu.memory_space<vmem>>, vector<128x128xf32>,
    %c0_i32 = arith.constant 0 : i32
    %4 = arith.cmpi eq, %arg0, %c0_i32 : i32
    %5 = arith.extui %4 : i1 to i32
    %c0_i32_5 = arith.constant 0 : i32
    %6 = arith.cmpi ne, %5, %c0_i32_5 : i32
    scf.if %6 {
      %cst_12 = arith.constant 0.000000e+00 : f32
      %16 = vector.broadcast %cst_12 : f32 to vector<2x128xf32>
      %c0_13 = arith.constant 0 : index
      %c0_14 = arith.constant 0 : index
      %17 = vector.load %arg4[%c0_13, %c0_14] : memref<2x128xf32, #tpu.memory_space<vmem>>, vector<2x128xf32>
      tpu.vector_store %arg4[%c0_13, %c0_14], %16 {strides = array<i32>} : memref<2x128xf32, #tpu.memory_space<vmem>>, vector<2x128xf32>,
    } else {
    }
    %cst_6 = arith.constant dense<0.000000e+00> : vector<128xf32>
    %7 = vector.multi_reduction <add>, %2, %cst_6 [0] : vector<128x128xf32> to vector<128xf32>
    %8 = vector.shape_cast %7 : vector<128xf32> to vector<1x128xf32>
    %9 = arith.mulf %2, %2 : vector<128x128xf32>
    %cst_7 = arith.constant dense<0.000000e+00> : vector<128xf32>
    %10 = vector.multi_reduction <add>, %9, %cst_7 [0] : vector<128x128xf32> to vector<128xf32>
    %11 = vector.shape_cast %10 : vector<128xf32> to vector<1x128xf32>
    %c0_8 = arith.constant 0 : index
    %c0_9 = arith.constant 0 : index
    %12 = vector.load %arg4[%c0_8, %c0_9] : memref<2x128xf32, #tpu.memory_space<vmem>>, vector<2x128xf32>
    %13 = tpu.concatenate %8, %11 in 0 : vector<1x128xf32>, vector<1x128xf32> -> vector<2x128xf32>
    %14 = arith.addf %12, %13 : vector<2x128xf32>
    %c0_10 = arith.constant 0 : index
    %c0_11 = arith.constant 0 : index
    %15 = vector.load %arg4[%c0_10, %c0_11] : memref<2x128xf32, #tpu.memory_space<vmem>>, vector<2x128xf32>
    tpu.vector_store %arg4[%c0_10, %c0_11], %14 {strides = array<i32>} : memref<2x128xf32, #tpu.memory_space<vmem>>, vector<2x128xf32>,
    return
  }
  func.func @transform_0(%arg0: i32) -> (i32, i32) {
    %c0_i32 = arith.constant 0 : i32
    %c0_i32_0 = arith.constant 0 : i32
    return %arg0, %c0_i32 : i32, i32
  }
  func.func @transform_1(%arg0: i32) -> (i32, i32) {
    %c0_i32 = arith.constant 0 : i32
    %c0_i32_0 = arith.constant 0 : i32
    %c0_i32_1 = arith.constant 0 : i32
    return %c0_i32, %c0_i32_0 : i32, i32
  }
  func.func @transform_2(%arg0: i32) -> (i32, i32) {
    %c0_i32 = arith.constant 0 : i32
    %c0_i32_0 = arith.constant 0 : i32
    return %arg0, %c0_i32 : i32, i32
  }
  func.func @transform_3(%arg0: i32) -> (i32, i32) {
    %c0_i32 = arith.constant 0 : i32
    %c0_i32_0 = arith.constant 0 : i32
    %c0_i32_1 = arith.constant 0 : i32
    return %c0_i32, %c0_i32_0 : i32, i32
  }
}

module attributes {stable_mosaic.version = 11 : i64} {
  func.func @_gemm_bias_act_kernel(%arg0: i32, %arg1: memref<128x128xbf16, #tpu.memory_space<vmem>>, %arg2: memref<128x128xbf16, #tpu.memory_space<vmem>>, %arg3: memref<1x128xf32, #tpu.memory_space<vmem>>, %arg4: memref<128x128xf32, #tpu.memory_space<vmem>>) attributes {dimension_semantics = [#tpu.dimension_semantics<parallel>], iteration_bounds = array<i64: 1>, scalar_prefetch = 0 : i64, scratch_operands = 0 : i64, tpu.core_type = #tpu.core_type<tc>, window_params = [{transform_indices = @transform_0, window_bounds = array<i64: 128, 128>}, {pipeline_mode = #tpu.pipeline_mode<synchronous>, transform_indices = @transform_1, window_bounds = array<i64: 128, 128>}, {pipeline_mode = #tpu.pipeline_mode<synchronous>, transform_indices = @transform_2, window_bounds = array<i64: 1, 128>}, {transform_indices = @transform_3, window_bounds = array<i64: 128, 128>}]} {
    %c0 = arith.constant 0 : index
    %c0_0 = arith.constant 0 : index
    %0 = vector.load %arg1[%c0, %c0_0] : memref<128x128xbf16, #tpu.memory_space<vmem>>, vector<128x128xbf16>
    %c0_1 = arith.constant 0 : index
    %c0_2 = arith.constant 0 : index
    %1 = vector.load %arg2[%c0_1, %c0_2] : memref<128x128xbf16, #tpu.memory_space<vmem>>, vector<128x128xbf16>
    %cst = arith.constant dense<0.000000e+00> : vector<128x128xf32>
    %2 = tpu.matmul %0, %1, %cst {dimension_numbers = #tpu.dot_dimension_numbers<[1], [0], [0], [1], [0, 0, 1, 1], [], []>} : vector<128x128xbf16>, vector<128x128xbf16>, vector<128x128xf32> -> vector<128x128xf32>
    %c0_3 = arith.constant 0 : index
    %c0_4 = arith.constant 0 : index
    %3 = vector.load %arg3[%c0_3, %c0_4] : memref<1x128xf32, #tpu.memory_space<vmem>>, vector<1x128xf32>
    %4 = vector.broadcast %3 : vector<1x128xf32> to vector<128x128xf32>
    %5 = arith.addf %2, %4 : vector<128x128xf32>
    %c0_5 = arith.constant 0 : index
    %c0_6 = arith.constant 0 : index
    %6 = vector.load %arg4[%c0_5, %c0_6] : memref<128x128xf32, #tpu.memory_space<vmem>>, vector<128x128xf32>
    tpu.vector_store %arg4[%c0_5, %c0_6], %5 {strides = array<i32>} : memref<128x128xf32, #tpu.memory_space<vmem>>, vector<128x128xf32>,
    return
  }
  func.func @transform_0(%arg0: i32) -> (i32, i32) {
    %c0_i32 = arith.constant 0 : i32
    %c0_i32_0 = arith.constant 0 : i32
    return %arg0, %c0_i32 : i32, i32
  }
  func.func @transform_1(%arg0: i32) -> (i32, i32) {
    %c0_i32 = arith.constant 0 : i32
    %c0_i32_0 = arith.constant 0 : i32
    %c0_i32_1 = arith.constant 0 : i32
    return %c0_i32, %c0_i32_0 : i32, i32
  }
  func.func @transform_2(%arg0: i32) -> (i32, i32) {
    %c0_i32 = arith.constant 0 : i32
    %c0_i32_0 = arith.constant 0 : i32
    %c0_i32_1 = arith.constant 0 : i32
    return %c0_i32, %c0_i32_0 : i32, i32
  }
  func.func @transform_3(%arg0: i32) -> (i32, i32) {
    %c0_i32 = arith.constant 0 : i32
    %c0_i32_0 = arith.constant 0 : i32
    return %arg0, %c0_i32 : i32, i32
  }
}

module attributes {stable_mosaic.version = 11 : i64} {
  func.func @_add_kernel(%arg0: i32, %arg1: memref<128x128xf32, #tpu.memory_space<vmem>>, %arg2: memref<128x128xf32, #tpu.memory_space<vmem>>, %arg3: memref<128x128xf32, #tpu.memory_space<vmem>>) attributes {dimension_semantics = [#tpu.dimension_semantics<parallel>], iteration_bounds = array<i64: 1>, scalar_prefetch = 0 : i64, scratch_operands = 0 : i64, tpu.core_type = #tpu.core_type<tc>, window_params = [{transform_indices = @transform_0, window_bounds = array<i64: 128, 128>}, {transform_indices = @transform_1, window_bounds = array<i64: 128, 128>}, {transform_indices = @transform_2, window_bounds = array<i64: 128, 128>}]} {
    %c0 = arith.constant 0 : index
    %c0_0 = arith.constant 0 : index
    %0 = vector.load %arg1[%c0, %c0_0] : memref<128x128xf32, #tpu.memory_space<vmem>>, vector<128x128xf32>
    %c0_1 = arith.constant 0 : index
    %c0_2 = arith.constant 0 : index
    %1 = vector.load %arg2[%c0_1, %c0_2] : memref<128x128xf32, #tpu.memory_space<vmem>>, vector<128x128xf32>
    %2 = arith.addf %0, %1 : vector<128x128xf32>
    %c0_3 = arith.constant 0 : index
    %c0_4 = arith.constant 0 : index
    %3 = vector.load %arg3[%c0_3, %c0_4] : memref<128x128xf32, #tpu.memory_space<vmem>>, vector<128x128xf32>
    tpu.vector_store %arg3[%c0_3, %c0_4], %2 {strides = array<i32>} : memref<128x128xf32, #tpu.memory_space<vmem>>, vector<128x128xf32>,
    return
  }
  func.func @transform_0(%arg0: i32) -> (i32, i32) {
    %c0_i32 = arith.constant 0 : i32
    %c0_i32_0 = arith.constant 0 : i32
    return %arg0, %c0_i32 : i32, i32
  }
  func.func @transform_1(%arg0: i32) -> (i32, i32) {
    %c0_i32 = arith.constant 0 : i32
    %c0_i32_0 = arith.constant 0 : i32
    return %arg0, %c0_i32 : i32, i32
  }
  func.func @transform_2(%arg0: i32) -> (i32, i32) {
    %c0_i32 = arith.constant 0 : i32
    %c0_i32_0 = arith.constant 0 : i32
    return %arg0, %c0_i32 : i32, i32
  }
}

module attributes {stable_mosaic.version = 11 : i64} {
  func.func @_yolo_kernel(%arg0: i32, %arg1: memref<1x7x192xf32, #tpu.memory_space<vmem>>, %arg2: memref<4x192xf32, #tpu.memory_space<vmem>>, %arg3: memref<1x7x192xf32, #tpu.memory_space<vmem>>) attributes {dimension_semantics = [#tpu.dimension_semantics<parallel>], iteration_bounds = array<i64: 2>, scalar_prefetch = 0 : i64, scratch_operands = 0 : i64, tpu.core_type = #tpu.core_type<tc>, window_params = [{transform_indices = @transform_0, window_bounds = array<i64: 1, 7, 192>}, {pipeline_mode = #tpu.pipeline_mode<synchronous>, transform_indices = @transform_1, window_bounds = array<i64: 4, 192>}, {transform_indices = @transform_2, window_bounds = array<i64: 1, 7, 192>}]} {
    %c0 = arith.constant 0 : index
    %c0_0 = arith.constant 0 : index
    %c0_1 = arith.constant 0 : index
    %0 = vector.load %arg1[%c0, %c0_0, %c0_1] : memref<1x7x192xf32, #tpu.memory_space<vmem>>, vector<1x7x192xf32>
    %1 = vector.shape_cast %0 : vector<1x7x192xf32> to vector<7x192xf32>
    %c0_2 = arith.constant 0 : index
    %c0_3 = arith.constant 0 : index
    %2 = vector.load %arg2[%c0_2, %c0_3] : memref<4x192xf32, #tpu.memory_space<vmem>>, vector<4x192xf32>
    %3 = vector.extract_strided_slice %1 {offsets = [0, 0], sizes = [2, 192], strides = [1, 1]} : vector<7x192xf32> to vector<2x192xf32>
    %4 = arith.negf %3 : vector<2x192xf32>
    %5 = math.exp %4 : vector<2x192xf32>
    %cst = arith.constant 1.000000e+00 : f32
    %6 = vector.broadcast %cst : f32 to vector<2x192xf32>
    %7 = arith.addf %6, %5 : vector<2x192xf32>
    %8 = arith.divf %6, %7 : vector<2x192xf32>
    %9 = vector.extract_strided_slice %2 {offsets = [0, 0], sizes = [2, 192], strides = [1, 1]} : vector<4x192xf32> to vector<2x192xf32>
    %10 = arith.addf %8, %9 : vector<2x192xf32>
    %cst_4 = arith.constant 2.000000e+00 : f32
    %11 = vector.broadcast %cst_4 : f32 to vector<2x192xf32>
    %12 = arith.mulf %10, %11 : vector<2x192xf32>
    %c0_5 = arith.constant 0 : index
    %c0_6 = arith.constant 0 : index
    %c0_7 = arith.constant 0 : index
    %13 = vector.load %arg3[%c0_5, %c0_6, %c0_7] : memref<1x7x192xf32, #tpu.memory_space<vmem>>, vector<1x2x192xf32>
    %14 = vector.shape_cast %13 : vector<1x2x192xf32> to vector<2x192xf32>
    %15 = vector.shape_cast %12 : vector<2x192xf32> to vector<1x2x192xf32>
    tpu.vector_store %arg3[%c0_5, %c0_6, %c0_7], %15 {strides = array<i32>} : memref<1x7x192xf32, #tpu.memory_space<vmem>>, vector<1x2x192xf32>,
    %16 = vector.extract_strided_slice %1 {offsets = [2, 0], sizes = [2, 192], strides = [1, 1]} : vector<7x192xf32> to vector<2x192xf32>
    %17 = math.exp %16 : vector<2x192xf32>
    %18 = vector.extract_strided_slice %2 {offsets = [2, 0], sizes = [2, 192], strides = [1, 1]} : vector<4x192xf32> to vector<2x192xf32>
    %cst_8 = arith.constant 2.000000e+00 : f32
    %19 = vector.broadcast %cst_8 : f32 to vector<2x192xf32>
    %20 = arith.mulf %18, %19 : vector<2x192xf32>
    %21 = arith.mulf %17, %20 : vector<2x192xf32>
    %c0_9 = arith.constant 0 : index
    %c2 = arith.constant 2 : index
    %c0_10 = arith.constant 0 : index
    %22 = vector.load %arg3[%c0_9, %c2, %c0_10] : memref<1x7x192xf32, #tpu.memory_space<vmem>>, vector<1x2x192xf32>
    %23 = vector.shape_cast %22 : vector<1x2x192xf32> to vector<2x192xf32>
    %24 = vector.shape_cast %21 : vector<2x192xf32> to vector<1x2x192xf32>
    tpu.vector_store %arg3[%c0_9, %c2, %c0_10], %24 {strides = array<i32>} : memref<1x7x192xf32, #tpu.memory_space<vmem>>, vector<1x2x192xf32>,
    %25 = vector.extract_strided_slice %1 {offsets = [4, 0], sizes = [3, 192], strides = [1, 1]} : vector<7x192xf32> to vector<3x192xf32>
    %26 = arith.negf %25 : vector<3x192xf32>
    %27 = math.exp %26 : vector<3x192xf32>
    %cst_11 = arith.constant 1.000000e+00 : f32
    %28 = vector.broadcast %cst_11 : f32 to vector<3x192xf32>
    %29 = arith.addf %28, %27 : vector<3x192xf32>
    %30 = arith.divf %28, %29 : vector<3x192xf32>
    %c0_12 = arith.constant 0 : index
    %c4 = arith.constant 4 : index
    %c0_13 = arith.constant 0 : index
    %31 = vector.load %arg3[%c0_12, %c4, %c0_13] : memref<1x7x192xf32, #tpu.memory_space<vmem>>, vector<1x3x192xf32>
    %32 = vector.shape_cast %31 : vector<1x3x192xf32> to vector<3x192xf32>
    %33 = vector.shape_cast %30 : vector<3x192xf32> to vector<1x3x192xf32>
    tpu.vector_store %arg3[%c0_12, %c4, %c0_13], %33 {strides = array<i32>} : memref<1x7x192xf32, #tpu.memory_space<vmem>>, vector<1x3x192xf32>,
    return
  }
  func.func @transform_0(%arg0: i32) -> (i32, i32, i32) {
    %c0_i32 = arith.constant 0 : i32
    %c0_i32_0 = arith.constant 0 : i32
    %c0_i32_1 = arith.constant 0 : i32
    return %arg0, %c0_i32, %c0_i32_0 : i32, i32, i32
  }
  func.func @transform_1(%arg0: i32) -> (i32, i32) {
    %c0_i32 = arith.constant 0 : i32
    %c0_i32_0 = arith.constant 0 : i32
    %c0_i32_1 = arith.constant 0 : i32
    return %c0_i32, %c0_i32_0 : i32, i32
  }
  func.func @transform_2(%arg0: i32) -> (i32, i32, i32) {
    %c0_i32 = arith.constant 0 : i32
    %c0_i32_0 = arith.constant 0 : i32
    %c0_i32_1 = arith.constant 0 : i32
    return %arg0, %c0_i32, %c0_i32_0 : i32, i32, i32
  }
}

module attributes {stable_mosaic.version = 11 : i64} {
  func.func @_gemm_bias_act_kernel(%arg0: i32, %arg1: memref<512x128xbf16, #tpu.memory_space<vmem>>, %arg2: memref<128x128xbf16, #tpu.memory_space<vmem>>, %arg3: memref<1x128xf32, #tpu.memory_space<vmem>>, %arg4: memref<512x128xf32, #tpu.memory_space<vmem>>) attributes {dimension_semantics = [#tpu.dimension_semantics<parallel>], iteration_bounds = array<i64: 1>, scalar_prefetch = 0 : i64, scratch_operands = 0 : i64, tpu.core_type = #tpu.core_type<tc>, window_params = [{transform_indices = @transform_0, window_bounds = array<i64: 512, 128>}, {pipeline_mode = #tpu.pipeline_mode<synchronous>, transform_indices = @transform_1, window_bounds = array<i64: 128, 128>}, {pipeline_mode = #tpu.pipeline_mode<synchronous>, transform_indices = @transform_2, window_bounds = array<i64: 1, 128>}, {transform_indices = @transform_3, window_bounds = array<i64: 512, 128>}]} {
    %c0 = arith.constant 0 : index
    %c0_0 = arith.constant 0 : index
    %0 = vector.load %arg1[%c0, %c0_0] : memref<512x128xbf16, #tpu.memory_space<vmem>>, vector<512x128xbf16>
    %c0_1 = arith.constant 0 : index
    %c0_2 = arith.constant 0 : index
    %1 = vector.load %arg2[%c0_1, %c0_2] : memref<128x128xbf16, #tpu.memory_space<vmem>>, vector<128x128xbf16>
    %cst = arith.constant dense<0.000000e+00> : vector<512x128xf32>
    %2 = tpu.matmul %0, %1, %cst {dimension_numbers = #tpu.dot_dimension_numbers<[1], [0], [0], [1], [0, 0, 1, 1], [], []>} : vector<512x128xbf16>, vector<128x128xbf16>, vector<512x128xf32> -> vector<512x128xf32>
    %c0_3 = arith.constant 0 : index
    %c0_4 = arith.constant 0 : index
    %3 = vector.load %arg3[%c0_3, %c0_4] : memref<1x128xf32, #tpu.memory_space<vmem>>, vector<1x128xf32>
    %4 = vector.broadcast %3 : vector<1x128xf32> to vector<512x128xf32>
    %5 = arith.addf %2, %4 : vector<512x128xf32>
    %c0_5 = arith.constant 0 : index
    %c0_6 = arith.constant 0 : index
    %6 = vector.load %arg4[%c0_5, %c0_6] : memref<512x128xf32, #tpu.memory_space<vmem>>, vector<512x128xf32>
    tpu.vector_store %arg4[%c0_5, %c0_6], %5 {strides = array<i32>} : memref<512x128xf32, #tpu.memory_space<vmem>>, vector<512x128xf32>,
    return
  }
  func.func @transform_0(%arg0: i32) -> (i32, i32) {
    %c0_i32 = arith.constant 0 : i32
    %c0_i32_0 = arith.constant 0 : i32
    return %arg0, %c0_i32 : i32, i32
  }
  func.func @transform_1(%arg0: i32) -> (i32, i32) {
    %c0_i32 = arith.constant 0 : i32
    %c0_i32_0 = arith.constant 0 : i32
    %c0_i32_1 = arith.constant 0 : i32
    return %c0_i32, %c0_i32_0 : i32, i32
  }
  func.func @transform_2(%arg0: i32) -> (i32, i32) {
    %c0_i32 = arith.constant 0 : i32
    %c0_i32_0 = arith.constant 0 : i32
    %c0_i32_1 = arith.constant 0 : i32
    return %c0_i32, %c0_i32_0 : i32, i32
  }
  func.func @transform_3(%arg0: i32) -> (i32, i32) {
    %c0_i32 = arith.constant 0 : i32
    %c0_i32_0 = arith.constant 0 : i32
    return %arg0, %c0_i32 : i32, i32
  }
}

module attributes {stable_mosaic.version = 11 : i64} {
  func.func @_gemm_stats_kernel(%arg0: i32, %arg1: memref<512x216xbf16, #tpu.memory_space<vmem>>, %arg2: memref<216x128xbf16, #tpu.memory_space<vmem>>, %arg3: memref<512x128xf32, #tpu.memory_space<vmem>>, %arg4: memref<2x128xf32, #tpu.memory_space<vmem>>) attributes {dimension_semantics = [#tpu.dimension_semantics<arbitrary>], iteration_bounds = array<i64: 1>, scalar_prefetch = 0 : i64, scratch_operands = 0 : i64, tpu.core_type = #tpu.core_type<tc>, window_params = [{transform_indices = @transform_0, window_bounds = array<i64: 512, 216>}, {pipeline_mode = #tpu.pipeline_mode<synchronous>, transform_indices = @transform_1, window_bounds = array<i64: 216, 128>}, {transform_indices = @transform_2, window_bounds = array<i64: 512, 128>}, {pipeline_mode = #tpu.pipeline_mode<synchronous>, transform_indices = @transform_3, window_bounds = array<i64: 2, 128>}]} {
    %c0 = arith.constant 0 : index
    %c0_0 = arith.constant 0 : index
    %0 = vector.load %arg1[%c0, %c0_0] : memref<512x216xbf16, #tpu.memory_space<vmem>>, vector<512x216xbf16>
    %c0_1 = arith.constant 0 : index
    %c0_2 = arith.constant 0 : index
    %1 = vector.load %arg2[%c0_1, %c0_2] : memref<216x128xbf16, #tpu.memory_space<vmem>>, vector<216x128xbf16>
    %cst = arith.constant dense<0.000000e+00> : vector<512x128xf32>
    %2 = tpu.matmul %0, %1, %cst {dimension_numbers = #tpu.dot_dimension_numbers<[1], [0], [0], [1], [0, 0, 1, 1], [], []>} : vector<512x216xbf16>, vector<216x128xbf16>, vector<512x128xf32> -> vector<512x128xf32>
    %c0_3 = arith.constant 0 : index
    %c0_4 = arith.constant 0 : index
    %3 = vector.load %arg3[%c0_3, %c0_4] : memref<512x128xf32, #tpu.memory_space<vmem>>, vector<512x128xf32>
    tpu.vector_store %arg3[%c0_3, %c0_4], %2 {strides = array<i32>} : memref<512x128xf32, #tpu.memory_space<vmem>>, vector<512x128xf32>,
    %c0_i32 = arith.constant 0 : i32
    %4 = arith.cmpi eq, %arg0, %c0_i32 : i32
    %5 = arith.extui %4 : i1 to i32
    %c0_i32_5 = arith.constant 0 : i32
    %6 = arith.cmpi ne, %5, %c0_i32_5 : i32
    scf.if %6 {
      %cst_12 = arith.constant 0.000000e+00 : f32
      %16 = vector.broadcast %cst_12 : f32 to vector<2x128xf32>
      %c0_13 = arith.constant 0 : index
      %c0_14 = arith.constant 0 : index
      %17 = vector.load %arg4[%c0_13, %c0_14] : memref<2x128xf32, #tpu.memory_space<vmem>>, vector<2x128xf32>
      tpu.vector_store %arg4[%c0_13, %c0_14], %16 {strides = array<i32>} : memref<2x128xf32, #tpu.memory_space<vmem>>, vector<2x128xf32>,
    } else {
    }
    %cst_6 = arith.constant dense<0.000000e+00> : vector<128xf32>
    %7 = vector.multi_reduction <add>, %2, %cst_6 [0] : vector<512x128xf32> to vector<128xf32>
    %8 = vector.shape_cast %7 : vector<128xf32> to vector<1x128xf32>
    %9 = arith.mulf %2, %2 : vector<512x128xf32>
    %cst_7 = arith.constant dense<0.000000e+00> : vector<128xf32>
    %10 = vector.multi_reduction <add>, %9, %cst_7 [0] : vector<512x128xf32> to vector<128xf32>
    %11 = vector.shape_cast %10 : vector<128xf32> to vector<1x128xf32>
    %c0_8 = arith.constant 0 : index
    %c0_9 = arith.constant 0 : index
    %12 = vector.load %arg4[%c0_8, %c0_9] : memref<2x128xf32, #tpu.memory_space<vmem>>, vector<2x128xf32>
    %13 = tpu.concatenate %8, %11 in 0 : vector<1x128xf32>, vector<1x128xf32> -> vector<2x128xf32>
    %14 = arith.addf %12, %13 : vector<2x128xf32>
    %c0_10 = arith.constant 0 : index
    %c0_11 = arith.constant 0 : index
    %15 = vector.load %arg4[%c0_10, %c0_11] : memref<2x128xf32, #tpu.memory_space<vmem>>, vector<2x128xf32>
    tpu.vector_store %arg4[%c0_10, %c0_11], %14 {strides = array<i32>} : memref<2x128xf32, #tpu.memory_space<vmem>>, vector<2x128xf32>,
    return
  }
  func.func @transform_0(%arg0: i32) -> (i32, i32) {
    %c0_i32 = arith.constant 0 : i32
    %c0_i32_0 = arith.constant 0 : i32
    return %arg0, %c0_i32 : i32, i32
  }
  func.func @transform_1(%arg0: i32) -> (i32, i32) {
    %c0_i32 = arith.constant 0 : i32
    %c0_i32_0 = arith.constant 0 : i32
    %c0_i32_1 = arith.constant 0 : i32
    return %c0_i32, %c0_i32_0 : i32, i32
  }
  func.func @transform_2(%arg0: i32) -> (i32, i32) {
    %c0_i32 = arith.constant 0 : i32
    %c0_i32_0 = arith.constant 0 : i32
    return %arg0, %c0_i32 : i32, i32
  }
  func.func @transform_3(%arg0: i32) -> (i32, i32) {
    %c0_i32 = arith.constant 0 : i32
    %c0_i32_0 = arith.constant 0 : i32
    %c0_i32_1 = arith.constant 0 : i32
    return %c0_i32, %c0_i32_0 : i32, i32
  }
}

module attributes {stable_mosaic.version = 11 : i64} {
  func.func @_yolo_kernel(%arg0: i32, %arg1: memref<1x7x768xf32, #tpu.memory_space<vmem>>, %arg2: memref<4x768xf32, #tpu.memory_space<vmem>>, %arg3: memref<1x7x768xf32, #tpu.memory_space<vmem>>) attributes {dimension_semantics = [#tpu.dimension_semantics<parallel>], iteration_bounds = array<i64: 2>, scalar_prefetch = 0 : i64, scratch_operands = 0 : i64, tpu.core_type = #tpu.core_type<tc>, window_params = [{transform_indices = @transform_0, window_bounds = array<i64: 1, 7, 768>}, {pipeline_mode = #tpu.pipeline_mode<synchronous>, transform_indices = @transform_1, window_bounds = array<i64: 4, 768>}, {transform_indices = @transform_2, window_bounds = array<i64: 1, 7, 768>}]} {
    %c0 = arith.constant 0 : index
    %c0_0 = arith.constant 0 : index
    %c0_1 = arith.constant 0 : index
    %0 = vector.load %arg1[%c0, %c0_0, %c0_1] : memref<1x7x768xf32, #tpu.memory_space<vmem>>, vector<1x7x768xf32>
    %1 = vector.shape_cast %0 : vector<1x7x768xf32> to vector<7x768xf32>
    %c0_2 = arith.constant 0 : index
    %c0_3 = arith.constant 0 : index
    %2 = vector.load %arg2[%c0_2, %c0_3] : memref<4x768xf32, #tpu.memory_space<vmem>>, vector<4x768xf32>
    %3 = vector.extract_strided_slice %1 {offsets = [0, 0], sizes = [2, 768], strides = [1, 1]} : vector<7x768xf32> to vector<2x768xf32>
    %4 = arith.negf %3 : vector<2x768xf32>
    %5 = math.exp %4 : vector<2x768xf32>
    %cst = arith.constant 1.000000e+00 : f32
    %6 = vector.broadcast %cst : f32 to vector<2x768xf32>
    %7 = arith.addf %6, %5 : vector<2x768xf32>
    %8 = arith.divf %6, %7 : vector<2x768xf32>
    %9 = vector.extract_strided_slice %2 {offsets = [0, 0], sizes = [2, 768], strides = [1, 1]} : vector<4x768xf32> to vector<2x768xf32>
    %10 = arith.addf %8, %9 : vector<2x768xf32>
    %cst_4 = arith.constant 1.000000e+00 : f32
    %11 = vector.broadcast %cst_4 : f32 to vector<2x768xf32>
    %12 = arith.mulf %10, %11 : vector<2x768xf32>
    %c0_5 = arith.constant 0 : index
    %c0_6 = arith.constant 0 : index
    %c0_7 = arith.constant 0 : index
    %13 = vector.load %arg3[%c0_5, %c0_6, %c0_7] : memref<1x7x768xf32, #tpu.memory_space<vmem>>, vector<1x2x768xf32>
    %14 = vector.shape_cast %13 : vector<1x2x768xf32> to vector<2x768xf32>
    %15 = vector.shape_cast %12 : vector<2x768xf32> to vector<1x2x768xf32>
    tpu.vector_store %arg3[%c0_5, %c0_6, %c0_7], %15 {strides = array<i32>} : memref<1x7x768xf32, #tpu.memory_space<vmem>>, vector<1x2x768xf32>,
    %16 = vector.extract_strided_slice %1 {offsets = [2, 0], sizes = [2, 768], strides = [1, 1]} : vector<7x768xf32> to vector<2x768xf32>
    %17 = math.exp %16 : vector<2x768xf32>
    %18 = vector.extract_strided_slice %2 {offsets = [2, 0], sizes = [2, 768], strides = [1, 1]} : vector<4x768xf32> to vector<2x768xf32>
    %cst_8 = arith.constant 1.000000e+00 : f32
    %19 = vector.broadcast %cst_8 : f32 to vector<2x768xf32>
    %20 = arith.mulf %18, %19 : vector<2x768xf32>
    %21 = arith.mulf %17, %20 : vector<2x768xf32>
    %c0_9 = arith.constant 0 : index
    %c2 = arith.constant 2 : index
    %c0_10 = arith.constant 0 : index
    %22 = vector.load %arg3[%c0_9, %c2, %c0_10] : memref<1x7x768xf32, #tpu.memory_space<vmem>>, vector<1x2x768xf32>
    %23 = vector.shape_cast %22 : vector<1x2x768xf32> to vector<2x768xf32>
    %24 = vector.shape_cast %21 : vector<2x768xf32> to vector<1x2x768xf32>
    tpu.vector_store %arg3[%c0_9, %c2, %c0_10], %24 {strides = array<i32>} : memref<1x7x768xf32, #tpu.memory_space<vmem>>, vector<1x2x768xf32>,
    %25 = vector.extract_strided_slice %1 {offsets = [4, 0], sizes = [3, 768], strides = [1, 1]} : vector<7x768xf32> to vector<3x768xf32>
    %26 = arith.negf %25 : vector<3x768xf32>
    %27 = math.exp %26 : vector<3x768xf32>
    %cst_11 = arith.constant 1.000000e+00 : f32
    %28 = vector.broadcast %cst_11 : f32 to vector<3x768xf32>
    %29 = arith.addf %28, %27 : vector<3x768xf32>
    %30 = arith.divf %28, %29 : vector<3x768xf32>
    %c0_12 = arith.constant 0 : index
    %c4 = arith.constant 4 : index
    %c0_13 = arith.constant 0 : index
    %31 = vector.load %arg3[%c0_12, %c4, %c0_13] : memref<1x7x768xf32, #tpu.memory_space<vmem>>, vector<1x3x768xf32>
    %32 = vector.shape_cast %31 : vector<1x3x768xf32> to vector<3x768xf32>
    %33 = vector.shape_cast %30 : vector<3x768xf32> to vector<1x3x768xf32>
    tpu.vector_store %arg3[%c0_12, %c4, %c0_13], %33 {strides = array<i32>} : memref<1x7x768xf32, #tpu.memory_space<vmem>>, vector<1x3x768xf32>,
    return
  }
  func.func @transform_0(%arg0: i32) -> (i32, i32, i32) {
    %c0_i32 = arith.constant 0 : i32
    %c0_i32_0 = arith.constant 0 : i32
    %c0_i32_1 = arith.constant 0 : i32
    return %arg0, %c0_i32, %c0_i32_0 : i32, i32, i32
  }
  func.func @transform_1(%arg0: i32) -> (i32, i32) {
    %c0_i32 = arith.constant 0 : i32
    %c0_i32_0 = arith.constant 0 : i32
    %c0_i32_1 = arith.constant 0 : i32
    return %c0_i32, %c0_i32_0 : i32, i32
  }
  func.func @transform_2(%arg0: i32) -> (i32, i32, i32) {
    %c0_i32 = arith.constant 0 : i32
    %c0_i32_0 = arith.constant 0 : i32
    %c0_i32_1 = arith.constant 0 : i32
    return %arg0, %c0_i32, %c0_i32_0 : i32, i32, i32
  }
}

</mosaic_0001>

<llo_original>
// kernel: tile.18
$region0: #{tile.18}
  #allocation2 [shape = 's32[1]{0}', space=sflag, size = 0x4, scoped, tag = 'scoped memory for tile.18']
  %s0 = inlined_call_operand.hbm [shape: f32[3], index: 0, kind: input, shape index: {}]
  %s1 = inlined_call_operand.vmem [shape: f32[64,3], index: 1, kind: output, shape index: {}]
  $region1: #{tile.18} parent=0
    #allocation0 [shape = 'u8[512]{0}', space=vmem, size = 0x400, scoped, tag = 'operand span for operand 0']
    #allocation1 [shape = 's32[1]{0}', space=sflag, size = 0x4, scoped, tag = 'scoped memory for tile.18']
    %2 = vsyncpa [#allocation1], 0
    // Predicated region
    $region2: #{tile.18} parent=1 // pred_check
      _
    $region3: #{tile.18} parent=1 // pred_check_branch
      %4 = sbr.rel (0) target = $region5
    $region4: #{tile.18} parent=1 // pred_region
      %s6 = ssub.s32 16, 16
      %7 = vsyncadd [#allocation1], %s6
      %s9 = sshll.u32 [#allocation0], 4
      %s10 = int_to_ptr.vmem [resolvable:$true] %s9
      %12 = dma.hbm_to_vmem [thread:$0]  %s0, 16, %s10, [#allocation1]
    $region5: #{tile.18} parent=1 // pred_fallthru
      _
    // Predicated region
    $region6: #{tile.18} parent=1 // pred_check
      _
    $region7: #{tile.18} parent=1 // pred_check_branch
      %14 = sbr.rel (0) target = $region9
    $region8: #{tile.18} parent=1 // pred_region
      %15 = dma.done [#allocation1], 16
    $region9: #{tile.18} parent=1 // pred_fallthru
      _
    %v16 = vld [vmem:[#allocation0] ss:$0 sm:$0xff]
    %17 = vst [vmem:[%s1] sm:$0xff] %v16
    %s18 = scalar_lea.vmem %s1, 8
    %19 = vst [vmem:[%s18] sm:$0xff] %v16
    %s20 = scalar_lea.vmem %s1, 16
    %21 = vst [vmem:[%s20] sm:$0xff] %v16
    %s22 = scalar_lea.vmem %s1, 24
    %23 = vst [vmem:[%s22] sm:$0xff] %v16
    %s24 = scalar_lea.vmem %s1, 32
    %25 = vst [vmem:[%s24] sm:$0xff] %v16
    %s26 = scalar_lea.vmem %s1, 40
    %27 = vst [vmem:[%s26] sm:$0xff] %v16
    %s28 = scalar_lea.vmem %s1, 48
    %29 = vst [vmem:[%s28] sm:$0xff] %v16
    %s30 = scalar_lea.vmem %s1, 56
    %31 = vst [vmem:[%s30] sm:$0xff] %v16
    %32 = vsyncpa [#allocation1], 1

// kernel: tile.26
$region0: #{tile.26}
  #allocation2 [shape = 's32[1]{0}', space=sflag, size = 0x4, scoped, tag = 'scoped memory for tile.26']
  %s0 = inlined_call_operand.hbm [shape: f32[3], index: 0, kind: input, shape index: {}]
  %s1 = inlined_call_operand.vmem [shape: f32[256,3], index: 1, kind: output, shape index: {}]
  $region1: #{tile.26} parent=0
    #allocation0 [shape = 'u8[512]{0}', space=vmem, size = 0x400, scoped, tag = 'operand span for operand 0']
    #allocation1 [shape = 's32[1]{0}', space=sflag, size = 0x4, scoped, tag = 'scoped memory for tile.26']
    %2 = vsyncpa [#allocation1], 0
    // Predicated region
    $region2: #{tile.26} parent=1 // pred_check
      _
    $region3: #{tile.26} parent=1 // pred_check_branch
      %4 = sbr.rel (0) target = $region5
    $region4: #{tile.26} parent=1 // pred_region
      %s6 = ssub.s32 16, 16
      %7 = vsyncadd [#allocation1], %s6
      %s9 = sshll.u32 [#allocation0], 4
      %s10 = int_to_ptr.vmem [resolvable:$true] %s9
      %12 = dma.hbm_to_vmem [thread:$0]  %s0, 16, %s10, [#allocation1]
    $region5: #{tile.26} parent=1 // pred_fallthru
      _
    // Predicated region
    $region6: #{tile.26} parent=1 // pred_check
      _
    $region7: #{tile.26} parent=1 // pred_check_branch
      %14 = sbr.rel (0) target = $region9
    $region8: #{tile.26} parent=1 // pred_region
      %15 = dma.done [#allocation1], 16
    $region9: #{tile.26} parent=1 // pred_fallthru
      _
    %v16 = vld [vmem:[#allocation0] ss:$0 sm:$0xff]
    %17 = vst [vmem:[%s1] sm:$0xff] %v16
    %s18 = scalar_lea.vmem %s1, 8
    %19 = vst [vmem:[%s18] sm:$0xff] %v16
    %s20 = scalar_lea.vmem %s1, 16
    %21 = vst [vmem:[%s20] sm:$0xff] %v16
    %s22 = scalar_lea.vmem %s1, 24
    %23 = vst [vmem:[%s22] sm:$0xff] %v16
    %s24 = scalar_lea.vmem %s1, 32
    %25 = vst [vmem:[%s24] sm:$0xff] %v16
    %s26 = scalar_lea.vmem %s1, 40
    %27 = vst [vmem:[%s26] sm:$0xff] %v16
    %s28 = scalar_lea.vmem %s1, 48
    %29 = vst [vmem:[%s28] sm:$0xff] %v16
    %s30 = scalar_lea.vmem %s1, 56
    %31 = vst [vmem:[%s30] sm:$0xff] %v16
    %s32 = scalar_lea.vmem %s1, 64
    %33 = vst [vmem:[%s32] sm:$0xff] %v16
    %s34 = scalar_lea.vmem %s1, 72
    %35 = vst [vmem:[%s34] sm:$0xff] %v16
    %s36 = scalar_lea.vmem %s1, 80
    %37 = vst [vmem:[%s36] sm:$0xff] %v16
    %s38 = scalar_lea.vmem %s1, 88
    %39 = vst [vmem:[%s38] sm:$0xff] %v16
    %s40 = scalar_lea.vmem %s1, 96
    %41 = vst [vmem:[%s40] sm:$0xff] %v16
    %s42 = scalar_lea.vmem %s1, 104
    %43 = vst [vmem:[%s42] sm:$0xff] %v16
    %s44 = scalar_lea.vmem %s1, 112
    %45 = vst [vmem:[%s44] sm:$0xff] %v16
    %s46 = scalar_lea.vmem %s1, 120
    %47 = vst [vmem:[%s46] sm:$0xff] %v16
    %s48 = scalar_lea.vmem %s1, 128
    %49 = vst [vmem:[%s48] sm:$0xff] %v16
    %s50 = scalar_lea.vmem %s1, 136
    %51 = vst [vmem:[%s50] sm:$0xff] %v16
    %s52 = scalar_lea.vmem %s1, 144
    %53 = vst [vmem:[%s52] sm:$0xff] %v16
    %s54 = scalar_lea.vmem %s1, 152
    %55 = vst [vmem:[%s54] sm:$0xff] %v16
    %s56 = scalar_lea.vmem %s1, 160
    %57 = vst [vmem:[%s56] sm:$0xff] %v16
    %s58 = scalar_lea.vmem %s1, 168
    %59 = vst [vmem:[%s58] sm:$0xff] %v16
    %s60 = scalar_lea.vmem %s1, 176
    %61 = vst [vmem:[%s60] sm:$0xff] %v16
    %s62 = scalar_lea.vmem %s1, 184
    %63 = vst [vmem:[%s62] sm:$0xff] %v16
    %s64 = scalar_lea.vmem %s1, 192
    %65 = vst [vmem:[%s64] sm:$0xff] %v16
    %s66 = scalar_lea.vmem %s1, 200
    %67 = vst [vmem:[%s66] sm:$0xff] %v16
    %s68 = scalar_lea.vmem %s1, 208
    %69 = vst [vmem:[%s68] sm:$0xff] %v16
    %s70 = scalar_lea.vmem %s1, 216
    %71 = vst [vmem:[%s70] sm:$0xff] %v16
    %s72 = scalar_lea.vmem %s1, 224
    %73 = vst [vmem:[%s72] sm:$0xff] %v16
    %s74 = scalar_lea.vmem %s1, 232
    %75 = vst [vmem:[%s74] sm:$0xff] %v16
    %s76 = scalar_lea.vmem %s1, 240
    %77 = vst [vmem:[%s76] sm:$0xff] %v16
    %s78 = scalar_lea.vmem %s1, 248
    %79 = vst [vmem:[%s78] sm:$0xff] %v16
    %80 = vsyncpa [#allocation1], 1

// kernel: tile.29
$region0: #{tile.29}
  #allocation0 [shape = 's32[1]{0}', space=sflag, size = 0x4, scoped, tag = 'scoped memory for tile.29']
  %s0 = inlined_call_operand.vmem [shape: f32[3], index: 0, kind: input, shape index: {}]
  %s1 = inlined_call_operand.vmem [shape: f32[256,3], index: 1, kind: output, shape index: {}]
  // Predicated region
  $region2: #{tile.29} parent=0 // pred_check
    _
  $region3: #{tile.29} parent=0 // pred_check_branch
    %3 = sbr.rel (0) target = $region5
  $region4: #{tile.29} parent=0 // pred_region
    _
  $region5: #{tile.29} parent=0 // pred_fallthru
    _
  %v4 = vld [vmem:[%s0] ss:$0 sm:$0xff]
  %5 = vst [vmem:[%s1] sm:$0xff] %v4
  %s6 = scalar_lea.vmem %s1, 8
  %7 = vst [vmem:[%s6] sm:$0xff] %v4
  %s8 = scalar_lea.vmem %s1, 16
  %9 = vst [vmem:[%s8] sm:$0xff] %v4
  %s10 = scalar_lea.vmem %s1, 24
  %11 = vst [vmem:[%s10] sm:$0xff] %v4
  %s12 = scalar_lea.vmem %s1, 32
  %13 = vst [vmem:[%s12] sm:$0xff] %v4
  %s14 = scalar_lea.vmem %s1, 40
  %15 = vst [vmem:[%s14] sm:$0xff] %v4
  %s16 = scalar_lea.vmem %s1, 48
  %17 = vst [vmem:[%s16] sm:$0xff] %v4
  %s18 = scalar_lea.vmem %s1, 56
  %19 = vst [vmem:[%s18] sm:$0xff] %v4
  %s20 = scalar_lea.vmem %s1, 64
  %21 = vst [vmem:[%s20] sm:$0xff] %v4
  %s22 = scalar_lea.vmem %s1, 72
  %23 = vst [vmem:[%s22] sm:$0xff] %v4
  %s24 = scalar_lea.vmem %s1, 80
  %25 = vst [vmem:[%s24] sm:$0xff] %v4
  %s26 = scalar_lea.vmem %s1, 88
  %27 = vst [vmem:[%s26] sm:$0xff] %v4
  %s28 = scalar_lea.vmem %s1, 96
  %29 = vst [vmem:[%s28] sm:$0xff] %v4
  %s30 = scalar_lea.vmem %s1, 104
  %31 = vst [vmem:[%s30] sm:$0xff] %v4
  %s32 = scalar_lea.vmem %s1, 112
  %33 = vst [vmem:[%s32] sm:$0xff] %v4
  %s34 = scalar_lea.vmem %s1, 120
  %35 = vst [vmem:[%s34] sm:$0xff] %v4
  %s36 = scalar_lea.vmem %s1, 128
  %37 = vst [vmem:[%s36] sm:$0xff] %v4
  %s38 = scalar_lea.vmem %s1, 136
  %39 = vst [vmem:[%s38] sm:$0xff] %v4
  %s40 = scalar_lea.vmem %s1, 144
  %41 = vst [vmem:[%s40] sm:$0xff] %v4
  %s42 = scalar_lea.vmem %s1, 152
  %43 = vst [vmem:[%s42] sm:$0xff] %v4
  %s44 = scalar_lea.vmem %s1, 160
  %45 = vst [vmem:[%s44] sm:$0xff] %v4
  %s46 = scalar_lea.vmem %s1, 168
  %47 = vst [vmem:[%s46] sm:$0xff] %v4
  %s48 = scalar_lea.vmem %s1, 176
  %49 = vst [vmem:[%s48] sm:$0xff] %v4
  %s50 = scalar_lea.vmem %s1, 184
  %51 = vst [vmem:[%s50] sm:$0xff] %v4
  %s52 = scalar_lea.vmem %s1, 192
  %53 = vst [vmem:[%s52] sm:$0xff] %v4
  %s54 = scalar_lea.vmem %s1, 200
  %55 = vst [vmem:[%s54] sm:$0xff] %v4
  %s56 = scalar_lea.vmem %s1, 208
  %57 = vst [vmem:[%s56] sm:$0xff] %v4
  %s58 = scalar_lea.vmem %s1, 216
  %59 = vst [vmem:[%s58] sm:$0xff] %v4
  %s60 = scalar_lea.vmem %s1, 224
  %61 = vst [vmem:[%s60] sm:$0xff] %v4
  %s62 = scalar_lea.vmem %s1, 232
  %63 = vst [vmem:[%s62] sm:$0xff] %v4
  %s64 = scalar_lea.vmem %s1, 240
  %65 = vst [vmem:[%s64] sm:$0xff] %v4
  %s66 = scalar_lea.vmem %s1, 248
  %67 = vst [vmem:[%s66] sm:$0xff] %v4

// kernel: _lambda_.14
$region0: #{_lambda_.14}
  #allocation0 [shape = 'u32[]', space=smem, size = 0x4, offset = 0x4, fixed_abs, tag = 'smem constant byte address 0x4 - core index']
  #allocation1 [shape = 'u32[144,128]{1,0:T(1,128)}', space=vmem, size = 0x12000, scoped, tag = 'internal scratch']
  %s0 = inlined_call_operand.vmem [shape: f32[512,128], index: 0, kind: input, shape index: {}]
  %s1 = inlined_call_operand.vmem [shape: f32[1,128], index: 1, kind: input, shape index: {}]
  %s2 = inlined_call_operand.vmem [shape: f32[1,128], index: 2, kind: input, shape index: {}]
  %s3 = inlined_call_operand.vmem [shape: f32[512,128], index: 3, kind: output, shape index: {}]
  %s4 = sld [smem:[#allocation0]]
  $region22: #{_lambda_.14} parent=0
    _
  %s6 = ssub.s32 1, %s4
  %s7 = scalar_select 0, %s6, %s4
  // Predicated region
  $region2: #{_lambda_.14} parent=0 // pred_check
    _
  $region3: #{_lambda_.14} parent=0 // pred_check_branch
    %9 = sbr.rel (0) target = $region5
  $region4: #{_lambda_.14} parent=0 // pred_region
    _
  $region5: #{_lambda_.14} parent=0 // pred_fallthru
    _
  // Predicated region
  $region6: #{_lambda_.14} parent=0 // pred_check
    _
  $region7: #{_lambda_.14} parent=0 // pred_check_branch
    %11 = sbr.rel (0) target = $region9
  $region8: #{_lambda_.14} parent=0 // pred_region
    _
  $region9: #{_lambda_.14} parent=0 // pred_fallthru
    _
  // Predicated region
  $region10: #{_lambda_.14} parent=0 // pred_check
    _
  $region11: #{_lambda_.14} parent=0 // pred_check_branch
    %13 = sbr.rel (0) target = $region13
  $region12: #{_lambda_.14} parent=0 // pred_region
    _
  $region13: #{_lambda_.14} parent=0 // pred_fallthru
    _
  %v14 = vld [vmem:[%s0] sm:$0xff]
  %v15 = vld [vmem:[%s0 + $0x8] sm:$0xff]
  %v16 = vld [vmem:[%s0 + $0x10] sm:$0xff]
  %v17 = vld [vmem:[%s0 + $0x18] sm:$0xff]
  %v18 = vld [vmem:[%s0 + $0x20] sm:$0xff]
  %v19 = vld [vmem:[%s0 + $0x28] sm:$0xff]
  %v20 = vld [vmem:[%s0 + $0x30] sm:$0xff]
  %v21 = vld [vmem:[%s0 + $0x38] sm:$0xff]
  %v22 = vld [vmem:[%s0 + $0x40] sm:$0xff]
  %v23 = vld [vmem:[%s0 + $0x48] sm:$0xff]
  %v24 = vld [vmem:[%s0 + $0x50] sm:$0xff]
  %v25 = vld [vmem:[%s0 + $0x58] sm:$0xff]
  %v26 = vld [vmem:[%s0 + $0x60] sm:$0xff]
  %v27 = vld [vmem:[%s0 + $0x68] sm:$0xff]
  %v28 = vld [vmem:[%s0 + $0x70] sm:$0xff]
  %v29 = vld [vmem:[%s0 + $0x78] sm:$0xff]
  %v30 = vld [vmem:[%s0 + $0x80] sm:$0xff]
  %v31 = vld [vmem:[%s0 + $0x88] sm:$0xff]
  %v32 = vld [vmem:[%s0 + $0x90] sm:$0xff]
  %v33 = vld [vmem:[%s0 + $0x98] sm:$0xff]
  %v34 = vld [vmem:[%s0 + $0xa0] sm:$0xff]
  %v35 = vld [vmem:[%s0 + $0xa8] sm:$0xff]
  %v36 = vld [vmem:[%s0 + $0xb0] sm:$0xff]
  %v37 = vld [vmem:[%s0 + $0xb8] sm:$0xff]
  %v38 = vld [vmem:[%s0 + $0xc0] sm:$0xff]
  %v39 = vld [vmem:[%s0 + $0xc8] sm:$0xff]
  %v40 = vld [vmem:[%s0 + $0xd0] sm:$0xff]
  %v41 = vld [vmem:[%s0 + $0xd8] sm:$0xff]
  %v42 = vld [vmem:[%s0 + $0xe0] sm:$0xff]
  %v43 = vld [vmem:[%s0 + $0xe8] sm:$0xff]
  %v44 = vld [vmem:[%s0 + $0xf0] sm:$0xff]
  %v45 = vld [vmem:[%s0 + $0xf8] sm:$0xff]
  %v46 = vld [vmem:[%s0 + $0x100] sm:$0xff]
  %v47 = vld [vmem:[%s0 + $0x108] sm:$0xff]
  %v48 = vld [vmem:[%s0 + $0x110] sm:$0xff]
  %v49 = vld [vmem:[%s0 + $0x118] sm:$0xff]
  %v50 = vld [vmem:[%s0 + $0x120] sm:$0xff]
  %v51 = vld [vmem:[%s0 + $0x128] sm:$0xff]
  %v52 = vld [vmem:[%s0 + $0x130] sm:$0xff]
  %v53 = vld [vmem:[%s0 + $0x138] sm:$0xff]
  %v54 = vld [vmem:[%s0 + $0x140] sm:$0xff]
  %v55 = vld [vmem:[%s0 + $0x148] sm:$0xff]
  %v56 = vld [vmem:[%s0 + $0x150] sm:$0xff]
  %v57 = vld [vmem:[%s0 + $0x158] sm:$0xff]
  %v58 = vld [vmem:[%s0 + $0x160] sm:$0xff]
  %v59 = vld [vmem:[%s0 + $0x168] sm:$0xff]
  %v60 = vld [vmem:[%s0 + $0x170] sm:$0xff]
  %v61 = vld [vmem:[%s0 + $0x178] sm:$0xff]
  %v62 = vld [vmem:[%s0 + $0x180] sm:$0xff]
  %v63 = vld [vmem:[%s0 + $0x188] sm:$0xff]
  %v64 = vld [vmem:[%s0 + $0x190] sm:$0xff]
  %v65 = vld [vmem:[%s0 + $0x198] sm:$0xff]
  %v66 = vld [vmem:[%s0 + $0x1a0] sm:$0xff]
  %v67 = vld [vmem:[%s0 + $0x1a8] sm:$0xff]
  %v68 = vld [vmem:[%s0 + $0x1b0] sm:$0xff]
  %v69 = vld [vmem:[%s0 + $0x1b8] sm:$0xff]
  %v70 = vld [vmem:[%s0 + $0x1c0] sm:$0xff]
  %v71 = vld [vmem:[%s0 + $0x1c8] sm:$0xff]
  %v72 = vld [vmem:[%s0 + $0x1d0] sm:$0xff]
  %v73 = vld [vmem:[%s0 + $0x1d8] sm:$0xff]
  %v74 = vld [vmem:[%s0 + $0x1e0] sm:$0xff]
  %v75 = vld [vmem:[%s0 + $0x1e8] sm:$0xff]
  %v76 = vld [vmem:[%s0 + $0x1f0] sm:$0xff]
  %v77 = vld [vmem:[%s0 + $0x1f8] sm:$0xff]
  %v78 = vld [vmem:[%s1] sm:$0x1]
  %v80 = vlaneseq
  %v81 = vshrl.u32 %v80, 7
  %v82 = vsub.s32 0, %v81
  %v83 = vrot.slane %v78, %v82
  %v85 = vmul.f32 %v14, %v83
  %v86 = vmul.f32 %v15, %v83
  %v87 = vmul.f32 %v16, %v83
  %v88 = vmul.f32 %v17, %v83
  %v89 = vmul.f32 %v18, %v83
  %v90 = vmul.f32 %v19, %v83
  %v91 = vmul.f32 %v20, %v83
  %v92 = vmul.f32 %v21, %v83
  %v93 = vmul.f32 %v22, %v83
  %v94 = vmul.f32 %v23, %v83
  %v95 = vmul.f32 %v24, %v83
  %v96 = vmul.f32 %v25, %v83
  %v97 = vmul.f32 %v26, %v83
  %v98 = vmul.f32 %v27, %v83
  %v99 = vmul.f32 %v28, %v83
  %v100 = vmul.f32 %v29, %v83
  %v101 = vmul.f32 %v30, %v83
  %v102 = vmul.f32 %v31, %v83
  %v103 = vmul.f32 %v32, %v83
  %v104 = vmul.f32 %v33, %v83
  %v105 = vmul.f32 %v34, %v83
  %v106 = vmul.f32 %v35, %v83
  %v107 = vmul.f32 %v36, %v83
  %v108 = vmul.f32 %v37, %v83
  %v109 = vmul.f32 %v38, %v83
  %v110 = vmul.f32 %v39, %v83
  %v111 = vmul.f32 %v40, %v83
  %v112 = vmul.f32 %v41, %v83
  %v113 = vmul.f32 %v42, %v83
  %v114 = vmul.f32 %v43, %v83
  %v115 = vmul.f32 %v44, %v83
  %v116 = vmul.f32 %v45, %v83
  %v117 = vmul.f32 %v46, %v83
  %v118 = vmul.f32 %v47, %v83
  %v119 = vmul.f32 %v48, %v83
  %v120 = vmul.f32 %v49, %v83
  %v121 = vmul.f32 %v50, %v83
  %v122 = vmul.f32 %v51, %v83
  %v123 = vmul.f32 %v52, %v83
  %v124 = vmul.f32 %v53, %v83
  %v125 = vmul.f32 %v54, %v83
  %v126 = vmul.f32 %v55, %v83
  %v127 = vmul.f32 %v56, %v83
  %v128 = vmul.f32 %v57, %v83
  %v129 = vmul.f32 %v58, %v83
  %v130 = vmul.f32 %v59, %v83
  %v131 = vmul.f32 %v60, %v83
  %v132 = vmul.f32 %v61, %v83
  %v133 = vmul.f32 %v62, %v83
  %v134 = vmul.f32 %v63, %v83
  %v135 = vmul.f32 %v64, %v83
  %v136 = vmul.f32 %v65, %v83
  %v137 = vmul.f32 %v66, %v83
  %v138 = vmul.f32 %v67, %v83
  %v139 = vmul.f32 %v68, %v83
  %v140 = vmul.f32 %v69, %v83
  %v141 = vmul.f32 %v70, %v83
  %v142 = vmul.f32 %v71, %v83
  %v143 = vmul.f32 %v72, %v83
  %v144 = vmul.f32 %v73, %v83
  %v145 = vmul.f32 %v74, %v83
  %v146 = vmul.f32 %v75, %v83
  %v147 = vmul.f32 %v76, %v83
  %v148 = vmul.f32 %v77, %v83
  %v149 = vld [vmem:[%s2] sm:$0x1]
  %v151 = vlaneseq
  %v152 = vshrl.u32 %v151, 7
  %v153 = vsub.s32 0, %v152
  %v154 = vrot.slane %v149, %v153
  %v156 = vadd.f32 %v85, %v154
  %v157 = vadd.f32 %v86, %v154
  %v158 = vadd.f32 %v87, %v154
  %v159 = vadd.f32 %v88, %v154
  %v160 = vadd.f32 %v89, %v154
  %v161 = vadd.f32 %v90, %v154
  %v162 = vadd.f32 %v91, %v154
  %v163 = vadd.f32 %v92, %v154
  %v164 = vadd.f32 %v93, %v154
  %v165 = vadd.f32 %v94, %v154
  %v166 = vadd.f32 %v95, %v154
  %v167 = vadd.f32 %v96, %v154
  %v168 = vadd.f32 %v97, %v154
  %v169 = vadd.f32 %v98, %v154
  %v170 = vadd.f32 %v99, %v154
  %v171 = vadd.f32 %v100, %v154
  %v172 = vadd.f32 %v101, %v154
  %v173 = vadd.f32 %v102, %v154
  %v174 = vadd.f32 %v103, %v154
  %v175 = vadd.f32 %v104, %v154
  %v176 = vadd.f32 %v105, %v154
  %v177 = vadd.f32 %v106, %v154
  %v178 = vadd.f32 %v107, %v154
  %v179 = vadd.f32 %v108, %v154
  %v180 = vadd.f32 %v109, %v154
  %v181 = vadd.f32 %v110, %v154
  %v182 = vadd.f32 %v111, %v154
  %v183 = vadd.f32 %v112, %v154
  %v184 = vadd.f32 %v113, %v154
  %v185 = vadd.f32 %v114, %v154
  %v186 = vadd.f32 %v115, %v154
  %v187 = vadd.f32 %v116, %v154
  %v188 = vadd.f32 %v117, %v154
  %v189 = vadd.f32 %v118, %v154
  %v190 = vadd.f32 %v119, %v154
  %v191 = vadd.f32 %v120, %v154
  %v192 = vadd.f32 %v121, %v154
  %v193 = vadd.f32 %v122, %v154
  %v194 = vadd.f32 %v123, %v154
  %v195 = vadd.f32 %v124, %v154
  %v196 = vadd.f32 %v125, %v154
  %v197 = vadd.f32 %v126, %v154
  %v198 = vadd.f32 %v127, %v154
  %v199 = vadd.f32 %v128, %v154
  %v200 = vadd.f32 %v129, %v154
  %v201 = vadd.f32 %v130, %v154
  %v202 = vadd.f32 %v131, %v154
  %v203 = vadd.f32 %v132, %v154
  %v204 = vadd.f32 %v133, %v154
  %v205 = vadd.f32 %v134, %v154
  %v206 = vadd.f32 %v135, %v154
  %v207 = vadd.f32 %v136, %v154
  %v208 = vadd.f32 %v137, %v154
  %v209 = vadd.f32 %v138, %v154
  %v210 = vadd.f32 %v139, %v154
  %v211 = vadd.f32 %v140, %v154
  %v212 = vadd.f32 %v141, %v154
  %v213 = vadd.f32 %v142, %v154
  %v214 = vadd.f32 %v143, %v154
  %v215 = vadd.f32 %v144, %v154
  %v216 = vadd.f32 %v145, %v154
  %v217 = vadd.f32 %v146, %v154
  %v218 = vadd.f32 %v147, %v154
  %v219 = vadd.f32 %v148, %v154
  %vm220 = vcmp.gt.f32.partialorder %v156, 0.0
  %vm221 = vcmp.gt.f32.partialorder %v157, 0.0
  %vm222 = vcmp.gt.f32.partialorder %v158, 0.0
  %vm223 = vcmp.gt.f32.partialorder %v159, 0.0
  %vm224 = vcmp.gt.f32.partialorder %v160, 0.0
  %vm225 = vcmp.gt.f32.partialorder %v161, 0.0
  %vm226 = vcmp.gt.f32.partialorder %v162, 0.0
  %vm227 = vcmp.gt.f32.partialorder %v163, 0.0
  %vm228 = vcmp.gt.f32.partialorder %v164, 0.0
  %vm229 = vcmp.gt.f32.partialorder %v165, 0.0
  %vm230 = vcmp.gt.f32.partialorder %v166, 0.0
  %vm231 = vcmp.gt.f32.partialorder %v167, 0.0
  %vm232 = vcmp.gt.f32.partialorder %v168, 0.0
  %vm233 = vcmp.gt.f32.partialorder %v169, 0.0
  %vm234 = vcmp.gt.f32.partialorder %v170, 0.0
  %vm235 = vcmp.gt.f32.partialorder %v171, 0.0
  %vm236 = vcmp.gt.f32.partialorder %v172, 0.0
  %vm237 = vcmp.gt.f32.partialorder %v173, 0.0
  %vm238 = vcmp.gt.f32.partialorder %v174, 0.0
  %vm239 = vcmp.gt.f32.partialorder %v175, 0.0
  %vm240 = vcmp.gt.f32.partialorder %v176, 0.0
  %vm241 = vcmp.gt.f32.partialorder %v177, 0.0
  %vm242 = vcmp.gt.f32.partialorder %v178, 0.0
  %vm243 = vcmp.gt.f32.partialorder %v179, 0.0
  %vm244 = vcmp.gt.f32.partialorder %v180, 0.0
  %vm245 = vcmp.gt.f32.partialorder %v181, 0.0
  %vm246 = vcmp.gt.f32.partialorder %v182, 0.0
  %vm247 = vcmp.gt.f32.partialorder %v183, 0.0
  %vm248 = vcmp.gt.f32.partialorder %v184, 0.0
  %vm249 = vcmp.gt.f32.partialorder %v185, 0.0
  %vm250 = vcmp.gt.f32.partialorder %v186, 0.0
  %vm251 = vcmp.gt.f32.partialorder %v187, 0.0
  %vm252 = vcmp.gt.f32.partialorder %v188, 0.0
  %vm253 = vcmp.gt.f32.partialorder %v189, 0.0
  %vm254 = vcmp.gt.f32.partialorder %v190, 0.0
  %vm255 = vcmp.gt.f32.partialorder %v191, 0.0
  %vm256 = vcmp.gt.f32.partialorder %v192, 0.0
  %vm257 = vcmp.gt.f32.partialorder %v193, 0.0
  %vm258 = vcmp.gt.f32.partialorder %v194, 0.0
  %vm259 = vcmp.gt.f32.partialorder %v195, 0.0
  %vm260 = vcmp.gt.f32.partialorder %v196, 0.0
  %vm261 = vcmp.gt.f32.partialorder %v197, 0.0
  %vm262 = vcmp.gt.f32.partialorder %v198, 0.0
  %vm263 = vcmp.gt.f32.partialorder %v199, 0.0
  %vm264 = vcmp.gt.f32.partialorder %v200, 0.0
  %vm265 = vcmp.gt.f32.partialorder %v201, 0.0
  %vm266 = vcmp.gt.f32.partialorder %v202, 0.0
  %vm267 = vcmp.gt.f32.partialorder %v203, 0.0
  %vm268 = vcmp.gt.f32.partialorder %v204, 0.0
  %vm269 = vcmp.gt.f32.partialorder %v205, 0.0
  %vm270 = vcmp.gt.f32.partialorder %v206, 0.0
  %vm271 = vcmp.gt.f32.partialorder %v207, 0.0
  %vm272 = vcmp.gt.f32.partialorder %v208, 0.0
  %vm273 = vcmp.gt.f32.partialorder %v209, 0.0
  %vm274 = vcmp.gt.f32.partialorder %v210, 0.0
  %vm275 = vcmp.gt.f32.partialorder %v211, 0.0
  %vm276 = vcmp.gt.f32.partialorder %v212, 0.0
  %vm277 = vcmp.gt.f32.partialorder %v213, 0.0
  %vm278 = vcmp.gt.f32.partialorder %v214, 0.0
  %vm279 = vcmp.gt.f32.partialorder %v215, 0.0
  %vm280 = vcmp.gt.f32.partialorder %v216, 0.0
  %vm281 = vcmp.gt.f32.partialorder %v217, 0.0
  %vm282 = vcmp.gt.f32.partialorder %v218, 0.0
  %vm283 = vcmp.gt.f32.partialorder %v219, 0.0
  %v284 = vmul.f32 %v156, 0.1
  %v285 = vmul.f32 %v157, 0.1
  %v286 = vmul.f32 %v158, 0.1
  %v287 = vmul.f32 %v159, 0.1
  %v288 = vmul.f32 %v160, 0.1
  %v289 = vmul.f32 %v161, 0.1
  %v290 = vmul.f32 %v162, 0.1
  %v291 = vmul.f32 %v163, 0.1
  %v292 = vmul.f32 %v164, 0.1
  %v293 = vmul.f32 %v165, 0.1
  %v294 = vmul.f32 %v166, 0.1
  %v295 = vmul.f32 %v167, 0.1
  %v296 = vmul.f32 %v168, 0.1
  %v297 = vmul.f32 %v169, 0.1
  %v298 = vmul.f32 %v170, 0.1
  %v299 = vmul.f32 %v171, 0.1
  %v300 = vmul.f32 %v172, 0.1
  %v301 = vmul.f32 %v173, 0.1
  %v302 = vmul.f32 %v174, 0.1
  %v303 = vmul.f32 %v175, 0.1
  %v304 = vmul.f32 %v176, 0.1
  %v305 = vmul.f32 %v177, 0.1
  %v306 = vmul.f32 %v178, 0.1
  %v307 = vmul.f32 %v179, 0.1
  %v308 = vmul.f32 %v180, 0.1
  %v309 = vmul.f32 %v181, 0.1
  %v310 = vmul.f32 %v182, 0.1
  %v311 = vmul.f32 %v183, 0.1
  %v312 = vmul.f32 %v184, 0.1
  %v313 = vmul.f32 %v185, 0.1
  %v314 = vmul.f32 %v186, 0.1
  %v315 = vmul.f32 %v187, 0.1
  %v316 = vmul.f32 %v188, 0.1
  %v317 = vmul.f32 %v189, 0.1
  %v318 = vmul.f32 %v190, 0.1
  %v319 = vmul.f32 %v191, 0.1
  %v320 = vmul.f32 %v192, 0.1
  %v321 = vmul.f32 %v193, 0.1
  %v322 = vmul.f32 %v194, 0.1
  %v323 = vmul.f32 %v195, 0.1
  %v324 = vmul.f32 %v196, 0.1
  %v325 = vmul.f32 %v197, 0.1
  %v326 = vmul.f32 %v198, 0.1
  %v327 = vmul.f32 %v199, 0.1
  %v328 = vmul.f32 %v200, 0.1
  %v329 = vmul.f32 %v201, 0.1
  %v330 = vmul.f32 %v202, 0.1
  %v331 = vmul.f32 %v203, 0.1
  %v332 = vmul.f32 %v204, 0.1
  %v333 = vmul.f32 %v205, 0.1
  %v334 = vmul.f32 %v206, 0.1
  %v335 = vmul.f32 %v207, 0.1
  %v336 = vmul.f32 %v208, 0.1
  %v337 = vmul.f32 %v209, 0.1
  %v338 = vmul.f32 %v210, 0.1
  %v339 = vmul.f32 %v211, 0.1
  %v340 = vmul.f32 %v212, 0.1
  %v341 = vmul.f32 %v213, 0.1
  %v342 = vmul.f32 %v214, 0.1
  %v343 = vmul.f32 %v215, 0.1
  %v344 = vmul.f32 %v216, 0.1
  %v345 = vmul.f32 %v217, 0.1
  %v346 = vmul.f32 %v218, 0.1
  %v347 = vmul.f32 %v219, 0.1
  %v348 = vsel %vm220, %v156, %v284
  %v349 = vsel %vm221, %v157, %v285
  %v350 = vsel %vm222, %v158, %v286
  %v351 = vsel %vm223, %v159, %v287
  %v352 = vsel %vm224, %v160, %v288
  %v353 = vsel %vm225, %v161, %v289
  %v354 = vsel %vm226, %v162, %v290
  %v355 = vsel %vm227, %v163, %v291
  %v356 = vsel %vm228, %v164, %v292
  %v357 = vsel %vm229, %v165, %v293
  %v358 = vsel %vm230, %v166, %v294
  %v359 = vsel %vm231, %v167, %v295
  %v360 = vsel %vm232, %v168, %v296
  %v361 = vsel %vm233, %v169, %v297
  %v362 = vsel %vm234, %v170, %v298
  %v363 = vsel %vm235, %v171, %v299
  %v364 = vsel %vm236, %v172, %v300
  %v365 = vsel %vm237, %v173, %v301
  %v366 = vsel %vm238, %v174, %v302
  %v367 = vsel %vm239, %v175, %v303
  %v368 = vsel %vm240, %v176, %v304
  %v369 = vsel %vm241, %v177, %v305
  %v370 = vsel %vm242, %v178, %v306
  %v371 = vsel %vm243, %v179, %v307
  %v372 = vsel %vm244, %v180, %v308
  %v373 = vsel %vm245, %v181, %v309
  %v374 = vsel %vm246, %v182, %v310
  %v375 = vsel %vm247, %v183, %v311
  %v376 = vsel %vm248, %v184, %v312
  %v377 = vsel %vm249, %v185, %v313
  %v378 = vsel %vm250, %v186, %v314
  %v379 = vsel %vm251, %v187, %v315
  %v380 = vsel %vm252, %v188, %v316
  %v381 = vsel %vm253, %v189, %v317
  %v382 = vsel %vm254, %v190, %v318
  %v383 = vsel %vm255, %v191, %v319
  %v384 = vsel %vm256, %v192, %v320
  %v385 = vsel %vm257, %v193, %v321
  %v386 = vsel %vm258, %v194, %v322
  %v387 = vsel %vm259, %v195, %v323
  %v388 = vsel %vm260, %v196, %v324
  %v389 = vsel %vm261, %v197, %v325
  %v390 = vsel %vm262, %v198, %v326
  %v391 = vsel %vm263, %v199, %v327
  %v392 = vsel %vm264, %v200, %v328
  %v393 = vsel %vm265, %v201, %v329
  %v394 = vsel %vm266, %v202, %v330
  %v395 = vsel %vm267, %v203, %v331
  %v396 = vsel %vm268, %v204, %v332
  %v397 = vsel %vm269, %v205, %v333
  %v398 = vsel %vm270, %v206, %v334
  %v399 = vsel %vm271, %v207, %v335
  %v400 = vsel %vm272, %v208, %v336
  %v401 = vsel %vm273, %v209, %v337
  %v402 = vsel %vm274, %v210, %v338
  %v403 = vsel %vm275, %v211, %v339
  %v404 = vsel %vm276, %v212, %v340
  %v405 = vsel %vm277, %v213, %v341
  %v406 = vsel %vm278, %v214, %v342
  %v407 = vsel %vm279, %v215, %v343
  %v408 = vsel %vm280, %v216, %v344
  %v409 = vsel %vm281, %v217, %v345
  %v410 = vsel %vm282, %v218, %v346
  %v411 = vsel %vm283, %v219, %v347
  %412 = vst [vmem:[%s3] sm:$0xff] %v348
  %413 = vst [vmem:[%s3 + $0x8] sm:$0xff] %v349
  %414 = vst [vmem:[%s3 + $0x10] sm:$0xff] %v350
  %415 = vst [vmem:[%s3 + $0x18] sm:$0xff] %v351
  %416 = vst [vmem:[%s3 + $0x20] sm:$0xff] %v352
  %417 = vst [vmem:[%s3 + $0x28] sm:$0xff] %v353
  %418 = vst [vmem:[%s3 + $0x30] sm:$0xff] %v354
  %419 = vst [vmem:[%s3 + $0x38] sm:$0xff] %v355
  %420 = vst [vmem:[%s3 + $0x40] sm:$0xff] %v356
  %421 = vst [vmem:[%s3 + $0x48] sm:$0xff] %v357
  %422 = vst [vmem:[%s3 + $0x50] sm:$0xff] %v358
  %423 = vst [vmem:[%s3 + $0x58] sm:$0xff] %v359
  %424 = vst [vmem:[%s3 + $0x60] sm:$0xff] %v360
  %425 = vst [vmem:[%s3 + $0x68] sm:$0xff] %v361
  %426 = vst [vmem:[%s3 + $0x70] sm:$0xff] %v362
  %427 = vst [vmem:[%s3 + $0x78] sm:$0xff] %v363
  %428 = vst [vmem:[%s3 + $0x80] sm:$0xff] %v364
  %429 = vst [vmem:[%s3 + $0x88] sm:$0xff] %v365
  %430 = vst [vmem:[%s3 + $0x90] sm:$0xff] %v366
  %431 = vst [vmem:[%s3 + $0x98] sm:$0xff] %v367
  %432 = vst [vmem:[%s3 + $0xa0] sm:$0xff] %v368
  %433 = vst [vmem:[%s3 + $0xa8] sm:$0xff] %v369
  %434 = vst [vmem:[%s3 + $0xb0] sm:$0xff] %v370
  %435 = vst [vmem:[%s3 + $0xb8] sm:$0xff] %v371
  %436 = vst [vmem:[%s3 + $0xc0] sm:$0xff] %v372
  %437 = vst [vmem:[%s3 + $0xc8] sm:$0xff] %v373
  %438 = vst [vmem:[%s3 + $0xd0] sm:$0xff] %v374
  %439 = vst [vmem:[%s3 + $0xd8] sm:$0xff] %v375
  %440 = vst [vmem:[%s3 + $0xe0] sm:$0xff] %v376
  %441 = vst [vmem:[%s3 + $0xe8] sm:$0xff] %v377
  %442 = vst [vmem:[%s3 + $0xf0] sm:$0xff] %v378
  %443 = vst [vmem:[%s3 + $0xf8] sm:$0xff] %v379
  %444 = vst [vmem:[%s3 + $0x100] sm:$0xff] %v380
  %445 = vst [vmem:[%s3 + $0x108] sm:$0xff] %v381
  %446 = vst [vmem:[%s3 + $0x110] sm:$0xff] %v382
  %447 = vst [vmem:[%s3 + $0x118] sm:$0xff] %v383
  %448 = vst [vmem:[%s3 + $0x120] sm:$0xff] %v384
  %449 = vst [vmem:[%s3 + $0x128] sm:$0xff] %v385
  %450 = vst [vmem:[%s3 + $0x130] sm:$0xff] %v386
  %451 = vst [vmem:[%s3 + $0x138] sm:$0xff] %v387
  %452 = vst [vmem:[%s3 + $0x140] sm:$0xff] %v388
  %453 = vst [vmem:[%s3 + $0x148] sm:$0xff] %v389
  %454 = vst [vmem:[%s3 + $0x150] sm:$0xff] %v390
  %455 = vst [vmem:[%s3 + $0x158] sm:$0xff] %v391
  %456 = vst [vmem:[%s3 + $0x160] sm:$0xff] %v392
  %457 = vst [vmem:[%s3 + $0x168] sm:$0xff] %v393
  %458 = vst [vmem:[%s3 + $0x170] sm:$0xff] %v394
  %459 = vst [vmem:[%s3 + $0x178] sm:$0xff] %v395
  %460 = vst [vmem:[%s3 + $0x180] sm:$0xff] %v396
  %461 = vst [vmem:[%s3 + $0x188] sm:$0xff] %v397
  %462 = vst [vmem:[%s3 + $0x190] sm:$0xff] %v398
  %463 = vst [vmem:[%s3 + $0x198] sm:$0xff] %v399
  %464 = vst [vmem:[%s3 + $0x1a0] sm:$0xff] %v400
  %465 = vst [vmem:[%s3 + $0x1a8] sm:$0xff] %v401
  %466 = vst [vmem:[%s3 + $0x1b0] sm:$0xff] %v402
  %467 = vst [vmem:[%s3 + $0x1b8] sm:$0xff] %v403
  %468 = vst [vmem:[%s3 + $0x1c0] sm:$0xff] %v404
  %469 = vst [vmem:[%s3 + $0x1c8] sm:$0xff] %v405
  %470 = vst [vmem:[%s3 + $0x1d0] sm:$0xff] %v406
  %471 = vst [vmem:[%s3 + $0x1d8] sm:$0xff] %v407
  %472 = vst [vmem:[%s3 + $0x1e0] sm:$0xff] %v408
  %473 = vst [vmem:[%s3 + $0x1e8] sm:$0xff] %v409
  %474 = vst [vmem:[%s3 + $0x1f0] sm:$0xff] %v410
  %475 = vst [vmem:[%s3 + $0x1f8] sm:$0xff] %v411
  // Predicated region
  $region14: #{_lambda_.14} parent=0 // pred_check
    _
  $region15: #{_lambda_.14} parent=0 // pred_check_branch
    %477 = sbr.rel (0) target = $region17
  $region16: #{_lambda_.14} parent=0 // pred_region
    _
  $region17: #{_lambda_.14} parent=0 // pred_fallthru
    _
  // Predicated region
  $region18: #{_lambda_.14} parent=0 // pred_check
    _
  $region19: #{_lambda_.14} parent=0 // pred_check_branch
    %479 = sbr.rel (0) target = $region21
  $region20: #{_lambda_.14} parent=0 // pred_region
    _
  $region21: #{_lambda_.14} parent=0 // pred_fallthru
    _

// kernel: _lambda_.13
$region0: #{_lambda_.13}
  #allocation0 [shape = 'u32[]', space=smem, size = 0x4, offset = 0x4, fixed_abs, tag = 'smem constant byte address 0x4 - core index']
  #allocation1 [shape = 'u32[144,128]{1,0:T(1,128)}', space=vmem, size = 0x12000, scoped, tag = 'internal scratch']
  %s0 = inlined_call_operand.vmem [shape: bf16[512,27], index: 0, kind: input, shape index: {}]
  %s1 = inlined_call_operand.vmem [shape: bf16[27,128], index: 1, kind: input, shape index: {}]
  %s2 = inlined_call_operand.vmem [shape: f32[512,128], index: 2, kind: output, shape index: {0}]
  %s3 = inlined_call_operand.vmem [shape: f32[2,128], index: 3, kind: output, shape index: {1}]
  %4 = xla_tuple %s2, %s3
  %s5 = sld [smem:[#allocation0]]
  $region30: #{_lambda_.13} parent=0
    _
  %s7 = ssub.s32 1, %s5
  %s8 = scalar_select 0, %s7, %s5
  // Predicated region
  $region2: #{_lambda_.13} parent=0 // pred_check
    _
  $region3: #{_lambda_.13} parent=0 // pred_check_branch
    %10 = sbr.rel (0) target = $region5
  $region4: #{_lambda_.13} parent=0 // pred_region
    _
  $region5: #{_lambda_.13} parent=0 // pred_fallthru
    _
  // Predicated region
  $region6: #{_lambda_.13} parent=0 // pred_check
    _
  $region7: #{_lambda_.13} parent=0 // pred_check_branch
    %12 = sbr.rel (0) target = $region9
  $region8: #{_lambda_.13} parent=0 // pred_region
    _
  $region9: #{_lambda_.13} parent=0 // pred_fallthru
    _
  %v14 = vld [vmem:[%s0] sm:$0xf]
  %v15 = vld [vmem:[%s0 + $0x4] sm:$0xf]
  %v16 = vld [vmem:[%s0 + $0x8] sm:$0xf]
  %v17 = vld [vmem:[%s0 + $0xc] sm:$0xf]
  %v18 = vld [vmem:[%s0 + $0x10] sm:$0xf]
  %v19 = vld [vmem:[%s0 + $0x14] sm:$0xf]
  %v20 = vld [vmem:[%s0 + $0x18] sm:$0xf]
  %v21 = vld [vmem:[%s0 + $0x1c] sm:$0xf]
  %v22 = vld [vmem:[%s0 + $0x20] sm:$0xf]
  %v23 = vld [vmem:[%s0 + $0x24] sm:$0xf]
  %v24 = vld [vmem:[%s0 + $0x28] sm:$0xf]
  %v25 = vld [vmem:[%s0 + $0x2c] sm:$0xf]
  %v26 = vld [vmem:[%s0 + $0x30] sm:$0xf]
  %v27 = vld [vmem:[%s0 + $0x34] sm:$0xf]
  %v28 = vld [vmem:[%s0 + $0x38] sm:$0xf]
  %v29 = vld [vmem:[%s0 + $0x3c] sm:$0xf]
  %v30 = vld [vmem:[%s0 + $0x40] sm:$0xf]
  %v31 = vld [vmem:[%s0 + $0x44] sm:$0xf]
  %v32 = vld [vmem:[%s0 + $0x48] sm:$0xf]
  %v33 = vld [vmem:[%s0 + $0x4c] sm:$0xf]
  %v34 = vld [vmem:[%s0 + $0x50] sm:$0xf]
  %v35 = vld [vmem:[%s0 + $0x54] sm:$0xf]
  %v36 = vld [vmem:[%s0 + $0x58] sm:$0xf]
  %v37 = vld [vmem:[%s0 + $0x5c] sm:$0xf]
  %v38 = vld [vmem:[%s0 + $0x60] sm:$0xf]
  %v39 = vld [vmem:[%s0 + $0x64] sm:$0xf]
  %v40 = vld [vmem:[%s0 + $0x68] sm:$0xf]
  %v41 = vld [vmem:[%s0 + $0x6c] sm:$0xf]
  %v42 = vld [vmem:[%s0 + $0x70] sm:$0xf]
  %v43 = vld [vmem:[%s0 + $0x74] sm:$0xf]
  %v44 = vld [vmem:[%s0 + $0x78] sm:$0xf]
  %v45 = vld [vmem:[%s0 + $0x7c] sm:$0xf]
  %v46 = vld [vmem:[%s0 + $0x80] sm:$0xf]
  %v47 = vld [vmem:[%s0 + $0x84] sm:$0xf]
  %v48 = vld [vmem:[%s0 + $0x88] sm:$0xf]
  %v49 = vld [vmem:[%s0 + $0x8c] sm:$0xf]
  %v50 = vld [vmem:[%s0 + $0x90] sm:$0xf]
  %v51 = vld [vmem:[%s0 + $0x94] sm:$0xf]
  %v52 = vld [vmem:[%s0 + $0x98] sm:$0xf]
  %v53 = vld [vmem:[%s0 + $0x9c] sm:$0xf]
  %v54 = vld [vmem:[%s0 + $0xa0] sm:$0xf]
  %v55 = vld [vmem:[%s0 + $0xa4] sm:$0xf]
  %v56 = vld [vmem:[%s0 + $0xa8] sm:$0xf]
  %v57 = vld [vmem:[%s0 + $0xac] sm:$0xf]
  %v58 = vld [vmem:[%s0 + $0xb0] sm:$0xf]
  %v59 = vld [vmem:[%s0 + $0xb4] sm:$0xf]
  %v60 = vld [vmem:[%s0 + $0xb8] sm:$0xf]
  %v61 = vld [vmem:[%s0 + $0xbc] sm:$0xf]
  %v62 = vld [vmem:[%s0 + $0xc0] sm:$0xf]
  %v63 = vld [vmem:[%s0 + $0xc4] sm:$0xf]
  %v64 = vld [vmem:[%s0 + $0xc8] sm:$0xf]
  %v65 = vld [vmem:[%s0 + $0xcc] sm:$0xf]
  %v66 = vld [vmem:[%s0 + $0xd0] sm:$0xf]
  %v67 = vld [vmem:[%s0 + $0xd4] sm:$0xf]
  %v68 = vld [vmem:[%s0 + $0xd8] sm:$0xf]
  %v69 = vld [vmem:[%s0 + $0xdc] sm:$0xf]
  %v70 = vld [vmem:[%s0 + $0xe0] sm:$0xf]
  %v71 = vld [vmem:[%s0 + $0xe4] sm:$0xf]
  %v72 = vld [vmem:[%s0 + $0xe8] sm:$0xf]
  %v73 = vld [vmem:[%s0 + $0xec] sm:$0xf]
  %v74 = vld [vmem:[%s0 + $0xf0] sm:$0xf]
  %v75 = vld [vmem:[%s0 + $0xf4] sm:$0xf]
  %v76 = vld [vmem:[%s0 + $0xf8] sm:$0xf]
  %v77 = vld [vmem:[%s0 + $0xfc] sm:$0xf]
  %v78 = vld [vmem:[%s1] sm:$0xf]
  %v79 = vld [vmem:[%s1 + $0x4] sm:$0xf]
  %v80 = vld [vmem:[%s1 + $0x8] sm:$0xf]
  %v81 = vld [vmem:[%s1 + $0xc] sm:$0x3]
  %v146 = vunpack.c.l.b16 %v14
  %v147 = vunpack.c.l.b16 %v15
  %v148 = vunpack.c.l.b16 %v16
  %v149 = vunpack.c.l.b16 %v17
  %v150 = vunpack.c.l.b16 %v18
  %v151 = vunpack.c.l.b16 %v19
  %v152 = vunpack.c.l.b16 %v20
  %v153 = vunpack.c.l.b16 %v21
  %v154 = vunpack.c.l.b16 %v22
  %v155 = vunpack.c.l.b16 %v23
  %v156 = vunpack.c.l.b16 %v24
  %v157 = vunpack.c.l.b16 %v25
  %v158 = vunpack.c.l.b16 %v26
  %v159 = vunpack.c.l.b16 %v27
  %v160 = vunpack.c.l.b16 %v28
  %v161 = vunpack.c.l.b16 %v29
  %v162 = vunpack.c.l.b16 %v30
  %v163 = vunpack.c.l.b16 %v31
  %v164 = vunpack.c.l.b16 %v32
  %v165 = vunpack.c.l.b16 %v33
  %v166 = vunpack.c.l.b16 %v34
  %v167 = vunpack.c.l.b16 %v35
  %v168 = vunpack.c.l.b16 %v36
  %v169 = vunpack.c.l.b16 %v37
  %v170 = vunpack.c.l.b16 %v38
  %v171 = vunpack.c.l.b16 %v39
  %v172 = vunpack.c.l.b16 %v40
  %v173 = vunpack.c.l.b16 %v41
  %v174 = vunpack.c.l.b16 %v42
  %v175 = vunpack.c.l.b16 %v43
  %v176 = vunpack.c.l.b16 %v44
  %v177 = vunpack.c.l.b16 %v45
  %v178 = vunpack.c.l.b16 %v46
  %v179 = vunpack.c.l.b16 %v47
  %v180 = vunpack.c.l.b16 %v48
  %v181 = vunpack.c.l.b16 %v49
  %v182 = vunpack.c.l.b16 %v50
  %v183 = vunpack.c.l.b16 %v51
  %v184 = vunpack.c.l.b16 %v52
  %v185 = vunpack.c.l.b16 %v53
  %v186 = vunpack.c.l.b16 %v54
  %v187 = vunpack.c.l.b16 %v55
  %v188 = vunpack.c.l.b16 %v56
  %v189 = vunpack.c.l.b16 %v57
  %v190 = vunpack.c.l.b16 %v58
  %v191 = vunpack.c.l.b16 %v59
  %v192 = vunpack.c.l.b16 %v60
  %v193 = vunpack.c.l.b16 %v61
  %v194 = vunpack.c.l.b16 %v62
  %v195 = vunpack.c.l.b16 %v63
  %v196 = vunpack.c.l.b16 %v64
  %v197 = vunpack.c.l.b16 %v65
  %v198 = vunpack.c.l.b16 %v66
  %v199 = vunpack.c.l.b16 %v67
  %v200 = vunpack.c.l.b16 %v68
  %v201 = vunpack.c.l.b16 %v69
  %v202 = vunpack.c.l.b16 %v70
  %v203 = vunpack.c.l.b16 %v71
  %v204 = vunpack.c.l.b16 %v72
  %v205 = vunpack.c.l.b16 %v73
  %v206 = vunpack.c.l.b16 %v74
  %v207 = vunpack.c.l.b16 %v75
  %v208 = vunpack.c.l.b16 %v76
  %v209 = vunpack.c.l.b16 %v77
  %v210 = vpack.c.b16 %v147, %v146
  %v211 = vpack.c.b16 %v149, %v148
  %v212 = vpack.c.b16 %v151, %v150
  %v213 = vpack.c.b16 %v153, %v152
  %v214 = vpack.c.b16 %v155, %v154
  %v215 = vpack.c.b16 %v157, %v156
  %v216 = vpack.c.b16 %v159, %v158
  %v217 = vpack.c.b16 %v161, %v160
  %v218 = vpack.c.b16 %v163, %v162
  %v219 = vpack.c.b16 %v165, %v164
  %v220 = vpack.c.b16 %v167, %v166
  %v221 = vpack.c.b16 %v169, %v168
  %v222 = vpack.c.b16 %v171, %v170
  %v223 = vpack.c.b16 %v173, %v172
  %v224 = vpack.c.b16 %v175, %v174
  %v225 = vpack.c.b16 %v177, %v176
  %v226 = vpack.c.b16 %v179, %v178
  %v227 = vpack.c.b16 %v181, %v180
  %v228 = vpack.c.b16 %v183, %v182
  %v229 = vpack.c.b16 %v185, %v184
  %v230 = vpack.c.b16 %v187, %v186
  %v231 = vpack.c.b16 %v189, %v188
  %v232 = vpack.c.b16 %v191, %v190
  %v233 = vpack.c.b16 %v193, %v192
  %v234 = vpack.c.b16 %v195, %v194
  %v235 = vpack.c.b16 %v197, %v196
  %v236 = vpack.c.b16 %v199, %v198
  %v237 = vpack.c.b16 %v201, %v200
  %v238 = vpack.c.b16 %v203, %v202
  %v239 = vpack.c.b16 %v205, %v204
  %v240 = vpack.c.b16 %v207, %v206
  %v241 = vpack.c.b16 %v209, %v208
  %v246 = vunpack.c.l.b16 %v78
  %v247 = vunpack.c.l.b16 %v79
  %v248 = vunpack.c.l.b16 %v80
  %v249 = vunpack.c.l.b16 %v81
  %v250 = vpack.c.b16 %v247, %v246
  %v251 = vpack.c.b16 %v249, %v248
  %vm253 = vcmask 220160
  %v255 = vsel %vm253, %v210, 0
  %v258 = vsel %vm253, %v211, 0
  %v261 = vsel %vm253, %v212, 0
  %v264 = vsel %vm253, %v213, 0
  %v267 = vsel %vm253, %v214, 0
  %v270 = vsel %vm253, %v215, 0
  %v273 = vsel %vm253, %v216, 0
  %v276 = vsel %vm253, %v217, 0
  %v279 = vsel %vm253, %v218, 0
  %v282 = vsel %vm253, %v219, 0
  %v285 = vsel %vm253, %v220, 0
  %v288 = vsel %vm253, %v221, 0
  %v291 = vsel %vm253, %v222, 0
  %v294 = vsel %vm253, %v223, 0
  %v297 = vsel %vm253, %v224, 0
  %v300 = vsel %vm253, %v225, 0
  %v303 = vsel %vm253, %v226, 0
  %v306 = vsel %vm253, %v227, 0
  %v309 = vsel %vm253, %v228, 0
  %v312 = vsel %vm253, %v229, 0
  %v315 = vsel %vm253, %v230, 0
  %v318 = vsel %vm253, %v231, 0
  %v321 = vsel %vm253, %v232, 0
  %v324 = vsel %vm253, %v233, 0
  %v327 = vsel %vm253, %v234, 0
  %v330 = vsel %vm253, %v235, 0
  %v333 = vsel %vm253, %v236, 0
  %v336 = vsel %vm253, %v237, 0
  %v339 = vsel %vm253, %v238, 0
  %v342 = vsel %vm253, %v239, 0
  %v345 = vsel %vm253, %v240, 0
  %v348 = vsel %vm253, %v241, 0
  %vm350 = vcmask 1044480
  %vm351 = vcmask 1045504
  %v352 = vsel %vm350, 4294967295, 65535
  %v353 = vsel %vm351, %v352, 0
  %v355 = vand.u32 %v251, %v353
  %357 = vmatprep.subr.bf16.mxu0 0
  %358 = vmatpush1.bf16.msra.mxu0 %v250
  %359 = vmatprep.subr.bf16.mxu0 0
  %360 = vmatpush1.bf16.msra.mxu0 %v355
  %361 = vmatprep.subr.bf16.mxu0 0
  %362 = vmatpush1.bf16.msra.mxu0 0
  %363 = vmatprep.subr.bf16.mxu0 0
  %364 = vmatpush1.bf16.msra.mxu0 0
  %365 = vmatprep.subr.bf16.mxu0 0
  %366 = vmatpush1.bf16.msra.mxu0 0
  %367 = vmatprep.subr.bf16.mxu0 0
  %368 = vmatpush1.bf16.msra.mxu0 0
  %369 = vmatprep.subr.bf16.mxu0 0
  %370 = vmatpush1.bf16.msra.mxu0 0
  %371 = vmatprep.subr.bf16.mxu0 0
  %372 = vmatpush1.bf16.msra.mxu0 0
  %373 = vmatprep.subr.bf16.mxu0 0
  %374 = vmatpush1.bf16.msra.mxu0 0
  %375 = vmatprep.subr.bf16.mxu0 0
  %376 = vmatpush1.bf16.msra.mxu0 0
  %377 = vmatprep.subr.bf16.mxu0 0
  %378 = vmatpush1.bf16.msra.mxu0 0
  %379 = vmatprep.subr.bf16.mxu0 0
  %380 = vmatpush1.bf16.msra.mxu0 0
  %381 = vmatprep.subr.bf16.mxu0 0
  %382 = vmatpush1.bf16.msra.mxu0 0
  %383 = vmatprep.subr.bf16.mxu0 0
  %384 = vmatpush1.bf16.msra.mxu0 0
  %385 = vmatprep.subr.bf16.mxu0 0
  %386 = vmatpush1.bf16.msra.mxu0 0
  %387 = vmatprep.subr.bf16.mxu0 0
  %388 = vmatpush1.bf16.msra.mxu0 0
  %389 = vmatprep.mubr.bf16.mxu0 0
  %390 = vmatmul.mubr.bf16.gmra.mrb[0].mxu0 %v255
  %v391 = vpop.f32.mrb[0].mxu0
  %v392 = vadd.f32 0.0, %v391
  %v393 = vpop.f32.mrb[0].mxu0
  %v394 = vpop.f32.mrb[0].mxu0
  %v395 = vadd.f32 0.0, %v394
  %v396 = vpop.f32.mrb[0].mxu0
  %397 = vmatprep.mubr.bf16.mxu0 0
  %398 = vmatmul.mubr.bf16.gmra.mrb[0].mxu0 %v258
  %v399 = vpop.f32.mrb[0].mxu0
  %v400 = vadd.f32 0.0, %v399
  %v401 = vpop.f32.mrb[0].mxu0
  %v402 = vpop.f32.mrb[0].mxu0
  %v403 = vadd.f32 0.0, %v402
  %v404 = vpop.f32.mrb[0].mxu0
  %405 = vmatprep.mubr.bf16.mxu0 0
  %406 = vmatmul.mubr.bf16.gmra.mrb[0].mxu0 %v261
  %v407 = vpop.f32.mrb[0].mxu0
  %v408 = vadd.f32 0.0, %v407
  %v409 = vpop.f32.mrb[0].mxu0
  %v410 = vpop.f32.mrb[0].mxu0
  %v411 = vadd.f32 0.0, %v410
  %v412 = vpop.f32.mrb[0].mxu0
  %413 = vmatprep.mubr.bf16.mxu0 0
  %414 = vmatmul.mubr.bf16.gmra.mrb[0].mxu0 %v264
  %v415 = vpop.f32.mrb[0].mxu0
  %v416 = vadd.f32 0.0, %v415
  %v417 = vpop.f32.mrb[0].mxu0
  %v418 = vpop.f32.mrb[0].mxu0
  %v419 = vadd.f32 0.0, %v418
  %v420 = vpop.f32.mrb[0].mxu0
  %421 = vmatprep.mubr.bf16.mxu0 0
  %422 = vmatmul.mubr.bf16.gmra.mrb[0].mxu0 %v267
  %v423 = vpop.f32.mrb[0].mxu0
  %v424 = vadd.f32 0.0, %v423
  %v425 = vpop.f32.mrb[0].mxu0
  %v426 = vpop.f32.mrb[0].mxu0
  %v427 = vadd.f32 0.0, %v426
  %v428 = vpop.f32.mrb[0].mxu0
  %429 = vmatprep.mubr.bf16.mxu0 0
  %430 = vmatmul.mubr.bf16.gmra.mrb[0].mxu0 %v270
  %v431 = vpop.f32.mrb[0].mxu0
  %v432 = vadd.f32 0.0, %v431
  %v433 = vpop.f32.mrb[0].mxu0
  %v434 = vpop.f32.mrb[0].mxu0
  %v435 = vadd.f32 0.0, %v434
  %v436 = vpop.f32.mrb[0].mxu0
  %437 = vmatprep.mubr.bf16.mxu0 0
  %438 = vmatmul.mubr.bf16.gmra.mrb[0].mxu0 %v273
  %v439 = vpop.f32.mrb[0].mxu0
  %v440 = vadd.f32 0.0, %v439
  %v441 = vpop.f32.mrb[0].mxu0
  %v442 = vpop.f32.mrb[0].mxu0
  %v443 = vadd.f32 0.0, %v442
  %v444 = vpop.f32.mrb[0].mxu0
  %445 = vmatprep.mubr.bf16.mxu0 0
  %446 = vmatmul.mubr.bf16.gmra.mrb[0].mxu0 %v276
  %v447 = vpop.f32.mrb[0].mxu0
  %v448 = vadd.f32 0.0, %v447
  %v449 = vpop.f32.mrb[0].mxu0
  %v450 = vpop.f32.mrb[0].mxu0
  %v451 = vadd.f32 0.0, %v450
  %v452 = vpop.f32.mrb[0].mxu0
  %453 = vmatprep.mubr.bf16.mxu0 0
  %454 = vmatmul.mubr.bf16.gmra.mrb[0].mxu0 %v279
  %v455 = vpop.f32.mrb[0].mxu0
  %v456 = vadd.f32 0.0, %v455
  %v457 = vpop.f32.mrb[0].mxu0
  %v458 = vpop.f32.mrb[0].mxu0
  %v459 = vadd.f32 0.0, %v458
  %v460 = vpop.f32.mrb[0].mxu0
  %461 = vmatprep.mubr.bf16.mxu0 0
  %462 = vmatmul.mubr.bf16.gmra.mrb[0].mxu0 %v282
  %v463 = vpop.f32.mrb[0].mxu0
  %v464 = vadd.f32 0.0, %v463
  %v465 = vpop.f32.mrb[0].mxu0
  %v466 = vpop.f32.mrb[0].mxu0
  %v467 = vadd.f32 0.0, %v466
  %v468 = vpop.f32.mrb[0].mxu0
  %469 = vmatprep.mubr.bf16.mxu0 0
  %470 = vmatmul.mubr.bf16.gmra.mrb[0].mxu0 %v285
  %v471 = vpop.f32.mrb[0].mxu0
  %v472 = vadd.f32 0.0, %v471
  %v473 = vpop.f32.mrb[0].mxu0
  %v474 = vpop.f32.mrb[0].mxu0
  %v475 = vadd.f32 0.0, %v474
  %v476 = vpop.f32.mrb[0].mxu0
  %477 = vmatprep.mubr.bf16.mxu0 0
  %478 = vmatmul.mubr.bf16.gmra.mrb[0].mxu0 %v288
  %v479 = vpop.f32.mrb[0].mxu0
  %v480 = vadd.f32 0.0, %v479
  %v481 = vpop.f32.mrb[0].mxu0
  %v482 = vpop.f32.mrb[0].mxu0
  %v483 = vadd.f32 0.0, %v482
  %v484 = vpop.f32.mrb[0].mxu0
  %485 = vmatprep.mubr.bf16.mxu0 0
  %486 = vmatmul.mubr.bf16.gmra.mrb[0].mxu0 %v291
  %v487 = vpop.f32.mrb[0].mxu0
  %v488 = vadd.f32 0.0, %v487
  %v489 = vpop.f32.mrb[0].mxu0
  %v490 = vpop.f32.mrb[0].mxu0
  %v491 = vadd.f32 0.0, %v490
  %v492 = vpop.f32.mrb[0].mxu0
  %493 = vmatprep.mubr.bf16.mxu0 0
  %494 = vmatmul.mubr.bf16.gmra.mrb[0].mxu0 %v294
  %v495 = vpop.f32.mrb[0].mxu0
  %v496 = vadd.f32 0.0, %v495
  %v497 = vpop.f32.mrb[0].mxu0
  %v498 = vpop.f32.mrb[0].mxu0
  %v499 = vadd.f32 0.0, %v498
  %v500 = vpop.f32.mrb[0].mxu0
  %501 = vmatprep.mubr.bf16.mxu0 0
  %502 = vmatmul.mubr.bf16.gmra.mrb[0].mxu0 %v297
  %v503 = vpop.f32.mrb[0].mxu0
  %v504 = vadd.f32 0.0, %v503
  %v505 = vpop.f32.mrb[0].mxu0
  %v506 = vpop.f32.mrb[0].mxu0
  %v507 = vadd.f32 0.0, %v506
  %v508 = vpop.f32.mrb[0].mxu0
  %509 = vmatprep.mubr.bf16.mxu0 0
  %510 = vmatmul.mubr.bf16.gmra.mrb[0].mxu0 %v300
  %v511 = vpop.f32.mrb[0].mxu0
  %v512 = vadd.f32 0.0, %v511
  %v513 = vpop.f32.mrb[0].mxu0
  %v514 = vpop.f32.mrb[0].mxu0
  %v515 = vadd.f32 0.0, %v514
  %v516 = vpop.f32.mrb[0].mxu0
  %517 = vmatprep.mubr.bf16.mxu0 0
  %518 = vmatmul.mubr.bf16.gmra.mrb[0].mxu0 %v303
  %v519 = vpop.f32.mrb[0].mxu0
  %v520 = vadd.f32 0.0, %v519
  %v521 = vpop.f32.mrb[0].mxu0
  %v522 = vpop.f32.mrb[0].mxu0
  %v523 = vadd.f32 0.0, %v522
  %v524 = vpop.f32.mrb[0].mxu0
  %525 = vmatprep.mubr.bf16.mxu0 0
  %526 = vmatmul.mubr.bf16.gmra.mrb[0].mxu0 %v306
  %v527 = vpop.f32.mrb[0].mxu0
  %v528 = vadd.f32 0.0, %v527
  %v529 = vpop.f32.mrb[0].mxu0
  %v530 = vpop.f32.mrb[0].mxu0
  %v531 = vadd.f32 0.0, %v530
  %v532 = vpop.f32.mrb[0].mxu0
  %533 = vmatprep.mubr.bf16.mxu0 0
  %534 = vmatmul.mubr.bf16.gmra.mrb[0].mxu0 %v309
  %v535 = vpop.f32.mrb[0].mxu0
  %v536 = vadd.f32 0.0, %v535
  %v537 = vpop.f32.mrb[0].mxu0
  %v538 = vpop.f32.mrb[0].mxu0
  %v539 = vadd.f32 0.0, %v538
  %v540 = vpop.f32.mrb[0].mxu0
  %541 = vmatprep.mubr.bf16.mxu0 0
  %542 = vmatmul.mubr.bf16.gmra.mrb[0].mxu0 %v312
  %v543 = vpop.f32.mrb[0].mxu0
  %v544 = vadd.f32 0.0, %v543
  %v545 = vpop.f32.mrb[0].mxu0
  %v546 = vpop.f32.mrb[0].mxu0
  %v547 = vadd.f32 0.0, %v546
  %v548 = vpop.f32.mrb[0].mxu0
  %549 = vmatprep.mubr.bf16.mxu0 0
  %550 = vmatmul.mubr.bf16.gmra.mrb[0].mxu0 %v315
  %v551 = vpop.f32.mrb[0].mxu0
  %v552 = vadd.f32 0.0, %v551
  %v553 = vpop.f32.mrb[0].mxu0
  %v554 = vpop.f32.mrb[0].mxu0
  %v555 = vadd.f32 0.0, %v554
  %v556 = vpop.f32.mrb[0].mxu0
  %557 = vmatprep.mubr.bf16.mxu0 0
  %558 = vmatmul.mubr.bf16.gmra.mrb[0].mxu0 %v318
  %v559 = vpop.f32.mrb[0].mxu0
  %v560 = vadd.f32 0.0, %v559
  %v561 = vpop.f32.mrb[0].mxu0
  %v562 = vpop.f32.mrb[0].mxu0
  %v563 = vadd.f32 0.0, %v562
  %v564 = vpop.f32.mrb[0].mxu0
  %565 = vmatprep.mubr.bf16.mxu0 0
  %566 = vmatmul.mubr.bf16.gmra.mrb[0].mxu0 %v321
  %v567 = vpop.f32.mrb[0].mxu0
  %v568 = vadd.f32 0.0, %v567
  %v569 = vpop.f32.mrb[0].mxu0
  %v570 = vpop.f32.mrb[0].mxu0
  %v571 = vadd.f32 0.0, %v570
  %v572 = vpop.f32.mrb[0].mxu0
  %573 = vmatprep.mubr.bf16.mxu0 0
  %574 = vmatmul.mubr.bf16.gmra.mrb[0].mxu0 %v324
  %v575 = vpop.f32.mrb[0].mxu0
  %v576 = vadd.f32 0.0, %v575
  %v577 = vpop.f32.mrb[0].mxu0
  %v578 = vpop.f32.mrb[0].mxu0
  %v579 = vadd.f32 0.0, %v578
  %v580 = vpop.f32.mrb[0].mxu0
  %581 = vmatprep.mubr.bf16.mxu0 0
  %582 = vmatmul.mubr.bf16.gmra.mrb[0].mxu0 %v327
  %v583 = vpop.f32.mrb[0].mxu0
  %v584 = vadd.f32 0.0, %v583
  %v585 = vpop.f32.mrb[0].mxu0
  %v586 = vpop.f32.mrb[0].mxu0
  %v587 = vadd.f32 0.0, %v586
  %v588 = vpop.f32.mrb[0].mxu0
  %589 = vmatprep.mubr.bf16.mxu0 0
  %590 = vmatmul.mubr.bf16.gmra.mrb[0].mxu0 %v330
  %v591 = vpop.f32.mrb[0].mxu0
  %v592 = vadd.f32 0.0, %v591
  %v593 = vpop.f32.mrb[0].mxu0
  %v594 = vpop.f32.mrb[0].mxu0
  %v595 = vadd.f32 0.0, %v594
  %v596 = vpop.f32.mrb[0].mxu0
  %597 = vmatprep.mubr.bf16.mxu0 0
  %598 = vmatmul.mubr.bf16.gmra.mrb[0].mxu0 %v333
  %v599 = vpop.f32.mrb[0].mxu0
  %v600 = vadd.f32 0.0, %v599
  %v601 = vpop.f32.mrb[0].mxu0
  %v602 = vpop.f32.mrb[0].mxu0
  %v603 = vadd.f32 0.0, %v602
  %v604 = vpop.f32.mrb[0].mxu0
  %605 = vmatprep.mubr.bf16.mxu0 0
  %606 = vmatmul.mubr.bf16.gmra.mrb[0].mxu0 %v336
  %v607 = vpop.f32.mrb[0].mxu0
  %v608 = vadd.f32 0.0, %v607
  %v609 = vpop.f32.mrb[0].mxu0
  %v610 = vpop.f32.mrb[0].mxu0
  %v611 = vadd.f32 0.0, %v610
  %v612 = vpop.f32.mrb[0].mxu0
  %613 = vmatprep.mubr.bf16.mxu0 0
  %614 = vmatmul.mubr.bf16.gmra.mrb[0].mxu0 %v339
  %v615 = vpop.f32.mrb[0].mxu0
  %v616 = vadd.f32 0.0, %v615
  %v617 = vpop.f32.mrb[0].mxu0
  %v618 = vpop.f32.mrb[0].mxu0
  %v619 = vadd.f32 0.0, %v618
  %v620 = vpop.f32.mrb[0].mxu0
  %621 = vmatprep.mubr.bf16.mxu0 0
  %622 = vmatmul.mubr.bf16.gmra.mrb[0].mxu0 %v342
  %v623 = vpop.f32.mrb[0].mxu0
  %v624 = vadd.f32 0.0, %v623
  %v625 = vpop.f32.mrb[0].mxu0
  %v626 = vpop.f32.mrb[0].mxu0
  %v627 = vadd.f32 0.0, %v626
  %v628 = vpop.f32.mrb[0].mxu0
  %629 = vmatprep.mubr.bf16.mxu0 0
  %630 = vmatmul.mubr.bf16.gmra.mrb[0].mxu0 %v345
  %v631 = vpop.f32.mrb[0].mxu0
  %v632 = vadd.f32 0.0, %v631
  %v633 = vpop.f32.mrb[0].mxu0
  %v634 = vpop.f32.mrb[0].mxu0
  %v635 = vadd.f32 0.0, %v634
  %v636 = vpop.f32.mrb[0].mxu0
  %637 = vmatprep.mubr.bf16.mxu0 0
  %638 = vmatmul.mubr.bf16.gmra.mrb[0].mxu0 %v348
  %v639 = vpop.f32.mrb[0].mxu0
  %v640 = vadd.f32 0.0, %v639
  %v641 = vpop.f32.mrb[0].mxu0
  %v642 = vpop.f32.mrb[0].mxu0
  %v643 = vadd.f32 0.0, %v642
  %v644 = vpop.f32.mrb[0].mxu0
  %645 = vdwg.mxu0
  %646 = vst [vmem:[%s2] sm:$0xff] %v392
  %647 = vst [vmem:[%s2 + $0x8] sm:$0xff] %v395
  %648 = vst [vmem:[%s2 + $0x10] sm:$0xff] %v400
  %649 = vst [vmem:[%s2 + $0x18] sm:$0xff] %v403
  %650 = vst [vmem:[%s2 + $0x20] sm:$0xff] %v408
  %651 = vst [vmem:[%s2 + $0x28] sm:$0xff] %v411
  %652 = vst [vmem:[%s2 + $0x30] sm:$0xff] %v416
  %653 = vst [vmem:[%s2 + $0x38] sm:$0xff] %v419
  %654 = vst [vmem:[%s2 + $0x40] sm:$0xff] %v424
  %655 = vst [vmem:[%s2 + $0x48] sm:$0xff] %v427
  %656 = vst [vmem:[%s2 + $0x50] sm:$0xff] %v432
  %657 = vst [vmem:[%s2 + $0x58] sm:$0xff] %v435
  %658 = vst [vmem:[%s2 + $0x60] sm:$0xff] %v440
  %659 = vst [vmem:[%s2 + $0x68] sm:$0xff] %v443
  %660 = vst [vmem:[%s2 + $0x70] sm:$0xff] %v448
  %661 = vst [vmem:[%s2 + $0x78] sm:$0xff] %v451
  %662 = vst [vmem:[%s2 + $0x80] sm:$0xff] %v456
  %663 = vst [vmem:[%s2 + $0x88] sm:$0xff] %v459
  %664 = vst [vmem:[%s2 + $0x90] sm:$0xff] %v464
  %665 = vst [vmem:[%s2 + $0x98] sm:$0xff] %v467
  %666 = vst [vmem:[%s2 + $0xa0] sm:$0xff] %v472
  %667 = vst [vmem:[%s2 + $0xa8] sm:$0xff] %v475
  %668 = vst [vmem:[%s2 + $0xb0] sm:$0xff] %v480
  %669 = vst [vmem:[%s2 + $0xb8] sm:$0xff] %v483
  %670 = vst [vmem:[%s2 + $0xc0] sm:$0xff] %v488
  %671 = vst [vmem:[%s2 + $0xc8] sm:$0xff] %v491
  %672 = vst [vmem:[%s2 + $0xd0] sm:$0xff] %v496
  %673 = vst [vmem:[%s2 + $0xd8] sm:$0xff] %v499
  %674 = vst [vmem:[%s2 + $0xe0] sm:$0xff] %v504
  %675 = vst [vmem:[%s2 + $0xe8] sm:$0xff] %v507
  %676 = vst [vmem:[%s2 + $0xf0] sm:$0xff] %v512
  %677 = vst [vmem:[%s2 + $0xf8] sm:$0xff] %v515
  %678 = vst [vmem:[%s2 + $0x100] sm:$0xff] %v520
  %679 = vst [vmem:[%s2 + $0x108] sm:$0xff] %v523
  %680 = vst [vmem:[%s2 + $0x110] sm:$0xff] %v528
  %681 = vst [vmem:[%s2 + $0x118] sm:$0xff] %v531
  %682 = vst [vmem:[%s2 + $0x120] sm:$0xff] %v536
  %683 = vst [vmem:[%s2 + $0x128] sm:$0xff] %v539
  %684 = vst [vmem:[%s2 + $0x130] sm:$0xff] %v544
  %685 = vst [vmem:[%s2 + $0x138] sm:$0xff] %v547
  %686 = vst [vmem:[%s2 + $0x140] sm:$0xff] %v552
  %687 = vst [vmem:[%s2 + $0x148] sm:$0xff] %v555
  %688 = vst [vmem:[%s2 + $0x150] sm:$0xff] %v560
  %689 = vst [vmem:[%s2 + $0x158] sm:$0xff] %v563
  %690 = vst [vmem:[%s2 + $0x160] sm:$0xff] %v568
  %691 = vst [vmem:[%s2 + $0x168] sm:$0xff] %v571
  %692 = vst [vmem:[%s2 + $0x170] sm:$0xff] %v576
  %693 = vst [vmem:[%s2 + $0x178] sm:$0xff] %v579
  %694 = vst [vmem:[%s2 + $0x180] sm:$0xff] %v584
  %695 = vst [vmem:[%s2 + $0x188] sm:$0xff] %v587
  %696 = vst [vmem:[%s2 + $0x190] sm:$0xff] %v592
  %697 = vst [vmem:[%s2 + $0x198] sm:$0xff] %v595
  %698 = vst [vmem:[%s2 + $0x1a0] sm:$0xff] %v600
  %699 = vst [vmem:[%s2 + $0x1a8] sm:$0xff] %v603
  %700 = vst [vmem:[%s2 + $0x1b0] sm:$0xff] %v608
  %701 = vst [vmem:[%s2 + $0x1b8] sm:$0xff] %v611
  %702 = vst [vmem:[%s2 + $0x1c0] sm:$0xff] %v616
  %703 = vst [vmem:[%s2 + $0x1c8] sm:$0xff] %v619
  %704 = vst [vmem:[%s2 + $0x1d0] sm:$0xff] %v624
  %705 = vst [vmem:[%s2 + $0x1d8] sm:$0xff] %v627
  %706 = vst [vmem:[%s2 + $0x1e0] sm:$0xff] %v632
  %707 = vst [vmem:[%s2 + $0x1e8] sm:$0xff] %v635
  %708 = vst [vmem:[%s2 + $0x1f0] sm:$0xff] %v640
  %709 = vst [vmem:[%s2 + $0x1f8] sm:$0xff] %v643
  %p710 = scmp.eq.s32.totalorder 0, 0
  // Predicated region
  $region10: #{_lambda_.13} parent=0 // pred_check
    %p711 = pneg %p710
  $region11: #{_lambda_.13} parent=0 // pred_check_branch
    %713 = sbr.rel (%p711) target = $region13
  $region12: #{_lambda_.13} parent=0 // pred_region
    %714 = vst [vmem:[%s3] sm:$0x3] 0.0
  $region13: #{_lambda_.13} parent=0 // pred_fallthru
    _
  %v715 = vadd.f32 %v392, %v395
  %v716 = vadd.f32 %v715, %v400
  %v717 = vadd.f32 %v716, %v403
  %v718 = vadd.f32 %v717, %v408
  %v719 = vadd.f32 %v718, %v411
  %v720 = vadd.f32 %v719, %v416
  %v721 = vadd.f32 %v720, %v419
  %v722 = vadd.f32 %v721, %v424
  %v723 = vadd.f32 %v722, %v427
  %v724 = vadd.f32 %v723, %v432
  %v725 = vadd.f32 %v724, %v435
  %v726 = vadd.f32 %v725, %v440
  %v727 = vadd.f32 %v726, %v443
  %v728 = vadd.f32 %v727, %v448
  %v729 = vadd.f32 %v728, %v451
  %v730 = vadd.f32 %v729, %v456
  %v731 = vadd.f32 %v730, %v459
  %v732 = vadd.f32 %v731, %v464
  %v733 = vadd.f32 %v732, %v467
  %v734 = vadd.f32 %v733, %v472
  %v735 = vadd.f32 %v734, %v475
  %v736 = vadd.f32 %v735, %v480
  %v737 = vadd.f32 %v736, %v483
  %v738 = vadd.f32 %v737, %v488
  %v739 = vadd.f32 %v738, %v491
  %v740 = vadd.f32 %v739, %v496
  %v741 = vadd.f32 %v740, %v499
  %v742 = vadd.f32 %v741, %v504
  %v743 = vadd.f32 %v742, %v507
  %v744 = vadd.f32 %v743, %v512
  %v745 = vadd.f32 %v744, %v515
  %v746 = vadd.f32 %v745, %v520
  %v747 = vadd.f32 %v746, %v523
  %v748 = vadd.f32 %v747, %v528
  %v749 = vadd.f32 %v748, %v531
  %v750 = vadd.f32 %v749, %v536
  %v751 = vadd.f32 %v750, %v539
  %v752 = vadd.f32 %v751, %v544
  %v753 = vadd.f32 %v752, %v547
  %v754 = vadd.f32 %v753, %v552
  %v755 = vadd.f32 %v754, %v555
  %v756 = vadd.f32 %v755, %v560
  %v757 = vadd.f32 %v756, %v563
  %v758 = vadd.f32 %v757, %v568
  %v759 = vadd.f32 %v758, %v571
  %v760 = vadd.f32 %v759, %v576
  %v761 = vadd.f32 %v760, %v579
  %v762 = vadd.f32 %v761, %v584
  %v763 = vadd.f32 %v762, %v587
  %v764 = vadd.f32 %v763, %v592
  %v765 = vadd.f32 %v764, %v595
  %v766 = vadd.f32 %v765, %v600
  %v767 = vadd.f32 %v766, %v603
  %v768 = vadd.f32 %v767, %v608
  %v769 = vadd.f32 %v768, %v611
  %v770 = vadd.f32 %v769, %v616
  %v771 = vadd.f32 %v770, %v619
  %v772 = vadd.f32 %v771, %v624
  %v773 = vadd.f32 %v772, %v627
  %v774 = vadd.f32 %v773, %v632
  %v775 = vadd.f32 %v774, %v635
  %v776 = vadd.f32 %v775, %v640
  %v777 = vadd.f32 %v776, %v643
  %v778 = vrot.slane %v777, 4
  %v779 = vadd.f32 %v777, %v778
  %v780 = vrot.slane %v779, 2
  %v781 = vadd.f32 %v779, %v780
  %v782 = vrot.slane %v781, 1
  %v783 = vadd.f32 %v781, %v782
  %v784 = vmul.f32 %v392, %v392
  %v785 = vmul.f32 %v395, %v395
  %v786 = vmul.f32 %v400, %v400
  %v787 = vmul.f32 %v403, %v403
  %v788 = vmul.f32 %v408, %v408
  %v789 = vmul.f32 %v411, %v411
  %v790 = vmul.f32 %v416, %v416
  %v791 = vmul.f32 %v419, %v419
  %v792 = vmul.f32 %v424, %v424
  %v793 = vmul.f32 %v427, %v427
  %v794 = vmul.f32 %v432, %v432
  %v795 = vmul.f32 %v435, %v435
  %v796 = vmul.f32 %v440, %v440
  %v797 = vmul.f32 %v443, %v443
  %v798 = vmul.f32 %v448, %v448
  %v799 = vmul.f32 %v451, %v451
  %v800 = vmul.f32 %v456, %v456
  %v801 = vmul.f32 %v459, %v459
  %v802 = vmul.f32 %v464, %v464
  %v803 = vmul.f32 %v467, %v467
  %v804 = vmul.f32 %v472, %v472
  %v805 = vmul.f32 %v475, %v475
  %v806 = vmul.f32 %v480, %v480
  %v807 = vmul.f32 %v483, %v483
  %v808 = vmul.f32 %v488, %v488
  %v809 = vmul.f32 %v491, %v491
  %v810 = vmul.f32 %v496, %v496
  %v811 = vmul.f32 %v499, %v499
  %v812 = vmul.f32 %v504, %v504
  %v813 = vmul.f32 %v507, %v507
  %v814 = vmul.f32 %v512, %v512
  %v815 = vmul.f32 %v515, %v515
  %v816 = vmul.f32 %v520, %v520
  %v817 = vmul.f32 %v523, %v523
  %v818 = vmul.f32 %v528, %v528
  %v819 = vmul.f32 %v531, %v531
  %v820 = vmul.f32 %v536, %v536
  %v821 = vmul.f32 %v539, %v539
  %v822 = vmul.f32 %v544, %v544
  %v823 = vmul.f32 %v547, %v547
  %v824 = vmul.f32 %v552, %v552
  %v825 = vmul.f32 %v555, %v555
  %v826 = vmul.f32 %v560, %v560
  %v827 = vmul.f32 %v563, %v563
  %v828 = vmul.f32 %v568, %v568
  %v829 = vmul.f32 %v571, %v571
  %v830 = vmul.f32 %v576, %v576
  %v831 = vmul.f32 %v579, %v579
  %v832 = vmul.f32 %v584, %v584
  %v833 = vmul.f32 %v587, %v587
  %v834 = vmul.f32 %v592, %v592
  %v835 = vmul.f32 %v595, %v595
  %v836 = vmul.f32 %v600, %v600
  %v837 = vmul.f32 %v603, %v603
  %v838 = vmul.f32 %v608, %v608
  %v839 = vmul.f32 %v611, %v611
  %v840 = vmul.f32 %v616, %v616
  %v841 = vmul.f32 %v619, %v619
  %v842 = vmul.f32 %v624, %v624
  %v843 = vmul.f32 %v627, %v627
  %v844 = vmul.f32 %v632, %v632
  %v845 = vmul.f32 %v635, %v635
  %v846 = vmul.f32 %v640, %v640
  %v847 = vmul.f32 %v643, %v643
  %v848 = vadd.f32 %v784, %v785
  %v849 = vadd.f32 %v848, %v786
  %v850 = vadd.f32 %v849, %v787
  %v851 = vadd.f32 %v850, %v788
  %v852 = vadd.f32 %v851, %v789
  %v853 = vadd.f32 %v852, %v790
  %v854 = vadd.f32 %v853, %v791
  %v855 = vadd.f32 %v854, %v792
  %v856 = vadd.f32 %v855, %v793
  %v857 = vadd.f32 %v856, %v794
  %v858 = vadd.f32 %v857, %v795
  %v859 = vadd.f32 %v858, %v796
  %v860 = vadd.f32 %v859, %v797
  %v861 = vadd.f32 %v860, %v798
  %v862 = vadd.f32 %v861, %v799
  %v863 = vadd.f32 %v862, %v800
  %v864 = vadd.f32 %v863, %v801
  %v865 = vadd.f32 %v864, %v802
  %v866 = vadd.f32 %v865, %v803
  %v867 = vadd.f32 %v866, %v804
  %v868 = vadd.f32 %v867, %v805
  %v869 = vadd.f32 %v868, %v806
  %v870 = vadd.f32 %v869, %v807
  %v871 = vadd.f32 %v870, %v808
  %v872 = vadd.f32 %v871, %v809
  %v873 = vadd.f32 %v872, %v810
  %v874 = vadd.f32 %v873, %v811
  %v875 = vadd.f32 %v874, %v812
  %v876 = vadd.f32 %v875, %v813
  %v877 = vadd.f32 %v876, %v814
  %v878 = vadd.f32 %v877, %v815
  %v879 = vadd.f32 %v878, %v816
  %v880 = vadd.f32 %v879, %v817
  %v881 = vadd.f32 %v880, %v818
  %v882 = vadd.f32 %v881, %v819
  %v883 = vadd.f32 %v882, %v820
  %v884 = vadd.f32 %v883, %v821
  %v885 = vadd.f32 %v884, %v822
  %v886 = vadd.f32 %v885, %v823
  %v887 = vadd.f32 %v886, %v824
  %v888 = vadd.f32 %v887, %v825
  %v889 = vadd.f32 %v888, %v826
  %v890 = vadd.f32 %v889, %v827
  %v891 = vadd.f32 %v890, %v828
  %v892 = vadd.f32 %v891, %v829
  %v893 = vadd.f32 %v892, %v830
  %v894 = vadd.f32 %v893, %v831
  %v895 = vadd.f32 %v894, %v832
  %v896 = vadd.f32 %v895, %v833
  %v897 = vadd.f32 %v896, %v834
  %v898 = vadd.f32 %v897, %v835
  %v899 = vadd.f32 %v898, %v836
  %v900 = vadd.f32 %v899, %v837
  %v901 = vadd.f32 %v900, %v838
  %v902 = vadd.f32 %v901, %v839
  %v903 = vadd.f32 %v902, %v840
  %v904 = vadd.f32 %v903, %v841
  %v905 = vadd.f32 %v904, %v842
  %v906 = vadd.f32 %v905, %v843
  %v907 = vadd.f32 %v906, %v844
  %v908 = vadd.f32 %v907, %v845
  %v909 = vadd.f32 %v908, %v846
  %v910 = vadd.f32 %v909, %v847
  %v911 = vrot.slane %v910, 4
  %v912 = vadd.f32 %v910, %v911
  %v913 = vrot.slane %v912, 2
  %v914 = vadd.f32 %v912, %v913
  %v915 = vrot.slane %v914, 1
  %v916 = vadd.f32 %v914, %v915
  %v917 = vld [vmem:[%s3] sm:$0x3]
  %vm918 = vcmask 1040384
  %v919 = vsel %vm918, %v783, %v916
  %v920 = vadd.f32 %v917, %v919
  %921 = vst [vmem:[%s3] sm:$0x3] %v920
  // Predicated region
  $region14: #{_lambda_.13} parent=0 // pred_check
    _
  $region15: #{_lambda_.13} parent=0 // pred_check_branch
    %923 = sbr.rel (0) target = $region17
  $region16: #{_lambda_.13} parent=0 // pred_region
    _
  $region17: #{_lambda_.13} parent=0 // pred_fallthru
    _
  // Predicated region
  $region18: #{_lambda_.13} parent=0 // pred_check
    _
  $region19: #{_lambda_.13} parent=0 // pred_check_branch
    %925 = sbr.rel (0) target = $region21
  $region20: #{_lambda_.13} parent=0 // pred_region
    _
  $region21: #{_lambda_.13} parent=0 // pred_fallthru
    _
  // Predicated region
  $region22: #{_lambda_.13} parent=0 // pred_check
    _
  $region23: #{_lambda_.13} parent=0 // pred_check_branch
    %927 = sbr.rel (0) target = $region25
  $region24: #{_lambda_.13} parent=0 // pred_region
    _
  $region25: #{_lambda_.13} parent=0 // pred_fallthru
    _
  // Predicated region
  $region26: #{_lambda_.13} parent=0 // pred_check
    _
  $region27: #{_lambda_.13} parent=0 // pred_check_branch
    %929 = sbr.rel (0) target = $region29
  $region28: #{_lambda_.13} parent=0 // pred_region
    _
  $region29: #{_lambda_.13} parent=0 // pred_fallthru
    _

// kernel: _lambda_.16
$region0: #{_lambda_.16}
  #allocation0 [shape = 'u32[]', space=smem, size = 0x4, offset = 0x4, fixed_abs, tag = 'smem constant byte address 0x4 - core index']
  #allocation1 [shape = 'u32[144,128]{1,0:T(1,128)}', space=vmem, size = 0x12000, scoped, tag = 'internal scratch']
  %s0 = inlined_call_operand.vmem [shape: f32[128,128], index: 0, kind: input, shape index: {}]
  %s1 = inlined_call_operand.vmem [shape: f32[1,128], index: 1, kind: input, shape index: {}]
  %s2 = inlined_call_operand.vmem [shape: f32[1,128], index: 2, kind: input, shape index: {}]
  %s3 = inlined_call_operand.vmem [shape: f32[128,128], index: 3, kind: output, shape index: {}]
  %s4 = sld [smem:[#allocation0]]
  $region22: #{_lambda_.16} parent=0
    _
  %s6 = ssub.s32 1, %s4
  %s7 = scalar_select 0, %s6, %s4
  // Predicated region
  $region2: #{_lambda_.16} parent=0 // pred_check
    _
  $region3: #{_lambda_.16} parent=0 // pred_check_branch
    %9 = sbr.rel (0) target = $region5
  $region4: #{_lambda_.16} parent=0 // pred_region
    _
  $region5: #{_lambda_.16} parent=0 // pred_fallthru
    _
  // Predicated region
  $region6: #{_lambda_.16} parent=0 // pred_check
    _
  $region7: #{_lambda_.16} parent=0 // pred_check_branch
    %11 = sbr.rel (0) target = $region9
  $region8: #{_lambda_.16} parent=0 // pred_region
    _
  $region9: #{_lambda_.16} parent=0 // pred_fallthru
    _
  // Predicated region
  $region10: #{_lambda_.16} parent=0 // pred_check
    _
  $region11: #{_lambda_.16} parent=0 // pred_check_branch
    %13 = sbr.rel (0) target = $region13
  $region12: #{_lambda_.16} parent=0 // pred_region
    _
  $region13: #{_lambda_.16} parent=0 // pred_fallthru
    _
  %v14 = vld [vmem:[%s0] sm:$0xff]
  %v15 = vld [vmem:[%s0 + $0x8] sm:$0xff]
  %v16 = vld [vmem:[%s0 + $0x10] sm:$0xff]
  %v17 = vld [vmem:[%s0 + $0x18] sm:$0xff]
  %v18 = vld [vmem:[%s0 + $0x20] sm:$0xff]
  %v19 = vld [vmem:[%s0 + $0x28] sm:$0xff]
  %v20 = vld [vmem:[%s0 + $0x30] sm:$0xff]
  %v21 = vld [vmem:[%s0 + $0x38] sm:$0xff]
  %v22 = vld [vmem:[%s0 + $0x40] sm:$0xff]
  %v23 = vld [vmem:[%s0 + $0x48] sm:$0xff]
  %v24 = vld [vmem:[%s0 + $0x50] sm:$0xff]
  %v25 = vld [vmem:[%s0 + $0x58] sm:$0xff]
  %v26 = vld [vmem:[%s0 + $0x60] sm:$0xff]
  %v27 = vld [vmem:[%s0 + $0x68] sm:$0xff]
  %v28 = vld [vmem:[%s0 + $0x70] sm:$0xff]
  %v29 = vld [vmem:[%s0 + $0x78] sm:$0xff]
  %v30 = vld [vmem:[%s1] sm:$0x1]
  %v32 = vlaneseq
  %v33 = vshrl.u32 %v32, 7
  %v34 = vsub.s32 0, %v33
  %v35 = vrot.slane %v30, %v34
  %v37 = vmul.f32 %v14, %v35
  %v38 = vmul.f32 %v15, %v35
  %v39 = vmul.f32 %v16, %v35
  %v40 = vmul.f32 %v17, %v35
  %v41 = vmul.f32 %v18, %v35
  %v42 = vmul.f32 %v19, %v35
  %v43 = vmul.f32 %v20, %v35
  %v44 = vmul.f32 %v21, %v35
  %v45 = vmul.f32 %v22, %v35
  %v46 = vmul.f32 %v23, %v35
  %v47 = vmul.f32 %v24, %v35
  %v48 = vmul.f32 %v25, %v35
  %v49 = vmul.f32 %v26, %v35
  %v50 = vmul.f32 %v27, %v35
  %v51 = vmul.f32 %v28, %v35
  %v52 = vmul.f32 %v29, %v35
  %v53 = vld [vmem:[%s2] sm:$0x1]
  %v55 = vlaneseq
  %v56 = vshrl.u32 %v55, 7
  %v57 = vsub.s32 0, %v56
  %v58 = vrot.slane %v53, %v57
  %v60 = vadd.f32 %v37, %v58
  %v61 = vadd.f32 %v38, %v58
  %v62 = vadd.f32 %v39, %v58
  %v63 = vadd.f32 %v40, %v58
  %v64 = vadd.f32 %v41, %v58
  %v65 = vadd.f32 %v42, %v58
  %v66 = vadd.f32 %v43, %v58
  %v67 = vadd.f32 %v44, %v58
  %v68 = vadd.f32 %v45, %v58
  %v69 = vadd.f32 %v46, %v58
  %v70 = vadd.f32 %v47, %v58
  %v71 = vadd.f32 %v48, %v58
  %v72 = vadd.f32 %v49, %v58
  %v73 = vadd.f32 %v50, %v58
  %v74 = vadd.f32 %v51, %v58
  %v75 = vadd.f32 %v52, %v58
  %vm76 = vcmp.gt.f32.partialorder %v60, 0.0
  %vm77 = vcmp.gt.f32.partialorder %v61, 0.0
  %vm78 = vcmp.gt.f32.partialorder %v62, 0.0
  %vm79 = vcmp.gt.f32.partialorder %v63, 0.0
  %vm80 = vcmp.gt.f32.partialorder %v64, 0.0
  %vm81 = vcmp.gt.f32.partialorder %v65, 0.0
  %vm82 = vcmp.gt.f32.partialorder %v66, 0.0
  %vm83 = vcmp.gt.f32.partialorder %v67, 0.0
  %vm84 = vcmp.gt.f32.partialorder %v68, 0.0
  %vm85 = vcmp.gt.f32.partialorder %v69, 0.0
  %vm86 = vcmp.gt.f32.partialorder %v70, 0.0
  %vm87 = vcmp.gt.f32.partialorder %v71, 0.0
  %vm88 = vcmp.gt.f32.partialorder %v72, 0.0
  %vm89 = vcmp.gt.f32.partialorder %v73, 0.0
  %vm90 = vcmp.gt.f32.partialorder %v74, 0.0
  %vm91 = vcmp.gt.f32.partialorder %v75, 0.0
  %v92 = vmul.f32 %v60, 0.1
  %v93 = vmul.f32 %v61, 0.1
  %v94 = vmul.f32 %v62, 0.1
  %v95 = vmul.f32 %v63, 0.1
  %v96 = vmul.f32 %v64, 0.1
  %v97 = vmul.f32 %v65, 0.1
  %v98 = vmul.f32 %v66, 0.1
  %v99 = vmul.f32 %v67, 0.1
  %v100 = vmul.f32 %v68, 0.1
  %v101 = vmul.f32 %v69, 0.1
  %v102 = vmul.f32 %v70, 0.1
  %v103 = vmul.f32 %v71, 0.1
  %v104 = vmul.f32 %v72, 0.1
  %v105 = vmul.f32 %v73, 0.1
  %v106 = vmul.f32 %v74, 0.1
  %v107 = vmul.f32 %v75, 0.1
  %v108 = vsel %vm76, %v60, %v92
  %v109 = vsel %vm77, %v61, %v93
  %v110 = vsel %vm78, %v62, %v94
  %v111 = vsel %vm79, %v63, %v95
  %v112 = vsel %vm80, %v64, %v96
  %v113 = vsel %vm81, %v65, %v97
  %v114 = vsel %vm82, %v66, %v98
  %v115 = vsel %vm83, %v67, %v99
  %v116 = vsel %vm84, %v68, %v100
  %v117 = vsel %vm85, %v69, %v101
  %v118 = vsel %vm86, %v70, %v102
  %v119 = vsel %vm87, %v71, %v103
  %v120 = vsel %vm88, %v72, %v104
  %v121 = vsel %vm89, %v73, %v105
  %v122 = vsel %vm90, %v74, %v106
  %v123 = vsel %vm91, %v75, %v107
  %124 = vst [vmem:[%s3] sm:$0xff] %v108
  %125 = vst [vmem:[%s3 + $0x8] sm:$0xff] %v109
  %126 = vst [vmem:[%s3 + $0x10] sm:$0xff] %v110
  %127 = vst [vmem:[%s3 + $0x18] sm:$0xff] %v111
  %128 = vst [vmem:[%s3 + $0x20] sm:$0xff] %v112
  %129 = vst [vmem:[%s3 + $0x28] sm:$0xff] %v113
  %130 = vst [vmem:[%s3 + $0x30] sm:$0xff] %v114
  %131 = vst [vmem:[%s3 + $0x38] sm:$0xff] %v115
  %132 = vst [vmem:[%s3 + $0x40] sm:$0xff] %v116
  %133 = vst [vmem:[%s3 + $0x48] sm:$0xff] %v117
  %134 = vst [vmem:[%s3 + $0x50] sm:$0xff] %v118
  %135 = vst [vmem:[%s3 + $0x58] sm:$0xff] %v119
  %136 = vst [vmem:[%s3 + $0x60] sm:$0xff] %v120
  %137 = vst [vmem:[%s3 + $0x68] sm:$0xff] %v121
  %138 = vst [vmem:[%s3 + $0x70] sm:$0xff] %v122
  %139 = vst [vmem:[%s3 + $0x78] sm:$0xff] %v123
  // Predicated region
  $region14: #{_lambda_.16} parent=0 // pred_check
    _
  $region15: #{_lambda_.16} parent=0 // pred_check_branch
    %141 = sbr.rel (0) target = $region17
  $region16: #{_lambda_.16} parent=0 // pred_region
    _
  $region17: #{_lambda_.16} parent=0 // pred_fallthru
    _
  // Predicated region
  $region18: #{_lambda_.16} parent=0 // pred_check
    _
  $region19: #{_lambda_.16} parent=0 // pred_check_branch
    %143 = sbr.rel (0) target = $region21
  $region20: #{_lambda_.16} parent=0 // pred_region
    _
  $region21: #{_lambda_.16} parent=0 // pred_fallthru
    _

// kernel: _lambda_.19
$region0: #{_lambda_.19}
  #allocation0 [shape = 'u32[]', space=smem, size = 0x4, offset = 0x4, fixed_abs, tag = 'smem constant byte address 0x4 - core index']
  #allocation1 [shape = 'u32[144,128]{1,0:T(1,128)}', space=vmem, size = 0x12000, scoped, tag = 'internal scratch']
  %s0 = inlined_call_operand.vmem [shape: f32[128,128], index: 0, kind: input, shape index: {}]
  %s1 = inlined_call_operand.vmem [shape: f32[128,128], index: 1, kind: input, shape index: {}]
  %s2 = inlined_call_operand.vmem [shape: f32[128,128], index: 2, kind: output, shape index: {}]
  %s3 = sld [smem:[#allocation0]]
  $region18: #{_lambda_.19} parent=0
    _
  %s5 = ssub.s32 1, %s3
  %s6 = scalar_select 0, %s5, %s3
  // Predicated region
  $region2: #{_lambda_.19} parent=0 // pred_check
    _
  $region3: #{_lambda_.19} parent=0 // pred_check_branch
    %8 = sbr.rel (0) target = $region5
  $region4: #{_lambda_.19} parent=0 // pred_region
    _
  $region5: #{_lambda_.19} parent=0 // pred_fallthru
    _
  // Predicated region
  $region6: #{_lambda_.19} parent=0 // pred_check
    _
  $region7: #{_lambda_.19} parent=0 // pred_check_branch
    %10 = sbr.rel (0) target = $region9
  $region8: #{_lambda_.19} parent=0 // pred_region
    _
  $region9: #{_lambda_.19} parent=0 // pred_fallthru
    _
  %v11 = vld [vmem:[%s0] sm:$0xff]
  %v12 = vld [vmem:[%s0 + $0x8] sm:$0xff]
  %v13 = vld [vmem:[%s0 + $0x10] sm:$0xff]
  %v14 = vld [vmem:[%s0 + $0x18] sm:$0xff]
  %v15 = vld [vmem:[%s0 + $0x20] sm:$0xff]
  %v16 = vld [vmem:[%s0 + $0x28] sm:$0xff]
  %v17 = vld [vmem:[%s0 + $0x30] sm:$0xff]
  %v18 = vld [vmem:[%s0 + $0x38] sm:$0xff]
  %v19 = vld [vmem:[%s0 + $0x40] sm:$0xff]
  %v20 = vld [vmem:[%s0 + $0x48] sm:$0xff]
  %v21 = vld [vmem:[%s0 + $0x50] sm:$0xff]
  %v22 = vld [vmem:[%s0 + $0x58] sm:$0xff]
  %v23 = vld [vmem:[%s0 + $0x60] sm:$0xff]
  %v24 = vld [vmem:[%s0 + $0x68] sm:$0xff]
  %v25 = vld [vmem:[%s0 + $0x70] sm:$0xff]
  %v26 = vld [vmem:[%s0 + $0x78] sm:$0xff]
  %v27 = vld [vmem:[%s1] sm:$0xff]
  %v28 = vld [vmem:[%s1 + $0x8] sm:$0xff]
  %v29 = vld [vmem:[%s1 + $0x10] sm:$0xff]
  %v30 = vld [vmem:[%s1 + $0x18] sm:$0xff]
  %v31 = vld [vmem:[%s1 + $0x20] sm:$0xff]
  %v32 = vld [vmem:[%s1 + $0x28] sm:$0xff]
  %v33 = vld [vmem:[%s1 + $0x30] sm:$0xff]
  %v34 = vld [vmem:[%s1 + $0x38] sm:$0xff]
  %v35 = vld [vmem:[%s1 + $0x40] sm:$0xff]
  %v36 = vld [vmem:[%s1 + $0x48] sm:$0xff]
  %v37 = vld [vmem:[%s1 + $0x50] sm:$0xff]
  %v38 = vld [vmem:[%s1 + $0x58] sm:$0xff]
  %v39 = vld [vmem:[%s1 + $0x60] sm:$0xff]
  %v40 = vld [vmem:[%s1 + $0x68] sm:$0xff]
  %v41 = vld [vmem:[%s1 + $0x70] sm:$0xff]
  %v42 = vld [vmem:[%s1 + $0x78] sm:$0xff]
  %v43 = vadd.f32 %v11, %v27
  %v44 = vadd.f32 %v12, %v28
  %v45 = vadd.f32 %v13, %v29
  %v46 = vadd.f32 %v14, %v30
  %v47 = vadd.f32 %v15, %v31
  %v48 = vadd.f32 %v16, %v32
  %v49 = vadd.f32 %v17, %v33
  %v50 = vadd.f32 %v18, %v34
  %v51 = vadd.f32 %v19, %v35
  %v52 = vadd.f32 %v20, %v36
  %v53 = vadd.f32 %v21, %v37
  %v54 = vadd.f32 %v22, %v38
  %v55 = vadd.f32 %v23, %v39
  %v56 = vadd.f32 %v24, %v40
  %v57 = vadd.f32 %v25, %v41
  %v58 = vadd.f32 %v26, %v42
  %59 = vst [vmem:[%s2] sm:$0xff] %v43
  %60 = vst [vmem:[%s2 + $0x8] sm:$0xff] %v44
  %61 = vst [vmem:[%s2 + $0x10] sm:$0xff] %v45
  %62 = vst [vmem:[%s2 + $0x18] sm:$0xff] %v46
  %63 = vst [vmem:[%s2 + $0x20] sm:$0xff] %v47
  %64 = vst [vmem:[%s2 + $0x28] sm:$0xff] %v48
  %65 = vst [vmem:[%s2 + $0x30] sm:$0xff] %v49
  %66 = vst [vmem:[%s2 + $0x38] sm:$0xff] %v50
  %67 = vst [vmem:[%s2 + $0x40] sm:$0xff] %v51
  %68 = vst [vmem:[%s2 + $0x48] sm:$0xff] %v52
  %69 = vst [vmem:[%s2 + $0x50] sm:$0xff] %v53
  %70 = vst [vmem:[%s2 + $0x58] sm:$0xff] %v54
  %71 = vst [vmem:[%s2 + $0x60] sm:$0xff] %v55
  %72 = vst [vmem:[%s2 + $0x68] sm:$0xff] %v56
  %73 = vst [vmem:[%s2 + $0x70] sm:$0xff] %v57
  %74 = vst [vmem:[%s2 + $0x78] sm:$0xff] %v58
  // Predicated region
  $region10: #{_lambda_.19} parent=0 // pred_check
    _
  $region11: #{_lambda_.19} parent=0 // pred_check_branch
    %76 = sbr.rel (0) target = $region13
  $region12: #{_lambda_.19} parent=0 // pred_region
    _
  $region13: #{_lambda_.19} parent=0 // pred_fallthru
    _
  // Predicated region
  $region14: #{_lambda_.19} parent=0 // pred_check
    _
  $region15: #{_lambda_.19} parent=0 // pred_check_branch
    %78 = sbr.rel (0) target = $region17
  $region16: #{_lambda_.19} parent=0 // pred_region
    _
  $region17: #{_lambda_.19} parent=0 // pred_fallthru
    _

// kernel: _lambda_.20
$region0: #{_lambda_.20}
  #allocation0 [shape = 'u32[]', space=smem, size = 0x4, offset = 0x4, fixed_abs, tag = 'smem constant byte address 0x4 - core index']
  #allocation1 [shape = 'u32[144,128]{1,0:T(1,128)}', space=vmem, size = 0x12000, scoped, tag = 'internal scratch']
  %s0 = inlined_call_operand.vmem [shape: bf16[128,128], index: 0, kind: input, shape index: {}]
  %s1 = inlined_call_operand.vmem [shape: bf16[128,128], index: 1, kind: input, shape index: {}]
  %s2 = inlined_call_operand.vmem [shape: f32[1,128], index: 2, kind: input, shape index: {}]
  %s3 = inlined_call_operand.vmem [shape: f32[128,128], index: 3, kind: output, shape index: {}]
  %s4 = sld [smem:[#allocation0]]
  $region22: #{_lambda_.20} parent=0
    _
  %s6 = ssub.s32 1, %s4
  %s7 = scalar_select 0, %s6, %s4
  // Predicated region
  $region2: #{_lambda_.20} parent=0 // pred_check
    _
  $region3: #{_lambda_.20} parent=0 // pred_check_branch
    %9 = sbr.rel (0) target = $region5
  $region4: #{_lambda_.20} parent=0 // pred_region
    _
  $region5: #{_lambda_.20} parent=0 // pred_fallthru
    _
  // Predicated region
  $region6: #{_lambda_.20} parent=0 // pred_check
    _
  $region7: #{_lambda_.20} parent=0 // pred_check_branch
    %11 = sbr.rel (0) target = $region9
  $region8: #{_lambda_.20} parent=0 // pred_region
    _
  $region9: #{_lambda_.20} parent=0 // pred_fallthru
    _
  // Predicated region
  $region10: #{_lambda_.20} parent=0 // pred_check
    _
  $region11: #{_lambda_.20} parent=0 // pred_check_branch
    %13 = sbr.rel (0) target = $region13
  $region12: #{_lambda_.20} parent=0 // pred_region
    _
  $region13: #{_lambda_.20} parent=0 // pred_fallthru
    _
  %v15 = vld [vmem:[%s0] sm:$0xf]
  %v16 = vld [vmem:[%s0 + $0x4] sm:$0xf]
  %v17 = vld [vmem:[%s0 + $0x8] sm:$0xf]
  %v18 = vld [vmem:[%s0 + $0xc] sm:$0xf]
  %v19 = vld [vmem:[%s0 + $0x10] sm:$0xf]
  %v20 = vld [vmem:[%s0 + $0x14] sm:$0xf]
  %v21 = vld [vmem:[%s0 + $0x18] sm:$0xf]
  %v22 = vld [vmem:[%s0 + $0x1c] sm:$0xf]
  %v23 = vld [vmem:[%s0 + $0x20] sm:$0xf]
  %v24 = vld [vmem:[%s0 + $0x24] sm:$0xf]
  %v25 = vld [vmem:[%s0 + $0x28] sm:$0xf]
  %v26 = vld [vmem:[%s0 + $0x2c] sm:$0xf]
  %v27 = vld [vmem:[%s0 + $0x30] sm:$0xf]
  %v28 = vld [vmem:[%s0 + $0x34] sm:$0xf]
  %v29 = vld [vmem:[%s0 + $0x38] sm:$0xf]
  %v30 = vld [vmem:[%s0 + $0x3c] sm:$0xf]
  %v31 = vld [vmem:[%s1] sm:$0xf]
  %v32 = vld [vmem:[%s1 + $0x4] sm:$0xf]
  %v33 = vld [vmem:[%s1 + $0x8] sm:$0xf]
  %v34 = vld [vmem:[%s1 + $0xc] sm:$0xf]
  %v35 = vld [vmem:[%s1 + $0x10] sm:$0xf]
  %v36 = vld [vmem:[%s1 + $0x14] sm:$0xf]
  %v37 = vld [vmem:[%s1 + $0x18] sm:$0xf]
  %v38 = vld [vmem:[%s1 + $0x1c] sm:$0xf]
  %v39 = vld [vmem:[%s1 + $0x20] sm:$0xf]
  %v40 = vld [vmem:[%s1 + $0x24] sm:$0xf]
  %v41 = vld [vmem:[%s1 + $0x28] sm:$0xf]
  %v42 = vld [vmem:[%s1 + $0x2c] sm:$0xf]
  %v43 = vld [vmem:[%s1 + $0x30] sm:$0xf]
  %v44 = vld [vmem:[%s1 + $0x34] sm:$0xf]
  %v45 = vld [vmem:[%s1 + $0x38] sm:$0xf]
  %v46 = vld [vmem:[%s1 + $0x3c] sm:$0xf]
  %v47 = vld [vmem:[%s2] sm:$0x1]
  %v49 = vlaneseq
  %v50 = vshrl.u32 %v49, 7
  %v51 = vsub.s32 0, %v50
  %v52 = vrot.slane %v47, %v51
  %v70 = vunpack.c.l.b16 %v15
  %v71 = vunpack.c.l.b16 %v16
  %v72 = vunpack.c.l.b16 %v17
  %v73 = vunpack.c.l.b16 %v18
  %v74 = vunpack.c.l.b16 %v19
  %v75 = vunpack.c.l.b16 %v20
  %v76 = vunpack.c.l.b16 %v21
  %v77 = vunpack.c.l.b16 %v22
  %v78 = vunpack.c.l.b16 %v23
  %v79 = vunpack.c.l.b16 %v24
  %v80 = vunpack.c.l.b16 %v25
  %v81 = vunpack.c.l.b16 %v26
  %v82 = vunpack.c.l.b16 %v27
  %v83 = vunpack.c.l.b16 %v28
  %v84 = vunpack.c.l.b16 %v29
  %v85 = vunpack.c.l.b16 %v30
  %v86 = vpack.c.b16 %v71, %v70
  %v87 = vpack.c.b16 %v73, %v72
  %v88 = vpack.c.b16 %v75, %v74
  %v89 = vpack.c.b16 %v77, %v76
  %v90 = vpack.c.b16 %v79, %v78
  %v91 = vpack.c.b16 %v81, %v80
  %v92 = vpack.c.b16 %v83, %v82
  %v93 = vpack.c.b16 %v85, %v84
  %v118 = vunpack.c.l.b16 %v31
  %v119 = vunpack.c.l.b16 %v32
  %v120 = vunpack.c.l.b16 %v33
  %v121 = vunpack.c.l.b16 %v34
  %v122 = vunpack.c.l.b16 %v35
  %v123 = vunpack.c.l.b16 %v36
  %v124 = vunpack.c.l.b16 %v37
  %v125 = vunpack.c.l.b16 %v38
  %v126 = vunpack.c.l.b16 %v39
  %v127 = vunpack.c.l.b16 %v40
  %v128 = vunpack.c.l.b16 %v41
  %v129 = vunpack.c.l.b16 %v42
  %v130 = vunpack.c.l.b16 %v43
  %v131 = vunpack.c.l.b16 %v44
  %v132 = vunpack.c.l.b16 %v45
  %v133 = vunpack.c.l.b16 %v46
  %v134 = vpack.c.b16 %v119, %v118
  %v135 = vpack.c.b16 %v121, %v120
  %v136 = vpack.c.b16 %v123, %v122
  %v137 = vpack.c.b16 %v125, %v124
  %v138 = vpack.c.b16 %v127, %v126
  %v139 = vpack.c.b16 %v129, %v128
  %v140 = vpack.c.b16 %v131, %v130
  %v141 = vpack.c.b16 %v133, %v132
  %150 = vmatprep.subr.bf16.mxu0 0
  %151 = vmatpush1.bf16.msra.mxu0 %v134
  %152 = vmatprep.subr.bf16.mxu0 0
  %153 = vmatpush1.bf16.msra.mxu0 %v135
  %154 = vmatprep.subr.bf16.mxu0 0
  %155 = vmatpush1.bf16.msra.mxu0 %v136
  %156 = vmatprep.subr.bf16.mxu0 0
  %157 = vmatpush1.bf16.msra.mxu0 %v137
  %158 = vmatprep.subr.bf16.mxu0 0
  %159 = vmatpush1.bf16.msra.mxu0 %v138
  %160 = vmatprep.subr.bf16.mxu0 0
  %161 = vmatpush1.bf16.msra.mxu0 %v139
  %162 = vmatprep.subr.bf16.mxu0 0
  %163 = vmatpush1.bf16.msra.mxu0 %v140
  %164 = vmatprep.subr.bf16.mxu0 0
  %165 = vmatpush1.bf16.msra.mxu0 %v141
  %166 = vmatprep.subr.bf16.mxu0 0
  %167 = vmatpush1.bf16.msra.mxu0 0
  %168 = vmatprep.subr.bf16.mxu0 0
  %169 = vmatpush1.bf16.msra.mxu0 0
  %170 = vmatprep.subr.bf16.mxu0 0
  %171 = vmatpush1.bf16.msra.mxu0 0
  %172 = vmatprep.subr.bf16.mxu0 0
  %173 = vmatpush1.bf16.msra.mxu0 0
  %174 = vmatprep.subr.bf16.mxu0 0
  %175 = vmatpush1.bf16.msra.mxu0 0
  %176 = vmatprep.subr.bf16.mxu0 0
  %177 = vmatpush1.bf16.msra.mxu0 0
  %178 = vmatprep.subr.bf16.mxu0 0
  %179 = vmatpush1.bf16.msra.mxu0 0
  %180 = vmatprep.subr.bf16.mxu0 0
  %181 = vmatpush1.bf16.msra.mxu0 0
  %182 = vmatprep.mubr.bf16.mxu0 0
  %183 = vmatmul.mubr.bf16.gmra.mrb[0].mxu0 %v86
  %v184 = vpop.f32.mrb[0].mxu0
  %v185 = vadd.f32 %v52, %v184
  %v186 = vpop.f32.mrb[0].mxu0
  %v187 = vpop.f32.mrb[0].mxu0
  %v188 = vadd.f32 %v52, %v187
  %v189 = vpop.f32.mrb[0].mxu0
  %190 = vmatprep.mubr.bf16.mxu0 0
  %191 = vmatmul.mubr.bf16.gmra.mrb[0].mxu0 %v87
  %v192 = vpop.f32.mrb[0].mxu0
  %v193 = vadd.f32 %v52, %v192
  %v194 = vpop.f32.mrb[0].mxu0
  %v195 = vpop.f32.mrb[0].mxu0
  %v196 = vadd.f32 %v52, %v195
  %v197 = vpop.f32.mrb[0].mxu0
  %198 = vmatprep.mubr.bf16.mxu0 0
  %199 = vmatmul.mubr.bf16.gmra.mrb[0].mxu0 %v88
  %v200 = vpop.f32.mrb[0].mxu0
  %v201 = vadd.f32 %v52, %v200
  %v202 = vpop.f32.mrb[0].mxu0
  %v203 = vpop.f32.mrb[0].mxu0
  %v204 = vadd.f32 %v52, %v203
  %v205 = vpop.f32.mrb[0].mxu0
  %206 = vmatprep.mubr.bf16.mxu0 0
  %207 = vmatmul.mubr.bf16.gmra.mrb[0].mxu0 %v89
  %v208 = vpop.f32.mrb[0].mxu0
  %v209 = vadd.f32 %v52, %v208
  %v210 = vpop.f32.mrb[0].mxu0
  %v211 = vpop.f32.mrb[0].mxu0
  %v212 = vadd.f32 %v52, %v211
  %v213 = vpop.f32.mrb[0].mxu0
  %214 = vmatprep.mubr.bf16.mxu0 0
  %215 = vmatmul.mubr.bf16.gmra.mrb[0].mxu0 %v90
  %v216 = vpop.f32.mrb[0].mxu0
  %v217 = vadd.f32 %v52, %v216
  %v218 = vpop.f32.mrb[0].mxu0
  %v219 = vpop.f32.mrb[0].mxu0
  %v220 = vadd.f32 %v52, %v219
  %v221 = vpop.f32.mrb[0].mxu0
  %222 = vmatprep.mubr.bf16.mxu0 0
  %223 = vmatmul.mubr.bf16.gmra.mrb[0].mxu0 %v91
  %v224 = vpop.f32.mrb[0].mxu0
  %v225 = vadd.f32 %v52, %v224
  %v226 = vpop.f32.mrb[0].mxu0
  %v227 = vpop.f32.mrb[0].mxu0
  %v228 = vadd.f32 %v52, %v227
  %v229 = vpop.f32.mrb[0].mxu0
  %230 = vmatprep.mubr.bf16.mxu0 0
  %231 = vmatmul.mubr.bf16.gmra.mrb[0].mxu0 %v92
  %v232 = vpop.f32.mrb[0].mxu0
  %v233 = vadd.f32 %v52, %v232
  %v234 = vpop.f32.mrb[0].mxu0
  %v235 = vpop.f32.mrb[0].mxu0
  %v236 = vadd.f32 %v52, %v235
  %v237 = vpop.f32.mrb[0].mxu0
  %238 = vmatprep.mubr.bf16.mxu0 0
  %239 = vmatmul.mubr.bf16.gmra.mrb[0].mxu0 %v93
  %v240 = vpop.f32.mrb[0].mxu0
  %v241 = vadd.f32 %v52, %v240
  %v242 = vpop.f32.mrb[0].mxu0
  %v243 = vpop.f32.mrb[0].mxu0
  %v244 = vadd.f32 %v52, %v243
  %v245 = vpop.f32.mrb[0].mxu0
  %246 = vdwg.mxu0
  %247 = vst [vmem:[%s3] sm:$0xff] %v185
  %248 = vst [vmem:[%s3 + $0x8] sm:$0xff] %v188
  %249 = vst [vmem:[%s3 + $0x10] sm:$0xff] %v193
  %250 = vst [vmem:[%s3 + $0x18] sm:$0xff] %v196
  %251 = vst [vmem:[%s3 + $0x20] sm:$0xff] %v201
  %252 = vst [vmem:[%s3 + $0x28] sm:$0xff] %v204
  %253 = vst [vmem:[%s3 + $0x30] sm:$0xff] %v209
  %254 = vst [vmem:[%s3 + $0x38] sm:$0xff] %v212
  %255 = vst [vmem:[%s3 + $0x40] sm:$0xff] %v217
  %256 = vst [vmem:[%s3 + $0x48] sm:$0xff] %v220
  %257 = vst [vmem:[%s3 + $0x50] sm:$0xff] %v225
  %258 = vst [vmem:[%s3 + $0x58] sm:$0xff] %v228
  %259 = vst [vmem:[%s3 + $0x60] sm:$0xff] %v233
  %260 = vst [vmem:[%s3 + $0x68] sm:$0xff] %v236
  %261 = vst [vmem:[%s3 + $0x70] sm:$0xff] %v241
  %262 = vst [vmem:[%s3 + $0x78] sm:$0xff] %v244
  // Predicated region
  $region14: #{_lambda_.20} parent=0 // pred_check
    _
  $region15: #{_lambda_.20} parent=0 // pred_check_branch
    %264 = sbr.rel (0) target = $region17
  $region16: #{_lambda_.20} parent=0 // pred_region
    _
  $region17: #{_lambda_.20} parent=0 // pred_fallthru
    _
  // Predicated region
  $region18: #{_lambda_.20} parent=0 // pred_check
    _
  $region19: #{_lambda_.20} parent=0 // pred_check_branch
    %266 = sbr.rel (0) target = $region21
  $region20: #{_lambda_.20} parent=0 // pred_region
    _
  $region21: #{_lambda_.20} parent=0 // pred_fallthru
    _

// kernel: _lambda_.15
$region0: #{_lambda_.15}
  #allocation0 [shape = 'u32[]', space=smem, size = 0x4, offset = 0x4, fixed_abs, tag = 'smem constant byte address 0x4 - core index']
  #allocation1 [shape = 'u32[144,128]{1,0:T(1,128)}', space=vmem, size = 0x12000, scoped, tag = 'internal scratch']
  %s0 = inlined_call_operand.vmem [shape: bf16[128,1152], index: 0, kind: input, shape index: {}]
  %s1 = inlined_call_operand.vmem [shape: bf16[1152,128], index: 1, kind: input, shape index: {}]
  %s2 = inlined_call_operand.vmem [shape: f32[128,128], index: 2, kind: output, shape index: {0}]
  %s3 = inlined_call_operand.vmem [shape: f32[2,128], index: 3, kind: output, shape index: {1}]
  %4 = xla_tuple %s2, %s3
  %s5 = sld [smem:[#allocation0]]
  $region30: #{_lambda_.15} parent=0
    _
  %s7 = ssub.s32 1, %s5
  %s8 = scalar_select 0, %s7, %s5
  // Predicated region
  $region2: #{_lambda_.15} parent=0 // pred_check
    _
  $region3: #{_lambda_.15} parent=0 // pred_check_branch
    %10 = sbr.rel (0) target = $region5
  $region4: #{_lambda_.15} parent=0 // pred_region
    _
  $region5: #{_lambda_.15} parent=0 // pred_fallthru
    _
  // Predicated region
  $region6: #{_lambda_.15} parent=0 // pred_check
    _
  $region7: #{_lambda_.15} parent=0 // pred_check_branch
    %12 = sbr.rel (0) target = $region9
  $region8: #{_lambda_.15} parent=0 // pred_region
    _
  $region9: #{_lambda_.15} parent=0 // pred_fallthru
    _
  %v14 = vld [vmem:[%s0] sm:$0xff]
  %v15 = vld [vmem:[%s0 + $0x8] sm:$0xff]
  %v16 = vld [vmem:[%s0 + $0x10] sm:$0xff]
  %v17 = vld [vmem:[%s0 + $0x18] sm:$0xff]
  %v18 = vld [vmem:[%s0 + $0x20] sm:$0xf]
  %v19 = vld [vmem:[%s0 + $0x24] sm:$0xff]
  %v20 = vld [vmem:[%s0 + $0x2c] sm:$0xff]
  %v21 = vld [vmem:[%s0 + $0x34] sm:$0xff]
  %v22 = vld [vmem:[%s0 + $0x3c] sm:$0xff]
  %v23 = vld [vmem:[%s0 + $0x44] sm:$0xf]
  %v24 = vld [vmem:[%s0 + $0x48] sm:$0xff]
  %v25 = vld [vmem:[%s0 + $0x50] sm:$0xff]
  %v26 = vld [vmem:[%s0 + $0x58] sm:$0xff]
  %v27 = vld [vmem:[%s0 + $0x60] sm:$0xff]
  %v28 = vld [vmem:[%s0 + $0x68] sm:$0xf]
  %v29 = vld [vmem:[%s0 + $0x6c] sm:$0xff]
  %v30 = vld [vmem:[%s0 + $0x74] sm:$0xff]
  %v31 = vld [vmem:[%s0 + $0x7c] sm:$0xff]
  %v32 = vld [vmem:[%s0 + $0x84] sm:$0xff]
  %v33 = vld [vmem:[%s0 + $0x8c] sm:$0xf]
  %v34 = vld [vmem:[%s0 + $0x90] sm:$0xff]
  %v35 = vld [vmem:[%s0 + $0x98] sm:$0xff]
  %v36 = vld [vmem:[%s0 + $0xa0] sm:$0xff]
  %v37 = vld [vmem:[%s0 + $0xa8] sm:$0xff]
  %v38 = vld [vmem:[%s0 + $0xb0] sm:$0xf]
  %v39 = vld [vmem:[%s0 + $0xb4] sm:$0xff]
  %v40 = vld [vmem:[%s0 + $0xbc] sm:$0xff]
  %v41 = vld [vmem:[%s0 + $0xc4] sm:$0xff]
  %v42 = vld [vmem:[%s0 + $0xcc] sm:$0xff]
  %v43 = vld [vmem:[%s0 + $0xd4] sm:$0xf]
  %v44 = vld [vmem:[%s0 + $0xd8] sm:$0xff]
  %v45 = vld [vmem:[%s0 + $0xe0] sm:$0xff]
  %v46 = vld [vmem:[%s0 + $0xe8] sm:$0xff]
  %v47 = vld [vmem:[%s0 + $0xf0] sm:$0xff]
  %v48 = vld [vmem:[%s0 + $0xf8] sm:$0xf]
  %v49 = vld [vmem:[%s0 + $0xfc] sm:$0xff]
  %v50 = vld [vmem:[%s0 + $0x104] sm:$0xff]
  %v51 = vld [vmem:[%s0 + $0x10c] sm:$0xff]
  %v52 = vld [vmem:[%s0 + $0x114] sm:$0xff]
  %v53 = vld [vmem:[%s0 + $0x11c] sm:$0xf]
  %v54 = vld [vmem:[%s0 + $0x120] sm:$0xff]
  %v55 = vld [vmem:[%s0 + $0x128] sm:$0xff]
  %v56 = vld [vmem:[%s0 + $0x130] sm:$0xff]
  %v57 = vld [vmem:[%s0 + $0x138] sm:$0xff]
  %v58 = vld [vmem:[%s0 + $0x140] sm:$0xf]
  %v59 = vld [vmem:[%s0 + $0x144] sm:$0xff]
  %v60 = vld [vmem:[%s0 + $0x14c] sm:$0xff]
  %v61 = vld [vmem:[%s0 + $0x154] sm:$0xff]
  %v62 = vld [vmem:[%s0 + $0x15c] sm:$0xff]
  %v63 = vld [vmem:[%s0 + $0x164] sm:$0xf]
  %v64 = vld [vmem:[%s0 + $0x168] sm:$0xff]
  %v65 = vld [vmem:[%s0 + $0x170] sm:$0xff]
  %v66 = vld [vmem:[%s0 + $0x178] sm:$0xff]
  %v67 = vld [vmem:[%s0 + $0x180] sm:$0xff]
  %v68 = vld [vmem:[%s0 + $0x188] sm:$0xf]
  %v69 = vld [vmem:[%s0 + $0x18c] sm:$0xff]
  %v70 = vld [vmem:[%s0 + $0x194] sm:$0xff]
  %v71 = vld [vmem:[%s0 + $0x19c] sm:$0xff]
  %v72 = vld [vmem:[%s0 + $0x1a4] sm:$0xff]
  %v73 = vld [vmem:[%s0 + $0x1ac] sm:$0xf]
  %v74 = vld [vmem:[%s0 + $0x1b0] sm:$0xff]
  %v75 = vld [vmem:[%s0 + $0x1b8] sm:$0xff]
  %v76 = vld [vmem:[%s0 + $0x1c0] sm:$0xff]
  %v77 = vld [vmem:[%s0 + $0x1c8] sm:$0xff]
  %v78 = vld [vmem:[%s0 + $0x1d0] sm:$0xf]
  %v79 = vld [vmem:[%s0 + $0x1d4] sm:$0xff]
  %v80 = vld [vmem:[%s0 + $0x1dc] sm:$0xff]
  %v81 = vld [vmem:[%s0 + $0x1e4] sm:$0xff]
  %v82 = vld [vmem:[%s0 + $0x1ec] sm:$0xff]
  %v83 = vld [vmem:[%s0 + $0x1f4] sm:$0xf]
  %v84 = vld [vmem:[%s0 + $0x1f8] sm:$0xff]
  %v85 = vld [vmem:[%s0 + $0x200] sm:$0xff]
  %v86 = vld [vmem:[%s0 + $0x208] sm:$0xff]
  %v87 = vld [vmem:[%s0 + $0x210] sm:$0xff]
  %v88 = vld [vmem:[%s0 + $0x218] sm:$0xf]
  %v89 = vld [vmem:[%s0 + $0x21c] sm:$0xff]
  %v90 = vld [vmem:[%s0 + $0x224] sm:$0xff]
  %v91 = vld [vmem:[%s0 + $0x22c] sm:$0xff]
  %v92 = vld [vmem:[%s0 + $0x234] sm:$0xff]
  %v93 = vld [vmem:[%s0 + $0x23c] sm:$0xf]
  %v94 = vld [vmem:[%s1] sm:$0xf]
  %v95 = vld [vmem:[%s1 + $0x4] sm:$0xf]
  %v96 = vld [vmem:[%s1 + $0x8] sm:$0xf]
  %v97 = vld [vmem:[%s1 + $0xc] sm:$0xf]
  %v98 = vld [vmem:[%s1 + $0x10] sm:$0xf]
  %v99 = vld [vmem:[%s1 + $0x14] sm:$0xf]
  %v100 = vld [vmem:[%s1 + $0x18] sm:$0xf]
  %v101 = vld [vmem:[%s1 + $0x1c] sm:$0xf]
  %v102 = vld [vmem:[%s1 + $0x20] sm:$0xf]
  %v103 = vld [vmem:[%s1 + $0x24] sm:$0xf]
  %v104 = vld [vmem:[%s1 + $0x28] sm:$0xf]
  %v105 = vld [vmem:[%s1 + $0x2c] sm:$0xf]
  %v106 = vld [vmem:[%s1 + $0x30] sm:$0xf]
  %v107 = vld [vmem:[%s1 + $0x34] sm:$0xf]
  %v108 = vld [vmem:[%s1 + $0x38] sm:$0xf]
  %v109 = vld [vmem:[%s1 + $0x3c] sm:$0xf]
  %v110 = vld [vmem:[%s1 + $0x40] sm:$0xf]
  %v111 = vld [vmem:[%s1 + $0x44] sm:$0xf]
  %v112 = vld [vmem:[%s1 + $0x48] sm:$0xf]
  %v113 = vld [vmem:[%s1 + $0x4c] sm:$0xf]
  %v114 = vld [vmem:[%s1 + $0x50] sm:$0xf]
  %v115 = vld [vmem:[%s1 + $0x54] sm:$0xf]
  %v116 = vld [vmem:[%s1 + $0x58] sm:$0xf]
  %v117 = vld [vmem:[%s1 + $0x5c] sm:$0xf]
  %v118 = vld [vmem:[%s1 + $0x60] sm:$0xf]
  %v119 = vld [vmem:[%s1 + $0x64] sm:$0xf]
  %v120 = vld [vmem:[%s1 + $0x68] sm:$0xf]
  %v121 = vld [vmem:[%s1 + $0x6c] sm:$0xf]
  %v122 = vld [vmem:[%s1 + $0x70] sm:$0xf]
  %v123 = vld [vmem:[%s1 + $0x74] sm:$0xf]
  %v124 = vld [vmem:[%s1 + $0x78] sm:$0xf]
  %v125 = vld [vmem:[%s1 + $0x7c] sm:$0xf]
  %v126 = vld [vmem:[%s1 + $0x80] sm:$0xf]
  %v127 = vld [vmem:[%s1 + $0x84] sm:$0xf]
  %v128 = vld [vmem:[%s1 + $0x88] sm:$0xf]
  %v129 = vld [vmem:[%s1 + $0x8c] sm:$0xf]
  %v130 = vld [vmem:[%s1 + $0x90] sm:$0xf]
  %v131 = vld [vmem:[%s1 + $0x94] sm:$0xf]
  %v132 = vld [vmem:[%s1 + $0x98] sm:$0xf]
  %v133 = vld [vmem:[%s1 + $0x9c] sm:$0xf]
  %v134 = vld [vmem:[%s1 + $0xa0] sm:$0xf]
  %v135 = vld [vmem:[%s1 + $0xa4] sm:$0xf]
  %v136 = vld [vmem:[%s1 + $0xa8] sm:$0xf]
  %v137 = vld [vmem:[%s1 + $0xac] sm:$0xf]
  %v138 = vld [vmem:[%s1 + $0xb0] sm:$0xf]
  %v139 = vld [vmem:[%s1 + $0xb4] sm:$0xf]
  %v140 = vld [vmem:[%s1 + $0xb8] sm:$0xf]
  %v141 = vld [vmem:[%s1 + $0xbc] sm:$0xf]
  %v142 = vld [vmem:[%s1 + $0xc0] sm:$0xf]
  %v143 = vld [vmem:[%s1 + $0xc4] sm:$0xf]
  %v144 = vld [vmem:[%s1 + $0xc8] sm:$0xf]
  %v145 = vld [vmem:[%s1 + $0xcc] sm:$0xf]
  %v146 = vld [vmem:[%s1 + $0xd0] sm:$0xf]
  %v147 = vld [vmem:[%s1 + $0xd4] sm:$0xf]
  %v148 = vld [vmem:[%s1 + $0xd8] sm:$0xf]
  %v149 = vld [vmem:[%s1 + $0xdc] sm:$0xf]
  %v150 = vld [vmem:[%s1 + $0xe0] sm:$0xf]
  %v151 = vld [vmem:[%s1 + $0xe4] sm:$0xf]
  %v152 = vld [vmem:[%s1 + $0xe8] sm:$0xf]
  %v153 = vld [vmem:[%s1 + $0xec] sm:$0xf]
  %v154 = vld [vmem:[%s1 + $0xf0] sm:$0xf]
  %v155 = vld [vmem:[%s1 + $0xf4] sm:$0xf]
  %v156 = vld [vmem:[%s1 + $0xf8] sm:$0xf]
  %v157 = vld [vmem:[%s1 + $0xfc] sm:$0xf]
  %v158 = vld [vmem:[%s1 + $0x100] sm:$0xf]
  %v159 = vld [vmem:[%s1 + $0x104] sm:$0xf]
  %v160 = vld [vmem:[%s1 + $0x108] sm:$0xf]
  %v161 = vld [vmem:[%s1 + $0x10c] sm:$0xf]
  %v162 = vld [vmem:[%s1 + $0x110] sm:$0xf]
  %v163 = vld [vmem:[%s1 + $0x114] sm:$0xf]
  %v164 = vld [vmem:[%s1 + $0x118] sm:$0xf]
  %v165 = vld [vmem:[%s1 + $0x11c] sm:$0xf]
  %v166 = vld [vmem:[%s1 + $0x120] sm:$0xf]
  %v167 = vld [vmem:[%s1 + $0x124] sm:$0xf]
  %v168 = vld [vmem:[%s1 + $0x128] sm:$0xf]
  %v169 = vld [vmem:[%s1 + $0x12c] sm:$0xf]
  %v170 = vld [vmem:[%s1 + $0x130] sm:$0xf]
  %v171 = vld [vmem:[%s1 + $0x134] sm:$0xf]
  %v172 = vld [vmem:[%s1 + $0x138] sm:$0xf]
  %v173 = vld [vmem:[%s1 + $0x13c] sm:$0xf]
  %v174 = vld [vmem:[%s1 + $0x140] sm:$0xf]
  %v175 = vld [vmem:[%s1 + $0x144] sm:$0xf]
  %v176 = vld [vmem:[%s1 + $0x148] sm:$0xf]
  %v177 = vld [vmem:[%s1 + $0x14c] sm:$0xf]
  %v178 = vld [vmem:[%s1 + $0x150] sm:$0xf]
  %v179 = vld [vmem:[%s1 + $0x154] sm:$0xf]
  %v180 = vld [vmem:[%s1 + $0x158] sm:$0xf]
  %v181 = vld [vmem:[%s1 + $0x15c] sm:$0xf]
  %v182 = vld [vmem:[%s1 + $0x160] sm:$0xf]
  %v183 = vld [vmem:[%s1 + $0x164] sm:$0xf]
  %v184 = vld [vmem:[%s1 + $0x168] sm:$0xf]
  %v185 = vld [vmem:[%s1 + $0x16c] sm:$0xf]
  %v186 = vld [vmem:[%s1 + $0x170] sm:$0xf]
  %v187 = vld [vmem:[%s1 + $0x174] sm:$0xf]
  %v188 = vld [vmem:[%s1 + $0x178] sm:$0xf]
  %v189 = vld [vmem:[%s1 + $0x17c] sm:$0xf]
  %v190 = vld [vmem:[%s1 + $0x180] sm:$0xf]
  %v191 = vld [vmem:[%s1 + $0x184] sm:$0xf]
  %v192 = vld [vmem:[%s1 + $0x188] sm:$0xf]
  %v193 = vld [vmem:[%s1 + $0x18c] sm:$0xf]
  %v194 = vld [vmem:[%s1 + $0x190] sm:$0xf]
  %v195 = vld [vmem:[%s1 + $0x194] sm:$0xf]
  %v196 = vld [vmem:[%s1 + $0x198] sm:$0xf]
  %v197 = vld [vmem:[%s1 + $0x19c] sm:$0xf]
  %v198 = vld [vmem:[%s1 + $0x1a0] sm:$0xf]
  %v199 = vld [vmem:[%s1 + $0x1a4] sm:$0xf]
  %v200 = vld [vmem:[%s1 + $0x1a8] sm:$0xf]
  %v201 = vld [vmem:[%s1 + $0x1ac] sm:$0xf]
  %v202 = vld [vmem:[%s1 + $0x1b0] sm:$0xf]
  %v203 = vld [vmem:[%s1 + $0x1b4] sm:$0xf]
  %v204 = vld [vmem:[%s1 + $0x1b8] sm:$0xf]
  %v205 = vld [vmem:[%s1 + $0x1bc] sm:$0xf]
  %v206 = vld [vmem:[%s1 + $0x1c0] sm:$0xf]
  %v207 = vld [vmem:[%s1 + $0x1c4] sm:$0xf]
  %v208 = vld [vmem:[%s1 + $0x1c8] sm:$0xf]
  %v209 = vld [vmem:[%s1 + $0x1cc] sm:$0xf]
  %v210 = vld [vmem:[%s1 + $0x1d0] sm:$0xf]
  %v211 = vld [vmem:[%s1 + $0x1d4] sm:$0xf]
  %v212 = vld [vmem:[%s1 + $0x1d8] sm:$0xf]
  %v213 = vld [vmem:[%s1 + $0x1dc] sm:$0xf]
  %v214 = vld [vmem:[%s1 + $0x1e0] sm:$0xf]
  %v215 = vld [vmem:[%s1 + $0x1e4] sm:$0xf]
  %v216 = vld [vmem:[%s1 + $0x1e8] sm:$0xf]
  %v217 = vld [vmem:[%s1 + $0x1ec] sm:$0xf]
  %v218 = vld [vmem:[%s1 + $0x1f0] sm:$0xf]
  %v219 = vld [vmem:[%s1 + $0x1f4] sm:$0xf]
  %v220 = vld [vmem:[%s1 + $0x1f8] sm:$0xf]
  %v221 = vld [vmem:[%s1 + $0x1fc] sm:$0xf]
  %v222 = vld [vmem:[%s1 + $0x200] sm:$0xf]
  %v223 = vld [vmem:[%s1 + $0x204] sm:$0xf]
  %v224 = vld [vmem:[%s1 + $0x208] sm:$0xf]
  %v225 = vld [vmem:[%s1 + $0x20c] sm:$0xf]
  %v226 = vld [vmem:[%s1 + $0x210] sm:$0xf]
  %v227 = vld [vmem:[%s1 + $0x214] sm:$0xf]
  %v228 = vld [vmem:[%s1 + $0x218] sm:$0xf]
  %v229 = vld [vmem:[%s1 + $0x21c] sm:$0xf]
  %v230 = vld [vmem:[%s1 + $0x220] sm:$0xf]
  %v231 = vld [vmem:[%s1 + $0x224] sm:$0xf]
  %v232 = vld [vmem:[%s1 + $0x228] sm:$0xf]
  %v233 = vld [vmem:[%s1 + $0x22c] sm:$0xf]
  %v234 = vld [vmem:[%s1 + $0x230] sm:$0xf]
  %v235 = vld [vmem:[%s1 + $0x234] sm:$0xf]
  %v236 = vld [vmem:[%s1 + $0x238] sm:$0xf]
  %v237 = vld [vmem:[%s1 + $0x23c] sm:$0xf]
  %v318 = vunpack.c.l.b16 %v14
  %v319 = vunpack.c.h.b16 %v14
  %v320 = vunpack.c.l.b16 %v15
  %v321 = vunpack.c.h.b16 %v15
  %v322 = vunpack.c.l.b16 %v16
  %v323 = vunpack.c.h.b16 %v16
  %v324 = vunpack.c.l.b16 %v17
  %v325 = vunpack.c.h.b16 %v17
  %v326 = vunpack.c.l.b16 %v18
  %v327 = vunpack.c.l.b16 %v19
  %v328 = vunpack.c.h.b16 %v19
  %v329 = vunpack.c.l.b16 %v20
  %v330 = vunpack.c.h.b16 %v20
  %v331 = vunpack.c.l.b16 %v21
  %v332 = vunpack.c.h.b16 %v21
  %v333 = vunpack.c.l.b16 %v22
  %v334 = vunpack.c.h.b16 %v22
  %v335 = vunpack.c.l.b16 %v23
  %v336 = vunpack.c.l.b16 %v24
  %v337 = vunpack.c.h.b16 %v24
  %v338 = vunpack.c.l.b16 %v25
  %v339 = vunpack.c.h.b16 %v25
  %v340 = vunpack.c.l.b16 %v26
  %v341 = vunpack.c.h.b16 %v26
  %v342 = vunpack.c.l.b16 %v27
  %v343 = vunpack.c.h.b16 %v27
  %v344 = vunpack.c.l.b16 %v28
  %v345 = vunpack.c.l.b16 %v29
  %v346 = vunpack.c.h.b16 %v29
  %v347 = vunpack.c.l.b16 %v30
  %v348 = vunpack.c.h.b16 %v30
  %v349 = vunpack.c.l.b16 %v31
  %v350 = vunpack.c.h.b16 %v31
  %v351 = vunpack.c.l.b16 %v32
  %v352 = vunpack.c.h.b16 %v32
  %v353 = vunpack.c.l.b16 %v33
  %v354 = vunpack.c.l.b16 %v34
  %v355 = vunpack.c.h.b16 %v34
  %v356 = vunpack.c.l.b16 %v35
  %v357 = vunpack.c.h.b16 %v35
  %v358 = vunpack.c.l.b16 %v36
  %v359 = vunpack.c.h.b16 %v36
  %v360 = vunpack.c.l.b16 %v37
  %v361 = vunpack.c.h.b16 %v37
  %v362 = vunpack.c.l.b16 %v38
  %v363 = vunpack.c.l.b16 %v39
  %v364 = vunpack.c.h.b16 %v39
  %v365 = vunpack.c.l.b16 %v40
  %v366 = vunpack.c.h.b16 %v40
  %v367 = vunpack.c.l.b16 %v41
  %v368 = vunpack.c.h.b16 %v41
  %v369 = vunpack.c.l.b16 %v42
  %v370 = vunpack.c.h.b16 %v42
  %v371 = vunpack.c.l.b16 %v43
  %v372 = vunpack.c.l.b16 %v44
  %v373 = vunpack.c.h.b16 %v44
  %v374 = vunpack.c.l.b16 %v45
  %v375 = vunpack.c.h.b16 %v45
  %v376 = vunpack.c.l.b16 %v46
  %v377 = vunpack.c.h.b16 %v46
  %v378 = vunpack.c.l.b16 %v47
  %v379 = vunpack.c.h.b16 %v47
  %v380 = vunpack.c.l.b16 %v48
  %v381 = vunpack.c.l.b16 %v49
  %v382 = vunpack.c.h.b16 %v49
  %v383 = vunpack.c.l.b16 %v50
  %v384 = vunpack.c.h.b16 %v50
  %v385 = vunpack.c.l.b16 %v51
  %v386 = vunpack.c.h.b16 %v51
  %v387 = vunpack.c.l.b16 %v52
  %v388 = vunpack.c.h.b16 %v52
  %v389 = vunpack.c.l.b16 %v53
  %v390 = vunpack.c.l.b16 %v54
  %v391 = vunpack.c.h.b16 %v54
  %v392 = vunpack.c.l.b16 %v55
  %v393 = vunpack.c.h.b16 %v55
  %v394 = vunpack.c.l.b16 %v56
  %v395 = vunpack.c.h.b16 %v56
  %v396 = vunpack.c.l.b16 %v57
  %v397 = vunpack.c.h.b16 %v57
  %v398 = vunpack.c.l.b16 %v58
  %v399 = vunpack.c.l.b16 %v59
  %v400 = vunpack.c.h.b16 %v59
  %v401 = vunpack.c.l.b16 %v60
  %v402 = vunpack.c.h.b16 %v60
  %v403 = vunpack.c.l.b16 %v61
  %v404 = vunpack.c.h.b16 %v61
  %v405 = vunpack.c.l.b16 %v62
  %v406 = vunpack.c.h.b16 %v62
  %v407 = vunpack.c.l.b16 %v63
  %v408 = vunpack.c.l.b16 %v64
  %v409 = vunpack.c.h.b16 %v64
  %v410 = vunpack.c.l.b16 %v65
  %v411 = vunpack.c.h.b16 %v65
  %v412 = vunpack.c.l.b16 %v66
  %v413 = vunpack.c.h.b16 %v66
  %v414 = vunpack.c.l.b16 %v67
  %v415 = vunpack.c.h.b16 %v67
  %v416 = vunpack.c.l.b16 %v68
  %v417 = vunpack.c.l.b16 %v69
  %v418 = vunpack.c.h.b16 %v69
  %v419 = vunpack.c.l.b16 %v70
  %v420 = vunpack.c.h.b16 %v70
  %v421 = vunpack.c.l.b16 %v71
  %v422 = vunpack.c.h.b16 %v71
  %v423 = vunpack.c.l.b16 %v72
  %v424 = vunpack.c.h.b16 %v72
  %v425 = vunpack.c.l.b16 %v73
  %v426 = vunpack.c.l.b16 %v74
  %v427 = vunpack.c.h.b16 %v74
  %v428 = vunpack.c.l.b16 %v75
  %v429 = vunpack.c.h.b16 %v75
  %v430 = vunpack.c.l.b16 %v76
  %v431 = vunpack.c.h.b16 %v76
  %v432 = vunpack.c.l.b16 %v77
  %v433 = vunpack.c.h.b16 %v77
  %v434 = vunpack.c.l.b16 %v78
  %v435 = vunpack.c.l.b16 %v79
  %v436 = vunpack.c.h.b16 %v79
  %v437 = vunpack.c.l.b16 %v80
  %v438 = vunpack.c.h.b16 %v80
  %v439 = vunpack.c.l.b16 %v81
  %v440 = vunpack.c.h.b16 %v81
  %v441 = vunpack.c.l.b16 %v82
  %v442 = vunpack.c.h.b16 %v82
  %v443 = vunpack.c.l.b16 %v83
  %v444 = vunpack.c.l.b16 %v84
  %v445 = vunpack.c.h.b16 %v84
  %v446 = vunpack.c.l.b16 %v85
  %v447 = vunpack.c.h.b16 %v85
  %v448 = vunpack.c.l.b16 %v86
  %v449 = vunpack.c.h.b16 %v86
  %v450 = vunpack.c.l.b16 %v87
  %v451 = vunpack.c.h.b16 %v87
  %v452 = vunpack.c.l.b16 %v88
  %v453 = vunpack.c.l.b16 %v89
  %v454 = vunpack.c.h.b16 %v89
  %v455 = vunpack.c.l.b16 %v90
  %v456 = vunpack.c.h.b16 %v90
  %v457 = vunpack.c.l.b16 %v91
  %v458 = vunpack.c.h.b16 %v91
  %v459 = vunpack.c.l.b16 %v92
  %v460 = vunpack.c.h.b16 %v92
  %v461 = vunpack.c.l.b16 %v93
  %v462 = vpack.c.b16 %v327, %v318
  %v463 = vpack.c.b16 %v328, %v319
  %v464 = vpack.c.b16 %v329, %v320
  %v465 = vpack.c.b16 %v330, %v321
  %v466 = vpack.c.b16 %v331, %v322
  %v467 = vpack.c.b16 %v332, %v323
  %v468 = vpack.c.b16 %v333, %v324
  %v469 = vpack.c.b16 %v334, %v325
  %v470 = vpack.c.b16 %v335, %v326
  %v471 = vpack.c.b16 %v345, %v336
  %v472 = vpack.c.b16 %v346, %v337
  %v473 = vpack.c.b16 %v347, %v338
  %v474 = vpack.c.b16 %v348, %v339
  %v475 = vpack.c.b16 %v349, %v340
  %v476 = vpack.c.b16 %v350, %v341
  %v477 = vpack.c.b16 %v351, %v342
  %v478 = vpack.c.b16 %v352, %v343
  %v479 = vpack.c.b16 %v353, %v344
  %v480 = vpack.c.b16 %v363, %v354
  %v481 = vpack.c.b16 %v364, %v355
  %v482 = vpack.c.b16 %v365, %v356
  %v483 = vpack.c.b16 %v366, %v357
  %v484 = vpack.c.b16 %v367, %v358
  %v485 = vpack.c.b16 %v368, %v359
  %v486 = vpack.c.b16 %v369, %v360
  %v487 = vpack.c.b16 %v370, %v361
  %v488 = vpack.c.b16 %v371, %v362
  %v489 = vpack.c.b16 %v381, %v372
  %v490 = vpack.c.b16 %v382, %v373
  %v491 = vpack.c.b16 %v383, %v374
  %v492 = vpack.c.b16 %v384, %v375
  %v493 = vpack.c.b16 %v385, %v376
  %v494 = vpack.c.b16 %v386, %v377
  %v495 = vpack.c.b16 %v387, %v378
  %v496 = vpack.c.b16 %v388, %v379
  %v497 = vpack.c.b16 %v389, %v380
  %v498 = vpack.c.b16 %v399, %v390
  %v499 = vpack.c.b16 %v400, %v391
  %v500 = vpack.c.b16 %v401, %v392
  %v501 = vpack.c.b16 %v402, %v393
  %v502 = vpack.c.b16 %v403, %v394
  %v503 = vpack.c.b16 %v404, %v395
  %v504 = vpack.c.b16 %v405, %v396
  %v505 = vpack.c.b16 %v406, %v397
  %v506 = vpack.c.b16 %v407, %v398
  %v507 = vpack.c.b16 %v417, %v408
  %v508 = vpack.c.b16 %v418, %v409
  %v509 = vpack.c.b16 %v419, %v410
  %v510 = vpack.c.b16 %v420, %v411
  %v511 = vpack.c.b16 %v421, %v412
  %v512 = vpack.c.b16 %v422, %v413
  %v513 = vpack.c.b16 %v423, %v414
  %v514 = vpack.c.b16 %v424, %v415
  %v515 = vpack.c.b16 %v425, %v416
  %v516 = vpack.c.b16 %v435, %v426
  %v517 = vpack.c.b16 %v436, %v427
  %v518 = vpack.c.b16 %v437, %v428
  %v519 = vpack.c.b16 %v438, %v429
  %v520 = vpack.c.b16 %v439, %v430
  %v521 = vpack.c.b16 %v440, %v431
  %v522 = vpack.c.b16 %v441, %v432
  %v523 = vpack.c.b16 %v442, %v433
  %v524 = vpack.c.b16 %v443, %v434
  %v525 = vpack.c.b16 %v453, %v444
  %v526 = vpack.c.b16 %v454, %v445
  %v527 = vpack.c.b16 %v455, %v446
  %v528 = vpack.c.b16 %v456, %v447
  %v529 = vpack.c.b16 %v457, %v448
  %v530 = vpack.c.b16 %v458, %v449
  %v531 = vpack.c.b16 %v459, %v450
  %v532 = vpack.c.b16 %v460, %v451
  %v533 = vpack.c.b16 %v461, %v452
  %v750 = vunpack.c.l.b16 %v94
  %v751 = vunpack.c.l.b16 %v95
  %v752 = vunpack.c.l.b16 %v96
  %v753 = vunpack.c.l.b16 %v97
  %v754 = vunpack.c.l.b16 %v98
  %v755 = vunpack.c.l.b16 %v99
  %v756 = vunpack.c.l.b16 %v100
  %v757 = vunpack.c.l.b16 %v101
  %v758 = vunpack.c.l.b16 %v102
  %v759 = vunpack.c.l.b16 %v103
  %v760 = vunpack.c.l.b16 %v104
  %v761 = vunpack.c.l.b16 %v105
  %v762 = vunpack.c.l.b16 %v106
  %v763 = vunpack.c.l.b16 %v107
  %v764 = vunpack.c.l.b16 %v108
  %v765 = vunpack.c.l.b16 %v109
  %v766 = vunpack.c.l.b16 %v110
  %v767 = vunpack.c.l.b16 %v111
  %v768 = vunpack.c.l.b16 %v112
  %v769 = vunpack.c.l.b16 %v113
  %v770 = vunpack.c.l.b16 %v114
  %v771 = vunpack.c.l.b16 %v115
  %v772 = vunpack.c.l.b16 %v116
  %v773 = vunpack.c.l.b16 %v117
  %v774 = vunpack.c.l.b16 %v118
  %v775 = vunpack.c.l.b16 %v119
  %v776 = vunpack.c.l.b16 %v120
  %v777 = vunpack.c.l.b16 %v121
  %v778 = vunpack.c.l.b16 %v122
  %v779 = vunpack.c.l.b16 %v123
  %v780 = vunpack.c.l.b16 %v124
  %v781 = vunpack.c.l.b16 %v125
  %v782 = vunpack.c.l.b16 %v126
  %v783 = vunpack.c.l.b16 %v127
  %v784 = vunpack.c.l.b16 %v128
  %v785 = vunpack.c.l.b16 %v129
  %v786 = vunpack.c.l.b16 %v130
  %v787 = vunpack.c.l.b16 %v131
  %v788 = vunpack.c.l.b16 %v132
  %v789 = vunpack.c.l.b16 %v133
  %v790 = vunpack.c.l.b16 %v134
  %v791 = vunpack.c.l.b16 %v135
  %v792 = vunpack.c.l.b16 %v136
  %v793 = vunpack.c.l.b16 %v137
  %v794 = vunpack.c.l.b16 %v138
  %v795 = vunpack.c.l.b16 %v139
  %v796 = vunpack.c.l.b16 %v140
  %v797 = vunpack.c.l.b16 %v141
  %v798 = vunpack.c.l.b16 %v142
  %v799 = vunpack.c.l.b16 %v143
  %v800 = vunpack.c.l.b16 %v144
  %v801 = vunpack.c.l.b16 %v145
  %v802 = vunpack.c.l.b16 %v146
  %v803 = vunpack.c.l.b16 %v147
  %v804 = vunpack.c.l.b16 %v148
  %v805 = vunpack.c.l.b16 %v149
  %v806 = vunpack.c.l.b16 %v150
  %v807 = vunpack.c.l.b16 %v151
  %v808 = vunpack.c.l.b16 %v152
  %v809 = vunpack.c.l.b16 %v153
  %v810 = vunpack.c.l.b16 %v154
  %v811 = vunpack.c.l.b16 %v155
  %v812 = vunpack.c.l.b16 %v156
  %v813 = vunpack.c.l.b16 %v157
  %v814 = vunpack.c.l.b16 %v158
  %v815 = vunpack.c.l.b16 %v159
  %v816 = vunpack.c.l.b16 %v160
  %v817 = vunpack.c.l.b16 %v161
  %v818 = vunpack.c.l.b16 %v162
  %v819 = vunpack.c.l.b16 %v163
  %v820 = vunpack.c.l.b16 %v164
  %v821 = vunpack.c.l.b16 %v165
  %v822 = vunpack.c.l.b16 %v166
  %v823 = vunpack.c.l.b16 %v167
  %v824 = vunpack.c.l.b16 %v168
  %v825 = vunpack.c.l.b16 %v169
  %v826 = vunpack.c.l.b16 %v170
  %v827 = vunpack.c.l.b16 %v171
  %v828 = vunpack.c.l.b16 %v172
  %v829 = vunpack.c.l.b16 %v173
  %v830 = vunpack.c.l.b16 %v174
  %v831 = vunpack.c.l.b16 %v175
  %v832 = vunpack.c.l.b16 %v176
  %v833 = vunpack.c.l.b16 %v177
  %v834 = vunpack.c.l.b16 %v178
  %v835 = vunpack.c.l.b16 %v179
  %v836 = vunpack.c.l.b16 %v180
  %v837 = vunpack.c.l.b16 %v181
  %v838 = vunpack.c.l.b16 %v182
  %v839 = vunpack.c.l.b16 %v183
  %v840 = vunpack.c.l.b16 %v184
  %v841 = vunpack.c.l.b16 %v185
  %v842 = vunpack.c.l.b16 %v186
  %v843 = vunpack.c.l.b16 %v187
  %v844 = vunpack.c.l.b16 %v188
  %v845 = vunpack.c.l.b16 %v189
  %v846 = vunpack.c.l.b16 %v190
  %v847 = vunpack.c.l.b16 %v191
  %v848 = vunpack.c.l.b16 %v192
  %v849 = vunpack.c.l.b16 %v193
  %v850 = vunpack.c.l.b16 %v194
  %v851 = vunpack.c.l.b16 %v195
  %v852 = vunpack.c.l.b16 %v196
  %v853 = vunpack.c.l.b16 %v197
  %v854 = vunpack.c.l.b16 %v198
  %v855 = vunpack.c.l.b16 %v199
  %v856 = vunpack.c.l.b16 %v200
  %v857 = vunpack.c.l.b16 %v201
  %v858 = vunpack.c.l.b16 %v202
  %v859 = vunpack.c.l.b16 %v203
  %v860 = vunpack.c.l.b16 %v204
  %v861 = vunpack.c.l.b16 %v205
  %v862 = vunpack.c.l.b16 %v206
  %v863 = vunpack.c.l.b16 %v207
  %v864 = vunpack.c.l.b16 %v208
  %v865 = vunpack.c.l.b16 %v209
  %v866 = vunpack.c.l.b16 %v210
  %v867 = vunpack.c.l.b16 %v211
  %v868 = vunpack.c.l.b16 %v212
  %v869 = vunpack.c.l.b16 %v213
  %v870 = vunpack.c.l.b16 %v214
  %v871 = vunpack.c.l.b16 %v215
  %v872 = vunpack.c.l.b16 %v216
  %v873 = vunpack.c.l.b16 %v217
  %v874 = vunpack.c.l.b16 %v218
  %v875 = vunpack.c.l.b16 %v219
  %v876 = vunpack.c.l.b16 %v220
  %v877 = vunpack.c.l.b16 %v221
  %v878 = vunpack.c.l.b16 %v222
  %v879 = vunpack.c.l.b16 %v223
  %v880 = vunpack.c.l.b16 %v224
  %v881 = vunpack.c.l.b16 %v225
  %v882 = vunpack.c.l.b16 %v226
  %v883 = vunpack.c.l.b16 %v227
  %v884 = vunpack.c.l.b16 %v228
  %v885 = vunpack.c.l.b16 %v229
  %v886 = vunpack.c.l.b16 %v230
  %v887 = vunpack.c.l.b16 %v231
  %v888 = vunpack.c.l.b16 %v232
  %v889 = vunpack.c.l.b16 %v233
  %v890 = vunpack.c.l.b16 %v234
  %v891 = vunpack.c.l.b16 %v235
  %v892 = vunpack.c.l.b16 %v236
  %v893 = vunpack.c.l.b16 %v237
  %v894 = vpack.c.b16 %v751, %v750
  %v895 = vpack.c.b16 %v753, %v752
  %v896 = vpack.c.b16 %v755, %v754
  %v897 = vpack.c.b16 %v757, %v756
  %v898 = vpack.c.b16 %v759, %v758
  %v899 = vpack.c.b16 %v761, %v760
  %v900 = vpack.c.b16 %v763, %v762
  %v901 = vpack.c.b16 %v765, %v764
  %v902 = vpack.c.b16 %v767, %v766
  %v903 = vpack.c.b16 %v769, %v768
  %v904 = vpack.c.b16 %v771, %v770
  %v905 = vpack.c.b16 %v773, %v772
  %v906 = vpack.c.b16 %v775, %v774
  %v907 = vpack.c.b16 %v777, %v776
  %v908 = vpack.c.b16 %v779, %v778
  %v909 = vpack.c.b16 %v781, %v780
  %v910 = vpack.c.b16 %v783, %v782
  %v911 = vpack.c.b16 %v785, %v784
  %v912 = vpack.c.b16 %v787, %v786
  %v913 = vpack.c.b16 %v789, %v788
  %v914 = vpack.c.b16 %v791, %v790
  %v915 = vpack.c.b16 %v793, %v792
  %v916 = vpack.c.b16 %v795, %v794
  %v917 = vpack.c.b16 %v797, %v796
  %v918 = vpack.c.b16 %v799, %v798
  %v919 = vpack.c.b16 %v801, %v800
  %v920 = vpack.c.b16 %v803, %v802
  %v921 = vpack.c.b16 %v805, %v804
  %v922 = vpack.c.b16 %v807, %v806
  %v923 = vpack.c.b16 %v809, %v808
  %v924 = vpack.c.b16 %v811, %v810
  %v925 = vpack.c.b16 %v813, %v812
  %v926 = vpack.c.b16 %v815, %v814
  %v927 = vpack.c.b16 %v817, %v816
  %v928 = vpack.c.b16 %v819, %v818
  %v929 = vpack.c.b16 %v821, %v820
  %v930 = vpack.c.b16 %v823, %v822
  %v931 = vpack.c.b16 %v825, %v824
  %v932 = vpack.c.b16 %v827, %v826
  %v933 = vpack.c.b16 %v829, %v828
  %v934 = vpack.c.b16 %v831, %v830
  %v935 = vpack.c.b16 %v833, %v832
  %v936 = vpack.c.b16 %v835, %v834
  %v937 = vpack.c.b16 %v837, %v836
  %v938 = vpack.c.b16 %v839, %v838
  %v939 = vpack.c.b16 %v841, %v840
  %v940 = vpack.c.b16 %v843, %v842
  %v941 = vpack.c.b16 %v845, %v844
  %v942 = vpack.c.b16 %v847, %v846
  %v943 = vpack.c.b16 %v849, %v848
  %v944 = vpack.c.b16 %v851, %v850
  %v945 = vpack.c.b16 %v853, %v852
  %v946 = vpack.c.b16 %v855, %v854
  %v947 = vpack.c.b16 %v857, %v856
  %v948 = vpack.c.b16 %v859, %v858
  %v949 = vpack.c.b16 %v861, %v860
  %v950 = vpack.c.b16 %v863, %v862
  %v951 = vpack.c.b16 %v865, %v864
  %v952 = vpack.c.b16 %v867, %v866
  %v953 = vpack.c.b16 %v869, %v868
  %v954 = vpack.c.b16 %v871, %v870
  %v955 = vpack.c.b16 %v873, %v872
  %v956 = vpack.c.b16 %v875, %v874
  %v957 = vpack.c.b16 %v877, %v876
  %v958 = vpack.c.b16 %v879, %v878
  %v959 = vpack.c.b16 %v881, %v880
  %v960 = vpack.c.b16 %v883, %v882
  %v961 = vpack.c.b16 %v885, %v884
  %v962 = vpack.c.b16 %v887, %v886
  %v963 = vpack.c.b16 %v889, %v888
  %v964 = vpack.c.b16 %v891, %v890
  %v965 = vpack.c.b16 %v893, %v892
  %1038 = vmatprep.subr.bf16.mxu0 0
  %1039 = vmatpush1.bf16.msra.mxu0 %v894
  %1040 = vmatprep.subr.bf16.mxu0 0
  %1041 = vmatpush1.bf16.msra.mxu0 %v895
  %1042 = vmatprep.subr.bf16.mxu0 0
  %1043 = vmatpush1.bf16.msra.mxu0 %v896
  %1044 = vmatprep.subr.bf16.mxu0 0
  %1045 = vmatpush1.bf16.msra.mxu0 %v897
  %1046 = vmatprep.subr.bf16.mxu0 0
  %1047 = vmatpush1.bf16.msra.mxu0 %v898
  %1048 = vmatprep.subr.bf16.mxu0 0
  %1049 = vmatpush1.bf16.msra.mxu0 %v899
  %1050 = vmatprep.subr.bf16.mxu0 0
  %1051 = vmatpush1.bf16.msra.mxu0 %v900
  %1052 = vmatprep.subr.bf16.mxu0 0
  %1053 = vmatpush1.bf16.msra.mxu0 %v901
  %1054 = vmatprep.subr.bf16.mxu0 0
  %1055 = vmatpush1.bf16.msra.mxu0 %v902
  %1056 = vmatprep.subr.bf16.mxu0 0
  %1057 = vmatpush1.bf16.msra.mxu0 %v903
  %1058 = vmatprep.subr.bf16.mxu0 0
  %1059 = vmatpush1.bf16.msra.mxu0 %v904
  %1060 = vmatprep.subr.bf16.mxu0 0
  %1061 = vmatpush1.bf16.msra.mxu0 %v905
  %1062 = vmatprep.subr.bf16.mxu0 0
  %1063 = vmatpush1.bf16.msra.mxu0 %v906
  %1064 = vmatprep.subr.bf16.mxu0 0
  %1065 = vmatpush1.bf16.msra.mxu0 %v907
  %1066 = vmatprep.subr.bf16.mxu0 0
  %1067 = vmatpush1.bf16.msra.mxu0 %v908
  %1068 = vmatprep.subr.bf16.mxu0 0
  %1069 = vmatpush1.bf16.msra.mxu0 %v909
  %1070 = vmatprep.mubr.bf16.mxu0 %v463
  %1071 = vmatmul.mubr.bf16.gmra.mrb[0].mxu0 %v462
  %v1072 = vpop.f32.mrb[0].mxu0
  %v1073 = vadd.f32 0.0, %v1072
  %v1074 = vpop.f32.mrb[0].mxu0
  %v1075 = vpop.f32.mrb[0].mxu0
  %v1076 = vadd.f32 0.0, %v1075
  %v1077 = vpop.f32.mrb[0].mxu0
  %1078 = vmatprep.mubr.bf16.mxu0 %v472
  %1079 = vmatmul.mubr.bf16.gmra.mrb[0].mxu0 %v471
  %v1080 = vpop.f32.mrb[0].mxu0
  %v1081 = vadd.f32 0.0, %v1080
  %v1082 = vpop.f32.mrb[0].mxu0
  %v1083 = vpop.f32.mrb[0].mxu0
  %v1084 = vadd.f32 0.0, %v1083
  %v1085 = vpop.f32.mrb[0].mxu0
  %1086 = vmatprep.mubr.bf16.mxu0 %v481
  %1087 = vmatmul.mubr.bf16.gmra.mrb[0].mxu0 %v480
  %v1088 = vpop.f32.mrb[0].mxu0
  %v1089 = vadd.f32 0.0, %v1088
  %v1090 = vpop.f32.mrb[0].mxu0
  %v1091 = vpop.f32.mrb[0].mxu0
  %v1092 = vadd.f32 0.0, %v1091
  %v1093 = vpop.f32.mrb[0].mxu0
  %1094 = vmatprep.mubr.bf16.mxu0 %v490
  %1095 = vmatmul.mubr.bf16.gmra.mrb[0].mxu0 %v489
  %v1096 = vpop.f32.mrb[0].mxu0
  %v1097 = vadd.f32 0.0, %v1096
  %v1098 = vpop.f32.mrb[0].mxu0
  %v1099 = vpop.f32.mrb[0].mxu0
  %v1100 = vadd.f32 0.0, %v1099
  %v1101 = vpop.f32.mrb[0].mxu0
  %1102 = vmatprep.mubr.bf16.mxu0 %v499
  %1103 = vmatmul.mubr.bf16.gmra.mrb[0].mxu0 %v498
  %v1104 = vpop.f32.mrb[0].mxu0
  %v1105 = vadd.f32 0.0, %v1104
  %v1106 = vpop.f32.mrb[0].mxu0
  %v1107 = vpop.f32.mrb[0].mxu0
  %v1108 = vadd.f32 0.0, %v1107
  %v1109 = vpop.f32.mrb[0].mxu0
  %1110 = vmatprep.mubr.bf16.mxu0 %v508
  %1111 = vmatmul.mubr.bf16.gmra.mrb[0].mxu0 %v507
  %v1112 = vpop.f32.mrb[0].mxu0
  %v1113 = vadd.f32 0.0, %v1112
  %v1114 = vpop.f32.mrb[0].mxu0
  %v1115 = vpop.f32.mrb[0].mxu0
  %v1116 = vadd.f32 0.0, %v1115
  %v1117 = vpop.f32.mrb[0].mxu0
  %1118 = vmatprep.mubr.bf16.mxu0 %v517
  %1119 = vmatmul.mubr.bf16.gmra.mrb[0].mxu0 %v516
  %v1120 = vpop.f32.mrb[0].mxu0
  %v1121 = vadd.f32 0.0, %v1120
  %v1122 = vpop.f32.mrb[0].mxu0
  %v1123 = vpop.f32.mrb[0].mxu0
  %v1124 = vadd.f32 0.0, %v1123
  %v1125 = vpop.f32.mrb[0].mxu0
  %1126 = vmatprep.mubr.bf16.mxu0 %v526
  %1127 = vmatmul.mubr.bf16.gmra.mrb[0].mxu0 %v525
  %v1128 = vpop.f32.mrb[0].mxu0
  %v1129 = vadd.f32 0.0, %v1128
  %v1130 = vpop.f32.mrb[0].mxu0
  %v1131 = vpop.f32.mrb[0].mxu0
  %v1132 = vadd.f32 0.0, %v1131
  %v1133 = vpop.f32.mrb[0].mxu0
  %1134 = vdwg.mxu0
  %1135 = vmatprep.subr.bf16.mxu0 0
  %1136 = vmatpush1.bf16.msra.mxu0 %v910
  %1137 = vmatprep.subr.bf16.mxu0 0
  %1138 = vmatpush1.bf16.msra.mxu0 %v911
  %1139 = vmatprep.subr.bf16.mxu0 0
  %1140 = vmatpush1.bf16.msra.mxu0 %v912
  %1141 = vmatprep.subr.bf16.mxu0 0
  %1142 = vmatpush1.bf16.msra.mxu0 %v913
  %1143 = vmatprep.subr.bf16.mxu0 0
  %1144 = vmatpush1.bf16.msra.mxu0 %v914
  %1145 = vmatprep.subr.bf16.mxu0 0
  %1146 = vmatpush1.bf16.msra.mxu0 %v915
  %1147 = vmatprep.subr.bf16.mxu0 0
  %1148 = vmatpush1.bf16.msra.mxu0 %v916
  %1149 = vmatprep.subr.bf16.mxu0 0
  %1150 = vmatpush1.bf16.msra.mxu0 %v917
  %1151 = vmatprep.subr.bf16.mxu0 0
  %1152 = vmatpush1.bf16.msra.mxu0 %v918
  %1153 = vmatprep.subr.bf16.mxu0 0
  %1154 = vmatpush1.bf16.msra.mxu0 %v919
  %1155 = vmatprep.subr.bf16.mxu0 0
  %1156 = vmatpush1.bf16.msra.mxu0 %v920
  %1157 = vmatprep.subr.bf16.mxu0 0
  %1158 = vmatpush1.bf16.msra.mxu0 %v921
  %1159 = vmatprep.subr.bf16.mxu0 0
  %1160 = vmatpush1.bf16.msra.mxu0 %v922
  %1161 = vmatprep.subr.bf16.mxu0 0
  %1162 = vmatpush1.bf16.msra.mxu0 %v923
  %1163 = vmatprep.subr.bf16.mxu0 0
  %1164 = vmatpush1.bf16.msra.mxu0 %v924
  %1165 = vmatprep.subr.bf16.mxu0 0
  %1166 = vmatpush1.bf16.msra.mxu0 %v925
  %1167 = vmatprep.mubr.bf16.mxu0 %v465
  %1168 = vmatmul.mubr.bf16.gmra.mrb[0].mxu0 %v464
  %v1169 = vpop.f32.mrb[0].mxu0
  %v1170 = vadd.f32 %v1073, %v1169
  %v1171 = vpop.f32.mrb[0].mxu0
  %v1172 = vpop.f32.mrb[0].mxu0
  %v1173 = vadd.f32 %v1076, %v1172
  %v1174 = vpop.f32.mrb[0].mxu0
  %1175 = vmatprep.mubr.bf16.mxu0 %v474
  %1176 = vmatmul.mubr.bf16.gmra.mrb[0].mxu0 %v473
  %v1177 = vpop.f32.mrb[0].mxu0
  %v1178 = vadd.f32 %v1081, %v1177
  %v1179 = vpop.f32.mrb[0].mxu0
  %v1180 = vpop.f32.mrb[0].mxu0
  %v1181 = vadd.f32 %v1084, %v1180
  %v1182 = vpop.f32.mrb[0].mxu0
  %1183 = vmatprep.mubr.bf16.mxu0 %v483
  %1184 = vmatmul.mubr.bf16.gmra.mrb[0].mxu0 %v482
  %v1185 = vpop.f32.mrb[0].mxu0
  %v1186 = vadd.f32 %v1089, %v1185
  %v1187 = vpop.f32.mrb[0].mxu0
  %v1188 = vpop.f32.mrb[0].mxu0
  %v1189 = vadd.f32 %v1092, %v1188
  %v1190 = vpop.f32.mrb[0].mxu0
  %1191 = vmatprep.mubr.bf16.mxu0 %v492
  %1192 = vmatmul.mubr.bf16.gmra.mrb[0].mxu0 %v491
  %v1193 = vpop.f32.mrb[0].mxu0
  %v1194 = vadd.f32 %v1097, %v1193
  %v1195 = vpop.f32.mrb[0].mxu0
  %v1196 = vpop.f32.mrb[0].mxu0
  %v1197 = vadd.f32 %v1100, %v1196
  %v1198 = vpop.f32.mrb[0].mxu0
  %1199 = vmatprep.mubr.bf16.mxu0 %v501
  %1200 = vmatmul.mubr.bf16.gmra.mrb[0].mxu0 %v500
  %v1201 = vpop.f32.mrb[0].mxu0
  %v1202 = vadd.f32 %v1105, %v1201
  %v1203 = vpop.f32.mrb[0].mxu0
  %v1204 = vpop.f32.mrb[0].mxu0
  %v1205 = vadd.f32 %v1108, %v1204
  %v1206 = vpop.f32.mrb[0].mxu0
  %1207 = vmatprep.mubr.bf16.mxu0 %v510
  %1208 = vmatmul.mubr.bf16.gmra.mrb[0].mxu0 %v509
  %v1209 = vpop.f32.mrb[0].mxu0
  %v1210 = vadd.f32 %v1113, %v1209
  %v1211 = vpop.f32.mrb[0].mxu0
  %v1212 = vpop.f32.mrb[0].mxu0
  %v1213 = vadd.f32 %v1116, %v1212
  %v1214 = vpop.f32.mrb[0].mxu0
  %1215 = vmatprep.mubr.bf16.mxu0 %v519
  %1216 = vmatmul.mubr.bf16.gmra.mrb[0].mxu0 %v518
  %v1217 = vpop.f32.mrb[0].mxu0
  %v1218 = vadd.f32 %v1121, %v1217
  %v1219 = vpop.f32.mrb[0].mxu0
  %v1220 = vpop.f32.mrb[0].mxu0
  %v1221 = vadd.f32 %v1124, %v1220
  %v1222 = vpop.f32.mrb[0].mxu0
  %1223 = vmatprep.mubr.bf16.mxu0 %v528
  %1224 = vmatmul.mubr.bf16.gmra.mrb[0].mxu0 %v527
  %v1225 = vpop.f32.mrb[0].mxu0
  %v1226 = vadd.f32 %v1129, %v1225
  %v1227 = vpop.f32.mrb[0].mxu0
  %v1228 = vpop.f32.mrb[0].mxu0
  %v1229 = vadd.f32 %v1132, %v1228
  %v1230 = vpop.f32.mrb[0].mxu0
  %1231 = vdwg.mxu0
  %1232 = vmatprep.subr.bf16.mxu0 0
  %1233 = vmatpush1.bf16.msra.mxu0 %v926
  %1234 = vmatprep.subr.bf16.mxu0 0
  %1235 = vmatpush1.bf16.msra.mxu0 %v927
  %1236 = vmatprep.subr.bf16.mxu0 0
  %1237 = vmatpush1.bf16.msra.mxu0 %v928
  %1238 = vmatprep.subr.bf16.mxu0 0
  %1239 = vmatpush1.bf16.msra.mxu0 %v929
  %1240 = vmatprep.subr.bf16.mxu0 0
  %1241 = vmatpush1.bf16.msra.mxu0 %v930
  %1242 = vmatprep.subr.bf16.mxu0 0
  %1243 = vmatpush1.bf16.msra.mxu0 %v931
  %1244 = vmatprep.subr.bf16.mxu0 0
  %1245 = vmatpush1.bf16.msra.mxu0 %v932
  %1246 = vmatprep.subr.bf16.mxu0 0
  %1247 = vmatpush1.bf16.msra.mxu0 %v933
  %1248 = vmatprep.subr.bf16.mxu0 0
  %1249 = vmatpush1.bf16.msra.mxu0 %v934
  %1250 = vmatprep.subr.bf16.mxu0 0
  %1251 = vmatpush1.bf16.msra.mxu0 %v935
  %1252 = vmatprep.subr.bf16.mxu0 0
  %1253 = vmatpush1.bf16.msra.mxu0 %v936
  %1254 = vmatprep.subr.bf16.mxu0 0
  %1255 = vmatpush1.bf16.msra.mxu0 %v937
  %1256 = vmatprep.subr.bf16.mxu0 0
  %1257 = vmatpush1.bf16.msra.mxu0 %v938
  %1258 = vmatprep.subr.bf16.mxu0 0
  %1259 = vmatpush1.bf16.msra.mxu0 %v939
  %1260 = vmatprep.subr.bf16.mxu0 0
  %1261 = vmatpush1.bf16.msra.mxu0 %v940
  %1262 = vmatprep.subr.bf16.mxu0 0
  %1263 = vmatpush1.bf16.msra.mxu0 %v941
  %1264 = vmatprep.mubr.bf16.mxu0 %v467
  %1265 = vmatmul.mubr.bf16.gmra.mrb[0].mxu0 %v466
  %v1266 = vpop.f32.mrb[0].mxu0
  %v1267 = vadd.f32 %v1170, %v1266
  %v1268 = vpop.f32.mrb[0].mxu0
  %v1269 = vpop.f32.mrb[0].mxu0
  %v1270 = vadd.f32 %v1173, %v1269
  %v1271 = vpop.f32.mrb[0].mxu0
  %1272 = vmatprep.mubr.bf16.mxu0 %v476
  %1273 = vmatmul.mubr.bf16.gmra.mrb[0].mxu0 %v475
  %v1274 = vpop.f32.mrb[0].mxu0
  %v1275 = vadd.f32 %v1178, %v1274
  %v1276 = vpop.f32.mrb[0].mxu0
  %v1277 = vpop.f32.mrb[0].mxu0
  %v1278 = vadd.f32 %v1181, %v1277
  %v1279 = vpop.f32.mrb[0].mxu0
  %1280 = vmatprep.mubr.bf16.mxu0 %v485
  %1281 = vmatmul.mubr.bf16.gmra.mrb[0].mxu0 %v484
  %v1282 = vpop.f32.mrb[0].mxu0
  %v1283 = vadd.f32 %v1186, %v1282
  %v1284 = vpop.f32.mrb[0].mxu0
  %v1285 = vpop.f32.mrb[0].mxu0
  %v1286 = vadd.f32 %v1189, %v1285
  %v1287 = vpop.f32.mrb[0].mxu0
  %1288 = vmatprep.mubr.bf16.mxu0 %v494
  %1289 = vmatmul.mubr.bf16.gmra.mrb[0].mxu0 %v493
  %v1290 = vpop.f32.mrb[0].mxu0
  %v1291 = vadd.f32 %v1194, %v1290
  %v1292 = vpop.f32.mrb[0].mxu0
  %v1293 = vpop.f32.mrb[0].mxu0
  %v1294 = vadd.f32 %v1197, %v1293
  %v1295 = vpop.f32.mrb[0].mxu0
  %1296 = vmatprep.mubr.bf16.mxu0 %v503
  %1297 = vmatmul.mubr.bf16.gmra.mrb[0].mxu0 %v502
  %v1298 = vpop.f32.mrb[0].mxu0
  %v1299 = vadd.f32 %v1202, %v1298
  %v1300 = vpop.f32.mrb[0].mxu0
  %v1301 = vpop.f32.mrb[0].mxu0
  %v1302 = vadd.f32 %v1205, %v1301
  %v1303 = vpop.f32.mrb[0].mxu0
  %1304 = vmatprep.mubr.bf16.mxu0 %v512
  %1305 = vmatmul.mubr.bf16.gmra.mrb[0].mxu0 %v511
  %v1306 = vpop.f32.mrb[0].mxu0
  %v1307 = vadd.f32 %v1210, %v1306
  %v1308 = vpop.f32.mrb[0].mxu0
  %v1309 = vpop.f32.mrb[0].mxu0
  %v1310 = vadd.f32 %v1213, %v1309
  %v1311 = vpop.f32.mrb[0].mxu0
  %1312 = vmatprep.mubr.bf16.mxu0 %v521
  %1313 = vmatmul.mubr.bf16.gmra.mrb[0].mxu0 %v520
  %v1314 = vpop.f32.mrb[0].mxu0
  %v1315 = vadd.f32 %v1218, %v1314
  %v1316 = vpop.f32.mrb[0].mxu0
  %v1317 = vpop.f32.mrb[0].mxu0
  %v1318 = vadd.f32 %v1221, %v1317
  %v1319 = vpop.f32.mrb[0].mxu0
  %1320 = vmatprep.mubr.bf16.mxu0 %v530
  %1321 = vmatmul.mubr.bf16.gmra.mrb[0].mxu0 %v529
  %v1322 = vpop.f32.mrb[0].mxu0
  %v1323 = vadd.f32 %v1226, %v1322
  %v1324 = vpop.f32.mrb[0].mxu0
  %v1325 = vpop.f32.mrb[0].mxu0
  %v1326 = vadd.f32 %v1229, %v1325
  %v1327 = vpop.f32.mrb[0].mxu0
  %1328 = vdwg.mxu0
  %1329 = vmatprep.subr.bf16.mxu0 0
  %1330 = vmatpush1.bf16.msra.mxu0 %v942
  %1331 = vmatprep.subr.bf16.mxu0 0
  %1332 = vmatpush1.bf16.msra.mxu0 %v943
  %1333 = vmatprep.subr.bf16.mxu0 0
  %1334 = vmatpush1.bf16.msra.mxu0 %v944
  %1335 = vmatprep.subr.bf16.mxu0 0
  %1336 = vmatpush1.bf16.msra.mxu0 %v945
  %1337 = vmatprep.subr.bf16.mxu0 0
  %1338 = vmatpush1.bf16.msra.mxu0 %v946
  %1339 = vmatprep.subr.bf16.mxu0 0
  %1340 = vmatpush1.bf16.msra.mxu0 %v947
  %1341 = vmatprep.subr.bf16.mxu0 0
  %1342 = vmatpush1.bf16.msra.mxu0 %v948
  %1343 = vmatprep.subr.bf16.mxu0 0
  %1344 = vmatpush1.bf16.msra.mxu0 %v949
  %1345 = vmatprep.subr.bf16.mxu0 0
  %1346 = vmatpush1.bf16.msra.mxu0 %v950
  %1347 = vmatprep.subr.bf16.mxu0 0
  %1348 = vmatpush1.bf16.msra.mxu0 %v951
  %1349 = vmatprep.subr.bf16.mxu0 0
  %1350 = vmatpush1.bf16.msra.mxu0 %v952
  %1351 = vmatprep.subr.bf16.mxu0 0
  %1352 = vmatpush1.bf16.msra.mxu0 %v953
  %1353 = vmatprep.subr.bf16.mxu0 0
  %1354 = vmatpush1.bf16.msra.mxu0 %v954
  %1355 = vmatprep.subr.bf16.mxu0 0
  %1356 = vmatpush1.bf16.msra.mxu0 %v955
  %1357 = vmatprep.subr.bf16.mxu0 0
  %1358 = vmatpush1.bf16.msra.mxu0 %v956
  %1359 = vmatprep.subr.bf16.mxu0 0
  %1360 = vmatpush1.bf16.msra.mxu0 %v957
  %1361 = vmatprep.mubr.bf16.mxu0 %v469
  %1362 = vmatmul.mubr.bf16.gmra.mrb[0].mxu0 %v468
  %v1363 = vpop.f32.mrb[0].mxu0
  %v1364 = vadd.f32 %v1267, %v1363
  %v1365 = vpop.f32.mrb[0].mxu0
  %v1366 = vpop.f32.mrb[0].mxu0
  %v1367 = vadd.f32 %v1270, %v1366
  %v1368 = vpop.f32.mrb[0].mxu0
  %1369 = vmatprep.mubr.bf16.mxu0 %v478
  %1370 = vmatmul.mubr.bf16.gmra.mrb[0].mxu0 %v477
  %v1371 = vpop.f32.mrb[0].mxu0
  %v1372 = vadd.f32 %v1275, %v1371
  %v1373 = vpop.f32.mrb[0].mxu0
  %v1374 = vpop.f32.mrb[0].mxu0
  %v1375 = vadd.f32 %v1278, %v1374
  %v1376 = vpop.f32.mrb[0].mxu0
  %1377 = vmatprep.mubr.bf16.mxu0 %v487
  %1378 = vmatmul.mubr.bf16.gmra.mrb[0].mxu0 %v486
  %v1379 = vpop.f32.mrb[0].mxu0
  %v1380 = vadd.f32 %v1283, %v1379
  %v1381 = vpop.f32.mrb[0].mxu0
  %v1382 = vpop.f32.mrb[0].mxu0
  %v1383 = vadd.f32 %v1286, %v1382
  %v1384 = vpop.f32.mrb[0].mxu0
  %1385 = vmatprep.mubr.bf16.mxu0 %v496
  %1386 = vmatmul.mubr.bf16.gmra.mrb[0].mxu0 %v495
  %v1387 = vpop.f32.mrb[0].mxu0
  %v1388 = vadd.f32 %v1291, %v1387
  %v1389 = vpop.f32.mrb[0].mxu0
  %v1390 = vpop.f32.mrb[0].mxu0
  %v1391 = vadd.f32 %v1294, %v1390
  %v1392 = vpop.f32.mrb[0].mxu0
  %1393 = vmatprep.mubr.bf16.mxu0 %v505
  %1394 = vmatmul.mubr.bf16.gmra.mrb[0].mxu0 %v504
  %v1395 = vpop.f32.mrb[0].mxu0
  %v1396 = vadd.f32 %v1299, %v1395
  %v1397 = vpop.f32.mrb[0].mxu0
  %v1398 = vpop.f32.mrb[0].mxu0
  %v1399 = vadd.f32 %v1302, %v1398
  %v1400 = vpop.f32.mrb[0].mxu0
  %1401 = vmatprep.mubr.bf16.mxu0 %v514
  %1402 = vmatmul.mubr.bf16.gmra.mrb[0].mxu0 %v513
  %v1403 = vpop.f32.mrb[0].mxu0
  %v1404 = vadd.f32 %v1307, %v1403
  %v1405 = vpop.f32.mrb[0].mxu0
  %v1406 = vpop.f32.mrb[0].mxu0
  %v1407 = vadd.f32 %v1310, %v1406
  %v1408 = vpop.f32.mrb[0].mxu0
  %1409 = vmatprep.mubr.bf16.mxu0 %v523
  %1410 = vmatmul.mubr.bf16.gmra.mrb[0].mxu0 %v522
  %v1411 = vpop.f32.mrb[0].mxu0
  %v1412 = vadd.f32 %v1315, %v1411
  %v1413 = vpop.f32.mrb[0].mxu0
  %v1414 = vpop.f32.mrb[0].mxu0
  %v1415 = vadd.f32 %v1318, %v1414
  %v1416 = vpop.f32.mrb[0].mxu0
  %1417 = vmatprep.mubr.bf16.mxu0 %v532
  %1418 = vmatmul.mubr.bf16.gmra.mrb[0].mxu0 %v531
  %v1419 = vpop.f32.mrb[0].mxu0
  %v1420 = vadd.f32 %v1323, %v1419
  %v1421 = vpop.f32.mrb[0].mxu0
  %v1422 = vpop.f32.mrb[0].mxu0
  %v1423 = vadd.f32 %v1326, %v1422
  %v1424 = vpop.f32.mrb[0].mxu0
  %1425 = vdwg.mxu0
  %1426 = vmatprep.subr.bf16.mxu0 0
  %1427 = vmatpush1.bf16.msra.mxu0 %v958
  %1428 = vmatprep.subr.bf16.mxu0 0
  %1429 = vmatpush1.bf16.msra.mxu0 %v959
  %1430 = vmatprep.subr.bf16.mxu0 0
  %1431 = vmatpush1.bf16.msra.mxu0 %v960
  %1432 = vmatprep.subr.bf16.mxu0 0
  %1433 = vmatpush1.bf16.msra.mxu0 %v961
  %1434 = vmatprep.subr.bf16.mxu0 0
  %1435 = vmatpush1.bf16.msra.mxu0 %v962
  %1436 = vmatprep.subr.bf16.mxu0 0
  %1437 = vmatpush1.bf16.msra.mxu0 %v963
  %1438 = vmatprep.subr.bf16.mxu0 0
  %1439 = vmatpush1.bf16.msra.mxu0 %v964
  %1440 = vmatprep.subr.bf16.mxu0 0
  %1441 = vmatpush1.bf16.msra.mxu0 %v965
  %1442 = vmatprep.subr.bf16.mxu0 0
  %1443 = vmatpush1.bf16.msra.mxu0 0
  %1444 = vmatprep.subr.bf16.mxu0 0
  %1445 = vmatpush1.bf16.msra.mxu0 0
  %1446 = vmatprep.subr.bf16.mxu0 0
  %1447 = vmatpush1.bf16.msra.mxu0 0
  %1448 = vmatprep.subr.bf16.mxu0 0
  %1449 = vmatpush1.bf16.msra.mxu0 0
  %1450 = vmatprep.subr.bf16.mxu0 0
  %1451 = vmatpush1.bf16.msra.mxu0 0
  %1452 = vmatprep.subr.bf16.mxu0 0
  %1453 = vmatpush1.bf16.msra.mxu0 0
  %1454 = vmatprep.subr.bf16.mxu0 0
  %1455 = vmatpush1.bf16.msra.mxu0 0
  %1456 = vmatprep.subr.bf16.mxu0 0
  %1457 = vmatpush1.bf16.msra.mxu0 0
  %1458 = vmatprep.mubr.bf16.mxu0 0
  %1459 = vmatmul.mubr.bf16.gmra.mrb[0].mxu0 %v470
  %v1460 = vpop.f32.mrb[0].mxu0
  %v1461 = vadd.f32 %v1364, %v1460
  %v1462 = vpop.f32.mrb[0].mxu0
  %v1463 = vpop.f32.mrb[0].mxu0
  %v1464 = vadd.f32 %v1367, %v1463
  %v1465 = vpop.f32.mrb[0].mxu0
  %1466 = vmatprep.mubr.bf16.mxu0 0
  %1467 = vmatmul.mubr.bf16.gmra.mrb[0].mxu0 %v479
  %v1468 = vpop.f32.mrb[0].mxu0
  %v1469 = vadd.f32 %v1372, %v1468
  %v1470 = vpop.f32.mrb[0].mxu0
  %v1471 = vpop.f32.mrb[0].mxu0
  %v1472 = vadd.f32 %v1375, %v1471
  %v1473 = vpop.f32.mrb[0].mxu0
  %1474 = vmatprep.mubr.bf16.mxu0 0
  %1475 = vmatmul.mubr.bf16.gmra.mrb[0].mxu0 %v488
  %v1476 = vpop.f32.mrb[0].mxu0
  %v1477 = vadd.f32 %v1380, %v1476
  %v1478 = vpop.f32.mrb[0].mxu0
  %v1479 = vpop.f32.mrb[0].mxu0
  %v1480 = vadd.f32 %v1383, %v1479
  %v1481 = vpop.f32.mrb[0].mxu0
  %1482 = vmatprep.mubr.bf16.mxu0 0
  %1483 = vmatmul.mubr.bf16.gmra.mrb[0].mxu0 %v497
  %v1484 = vpop.f32.mrb[0].mxu0
  %v1485 = vadd.f32 %v1388, %v1484
  %v1486 = vpop.f32.mrb[0].mxu0
  %v1487 = vpop.f32.mrb[0].mxu0
  %v1488 = vadd.f32 %v1391, %v1487
  %v1489 = vpop.f32.mrb[0].mxu0
  %1490 = vmatprep.mubr.bf16.mxu0 0
  %1491 = vmatmul.mubr.bf16.gmra.mrb[0].mxu0 %v506
  %v1492 = vpop.f32.mrb[0].mxu0
  %v1493 = vadd.f32 %v1396, %v1492
  %v1494 = vpop.f32.mrb[0].mxu0
  %v1495 = vpop.f32.mrb[0].mxu0
  %v1496 = vadd.f32 %v1399, %v1495
  %v1497 = vpop.f32.mrb[0].mxu0
  %1498 = vmatprep.mubr.bf16.mxu0 0
  %1499 = vmatmul.mubr.bf16.gmra.mrb[0].mxu0 %v515
  %v1500 = vpop.f32.mrb[0].mxu0
  %v1501 = vadd.f32 %v1404, %v1500
  %v1502 = vpop.f32.mrb[0].mxu0
  %v1503 = vpop.f32.mrb[0].mxu0
  %v1504 = vadd.f32 %v1407, %v1503
  %v1505 = vpop.f32.mrb[0].mxu0
  %1506 = vmatprep.mubr.bf16.mxu0 0
  %1507 = vmatmul.mubr.bf16.gmra.mrb[0].mxu0 %v524
  %v1508 = vpop.f32.mrb[0].mxu0
  %v1509 = vadd.f32 %v1412, %v1508
  %v1510 = vpop.f32.mrb[0].mxu0
  %v1511 = vpop.f32.mrb[0].mxu0
  %v1512 = vadd.f32 %v1415, %v1511
  %v1513 = vpop.f32.mrb[0].mxu0
  %1514 = vmatprep.mubr.bf16.mxu0 0
  %1515 = vmatmul.mubr.bf16.gmra.mrb[0].mxu0 %v533
  %v1516 = vpop.f32.mrb[0].mxu0
  %v1517 = vadd.f32 %v1420, %v1516
  %v1518 = vpop.f32.mrb[0].mxu0
  %v1519 = vpop.f32.mrb[0].mxu0
  %v1520 = vadd.f32 %v1423, %v1519
  %v1521 = vpop.f32.mrb[0].mxu0
  %1522 = vdwg.mxu0
  %1523 = vst [vmem:[%s2] sm:$0xff] %v1461
  %1524 = vst [vmem:[%s2 + $0x8] sm:$0xff] %v1464
  %1525 = vst [vmem:[%s2 + $0x10] sm:$0xff] %v1469
  %1526 = vst [vmem:[%s2 + $0x18] sm:$0xff] %v1472
  %1527 = vst [vmem:[%s2 + $0x20] sm:$0xff] %v1477
  %1528 = vst [vmem:[%s2 + $0x28] sm:$0xff] %v1480
  %1529 = vst [vmem:[%s2 + $0x30] sm:$0xff] %v1485
  %1530 = vst [vmem:[%s2 + $0x38] sm:$0xff] %v1488
  %1531 = vst [vmem:[%s2 + $0x40] sm:$0xff] %v1493
  %1532 = vst [vmem:[%s2 + $0x48] sm:$0xff] %v1496
  %1533 = vst [vmem:[%s2 + $0x50] sm:$0xff] %v1501
  %1534 = vst [vmem:[%s2 + $0x58] sm:$0xff] %v1504
  %1535 = vst [vmem:[%s2 + $0x60] sm:$0xff] %v1509
  %1536 = vst [vmem:[%s2 + $0x68] sm:$0xff] %v1512
  %1537 = vst [vmem:[%s2 + $0x70] sm:$0xff] %v1517
  %1538 = vst [vmem:[%s2 + $0x78] sm:$0xff] %v1520
  %p1539 = scmp.eq.s32.totalorder 0, 0
  // Predicated region
  $region10: #{_lambda_.15} parent=0 // pred_check
    %p1540 = pneg %p1539
  $region11: #{_lambda_.15} parent=0 // pred_check_branch
    %1542 = sbr.rel (%p1540) target = $region13
  $region12: #{_lambda_.15} parent=0 // pred_region
    %1543 = vst [vmem:[%s3] sm:$0x3] 0.0
  $region13: #{_lambda_.15} parent=0 // pred_fallthru
    _
  %v1544 = vadd.f32 %v1461, %v1464
  %v1545 = vadd.f32 %v1544, %v1469
  %v1546 = vadd.f32 %v1545, %v1472
  %v1547 = vadd.f32 %v1546, %v1477
  %v1548 = vadd.f32 %v1547, %v1480
  %v1549 = vadd.f32 %v1548, %v1485
  %v1550 = vadd.f32 %v1549, %v1488
  %v1551 = vadd.f32 %v1550, %v1493
  %v1552 = vadd.f32 %v1551, %v1496
  %v1553 = vadd.f32 %v1552, %v1501
  %v1554 = vadd.f32 %v1553, %v1504
  %v1555 = vadd.f32 %v1554, %v1509
  %v1556 = vadd.f32 %v1555, %v1512
  %v1557 = vadd.f32 %v1556, %v1517
  %v1558 = vadd.f32 %v1557, %v1520
  %v1559 = vrot.slane %v1558, 4
  %v1560 = vadd.f32 %v1558, %v1559
  %v1561 = vrot.slane %v1560, 2
  %v1562 = vadd.f32 %v1560, %v1561
  %v1563 = vrot.slane %v1562, 1
  %v1564 = vadd.f32 %v1562, %v1563
  %v1565 = vmul.f32 %v1461, %v1461
  %v1566 = vmul.f32 %v1464, %v1464
  %v1567 = vmul.f32 %v1469, %v1469
  %v1568 = vmul.f32 %v1472, %v1472
  %v1569 = vmul.f32 %v1477, %v1477
  %v1570 = vmul.f32 %v1480, %v1480
  %v1571 = vmul.f32 %v1485, %v1485
  %v1572 = vmul.f32 %v1488, %v1488
  %v1573 = vmul.f32 %v1493, %v1493
  %v1574 = vmul.f32 %v1496, %v1496
  %v1575 = vmul.f32 %v1501, %v1501
  %v1576 = vmul.f32 %v1504, %v1504
  %v1577 = vmul.f32 %v1509, %v1509
  %v1578 = vmul.f32 %v1512, %v1512
  %v1579 = vmul.f32 %v1517, %v1517
  %v1580 = vmul.f32 %v1520, %v1520
  %v1581 = vadd.f32 %v1565, %v1566
  %v1582 = vadd.f32 %v1581, %v1567
  %v1583 = vadd.f32 %v1582, %v1568
  %v1584 = vadd.f32 %v1583, %v1569
  %v1585 = vadd.f32 %v1584, %v1570
  %v1586 = vadd.f32 %v1585, %v1571
  %v1587 = vadd.f32 %v1586, %v1572
  %v1588 = vadd.f32 %v1587, %v1573
  %v1589 = vadd.f32 %v1588, %v1574
  %v1590 = vadd.f32 %v1589, %v1575
  %v1591 = vadd.f32 %v1590, %v1576
  %v1592 = vadd.f32 %v1591, %v1577
  %v1593 = vadd.f32 %v1592, %v1578
  %v1594 = vadd.f32 %v1593, %v1579
  %v1595 = vadd.f32 %v1594, %v1580
  %v1596 = vrot.slane %v1595, 4
  %v1597 = vadd.f32 %v1595, %v1596
  %v1598 = vrot.slane %v1597, 2
  %v1599 = vadd.f32 %v1597, %v1598
  %v1600 = vrot.slane %v1599, 1
  %v1601 = vadd.f32 %v1599, %v1600
  %v1602 = vld [vmem:[%s3] sm:$0x3]
  %vm1603 = vcmask 1040384
  %v1604 = vsel %vm1603, %v1564, %v1601
  %v1605 = vadd.f32 %v1602, %v1604
  %1606 = vst [vmem:[%s3] sm:$0x3] %v1605
  // Predicated region
  $region14: #{_lambda_.15} parent=0 // pred_check
    _
  $region15: #{_lambda_.15} parent=0 // pred_check_branch
    %1608 = sbr.rel (0) target = $region17
  $region16: #{_lambda_.15} parent=0 // pred_region
    _
  $region17: #{_lambda_.15} parent=0 // pred_fallthru
    _
  // Predicated region
  $region18: #{_lambda_.15} parent=0 // pred_check
    _
  $region19: #{_lambda_.15} parent=0 // pred_check_branch
    %1610 = sbr.rel (0) target = $region21
  $region20: #{_lambda_.15} parent=0 // pred_region
    _
  $region21: #{_lambda_.15} parent=0 // pred_fallthru
    _
  // Predicated region
  $region22: #{_lambda_.15} parent=0 // pred_check
    _
  $region23: #{_lambda_.15} parent=0 // pred_check_branch
    %1612 = sbr.rel (0) target = $region25
  $region24: #{_lambda_.15} parent=0 // pred_region
    _
  $region25: #{_lambda_.15} parent=0 // pred_fallthru
    _
  // Predicated region
  $region26: #{_lambda_.15} parent=0 // pred_check
    _
  $region27: #{_lambda_.15} parent=0 // pred_check_branch
    %1614 = sbr.rel (0) target = $region29
  $region28: #{_lambda_.15} parent=0 // pred_region
    _
  $region29: #{_lambda_.15} parent=0 // pred_fallthru
    _

// kernel: _lambda_.21
$region0: #{_lambda_.21}
  #allocation0 [shape = 'u32[]', space=smem, size = 0x4, offset = 0x4, fixed_abs, tag = 'smem constant byte address 0x4 - core index']
  #allocation1 [shape = 'u32[144,128]{1,0:T(1,128)}', space=vmem, size = 0x12000, scoped, tag = 'internal scratch']
  %s0 = inlined_call_operand.vmem [shape: f32[2,7,192], index: 0, kind: input, shape index: {}]
  %s1 = inlined_call_operand.vmem [shape: f32[4,192], index: 1, kind: input, shape index: {}]
  %s2 = inlined_call_operand.vmem [shape: f32[2,7,192], index: 2, kind: output, shape index: {}]
  %s3 = sld [smem:[#allocation0]]
  $region41: #{_lambda_.21} parent=0
    _
  %s5 = ssub.s32 1, %s3
  %s6 = scalar_select 0, %s5, %s3
  loop: start=0, step=1, limit=4
  $region2: #{_lambda_.21} parent=0 // loop_pre_header
    _
  $region3: #{_lambda_.21} parent=0 // loop_header
    %s8 = sphi 0, %s12
    %p9 = scmp.ge.s32.totalorder %s8, 4
    %s18 = sphi 0, %s20
    %s21 = sphi 0, %s18
    %s22 = sphi 0, %s21
    %s38 = sphi 0, %s22
    %s42 = sphi 0, %s42
    %s44 = sphi 0, %s42
    %s45 = sphi 0, %s44
    %s59 = sphi 0, %s45
    %s65 = sphi 0, %s67
    %s68 = sphi 0, %s65
    %s69 = sphi 0, %s68
    %s85 = sphi 0, %s69
  $region4: #{_lambda_.21} parent=0 // loop_header_branch
    %11 = sbr.rel (%p9) target = $region8
  $region5: #{_lambda_.21} parent=0 // loop_body
    %s13 = ssub.s32 %s8, 1
    %s14 = ssub.s32 %s8, 2
    %s15 = sadd.s32 %s8, 1
    %s16 = ssub.s32 %s8, %s15
    %p17 = scmp.eq.s32.totalorder %s16, 0
    %s19 = sadd.s32 %s18, 1
    %s20 = scalar_select %p17, %s18, %s19
    %p23 = pneg %p17
    %p24 = scmp.eq.s32.totalorder %s8, 1
    %p25 = por %p23, %p24
    %p26 = scmp.ne.s32.totalorder %s18, %s21
    %p27 = scmp.eq.s32.totalorder %s8, 0
    %p28 = por %p26, %p27
    %p29 = scmp.ne.s32.totalorder %s18, %s21
    %p30 = scmp.eq.s32.totalorder %s13, 1
    %p31 = por %p29, %p30
    %p32 = scmp.ne.s32.totalorder %s21, %s22
    %p33 = scmp.eq.s32.totalorder %s13, 0
    %p34 = por %p32, %p33
    %p35 = scmp.ne.s32.totalorder %s21, %s22
    %p36 = scmp.eq.s32.totalorder %s14, 1
    %p37 = por %p35, %p36
    %p39 = scmp.ne.s32.totalorder %s22, %s38
    %p40 = scmp.eq.s32.totalorder %s14, 0
    %p41 = por %p39, %p40
    %s43 = sadd.s32 %s42, 1
    %p46 = scmp.eq.s32.totalorder %s8, 1
    %p47 = scmp.ne.s32.totalorder %s42, %s44
    %p48 = scmp.eq.s32.totalorder %s8, 0
    %p49 = por %p47, %p48
    %p50 = scmp.ne.s32.totalorder %s42, %s44
    %p51 = scmp.eq.s32.totalorder %s13, 1
    %p52 = por %p50, %p51
    %p53 = scmp.ne.s32.totalorder %s44, %s45
    %p54 = scmp.eq.s32.totalorder %s13, 0
    %p55 = por %p53, %p54
    %p56 = scmp.ne.s32.totalorder %s44, %s45
    %p57 = scmp.eq.s32.totalorder %s14, 1
    %p58 = por %p56, %p57
    %p60 = scmp.ne.s32.totalorder %s45, %s59
    %p61 = scmp.eq.s32.totalorder %s14, 0
    %p62 = por %p60, %p61
    %s63 = ssub.s32 %s8, %s15
    %p64 = scmp.eq.s32.totalorder %s63, 0
    %s66 = sadd.s32 %s65, 1
    %s67 = scalar_select %p64, %s65, %s66
    %p70 = pneg %p64
    %p71 = scmp.eq.s32.totalorder %s8, 1
    %p72 = por %p70, %p71
    %p73 = scmp.ne.s32.totalorder %s65, %s68
    %p74 = scmp.eq.s32.totalorder %s8, 0
    %p75 = por %p73, %p74
    %p76 = scmp.ne.s32.totalorder %s65, %s68
    %p77 = scmp.eq.s32.totalorder %s13, 1
    %p78 = por %p76, %p77
    %p79 = scmp.ne.s32.totalorder %s68, %s69
    %p80 = scmp.eq.s32.totalorder %s13, 0
    %p81 = por %p79, %p80
    %p82 = scmp.ne.s32.totalorder %s68, %s69
    %p83 = scmp.eq.s32.totalorder %s14, 1
    %p84 = por %p82, %p83
    %p86 = scmp.ne.s32.totalorder %s69, %s85
    %p87 = scmp.eq.s32.totalorder %s14, 0
    %p88 = por %p86, %p87
    %p89 = scmp.le.s32.totalorder 1, %s8
    %p90 = scmp.lt.s32.totalorder %s8, 3
    %p91 = pnand %p89, %p90
    %p92 = pneg %p91
    // Predicated region
    $region9: #{_lambda_.21} parent=5 // pred_check
      _
    $region10: #{_lambda_.21} parent=5 // pred_check_branch
      %94 = sbr.rel (%p91) target = $region12
    $region11: #{_lambda_.21} parent=5 // pred_region
      %s95 = ssub.s32 %s8, 1
      // Predicated region
      $region13: #{_lambda_.21} parent=11 // pred_check
        %p96 = pneg %p55
      $region14: #{_lambda_.21} parent=11 // pred_check_branch
        %98 = sbr.rel (%p96) target = $region16
      $region15: #{_lambda_.21} parent=11 // pred_region
        _
      $region16: #{_lambda_.21} parent=11 // pred_fallthru
        _
    $region12: #{_lambda_.21} parent=5 // pred_fallthru
      _
    %p99 = scmp.lt.s32.totalorder %s8, 2
    // Predicated region
    $region17: #{_lambda_.21} parent=5 // pred_check
      %p100 = pneg %p99
    $region18: #{_lambda_.21} parent=5 // pred_check_branch
      %102 = sbr.rel (%p100) target = $region20
    $region19: #{_lambda_.21} parent=5 // pred_region
      // Predicated region
      $region21: #{_lambda_.21} parent=19 // pred_check
        %p103 = pneg %p28
      $region22: #{_lambda_.21} parent=19 // pred_check_branch
        %105 = sbr.rel (%p103) target = $region24
      $region23: #{_lambda_.21} parent=19 // pred_region
        %p106 = scmp.lt.s32.totalorder %s8, 1
        %s107 = scalar_select %p106, %s8, 1
        %s108 = smul.addr %s107, 2
        %s109 = smul.addr %s108, 8
        %s110 = scalar_lea.vmem %s0, %s109
      $region24: #{_lambda_.21} parent=19 // pred_fallthru
        _
    $region20: #{_lambda_.21} parent=5 // pred_fallthru
      _
    %p111 = scmp.le.s32.totalorder 1, %s8
    %p112 = scmp.lt.s32.totalorder %s8, 3
    %p113 = pnand %p111, %p112
    %p114 = pneg %p113
    // Predicated region
    $region25: #{_lambda_.21} parent=5 // pred_check
      _
    $region26: #{_lambda_.21} parent=5 // pred_check_branch
      %116 = sbr.rel (%p113) target = $region28
    $region27: #{_lambda_.21} parent=5 // pred_region
      %s117 = ssub.s32 %s8, 1
      %p118 = scmp.lt.s32.totalorder %s13, 1
      %s119 = scalar_select %p118, %s13, 1
      %s120 = smul.addr %s119, 2
      %s121 = smul.addr %s120, 8
      %s122 = scalar_lea.vmem %s0, %s121
      %p123 = pneg %p34
      %p124 = pneg %p31
      %p125 = pneg %p55
      %p126 = pneg %p52
      %p127 = pneg %p81
      %p128 = pneg %p78
      %p129 = scmp.lt.s32.totalorder %s13, 1
      %s130 = scalar_select %p129, %s13, 1
      %s131 = smul.addr %s130, 2
      %s132 = smul.addr %s131, 8
      %s133 = scalar_lea.vmem %s2, %s132
      %p134 = scmp.lt.s32.totalorder %s13, 1
      %s135 = scalar_select %p134, %s13, 1
      %s136 = smul.addr %s135, 2
      %s137 = smul.addr %s136, 8
      %s138 = scalar_lea.vmem %s0, %s137
      %p139 = scmp.lt.s32.totalorder %s13, 1
      %s140 = scalar_select %p139, %s13, 1
      %s141 = smul.addr %s140, 2
      %s142 = smul.addr %s141, 8
      %s143 = scalar_lea.vmem %s2, %s142
      %v144 = vld [vmem:[%s138] sm:$0x7f]
      %v145 = vld [vmem:[%s138 + $0x8] sm:$0x7f]
      %v146 = vld [vmem:[%s1] sm:$0xff]
      %v147 = vxor.u32 %v144, 2147483648
      %v148 = vxor.u32 %v145, 2147483648
      %v149 = vmul.f32 %v147, 1.442695
      %v150 = vpow.pop %v149
      %v151 = vmul.f32 %v148, 1.442695
      %v152 = vpow.pop %v151
      %v153 = vadd.f32 %v150, 1.0
      %v154 = vadd.f32 %v152, 1.0
      %v155 = vrcp.pop %v153
      %v156 = vmul.f32 1.0, %v155
      %v157 = vrcp.pop %v154
      %v158 = vmul.f32 1.0, %v157
      %v160 = vcombine.high %v146, %v146
      %v162 = vadd.f32 %v156, %v146
      %v163 = vadd.f32 %v158, %v160
      %v164 = vmul.f32 %v162, 2.0
      %v165 = vmul.f32 %v163, 2.0
      %166 = vst [vmem:[%s143] sm:$0x3] %v164
      %vm167 = vcmask 517120
      %168 = vst.msk [vmem:[%s143 + $0x8] sm:$0x3] %vm167, %v165
      %v169 = vmul.f32 %v144, 1.442695
      %v170 = vpow.pop %v169
      %v171 = vmul.f32 %v145, 1.442695
      %v172 = vpow.pop %v171
      %v173 = vmul.f32 %v146, 2.0
      %v175 = vcombine.high %v173, %v173
      %v177 = vmul.f32 %v170, %v173
      %v178 = vmul.f32 %v172, %v175
      %179 = vst [vmem:[%s143] sm:$0xc] %v177
      %vm180 = vcmask 519170
      %181 = vst.msk [vmem:[%s143 + $0x8] sm:$0xc] %vm180, %v178
      %182 = vst [vmem:[%s143] sm:$0x70] %v156
      %vm183 = vcmask 522244
      %184 = vst.msk [vmem:[%s143 + $0x8] sm:$0x70] %vm183, %v158
      %p185 = scmp.lt.s32.totalorder %s13, 1
      %s186 = scalar_select %p185, %s13, 1
      %s187 = smul.addr %s186, 2
      %s188 = smul.addr %s187, 8
      %s189 = scalar_lea.vmem %s2, %s188
      // Predicated region
      $region29: #{_lambda_.21} parent=27 // pred_check
        %p190 = pneg %p78
      $region30: #{_lambda_.21} parent=27 // pred_check_branch
        %192 = sbr.rel (%p190) target = $region32
      $region31: #{_lambda_.21} parent=27 // pred_region
        _
      $region32: #{_lambda_.21} parent=27 // pred_fallthru
        _
    $region28: #{_lambda_.21} parent=5 // pred_fallthru
      _
    %p193 = scmp.le.s32.totalorder 2, %s8
    // Predicated region
    $region33: #{_lambda_.21} parent=5 // pred_check
      %p194 = pneg %p193
    $region34: #{_lambda_.21} parent=5 // pred_check_branch
      %196 = sbr.rel (%p194) target = $region36
    $region35: #{_lambda_.21} parent=5 // pred_region
      %s197 = ssub.s32 %s8, 2
      // Predicated region
      $region37: #{_lambda_.21} parent=35 // pred_check
        %p198 = pneg %p84
      $region38: #{_lambda_.21} parent=35 // pred_check_branch
        %200 = sbr.rel (%p198) target = $region40
      $region39: #{_lambda_.21} parent=35 // pred_region
        %p201 = scmp.lt.s32.totalorder %s14, 1
        %s202 = scalar_select %p201, %s14, 1
        %s203 = smul.addr %s202, 2
        %s204 = smul.addr %s203, 8
        %s205 = scalar_lea.vmem %s2, %s204
      $region40: #{_lambda_.21} parent=35 // pred_fallthru
        _
    $region36: #{_lambda_.21} parent=5 // pred_fallthru
      _
  $region6: #{_lambda_.21} parent=0 // loop_footer
    %s12 = sadd.s32 1, %s8
  $region7: #{_lambda_.21} parent=0 // loop_footer_branch
    %7 = sbr.rel target = $region3
  $region8: #{_lambda_.21} parent=0 // loop_exit
    _

// kernel: _lambda_.24
$region0: #{_lambda_.24}
  #allocation0 [shape = 'u32[]', space=smem, size = 0x4, offset = 0x4, fixed_abs, tag = 'smem constant byte address 0x4 - core index']
  #allocation1 [shape = 'u32[144,128]{1,0:T(1,128)}', space=vmem, size = 0x12000, scoped, tag = 'internal scratch']
  %s0 = inlined_call_operand.vmem [shape: bf16[512,128], index: 0, kind: input, shape index: {}]
  %s1 = inlined_call_operand.vmem [shape: bf16[128,128], index: 1, kind: input, shape index: {}]
  %s2 = inlined_call_operand.vmem [shape: f32[1,128], index: 2, kind: input, shape index: {}]
  %s3 = inlined_call_operand.vmem [shape: f32[512,128], index: 3, kind: output, shape index: {}]
  %s4 = sld [smem:[#allocation0]]
  $region22: #{_lambda_.24} parent=0
    _
  %s6 = ssub.s32 1, %s4
  %s7 = scalar_select 0, %s6, %s4
  // Predicated region
  $region2: #{_lambda_.24} parent=0 // pred_check
    _
  $region3: #{_lambda_.24} parent=0 // pred_check_branch
    %9 = sbr.rel (0) target = $region5
  $region4: #{_lambda_.24} parent=0 // pred_region
    _
  $region5: #{_lambda_.24} parent=0 // pred_fallthru
    _
  // Predicated region
  $region6: #{_lambda_.24} parent=0 // pred_check
    _
  $region7: #{_lambda_.24} parent=0 // pred_check_branch
    %11 = sbr.rel (0) target = $region9
  $region8: #{_lambda_.24} parent=0 // pred_region
    _
  $region9: #{_lambda_.24} parent=0 // pred_fallthru
    _
  // Predicated region
  $region10: #{_lambda_.24} parent=0 // pred_check
    _
  $region11: #{_lambda_.24} parent=0 // pred_check_branch
    %13 = sbr.rel (0) target = $region13
  $region12: #{_lambda_.24} parent=0 // pred_region
    _
  $region13: #{_lambda_.24} parent=0 // pred_fallthru
    _
  %v15 = vld [vmem:[%s0] sm:$0xf]
  %v16 = vld [vmem:[%s0 + $0x4] sm:$0xf]
  %v17 = vld [vmem:[%s0 + $0x8] sm:$0xf]
  %v18 = vld [vmem:[%s0 + $0xc] sm:$0xf]
  %v19 = vld [vmem:[%s0 + $0x10] sm:$0xf]
  %v20 = vld [vmem:[%s0 + $0x14] sm:$0xf]
  %v21 = vld [vmem:[%s0 + $0x18] sm:$0xf]
  %v22 = vld [vmem:[%s0 + $0x1c] sm:$0xf]
  %v23 = vld [vmem:[%s0 + $0x20] sm:$0xf]
  %v24 = vld [vmem:[%s0 + $0x24] sm:$0xf]
  %v25 = vld [vmem:[%s0 + $0x28] sm:$0xf]
  %v26 = vld [vmem:[%s0 + $0x2c] sm:$0xf]
  %v27 = vld [vmem:[%s0 + $0x30] sm:$0xf]
  %v28 = vld [vmem:[%s0 + $0x34] sm:$0xf]
  %v29 = vld [vmem:[%s0 + $0x38] sm:$0xf]
  %v30 = vld [vmem:[%s0 + $0x3c] sm:$0xf]
  %v31 = vld [vmem:[%s0 + $0x40] sm:$0xf]
  %v32 = vld [vmem:[%s0 + $0x44] sm:$0xf]
  %v33 = vld [vmem:[%s0 + $0x48] sm:$0xf]
  %v34 = vld [vmem:[%s0 + $0x4c] sm:$0xf]
  %v35 = vld [vmem:[%s0 + $0x50] sm:$0xf]
  %v36 = vld [vmem:[%s0 + $0x54] sm:$0xf]
  %v37 = vld [vmem:[%s0 + $0x58] sm:$0xf]
  %v38 = vld [vmem:[%s0 + $0x5c] sm:$0xf]
  %v39 = vld [vmem:[%s0 + $0x60] sm:$0xf]
  %v40 = vld [vmem:[%s0 + $0x64] sm:$0xf]
  %v41 = vld [vmem:[%s0 + $0x68] sm:$0xf]
  %v42 = vld [vmem:[%s0 + $0x6c] sm:$0xf]
  %v43 = vld [vmem:[%s0 + $0x70] sm:$0xf]
  %v44 = vld [vmem:[%s0 + $0x74] sm:$0xf]
  %v45 = vld [vmem:[%s0 + $0x78] sm:$0xf]
  %v46 = vld [vmem:[%s0 + $0x7c] sm:$0xf]
  %v47 = vld [vmem:[%s0 + $0x80] sm:$0xf]
  %v48 = vld [vmem:[%s0 + $0x84] sm:$0xf]
  %v49 = vld [vmem:[%s0 + $0x88] sm:$0xf]
  %v50 = vld [vmem:[%s0 + $0x8c] sm:$0xf]
  %v51 = vld [vmem:[%s0 + $0x90] sm:$0xf]
  %v52 = vld [vmem:[%s0 + $0x94] sm:$0xf]
  %v53 = vld [vmem:[%s0 + $0x98] sm:$0xf]
  %v54 = vld [vmem:[%s0 + $0x9c] sm:$0xf]
  %v55 = vld [vmem:[%s0 + $0xa0] sm:$0xf]
  %v56 = vld [vmem:[%s0 + $0xa4] sm:$0xf]
  %v57 = vld [vmem:[%s0 + $0xa8] sm:$0xf]
  %v58 = vld [vmem:[%s0 + $0xac] sm:$0xf]
  %v59 = vld [vmem:[%s0 + $0xb0] sm:$0xf]
  %v60 = vld [vmem:[%s0 + $0xb4] sm:$0xf]
  %v61 = vld [vmem:[%s0 + $0xb8] sm:$0xf]
  %v62 = vld [vmem:[%s0 + $0xbc] sm:$0xf]
  %v63 = vld [vmem:[%s0 + $0xc0] sm:$0xf]
  %v64 = vld [vmem:[%s0 + $0xc4] sm:$0xf]
  %v65 = vld [vmem:[%s0 + $0xc8] sm:$0xf]
  %v66 = vld [vmem:[%s0 + $0xcc] sm:$0xf]
  %v67 = vld [vmem:[%s0 + $0xd0] sm:$0xf]
  %v68 = vld [vmem:[%s0 + $0xd4] sm:$0xf]
  %v69 = vld [vmem:[%s0 + $0xd8] sm:$0xf]
  %v70 = vld [vmem:[%s0 + $0xdc] sm:$0xf]
  %v71 = vld [vmem:[%s0 + $0xe0] sm:$0xf]
  %v72 = vld [vmem:[%s0 + $0xe4] sm:$0xf]
  %v73 = vld [vmem:[%s0 + $0xe8] sm:$0xf]
  %v74 = vld [vmem:[%s0 + $0xec] sm:$0xf]
  %v75 = vld [vmem:[%s0 + $0xf0] sm:$0xf]
  %v76 = vld [vmem:[%s0 + $0xf4] sm:$0xf]
  %v77 = vld [vmem:[%s0 + $0xf8] sm:$0xf]
  %v78 = vld [vmem:[%s0 + $0xfc] sm:$0xf]
  %v79 = vld [vmem:[%s1] sm:$0xf]
  %v80 = vld [vmem:[%s1 + $0x4] sm:$0xf]
  %v81 = vld [vmem:[%s1 + $0x8] sm:$0xf]
  %v82 = vld [vmem:[%s1 + $0xc] sm:$0xf]
  %v83 = vld [vmem:[%s1 + $0x10] sm:$0xf]
  %v84 = vld [vmem:[%s1 + $0x14] sm:$0xf]
  %v85 = vld [vmem:[%s1 + $0x18] sm:$0xf]
  %v86 = vld [vmem:[%s1 + $0x1c] sm:$0xf]
  %v87 = vld [vmem:[%s1 + $0x20] sm:$0xf]
  %v88 = vld [vmem:[%s1 + $0x24] sm:$0xf]
  %v89 = vld [vmem:[%s1 + $0x28] sm:$0xf]
  %v90 = vld [vmem:[%s1 + $0x2c] sm:$0xf]
  %v91 = vld [vmem:[%s1 + $0x30] sm:$0xf]
  %v92 = vld [vmem:[%s1 + $0x34] sm:$0xf]
  %v93 = vld [vmem:[%s1 + $0x38] sm:$0xf]
  %v94 = vld [vmem:[%s1 + $0x3c] sm:$0xf]
  %v95 = vld [vmem:[%s2] sm:$0x1]
  %v97 = vlaneseq
  %v98 = vshrl.u32 %v97, 7
  %v99 = vsub.s32 0, %v98
  %v100 = vrot.slane %v95, %v99
  %v166 = vunpack.c.l.b16 %v15
  %v167 = vunpack.c.l.b16 %v16
  %v168 = vunpack.c.l.b16 %v17
  %v169 = vunpack.c.l.b16 %v18
  %v170 = vunpack.c.l.b16 %v19
  %v171 = vunpack.c.l.b16 %v20
  %v172 = vunpack.c.l.b16 %v21
  %v173 = vunpack.c.l.b16 %v22
  %v174 = vunpack.c.l.b16 %v23
  %v175 = vunpack.c.l.b16 %v24
  %v176 = vunpack.c.l.b16 %v25
  %v177 = vunpack.c.l.b16 %v26
  %v178 = vunpack.c.l.b16 %v27
  %v179 = vunpack.c.l.b16 %v28
  %v180 = vunpack.c.l.b16 %v29
  %v181 = vunpack.c.l.b16 %v30
  %v182 = vunpack.c.l.b16 %v31
  %v183 = vunpack.c.l.b16 %v32
  %v184 = vunpack.c.l.b16 %v33
  %v185 = vunpack.c.l.b16 %v34
  %v186 = vunpack.c.l.b16 %v35
  %v187 = vunpack.c.l.b16 %v36
  %v188 = vunpack.c.l.b16 %v37
  %v189 = vunpack.c.l.b16 %v38
  %v190 = vunpack.c.l.b16 %v39
  %v191 = vunpack.c.l.b16 %v40
  %v192 = vunpack.c.l.b16 %v41
  %v193 = vunpack.c.l.b16 %v42
  %v194 = vunpack.c.l.b16 %v43
  %v195 = vunpack.c.l.b16 %v44
  %v196 = vunpack.c.l.b16 %v45
  %v197 = vunpack.c.l.b16 %v46
  %v198 = vunpack.c.l.b16 %v47
  %v199 = vunpack.c.l.b16 %v48
  %v200 = vunpack.c.l.b16 %v49
  %v201 = vunpack.c.l.b16 %v50
  %v202 = vunpack.c.l.b16 %v51
  %v203 = vunpack.c.l.b16 %v52
  %v204 = vunpack.c.l.b16 %v53
  %v205 = vunpack.c.l.b16 %v54
  %v206 = vunpack.c.l.b16 %v55
  %v207 = vunpack.c.l.b16 %v56
  %v208 = vunpack.c.l.b16 %v57
  %v209 = vunpack.c.l.b16 %v58
  %v210 = vunpack.c.l.b16 %v59
  %v211 = vunpack.c.l.b16 %v60
  %v212 = vunpack.c.l.b16 %v61
  %v213 = vunpack.c.l.b16 %v62
  %v214 = vunpack.c.l.b16 %v63
  %v215 = vunpack.c.l.b16 %v64
  %v216 = vunpack.c.l.b16 %v65
  %v217 = vunpack.c.l.b16 %v66
  %v218 = vunpack.c.l.b16 %v67
  %v219 = vunpack.c.l.b16 %v68
  %v220 = vunpack.c.l.b16 %v69
  %v221 = vunpack.c.l.b16 %v70
  %v222 = vunpack.c.l.b16 %v71
  %v223 = vunpack.c.l.b16 %v72
  %v224 = vunpack.c.l.b16 %v73
  %v225 = vunpack.c.l.b16 %v74
  %v226 = vunpack.c.l.b16 %v75
  %v227 = vunpack.c.l.b16 %v76
  %v228 = vunpack.c.l.b16 %v77
  %v229 = vunpack.c.l.b16 %v78
  %v230 = vpack.c.b16 %v167, %v166
  %v231 = vpack.c.b16 %v169, %v168
  %v232 = vpack.c.b16 %v171, %v170
  %v233 = vpack.c.b16 %v173, %v172
  %v234 = vpack.c.b16 %v175, %v174
  %v235 = vpack.c.b16 %v177, %v176
  %v236 = vpack.c.b16 %v179, %v178
  %v237 = vpack.c.b16 %v181, %v180
  %v238 = vpack.c.b16 %v183, %v182
  %v239 = vpack.c.b16 %v185, %v184
  %v240 = vpack.c.b16 %v187, %v186
  %v241 = vpack.c.b16 %v189, %v188
  %v242 = vpack.c.b16 %v191, %v190
  %v243 = vpack.c.b16 %v193, %v192
  %v244 = vpack.c.b16 %v195, %v194
  %v245 = vpack.c.b16 %v197, %v196
  %v246 = vpack.c.b16 %v199, %v198
  %v247 = vpack.c.b16 %v201, %v200
  %v248 = vpack.c.b16 %v203, %v202
  %v249 = vpack.c.b16 %v205, %v204
  %v250 = vpack.c.b16 %v207, %v206
  %v251 = vpack.c.b16 %v209, %v208
  %v252 = vpack.c.b16 %v211, %v210
  %v253 = vpack.c.b16 %v213, %v212
  %v254 = vpack.c.b16 %v215, %v214
  %v255 = vpack.c.b16 %v217, %v216
  %v256 = vpack.c.b16 %v219, %v218
  %v257 = vpack.c.b16 %v221, %v220
  %v258 = vpack.c.b16 %v223, %v222
  %v259 = vpack.c.b16 %v225, %v224
  %v260 = vpack.c.b16 %v227, %v226
  %v261 = vpack.c.b16 %v229, %v228
  %v310 = vunpack.c.l.b16 %v79
  %v311 = vunpack.c.l.b16 %v80
  %v312 = vunpack.c.l.b16 %v81
  %v313 = vunpack.c.l.b16 %v82
  %v314 = vunpack.c.l.b16 %v83
  %v315 = vunpack.c.l.b16 %v84
  %v316 = vunpack.c.l.b16 %v85
  %v317 = vunpack.c.l.b16 %v86
  %v318 = vunpack.c.l.b16 %v87
  %v319 = vunpack.c.l.b16 %v88
  %v320 = vunpack.c.l.b16 %v89
  %v321 = vunpack.c.l.b16 %v90
  %v322 = vunpack.c.l.b16 %v91
  %v323 = vunpack.c.l.b16 %v92
  %v324 = vunpack.c.l.b16 %v93
  %v325 = vunpack.c.l.b16 %v94
  %v326 = vpack.c.b16 %v311, %v310
  %v327 = vpack.c.b16 %v313, %v312
  %v328 = vpack.c.b16 %v315, %v314
  %v329 = vpack.c.b16 %v317, %v316
  %v330 = vpack.c.b16 %v319, %v318
  %v331 = vpack.c.b16 %v321, %v320
  %v332 = vpack.c.b16 %v323, %v322
  %v333 = vpack.c.b16 %v325, %v324
  %342 = vmatprep.subr.bf16.mxu0 0
  %343 = vmatpush1.bf16.msra.mxu0 %v326
  %344 = vmatprep.subr.bf16.mxu0 0
  %345 = vmatpush1.bf16.msra.mxu0 %v327
  %346 = vmatprep.subr.bf16.mxu0 0
  %347 = vmatpush1.bf16.msra.mxu0 %v328
  %348 = vmatprep.subr.bf16.mxu0 0
  %349 = vmatpush1.bf16.msra.mxu0 %v329
  %350 = vmatprep.subr.bf16.mxu0 0
  %351 = vmatpush1.bf16.msra.mxu0 %v330
  %352 = vmatprep.subr.bf16.mxu0 0
  %353 = vmatpush1.bf16.msra.mxu0 %v331
  %354 = vmatprep.subr.bf16.mxu0 0
  %355 = vmatpush1.bf16.msra.mxu0 %v332
  %356 = vmatprep.subr.bf16.mxu0 0
  %357 = vmatpush1.bf16.msra.mxu0 %v333
  %358 = vmatprep.subr.bf16.mxu0 0
  %359 = vmatpush1.bf16.msra.mxu0 0
  %360 = vmatprep.subr.bf16.mxu0 0
  %361 = vmatpush1.bf16.msra.mxu0 0
  %362 = vmatprep.subr.bf16.mxu0 0
  %363 = vmatpush1.bf16.msra.mxu0 0
  %364 = vmatprep.subr.bf16.mxu0 0
  %365 = vmatpush1.bf16.msra.mxu0 0
  %366 = vmatprep.subr.bf16.mxu0 0
  %367 = vmatpush1.bf16.msra.mxu0 0
  %368 = vmatprep.subr.bf16.mxu0 0
  %369 = vmatpush1.bf16.msra.mxu0 0
  %370 = vmatprep.subr.bf16.mxu0 0
  %371 = vmatpush1.bf16.msra.mxu0 0
  %372 = vmatprep.subr.bf16.mxu0 0
  %373 = vmatpush1.bf16.msra.mxu0 0
  %374 = vmatprep.mubr.bf16.mxu0 0
  %375 = vmatmul.mubr.bf16.gmra.mrb[0].mxu0 %v230
  %v376 = vpop.f32.mrb[0].mxu0
  %v377 = vadd.f32 %v100, %v376
  %v378 = vpop.f32.mrb[0].mxu0
  %v379 = vpop.f32.mrb[0].mxu0
  %v380 = vadd.f32 %v100, %v379
  %v381 = vpop.f32.mrb[0].mxu0
  %382 = vmatprep.mubr.bf16.mxu0 0
  %383 = vmatmul.mubr.bf16.gmra.mrb[0].mxu0 %v231
  %v384 = vpop.f32.mrb[0].mxu0
  %v385 = vadd.f32 %v100, %v384
  %v386 = vpop.f32.mrb[0].mxu0
  %v387 = vpop.f32.mrb[0].mxu0
  %v388 = vadd.f32 %v100, %v387
  %v389 = vpop.f32.mrb[0].mxu0
  %390 = vmatprep.mubr.bf16.mxu0 0
  %391 = vmatmul.mubr.bf16.gmra.mrb[0].mxu0 %v232
  %v392 = vpop.f32.mrb[0].mxu0
  %v393 = vadd.f32 %v100, %v392
  %v394 = vpop.f32.mrb[0].mxu0
  %v395 = vpop.f32.mrb[0].mxu0
  %v396 = vadd.f32 %v100, %v395
  %v397 = vpop.f32.mrb[0].mxu0
  %398 = vmatprep.mubr.bf16.mxu0 0
  %399 = vmatmul.mubr.bf16.gmra.mrb[0].mxu0 %v233
  %v400 = vpop.f32.mrb[0].mxu0
  %v401 = vadd.f32 %v100, %v400
  %v402 = vpop.f32.mrb[0].mxu0
  %v403 = vpop.f32.mrb[0].mxu0
  %v404 = vadd.f32 %v100, %v403
  %v405 = vpop.f32.mrb[0].mxu0
  %406 = vmatprep.mubr.bf16.mxu0 0
  %407 = vmatmul.mubr.bf16.gmra.mrb[0].mxu0 %v234
  %v408 = vpop.f32.mrb[0].mxu0
  %v409 = vadd.f32 %v100, %v408
  %v410 = vpop.f32.mrb[0].mxu0
  %v411 = vpop.f32.mrb[0].mxu0
  %v412 = vadd.f32 %v100, %v411
  %v413 = vpop.f32.mrb[0].mxu0
  %414 = vmatprep.mubr.bf16.mxu0 0
  %415 = vmatmul.mubr.bf16.gmra.mrb[0].mxu0 %v235
  %v416 = vpop.f32.mrb[0].mxu0
  %v417 = vadd.f32 %v100, %v416
  %v418 = vpop.f32.mrb[0].mxu0
  %v419 = vpop.f32.mrb[0].mxu0
  %v420 = vadd.f32 %v100, %v419
  %v421 = vpop.f32.mrb[0].mxu0
  %422 = vmatprep.mubr.bf16.mxu0 0
  %423 = vmatmul.mubr.bf16.gmra.mrb[0].mxu0 %v236
  %v424 = vpop.f32.mrb[0].mxu0
  %v425 = vadd.f32 %v100, %v424
  %v426 = vpop.f32.mrb[0].mxu0
  %v427 = vpop.f32.mrb[0].mxu0
  %v428 = vadd.f32 %v100, %v427
  %v429 = vpop.f32.mrb[0].mxu0
  %430 = vmatprep.mubr.bf16.mxu0 0
  %431 = vmatmul.mubr.bf16.gmra.mrb[0].mxu0 %v237
  %v432 = vpop.f32.mrb[0].mxu0
  %v433 = vadd.f32 %v100, %v432
  %v434 = vpop.f32.mrb[0].mxu0
  %v435 = vpop.f32.mrb[0].mxu0
  %v436 = vadd.f32 %v100, %v435
  %v437 = vpop.f32.mrb[0].mxu0
  %438 = vmatprep.mubr.bf16.mxu0 0
  %439 = vmatmul.mubr.bf16.gmra.mrb[0].mxu0 %v238
  %v440 = vpop.f32.mrb[0].mxu0
  %v441 = vadd.f32 %v100, %v440
  %v442 = vpop.f32.mrb[0].mxu0
  %v443 = vpop.f32.mrb[0].mxu0
  %v444 = vadd.f32 %v100, %v443
  %v445 = vpop.f32.mrb[0].mxu0
  %446 = vmatprep.mubr.bf16.mxu0 0
  %447 = vmatmul.mubr.bf16.gmra.mrb[0].mxu0 %v239
  %v448 = vpop.f32.mrb[0].mxu0
  %v449 = vadd.f32 %v100, %v448
  %v450 = vpop.f32.mrb[0].mxu0
  %v451 = vpop.f32.mrb[0].mxu0
  %v452 = vadd.f32 %v100, %v451
  %v453 = vpop.f32.mrb[0].mxu0
  %454 = vmatprep.mubr.bf16.mxu0 0
  %455 = vmatmul.mubr.bf16.gmra.mrb[0].mxu0 %v240
  %v456 = vpop.f32.mrb[0].mxu0
  %v457 = vadd.f32 %v100, %v456
  %v458 = vpop.f32.mrb[0].mxu0
  %v459 = vpop.f32.mrb[0].mxu0
  %v460 = vadd.f32 %v100, %v459
  %v461 = vpop.f32.mrb[0].mxu0
  %462 = vmatprep.mubr.bf16.mxu0 0
  %463 = vmatmul.mubr.bf16.gmra.mrb[0].mxu0 %v241
  %v464 = vpop.f32.mrb[0].mxu0
  %v465 = vadd.f32 %v100, %v464
  %v466 = vpop.f32.mrb[0].mxu0
  %v467 = vpop.f32.mrb[0].mxu0
  %v468 = vadd.f32 %v100, %v467
  %v469 = vpop.f32.mrb[0].mxu0
  %470 = vmatprep.mubr.bf16.mxu0 0
  %471 = vmatmul.mubr.bf16.gmra.mrb[0].mxu0 %v242
  %v472 = vpop.f32.mrb[0].mxu0
  %v473 = vadd.f32 %v100, %v472
  %v474 = vpop.f32.mrb[0].mxu0
  %v475 = vpop.f32.mrb[0].mxu0
  %v476 = vadd.f32 %v100, %v475
  %v477 = vpop.f32.mrb[0].mxu0
  %478 = vmatprep.mubr.bf16.mxu0 0
  %479 = vmatmul.mubr.bf16.gmra.mrb[0].mxu0 %v243
  %v480 = vpop.f32.mrb[0].mxu0
  %v481 = vadd.f32 %v100, %v480
  %v482 = vpop.f32.mrb[0].mxu0
  %v483 = vpop.f32.mrb[0].mxu0
  %v484 = vadd.f32 %v100, %v483
  %v485 = vpop.f32.mrb[0].mxu0
  %486 = vmatprep.mubr.bf16.mxu0 0
  %487 = vmatmul.mubr.bf16.gmra.mrb[0].mxu0 %v244
  %v488 = vpop.f32.mrb[0].mxu0
  %v489 = vadd.f32 %v100, %v488
  %v490 = vpop.f32.mrb[0].mxu0
  %v491 = vpop.f32.mrb[0].mxu0
  %v492 = vadd.f32 %v100, %v491
  %v493 = vpop.f32.mrb[0].mxu0
  %494 = vmatprep.mubr.bf16.mxu0 0
  %495 = vmatmul.mubr.bf16.gmra.mrb[0].mxu0 %v245
  %v496 = vpop.f32.mrb[0].mxu0
  %v497 = vadd.f32 %v100, %v496
  %v498 = vpop.f32.mrb[0].mxu0
  %v499 = vpop.f32.mrb[0].mxu0
  %v500 = vadd.f32 %v100, %v499
  %v501 = vpop.f32.mrb[0].mxu0
  %502 = vmatprep.mubr.bf16.mxu0 0
  %503 = vmatmul.mubr.bf16.gmra.mrb[0].mxu0 %v246
  %v504 = vpop.f32.mrb[0].mxu0
  %v505 = vadd.f32 %v100, %v504
  %v506 = vpop.f32.mrb[0].mxu0
  %v507 = vpop.f32.mrb[0].mxu0
  %v508 = vadd.f32 %v100, %v507
  %v509 = vpop.f32.mrb[0].mxu0
  %510 = vmatprep.mubr.bf16.mxu0 0
  %511 = vmatmul.mubr.bf16.gmra.mrb[0].mxu0 %v247
  %v512 = vpop.f32.mrb[0].mxu0
  %v513 = vadd.f32 %v100, %v512
  %v514 = vpop.f32.mrb[0].mxu0
  %v515 = vpop.f32.mrb[0].mxu0
  %v516 = vadd.f32 %v100, %v515
  %v517 = vpop.f32.mrb[0].mxu0
  %518 = vmatprep.mubr.bf16.mxu0 0
  %519 = vmatmul.mubr.bf16.gmra.mrb[0].mxu0 %v248
  %v520 = vpop.f32.mrb[0].mxu0
  %v521 = vadd.f32 %v100, %v520
  %v522 = vpop.f32.mrb[0].mxu0
  %v523 = vpop.f32.mrb[0].mxu0
  %v524 = vadd.f32 %v100, %v523
  %v525 = vpop.f32.mrb[0].mxu0
  %526 = vmatprep.mubr.bf16.mxu0 0
  %527 = vmatmul.mubr.bf16.gmra.mrb[0].mxu0 %v249
  %v528 = vpop.f32.mrb[0].mxu0
  %v529 = vadd.f32 %v100, %v528
  %v530 = vpop.f32.mrb[0].mxu0
  %v531 = vpop.f32.mrb[0].mxu0
  %v532 = vadd.f32 %v100, %v531
  %v533 = vpop.f32.mrb[0].mxu0
  %534 = vmatprep.mubr.bf16.mxu0 0
  %535 = vmatmul.mubr.bf16.gmra.mrb[0].mxu0 %v250
  %v536 = vpop.f32.mrb[0].mxu0
  %v537 = vadd.f32 %v100, %v536
  %v538 = vpop.f32.mrb[0].mxu0
  %v539 = vpop.f32.mrb[0].mxu0
  %v540 = vadd.f32 %v100, %v539
  %v541 = vpop.f32.mrb[0].mxu0
  %542 = vmatprep.mubr.bf16.mxu0 0
  %543 = vmatmul.mubr.bf16.gmra.mrb[0].mxu0 %v251
  %v544 = vpop.f32.mrb[0].mxu0
  %v545 = vadd.f32 %v100, %v544
  %v546 = vpop.f32.mrb[0].mxu0
  %v547 = vpop.f32.mrb[0].mxu0
  %v548 = vadd.f32 %v100, %v547
  %v549 = vpop.f32.mrb[0].mxu0
  %550 = vmatprep.mubr.bf16.mxu0 0
  %551 = vmatmul.mubr.bf16.gmra.mrb[0].mxu0 %v252
  %v552 = vpop.f32.mrb[0].mxu0
  %v553 = vadd.f32 %v100, %v552
  %v554 = vpop.f32.mrb[0].mxu0
  %v555 = vpop.f32.mrb[0].mxu0
  %v556 = vadd.f32 %v100, %v555
  %v557 = vpop.f32.mrb[0].mxu0
  %558 = vmatprep.mubr.bf16.mxu0 0
  %559 = vmatmul.mubr.bf16.gmra.mrb[0].mxu0 %v253
  %v560 = vpop.f32.mrb[0].mxu0
  %v561 = vadd.f32 %v100, %v560
  %v562 = vpop.f32.mrb[0].mxu0
  %v563 = vpop.f32.mrb[0].mxu0
  %v564 = vadd.f32 %v100, %v563
  %v565 = vpop.f32.mrb[0].mxu0
  %566 = vmatprep.mubr.bf16.mxu0 0
  %567 = vmatmul.mubr.bf16.gmra.mrb[0].mxu0 %v254
  %v568 = vpop.f32.mrb[0].mxu0
  %v569 = vadd.f32 %v100, %v568
  %v570 = vpop.f32.mrb[0].mxu0
  %v571 = vpop.f32.mrb[0].mxu0
  %v572 = vadd.f32 %v100, %v571
  %v573 = vpop.f32.mrb[0].mxu0
  %574 = vmatprep.mubr.bf16.mxu0 0
  %575 = vmatmul.mubr.bf16.gmra.mrb[0].mxu0 %v255
  %v576 = vpop.f32.mrb[0].mxu0
  %v577 = vadd.f32 %v100, %v576
  %v578 = vpop.f32.mrb[0].mxu0
  %v579 = vpop.f32.mrb[0].mxu0
  %v580 = vadd.f32 %v100, %v579
  %v581 = vpop.f32.mrb[0].mxu0
  %582 = vmatprep.mubr.bf16.mxu0 0
  %583 = vmatmul.mubr.bf16.gmra.mrb[0].mxu0 %v256
  %v584 = vpop.f32.mrb[0].mxu0
  %v585 = vadd.f32 %v100, %v584
  %v586 = vpop.f32.mrb[0].mxu0
  %v587 = vpop.f32.mrb[0].mxu0
  %v588 = vadd.f32 %v100, %v587
  %v589 = vpop.f32.mrb[0].mxu0
  %590 = vmatprep.mubr.bf16.mxu0 0
  %591 = vmatmul.mubr.bf16.gmra.mrb[0].mxu0 %v257
  %v592 = vpop.f32.mrb[0].mxu0
  %v593 = vadd.f32 %v100, %v592
  %v594 = vpop.f32.mrb[0].mxu0
  %v595 = vpop.f32.mrb[0].mxu0
  %v596 = vadd.f32 %v100, %v595
  %v597 = vpop.f32.mrb[0].mxu0
  %598 = vmatprep.mubr.bf16.mxu0 0
  %599 = vmatmul.mubr.bf16.gmra.mrb[0].mxu0 %v258
  %v600 = vpop.f32.mrb[0].mxu0
  %v601 = vadd.f32 %v100, %v600
  %v602 = vpop.f32.mrb[0].mxu0
  %v603 = vpop.f32.mrb[0].mxu0
  %v604 = vadd.f32 %v100, %v603
  %v605 = vpop.f32.mrb[0].mxu0
  %606 = vmatprep.mubr.bf16.mxu0 0
  %607 = vmatmul.mubr.bf16.gmra.mrb[0].mxu0 %v259
  %v608 = vpop.f32.mrb[0].mxu0
  %v609 = vadd.f32 %v100, %v608
  %v610 = vpop.f32.mrb[0].mxu0
  %v611 = vpop.f32.mrb[0].mxu0
  %v612 = vadd.f32 %v100, %v611
  %v613 = vpop.f32.mrb[0].mxu0
  %614 = vmatprep.mubr.bf16.mxu0 0
  %615 = vmatmul.mubr.bf16.gmra.mrb[0].mxu0 %v260
  %v616 = vpop.f32.mrb[0].mxu0
  %v617 = vadd.f32 %v100, %v616
  %v618 = vpop.f32.mrb[0].mxu0
  %v619 = vpop.f32.mrb[0].mxu0
  %v620 = vadd.f32 %v100, %v619
  %v621 = vpop.f32.mrb[0].mxu0
  %622 = vmatprep.mubr.bf16.mxu0 0
  %623 = vmatmul.mubr.bf16.gmra.mrb[0].mxu0 %v261
  %v624 = vpop.f32.mrb[0].mxu0
  %v625 = vadd.f32 %v100, %v624
  %v626 = vpop.f32.mrb[0].mxu0
  %v627 = vpop.f32.mrb[0].mxu0
  %v628 = vadd.f32 %v100, %v627
  %v629 = vpop.f32.mrb[0].mxu0
  %630 = vdwg.mxu0
  %631 = vst [vmem:[%s3] sm:$0xff] %v377
  %632 = vst [vmem:[%s3 + $0x8] sm:$0xff] %v380
  %633 = vst [vmem:[%s3 + $0x10] sm:$0xff] %v385
  %634 = vst [vmem:[%s3 + $0x18] sm:$0xff] %v388
  %635 = vst [vmem:[%s3 + $0x20] sm:$0xff] %v393
  %636 = vst [vmem:[%s3 + $0x28] sm:$0xff] %v396
  %637 = vst [vmem:[%s3 + $0x30] sm:$0xff] %v401
  %638 = vst [vmem:[%s3 + $0x38] sm:$0xff] %v404
  %639 = vst [vmem:[%s3 + $0x40] sm:$0xff] %v409
  %640 = vst [vmem:[%s3 + $0x48] sm:$0xff] %v412
  %641 = vst [vmem:[%s3 + $0x50] sm:$0xff] %v417
  %642 = vst [vmem:[%s3 + $0x58] sm:$0xff] %v420
  %643 = vst [vmem:[%s3 + $0x60] sm:$0xff] %v425
  %644 = vst [vmem:[%s3 + $0x68] sm:$0xff] %v428
  %645 = vst [vmem:[%s3 + $0x70] sm:$0xff] %v433
  %646 = vst [vmem:[%s3 + $0x78] sm:$0xff] %v436
  %647 = vst [vmem:[%s3 + $0x80] sm:$0xff] %v441
  %648 = vst [vmem:[%s3 + $0x88] sm:$0xff] %v444
  %649 = vst [vmem:[%s3 + $0x90] sm:$0xff] %v449
  %650 = vst [vmem:[%s3 + $0x98] sm:$0xff] %v452
  %651 = vst [vmem:[%s3 + $0xa0] sm:$0xff] %v457
  %652 = vst [vmem:[%s3 + $0xa8] sm:$0xff] %v460
  %653 = vst [vmem:[%s3 + $0xb0] sm:$0xff] %v465
  %654 = vst [vmem:[%s3 + $0xb8] sm:$0xff] %v468
  %655 = vst [vmem:[%s3 + $0xc0] sm:$0xff] %v473
  %656 = vst [vmem:[%s3 + $0xc8] sm:$0xff] %v476
  %657 = vst [vmem:[%s3 + $0xd0] sm:$0xff] %v481
  %658 = vst [vmem:[%s3 + $0xd8] sm:$0xff] %v484
  %659 = vst [vmem:[%s3 + $0xe0] sm:$0xff] %v489
  %660 = vst [vmem:[%s3 + $0xe8] sm:$0xff] %v492
  %661 = vst [vmem:[%s3 + $0xf0] sm:$0xff] %v497
  %662 = vst [vmem:[%s3 + $0xf8] sm:$0xff] %v500
  %663 = vst [vmem:[%s3 + $0x100] sm:$0xff] %v505
  %664 = vst [vmem:[%s3 + $0x108] sm:$0xff] %v508
  %665 = vst [vmem:[%s3 + $0x110] sm:$0xff] %v513
  %666 = vst [vmem:[%s3 + $0x118] sm:$0xff] %v516
  %667 = vst [vmem:[%s3 + $0x120] sm:$0xff] %v521
  %668 = vst [vmem:[%s3 + $0x128] sm:$0xff] %v524
  %669 = vst [vmem:[%s3 + $0x130] sm:$0xff] %v529
  %670 = vst [vmem:[%s3 + $0x138] sm:$0xff] %v532
  %671 = vst [vmem:[%s3 + $0x140] sm:$0xff] %v537
  %672 = vst [vmem:[%s3 + $0x148] sm:$0xff] %v540
  %673 = vst [vmem:[%s3 + $0x150] sm:$0xff] %v545
  %674 = vst [vmem:[%s3 + $0x158] sm:$0xff] %v548
  %675 = vst [vmem:[%s3 + $0x160] sm:$0xff] %v553
  %676 = vst [vmem:[%s3 + $0x168] sm:$0xff] %v556
  %677 = vst [vmem:[%s3 + $0x170] sm:$0xff] %v561
  %678 = vst [vmem:[%s3 + $0x178] sm:$0xff] %v564
  %679 = vst [vmem:[%s3 + $0x180] sm:$0xff] %v569
  %680 = vst [vmem:[%s3 + $0x188] sm:$0xff] %v572
  %681 = vst [vmem:[%s3 + $0x190] sm:$0xff] %v577
  %682 = vst [vmem:[%s3 + $0x198] sm:$0xff] %v580
  %683 = vst [vmem:[%s3 + $0x1a0] sm:$0xff] %v585
  %684 = vst [vmem:[%s3 + $0x1a8] sm:$0xff] %v588
  %685 = vst [vmem:[%s3 + $0x1b0] sm:$0xff] %v593
  %686 = vst [vmem:[%s3 + $0x1b8] sm:$0xff] %v596
  %687 = vst [vmem:[%s3 + $0x1c0] sm:$0xff] %v601
  %688 = vst [vmem:[%s3 + $0x1c8] sm:$0xff] %v604
  %689 = vst [vmem:[%s3 + $0x1d0] sm:$0xff] %v609
  %690 = vst [vmem:[%s3 + $0x1d8] sm:$0xff] %v612
  %691 = vst [vmem:[%s3 + $0x1e0] sm:$0xff] %v617
  %692 = vst [vmem:[%s3 + $0x1e8] sm:$0xff] %v620
  %693 = vst [vmem:[%s3 + $0x1f0] sm:$0xff] %v625
  %694 = vst [vmem:[%s3 + $0x1f8] sm:$0xff] %v628
  // Predicated region
  $region14: #{_lambda_.24} parent=0 // pred_check
    _
  $region15: #{_lambda_.24} parent=0 // pred_check_branch
    %696 = sbr.rel (0) target = $region17
  $region16: #{_lambda_.24} parent=0 // pred_region
    _
  $region17: #{_lambda_.24} parent=0 // pred_fallthru
    _
  // Predicated region
  $region18: #{_lambda_.24} parent=0 // pred_check
    _
  $region19: #{_lambda_.24} parent=0 // pred_check_branch
    %698 = sbr.rel (0) target = $region21
  $region20: #{_lambda_.24} parent=0 // pred_region
    _
  $region21: #{_lambda_.24} parent=0 // pred_fallthru
    _

// kernel: _lambda_.22
$region0: #{_lambda_.22}
  #allocation0 [shape = 'u32[]', space=smem, size = 0x4, offset = 0x4, fixed_abs, tag = 'smem constant byte address 0x4 - core index']
  #allocation1 [shape = 'u32[144,128]{1,0:T(1,128)}', space=vmem, size = 0x12000, scoped, tag = 'internal scratch']
  %s0 = inlined_call_operand.vmem [shape: bf16[512,216], index: 0, kind: input, shape index: {}]
  %s1 = inlined_call_operand.vmem [shape: bf16[216,128], index: 1, kind: input, shape index: {}]
  %s2 = inlined_call_operand.vmem [shape: f32[512,128], index: 2, kind: output, shape index: {0}]
  %s3 = inlined_call_operand.vmem [shape: f32[2,128], index: 3, kind: output, shape index: {1}]
  %4 = xla_tuple %s2, %s3
  %s5 = sld [smem:[#allocation0]]
  $region30: #{_lambda_.22} parent=0
    _
  %s7 = ssub.s32 1, %s5
  %s8 = scalar_select 0, %s7, %s5
  // Predicated region
  $region2: #{_lambda_.22} parent=0 // pred_check
    _
  $region3: #{_lambda_.22} parent=0 // pred_check_branch
    %10 = sbr.rel (0) target = $region5
  $region4: #{_lambda_.22} parent=0 // pred_region
    _
  $region5: #{_lambda_.22} parent=0 // pred_fallthru
    _
  // Predicated region
  $region6: #{_lambda_.22} parent=0 // pred_check
    _
  $region7: #{_lambda_.22} parent=0 // pred_check_branch
    %12 = sbr.rel (0) target = $region9
  $region8: #{_lambda_.22} parent=0 // pred_region
    _
  $region9: #{_lambda_.22} parent=0 // pred_fallthru
    _
  %v14 = vld [vmem:[%s0] sm:$0xff]
  %v15 = vld [vmem:[%s0 + $0x8] sm:$0xff]
  %v16 = vld [vmem:[%s0 + $0x10] sm:$0xff]
  %v17 = vld [vmem:[%s0 + $0x18] sm:$0xff]
  %v18 = vld [vmem:[%s0 + $0x20] sm:$0xff]
  %v19 = vld [vmem:[%s0 + $0x28] sm:$0xff]
  %v20 = vld [vmem:[%s0 + $0x30] sm:$0xff]
  %v21 = vld [vmem:[%s0 + $0x38] sm:$0xff]
  %v22 = vld [vmem:[%s0 + $0x40] sm:$0xff]
  %v23 = vld [vmem:[%s0 + $0x48] sm:$0xff]
  %v24 = vld [vmem:[%s0 + $0x50] sm:$0xff]
  %v25 = vld [vmem:[%s0 + $0x58] sm:$0xff]
  %v26 = vld [vmem:[%s0 + $0x60] sm:$0xff]
  %v27 = vld [vmem:[%s0 + $0x68] sm:$0xff]
  %v28 = vld [vmem:[%s0 + $0x70] sm:$0xff]
  %v29 = vld [vmem:[%s0 + $0x78] sm:$0xff]
  %v30 = vld [vmem:[%s0 + $0x80] sm:$0xff]
  %v31 = vld [vmem:[%s0 + $0x88] sm:$0xff]
  %v32 = vld [vmem:[%s0 + $0x90] sm:$0xff]
  %v33 = vld [vmem:[%s0 + $0x98] sm:$0xff]
  %v34 = vld [vmem:[%s0 + $0xa0] sm:$0xff]
  %v35 = vld [vmem:[%s0 + $0xa8] sm:$0xff]
  %v36 = vld [vmem:[%s0 + $0xb0] sm:$0xff]
  %v37 = vld [vmem:[%s0 + $0xb8] sm:$0xff]
  %v38 = vld [vmem:[%s0 + $0xc0] sm:$0xff]
  %v39 = vld [vmem:[%s0 + $0xc8] sm:$0xff]
  %v40 = vld [vmem:[%s0 + $0xd0] sm:$0xff]
  %v41 = vld [vmem:[%s0 + $0xd8] sm:$0xff]
  %v42 = vld [vmem:[%s0 + $0xe0] sm:$0xff]
  %v43 = vld [vmem:[%s0 + $0xe8] sm:$0xff]
  %v44 = vld [vmem:[%s0 + $0xf0] sm:$0xff]
  %v45 = vld [vmem:[%s0 + $0xf8] sm:$0xff]
  %v46 = vld [vmem:[%s0 + $0x100] sm:$0xff]
  %v47 = vld [vmem:[%s0 + $0x108] sm:$0xff]
  %v48 = vld [vmem:[%s0 + $0x110] sm:$0xff]
  %v49 = vld [vmem:[%s0 + $0x118] sm:$0xff]
  %v50 = vld [vmem:[%s0 + $0x120] sm:$0xff]
  %v51 = vld [vmem:[%s0 + $0x128] sm:$0xff]
  %v52 = vld [vmem:[%s0 + $0x130] sm:$0xff]
  %v53 = vld [vmem:[%s0 + $0x138] sm:$0xff]
  %v54 = vld [vmem:[%s0 + $0x140] sm:$0xff]
  %v55 = vld [vmem:[%s0 + $0x148] sm:$0xff]
  %v56 = vld [vmem:[%s0 + $0x150] sm:$0xff]
  %v57 = vld [vmem:[%s0 + $0x158] sm:$0xff]
  %v58 = vld [vmem:[%s0 + $0x160] sm:$0xff]
  %v59 = vld [vmem:[%s0 + $0x168] sm:$0xff]
  %v60 = vld [vmem:[%s0 + $0x170] sm:$0xff]
  %v61 = vld [vmem:[%s0 + $0x178] sm:$0xff]
  %v62 = vld [vmem:[%s0 + $0x180] sm:$0xff]
  %v63 = vld [vmem:[%s0 + $0x188] sm:$0xff]
  %v64 = vld [vmem:[%s0 + $0x190] sm:$0xff]
  %v65 = vld [vmem:[%s0 + $0x198] sm:$0xff]
  %v66 = vld [vmem:[%s0 + $0x1a0] sm:$0xff]
  %v67 = vld [vmem:[%s0 + $0x1a8] sm:$0xff]
  %v68 = vld [vmem:[%s0 + $0x1b0] sm:$0xff]
  %v69 = vld [vmem:[%s0 + $0x1b8] sm:$0xff]
  %v70 = vld [vmem:[%s0 + $0x1c0] sm:$0xff]
  %v71 = vld [vmem:[%s0 + $0x1c8] sm:$0xff]
  %v72 = vld [vmem:[%s0 + $0x1d0] sm:$0xff]
  %v73 = vld [vmem:[%s0 + $0x1d8] sm:$0xff]
  %v74 = vld [vmem:[%s0 + $0x1e0] sm:$0xff]
  %v75 = vld [vmem:[%s0 + $0x1e8] sm:$0xff]
  %v76 = vld [vmem:[%s0 + $0x1f0] sm:$0xff]
  %v77 = vld [vmem:[%s0 + $0x1f8] sm:$0xff]
  %v78 = vld [vmem:[%s1] sm:$0xf]
  %v79 = vld [vmem:[%s1 + $0x4] sm:$0xf]
  %v80 = vld [vmem:[%s1 + $0x8] sm:$0xf]
  %v81 = vld [vmem:[%s1 + $0xc] sm:$0xf]
  %v82 = vld [vmem:[%s1 + $0x10] sm:$0xf]
  %v83 = vld [vmem:[%s1 + $0x14] sm:$0xf]
  %v84 = vld [vmem:[%s1 + $0x18] sm:$0xf]
  %v85 = vld [vmem:[%s1 + $0x1c] sm:$0xf]
  %v86 = vld [vmem:[%s1 + $0x20] sm:$0xf]
  %v87 = vld [vmem:[%s1 + $0x24] sm:$0xf]
  %v88 = vld [vmem:[%s1 + $0x28] sm:$0xf]
  %v89 = vld [vmem:[%s1 + $0x2c] sm:$0xf]
  %v90 = vld [vmem:[%s1 + $0x30] sm:$0xf]
  %v91 = vld [vmem:[%s1 + $0x34] sm:$0xf]
  %v92 = vld [vmem:[%s1 + $0x38] sm:$0xf]
  %v93 = vld [vmem:[%s1 + $0x3c] sm:$0xf]
  %v94 = vld [vmem:[%s1 + $0x40] sm:$0xf]
  %v95 = vld [vmem:[%s1 + $0x44] sm:$0xf]
  %v96 = vld [vmem:[%s1 + $0x48] sm:$0xf]
  %v97 = vld [vmem:[%s1 + $0x4c] sm:$0xf]
  %v98 = vld [vmem:[%s1 + $0x50] sm:$0xf]
  %v99 = vld [vmem:[%s1 + $0x54] sm:$0xf]
  %v100 = vld [vmem:[%s1 + $0x58] sm:$0xf]
  %v101 = vld [vmem:[%s1 + $0x5c] sm:$0xf]
  %v102 = vld [vmem:[%s1 + $0x60] sm:$0xf]
  %v103 = vld [vmem:[%s1 + $0x64] sm:$0xf]
  %v104 = vld [vmem:[%s1 + $0x68] sm:$0xf]
  %v169 = vunpack.c.l.b16 %v14
  %v170 = vunpack.c.h.b16 %v14
  %v171 = vunpack.c.l.b16 %v15
  %v172 = vunpack.c.h.b16 %v15
  %v173 = vunpack.c.l.b16 %v16
  %v174 = vunpack.c.h.b16 %v16
  %v175 = vunpack.c.l.b16 %v17
  %v176 = vunpack.c.h.b16 %v17
  %v177 = vunpack.c.l.b16 %v18
  %v178 = vunpack.c.h.b16 %v18
  %v179 = vunpack.c.l.b16 %v19
  %v180 = vunpack.c.h.b16 %v19
  %v181 = vunpack.c.l.b16 %v20
  %v182 = vunpack.c.h.b16 %v20
  %v183 = vunpack.c.l.b16 %v21
  %v184 = vunpack.c.h.b16 %v21
  %v185 = vunpack.c.l.b16 %v22
  %v186 = vunpack.c.h.b16 %v22
  %v187 = vunpack.c.l.b16 %v23
  %v188 = vunpack.c.h.b16 %v23
  %v189 = vunpack.c.l.b16 %v24
  %v190 = vunpack.c.h.b16 %v24
  %v191 = vunpack.c.l.b16 %v25
  %v192 = vunpack.c.h.b16 %v25
  %v193 = vunpack.c.l.b16 %v26
  %v194 = vunpack.c.h.b16 %v26
  %v195 = vunpack.c.l.b16 %v27
  %v196 = vunpack.c.h.b16 %v27
  %v197 = vunpack.c.l.b16 %v28
  %v198 = vunpack.c.h.b16 %v28
  %v199 = vunpack.c.l.b16 %v29
  %v200 = vunpack.c.h.b16 %v29
  %v201 = vunpack.c.l.b16 %v30
  %v202 = vunpack.c.h.b16 %v30
  %v203 = vunpack.c.l.b16 %v31
  %v204 = vunpack.c.h.b16 %v31
  %v205 = vunpack.c.l.b16 %v32
  %v206 = vunpack.c.h.b16 %v32
  %v207 = vunpack.c.l.b16 %v33
  %v208 = vunpack.c.h.b16 %v33
  %v209 = vunpack.c.l.b16 %v34
  %v210 = vunpack.c.h.b16 %v34
  %v211 = vunpack.c.l.b16 %v35
  %v212 = vunpack.c.h.b16 %v35
  %v213 = vunpack.c.l.b16 %v36
  %v214 = vunpack.c.h.b16 %v36
  %v215 = vunpack.c.l.b16 %v37
  %v216 = vunpack.c.h.b16 %v37
  %v217 = vunpack.c.l.b16 %v38
  %v218 = vunpack.c.h.b16 %v38
  %v219 = vunpack.c.l.b16 %v39
  %v220 = vunpack.c.h.b16 %v39
  %v221 = vunpack.c.l.b16 %v40
  %v222 = vunpack.c.h.b16 %v40
  %v223 = vunpack.c.l.b16 %v41
  %v224 = vunpack.c.h.b16 %v41
  %v225 = vunpack.c.l.b16 %v42
  %v226 = vunpack.c.h.b16 %v42
  %v227 = vunpack.c.l.b16 %v43
  %v228 = vunpack.c.h.b16 %v43
  %v229 = vunpack.c.l.b16 %v44
  %v230 = vunpack.c.h.b16 %v44
  %v231 = vunpack.c.l.b16 %v45
  %v232 = vunpack.c.h.b16 %v45
  %v233 = vunpack.c.l.b16 %v46
  %v234 = vunpack.c.h.b16 %v46
  %v235 = vunpack.c.l.b16 %v47
  %v236 = vunpack.c.h.b16 %v47
  %v237 = vunpack.c.l.b16 %v48
  %v238 = vunpack.c.h.b16 %v48
  %v239 = vunpack.c.l.b16 %v49
  %v240 = vunpack.c.h.b16 %v49
  %v241 = vunpack.c.l.b16 %v50
  %v242 = vunpack.c.h.b16 %v50
  %v243 = vunpack.c.l.b16 %v51
  %v244 = vunpack.c.h.b16 %v51
  %v245 = vunpack.c.l.b16 %v52
  %v246 = vunpack.c.h.b16 %v52
  %v247 = vunpack.c.l.b16 %v53
  %v248 = vunpack.c.h.b16 %v53
  %v249 = vunpack.c.l.b16 %v54
  %v250 = vunpack.c.h.b16 %v54
  %v251 = vunpack.c.l.b16 %v55
  %v252 = vunpack.c.h.b16 %v55
  %v253 = vunpack.c.l.b16 %v56
  %v254 = vunpack.c.h.b16 %v56
  %v255 = vunpack.c.l.b16 %v57
  %v256 = vunpack.c.h.b16 %v57
  %v257 = vunpack.c.l.b16 %v58
  %v258 = vunpack.c.h.b16 %v58
  %v259 = vunpack.c.l.b16 %v59
  %v260 = vunpack.c.h.b16 %v59
  %v261 = vunpack.c.l.b16 %v60
  %v262 = vunpack.c.h.b16 %v60
  %v263 = vunpack.c.l.b16 %v61
  %v264 = vunpack.c.h.b16 %v61
  %v265 = vunpack.c.l.b16 %v62
  %v266 = vunpack.c.h.b16 %v62
  %v267 = vunpack.c.l.b16 %v63
  %v268 = vunpack.c.h.b16 %v63
  %v269 = vunpack.c.l.b16 %v64
  %v270 = vunpack.c.h.b16 %v64
  %v271 = vunpack.c.l.b16 %v65
  %v272 = vunpack.c.h.b16 %v65
  %v273 = vunpack.c.l.b16 %v66
  %v274 = vunpack.c.h.b16 %v66
  %v275 = vunpack.c.l.b16 %v67
  %v276 = vunpack.c.h.b16 %v67
  %v277 = vunpack.c.l.b16 %v68
  %v278 = vunpack.c.h.b16 %v68
  %v279 = vunpack.c.l.b16 %v69
  %v280 = vunpack.c.h.b16 %v69
  %v281 = vunpack.c.l.b16 %v70
  %v282 = vunpack.c.h.b16 %v70
  %v283 = vunpack.c.l.b16 %v71
  %v284 = vunpack.c.h.b16 %v71
  %v285 = vunpack.c.l.b16 %v72
  %v286 = vunpack.c.h.b16 %v72
  %v287 = vunpack.c.l.b16 %v73
  %v288 = vunpack.c.h.b16 %v73
  %v289 = vunpack.c.l.b16 %v74
  %v290 = vunpack.c.h.b16 %v74
  %v291 = vunpack.c.l.b16 %v75
  %v292 = vunpack.c.h.b16 %v75
  %v293 = vunpack.c.l.b16 %v76
  %v294 = vunpack.c.h.b16 %v76
  %v295 = vunpack.c.l.b16 %v77
  %v296 = vunpack.c.h.b16 %v77
  %v297 = vpack.c.b16 %v171, %v169
  %v298 = vpack.c.b16 %v172, %v170
  %v299 = vpack.c.b16 %v175, %v173
  %v300 = vpack.c.b16 %v176, %v174
  %v301 = vpack.c.b16 %v179, %v177
  %v302 = vpack.c.b16 %v180, %v178
  %v303 = vpack.c.b16 %v183, %v181
  %v304 = vpack.c.b16 %v184, %v182
  %v305 = vpack.c.b16 %v187, %v185
  %v306 = vpack.c.b16 %v188, %v186
  %v307 = vpack.c.b16 %v191, %v189
  %v308 = vpack.c.b16 %v192, %v190
  %v309 = vpack.c.b16 %v195, %v193
  %v310 = vpack.c.b16 %v196, %v194
  %v311 = vpack.c.b16 %v199, %v197
  %v312 = vpack.c.b16 %v200, %v198
  %v313 = vpack.c.b16 %v203, %v201
  %v314 = vpack.c.b16 %v204, %v202
  %v315 = vpack.c.b16 %v207, %v205
  %v316 = vpack.c.b16 %v208, %v206
  %v317 = vpack.c.b16 %v211, %v209
  %v318 = vpack.c.b16 %v212, %v210
  %v319 = vpack.c.b16 %v215, %v213
  %v320 = vpack.c.b16 %v216, %v214
  %v321 = vpack.c.b16 %v219, %v217
  %v322 = vpack.c.b16 %v220, %v218
  %v323 = vpack.c.b16 %v223, %v221
  %v324 = vpack.c.b16 %v224, %v222
  %v325 = vpack.c.b16 %v227, %v225
  %v326 = vpack.c.b16 %v228, %v226
  %v327 = vpack.c.b16 %v231, %v229
  %v328 = vpack.c.b16 %v232, %v230
  %v329 = vpack.c.b16 %v235, %v233
  %v330 = vpack.c.b16 %v236, %v234
  %v331 = vpack.c.b16 %v239, %v237
  %v332 = vpack.c.b16 %v240, %v238
  %v333 = vpack.c.b16 %v243, %v241
  %v334 = vpack.c.b16 %v244, %v242
  %v335 = vpack.c.b16 %v247, %v245
  %v336 = vpack.c.b16 %v248, %v246
  %v337 = vpack.c.b16 %v251, %v249
  %v338 = vpack.c.b16 %v252, %v250
  %v339 = vpack.c.b16 %v255, %v253
  %v340 = vpack.c.b16 %v256, %v254
  %v341 = vpack.c.b16 %v259, %v257
  %v342 = vpack.c.b16 %v260, %v258
  %v343 = vpack.c.b16 %v263, %v261
  %v344 = vpack.c.b16 %v264, %v262
  %v345 = vpack.c.b16 %v267, %v265
  %v346 = vpack.c.b16 %v268, %v266
  %v347 = vpack.c.b16 %v271, %v269
  %v348 = vpack.c.b16 %v272, %v270
  %v349 = vpack.c.b16 %v275, %v273
  %v350 = vpack.c.b16 %v276, %v274
  %v351 = vpack.c.b16 %v279, %v277
  %v352 = vpack.c.b16 %v280, %v278
  %v353 = vpack.c.b16 %v283, %v281
  %v354 = vpack.c.b16 %v284, %v282
  %v355 = vpack.c.b16 %v287, %v285
  %v356 = vpack.c.b16 %v288, %v286
  %v357 = vpack.c.b16 %v291, %v289
  %v358 = vpack.c.b16 %v292, %v290
  %v359 = vpack.c.b16 %v295, %v293
  %v360 = vpack.c.b16 %v296, %v294
  %v420 = vunpack.c.l.b16 %v78
  %v421 = vunpack.c.l.b16 %v79
  %v422 = vunpack.c.l.b16 %v80
  %v423 = vunpack.c.l.b16 %v81
  %v424 = vunpack.c.l.b16 %v82
  %v425 = vunpack.c.l.b16 %v83
  %v426 = vunpack.c.l.b16 %v84
  %v427 = vunpack.c.l.b16 %v85
  %v428 = vunpack.c.l.b16 %v86
  %v429 = vunpack.c.l.b16 %v87
  %v430 = vunpack.c.l.b16 %v88
  %v431 = vunpack.c.l.b16 %v89
  %v432 = vunpack.c.l.b16 %v90
  %v433 = vunpack.c.l.b16 %v91
  %v434 = vunpack.c.l.b16 %v92
  %v435 = vunpack.c.l.b16 %v93
  %v436 = vunpack.c.l.b16 %v94
  %v437 = vunpack.c.l.b16 %v95
  %v438 = vunpack.c.l.b16 %v96
  %v439 = vunpack.c.l.b16 %v97
  %v440 = vunpack.c.l.b16 %v98
  %v441 = vunpack.c.l.b16 %v99
  %v442 = vunpack.c.l.b16 %v100
  %v443 = vunpack.c.l.b16 %v101
  %v444 = vunpack.c.l.b16 %v102
  %v445 = vunpack.c.l.b16 %v103
  %v446 = vunpack.c.l.b16 %v104
  %v447 = vpack.c.b16 %v421, %v420
  %v448 = vpack.c.b16 %v423, %v422
  %v449 = vpack.c.b16 %v425, %v424
  %v450 = vpack.c.b16 %v427, %v426
  %v451 = vpack.c.b16 %v429, %v428
  %v452 = vpack.c.b16 %v431, %v430
  %v453 = vpack.c.b16 %v433, %v432
  %v454 = vpack.c.b16 %v435, %v434
  %v455 = vpack.c.b16 %v437, %v436
  %v456 = vpack.c.b16 %v439, %v438
  %v457 = vpack.c.b16 %v441, %v440
  %v458 = vpack.c.b16 %v443, %v442
  %v459 = vpack.c.b16 %v445, %v444
  %v460 = vpack.c.b16 %v446, %v446
  %vm474 = vcmask 719872
  %v476 = vsel %vm474, %v298, 0
  %v479 = vsel %vm474, %v300, 0
  %v482 = vsel %vm474, %v302, 0
  %v485 = vsel %vm474, %v304, 0
  %v488 = vsel %vm474, %v306, 0
  %v491 = vsel %vm474, %v308, 0
  %v494 = vsel %vm474, %v310, 0
  %v497 = vsel %vm474, %v312, 0
  %v500 = vsel %vm474, %v314, 0
  %v503 = vsel %vm474, %v316, 0
  %v506 = vsel %vm474, %v318, 0
  %v509 = vsel %vm474, %v320, 0
  %v512 = vsel %vm474, %v322, 0
  %v515 = vsel %vm474, %v324, 0
  %v518 = vsel %vm474, %v326, 0
  %v521 = vsel %vm474, %v328, 0
  %v524 = vsel %vm474, %v330, 0
  %v527 = vsel %vm474, %v332, 0
  %v530 = vsel %vm474, %v334, 0
  %v533 = vsel %vm474, %v336, 0
  %v536 = vsel %vm474, %v338, 0
  %v539 = vsel %vm474, %v340, 0
  %v542 = vsel %vm474, %v342, 0
  %v545 = vsel %vm474, %v344, 0
  %v548 = vsel %vm474, %v346, 0
  %v551 = vsel %vm474, %v348, 0
  %v554 = vsel %vm474, %v350, 0
  %v557 = vsel %vm474, %v352, 0
  %v560 = vsel %vm474, %v354, 0
  %v563 = vsel %vm474, %v356, 0
  %v566 = vsel %vm474, %v358, 0
  %v569 = vsel %vm474, %v360, 0
  %vm571 = vcmask 1043456
  %v573 = vsel %vm571, %v460, 0
  %575 = vmatprep.subr.bf16.mxu0 0
  %576 = vmatpush1.bf16.msra.mxu0 %v447
  %577 = vmatprep.subr.bf16.mxu0 0
  %578 = vmatpush1.bf16.msra.mxu0 %v448
  %579 = vmatprep.subr.bf16.mxu0 0
  %580 = vmatpush1.bf16.msra.mxu0 %v449
  %581 = vmatprep.subr.bf16.mxu0 0
  %582 = vmatpush1.bf16.msra.mxu0 %v450
  %583 = vmatprep.subr.bf16.mxu0 0
  %584 = vmatpush1.bf16.msra.mxu0 %v451
  %585 = vmatprep.subr.bf16.mxu0 0
  %586 = vmatpush1.bf16.msra.mxu0 %v452
  %587 = vmatprep.subr.bf16.mxu0 0
  %588 = vmatpush1.bf16.msra.mxu0 %v453
  %589 = vmatprep.subr.bf16.mxu0 0
  %590 = vmatpush1.bf16.msra.mxu0 %v454
  %591 = vmatprep.subr.bf16.mxu0 0
  %592 = vmatpush1.bf16.msra.mxu0 %v455
  %593 = vmatprep.subr.bf16.mxu0 0
  %594 = vmatpush1.bf16.msra.mxu0 %v456
  %595 = vmatprep.subr.bf16.mxu0 0
  %596 = vmatpush1.bf16.msra.mxu0 %v457
  %597 = vmatprep.subr.bf16.mxu0 0
  %598 = vmatpush1.bf16.msra.mxu0 %v458
  %599 = vmatprep.subr.bf16.mxu0 0
  %600 = vmatpush1.bf16.msra.mxu0 %v459
  %601 = vmatprep.subr.bf16.mxu0 0
  %602 = vmatpush1.bf16.msra.mxu0 %v573
  %603 = vmatprep.subr.bf16.mxu0 0
  %604 = vmatpush1.bf16.msra.mxu0 0
  %605 = vmatprep.subr.bf16.mxu0 0
  %606 = vmatpush1.bf16.msra.mxu0 0
  %607 = vmatprep.mubr.bf16.mxu0 %v476
  %608 = vmatmul.mubr.bf16.gmra.mrb[0].mxu0 %v297
  %v609 = vpop.f32.mrb[0].mxu0
  %v610 = vadd.f32 0.0, %v609
  %v611 = vpop.f32.mrb[0].mxu0
  %v612 = vpop.f32.mrb[0].mxu0
  %v613 = vadd.f32 0.0, %v612
  %v614 = vpop.f32.mrb[0].mxu0
  %615 = vmatprep.mubr.bf16.mxu0 %v479
  %616 = vmatmul.mubr.bf16.gmra.mrb[0].mxu0 %v299
  %v617 = vpop.f32.mrb[0].mxu0
  %v618 = vadd.f32 0.0, %v617
  %v619 = vpop.f32.mrb[0].mxu0
  %v620 = vpop.f32.mrb[0].mxu0
  %v621 = vadd.f32 0.0, %v620
  %v622 = vpop.f32.mrb[0].mxu0
  %623 = vmatprep.mubr.bf16.mxu0 %v482
  %624 = vmatmul.mubr.bf16.gmra.mrb[0].mxu0 %v301
  %v625 = vpop.f32.mrb[0].mxu0
  %v626 = vadd.f32 0.0, %v625
  %v627 = vpop.f32.mrb[0].mxu0
  %v628 = vpop.f32.mrb[0].mxu0
  %v629 = vadd.f32 0.0, %v628
  %v630 = vpop.f32.mrb[0].mxu0
  %631 = vmatprep.mubr.bf16.mxu0 %v485
  %632 = vmatmul.mubr.bf16.gmra.mrb[0].mxu0 %v303
  %v633 = vpop.f32.mrb[0].mxu0
  %v634 = vadd.f32 0.0, %v633
  %v635 = vpop.f32.mrb[0].mxu0
  %v636 = vpop.f32.mrb[0].mxu0
  %v637 = vadd.f32 0.0, %v636
  %v638 = vpop.f32.mrb[0].mxu0
  %639 = vmatprep.mubr.bf16.mxu0 %v488
  %640 = vmatmul.mubr.bf16.gmra.mrb[0].mxu0 %v305
  %v641 = vpop.f32.mrb[0].mxu0
  %v642 = vadd.f32 0.0, %v641
  %v643 = vpop.f32.mrb[0].mxu0
  %v644 = vpop.f32.mrb[0].mxu0
  %v645 = vadd.f32 0.0, %v644
  %v646 = vpop.f32.mrb[0].mxu0
  %647 = vmatprep.mubr.bf16.mxu0 %v491
  %648 = vmatmul.mubr.bf16.gmra.mrb[0].mxu0 %v307
  %v649 = vpop.f32.mrb[0].mxu0
  %v650 = vadd.f32 0.0, %v649
  %v651 = vpop.f32.mrb[0].mxu0
  %v652 = vpop.f32.mrb[0].mxu0
  %v653 = vadd.f32 0.0, %v652
  %v654 = vpop.f32.mrb[0].mxu0
  %655 = vmatprep.mubr.bf16.mxu0 %v494
  %656 = vmatmul.mubr.bf16.gmra.mrb[0].mxu0 %v309
  %v657 = vpop.f32.mrb[0].mxu0
  %v658 = vadd.f32 0.0, %v657
  %v659 = vpop.f32.mrb[0].mxu0
  %v660 = vpop.f32.mrb[0].mxu0
  %v661 = vadd.f32 0.0, %v660
  %v662 = vpop.f32.mrb[0].mxu0
  %663 = vmatprep.mubr.bf16.mxu0 %v497
  %664 = vmatmul.mubr.bf16.gmra.mrb[0].mxu0 %v311
  %v665 = vpop.f32.mrb[0].mxu0
  %v666 = vadd.f32 0.0, %v665
  %v667 = vpop.f32.mrb[0].mxu0
  %v668 = vpop.f32.mrb[0].mxu0
  %v669 = vadd.f32 0.0, %v668
  %v670 = vpop.f32.mrb[0].mxu0
  %671 = vmatprep.mubr.bf16.mxu0 %v500
  %672 = vmatmul.mubr.bf16.gmra.mrb[0].mxu0 %v313
  %v673 = vpop.f32.mrb[0].mxu0
  %v674 = vadd.f32 0.0, %v673
  %v675 = vpop.f32.mrb[0].mxu0
  %v676 = vpop.f32.mrb[0].mxu0
  %v677 = vadd.f32 0.0, %v676
  %v678 = vpop.f32.mrb[0].mxu0
  %679 = vmatprep.mubr.bf16.mxu0 %v503
  %680 = vmatmul.mubr.bf16.gmra.mrb[0].mxu0 %v315
  %v681 = vpop.f32.mrb[0].mxu0
  %v682 = vadd.f32 0.0, %v681
  %v683 = vpop.f32.mrb[0].mxu0
  %v684 = vpop.f32.mrb[0].mxu0
  %v685 = vadd.f32 0.0, %v684
  %v686 = vpop.f32.mrb[0].mxu0
  %687 = vmatprep.mubr.bf16.mxu0 %v506
  %688 = vmatmul.mubr.bf16.gmra.mrb[0].mxu0 %v317
  %v689 = vpop.f32.mrb[0].mxu0
  %v690 = vadd.f32 0.0, %v689
  %v691 = vpop.f32.mrb[0].mxu0
  %v692 = vpop.f32.mrb[0].mxu0
  %v693 = vadd.f32 0.0, %v692
  %v694 = vpop.f32.mrb[0].mxu0
  %695 = vmatprep.mubr.bf16.mxu0 %v509
  %696 = vmatmul.mubr.bf16.gmra.mrb[0].mxu0 %v319
  %v697 = vpop.f32.mrb[0].mxu0
  %v698 = vadd.f32 0.0, %v697
  %v699 = vpop.f32.mrb[0].mxu0
  %v700 = vpop.f32.mrb[0].mxu0
  %v701 = vadd.f32 0.0, %v700
  %v702 = vpop.f32.mrb[0].mxu0
  %703 = vmatprep.mubr.bf16.mxu0 %v512
  %704 = vmatmul.mubr.bf16.gmra.mrb[0].mxu0 %v321
  %v705 = vpop.f32.mrb[0].mxu0
  %v706 = vadd.f32 0.0, %v705
  %v707 = vpop.f32.mrb[0].mxu0
  %v708 = vpop.f32.mrb[0].mxu0
  %v709 = vadd.f32 0.0, %v708
  %v710 = vpop.f32.mrb[0].mxu0
  %711 = vmatprep.mubr.bf16.mxu0 %v515
  %712 = vmatmul.mubr.bf16.gmra.mrb[0].mxu0 %v323
  %v713 = vpop.f32.mrb[0].mxu0
  %v714 = vadd.f32 0.0, %v713
  %v715 = vpop.f32.mrb[0].mxu0
  %v716 = vpop.f32.mrb[0].mxu0
  %v717 = vadd.f32 0.0, %v716
  %v718 = vpop.f32.mrb[0].mxu0
  %719 = vmatprep.mubr.bf16.mxu0 %v518
  %720 = vmatmul.mubr.bf16.gmra.mrb[0].mxu0 %v325
  %v721 = vpop.f32.mrb[0].mxu0
  %v722 = vadd.f32 0.0, %v721
  %v723 = vpop.f32.mrb[0].mxu0
  %v724 = vpop.f32.mrb[0].mxu0
  %v725 = vadd.f32 0.0, %v724
  %v726 = vpop.f32.mrb[0].mxu0
  %727 = vmatprep.mubr.bf16.mxu0 %v521
  %728 = vmatmul.mubr.bf16.gmra.mrb[0].mxu0 %v327
  %v729 = vpop.f32.mrb[0].mxu0
  %v730 = vadd.f32 0.0, %v729
  %v731 = vpop.f32.mrb[0].mxu0
  %v732 = vpop.f32.mrb[0].mxu0
  %v733 = vadd.f32 0.0, %v732
  %v734 = vpop.f32.mrb[0].mxu0
  %735 = vmatprep.mubr.bf16.mxu0 %v524
  %736 = vmatmul.mubr.bf16.gmra.mrb[0].mxu0 %v329
  %v737 = vpop.f32.mrb[0].mxu0
  %v738 = vadd.f32 0.0, %v737
  %v739 = vpop.f32.mrb[0].mxu0
  %v740 = vpop.f32.mrb[0].mxu0
  %v741 = vadd.f32 0.0, %v740
  %v742 = vpop.f32.mrb[0].mxu0
  %743 = vmatprep.mubr.bf16.mxu0 %v527
  %744 = vmatmul.mubr.bf16.gmra.mrb[0].mxu0 %v331
  %v745 = vpop.f32.mrb[0].mxu0
  %v746 = vadd.f32 0.0, %v745
  %v747 = vpop.f32.mrb[0].mxu0
  %v748 = vpop.f32.mrb[0].mxu0
  %v749 = vadd.f32 0.0, %v748
  %v750 = vpop.f32.mrb[0].mxu0
  %751 = vmatprep.mubr.bf16.mxu0 %v530
  %752 = vmatmul.mubr.bf16.gmra.mrb[0].mxu0 %v333
  %v753 = vpop.f32.mrb[0].mxu0
  %v754 = vadd.f32 0.0, %v753
  %v755 = vpop.f32.mrb[0].mxu0
  %v756 = vpop.f32.mrb[0].mxu0
  %v757 = vadd.f32 0.0, %v756
  %v758 = vpop.f32.mrb[0].mxu0
  %759 = vmatprep.mubr.bf16.mxu0 %v533
  %760 = vmatmul.mubr.bf16.gmra.mrb[0].mxu0 %v335
  %v761 = vpop.f32.mrb[0].mxu0
  %v762 = vadd.f32 0.0, %v761
  %v763 = vpop.f32.mrb[0].mxu0
  %v764 = vpop.f32.mrb[0].mxu0
  %v765 = vadd.f32 0.0, %v764
  %v766 = vpop.f32.mrb[0].mxu0
  %767 = vmatprep.mubr.bf16.mxu0 %v536
  %768 = vmatmul.mubr.bf16.gmra.mrb[0].mxu0 %v337
  %v769 = vpop.f32.mrb[0].mxu0
  %v770 = vadd.f32 0.0, %v769
  %v771 = vpop.f32.mrb[0].mxu0
  %v772 = vpop.f32.mrb[0].mxu0
  %v773 = vadd.f32 0.0, %v772
  %v774 = vpop.f32.mrb[0].mxu0
  %775 = vmatprep.mubr.bf16.mxu0 %v539
  %776 = vmatmul.mubr.bf16.gmra.mrb[0].mxu0 %v339
  %v777 = vpop.f32.mrb[0].mxu0
  %v778 = vadd.f32 0.0, %v777
  %v779 = vpop.f32.mrb[0].mxu0
  %v780 = vpop.f32.mrb[0].mxu0
  %v781 = vadd.f32 0.0, %v780
  %v782 = vpop.f32.mrb[0].mxu0
  %783 = vmatprep.mubr.bf16.mxu0 %v542
  %784 = vmatmul.mubr.bf16.gmra.mrb[0].mxu0 %v341
  %v785 = vpop.f32.mrb[0].mxu0
  %v786 = vadd.f32 0.0, %v785
  %v787 = vpop.f32.mrb[0].mxu0
  %v788 = vpop.f32.mrb[0].mxu0
  %v789 = vadd.f32 0.0, %v788
  %v790 = vpop.f32.mrb[0].mxu0
  %791 = vmatprep.mubr.bf16.mxu0 %v545
  %792 = vmatmul.mubr.bf16.gmra.mrb[0].mxu0 %v343
  %v793 = vpop.f32.mrb[0].mxu0
  %v794 = vadd.f32 0.0, %v793
  %v795 = vpop.f32.mrb[0].mxu0
  %v796 = vpop.f32.mrb[0].mxu0
  %v797 = vadd.f32 0.0, %v796
  %v798 = vpop.f32.mrb[0].mxu0
  %799 = vmatprep.mubr.bf16.mxu0 %v548
  %800 = vmatmul.mubr.bf16.gmra.mrb[0].mxu0 %v345
  %v801 = vpop.f32.mrb[0].mxu0
  %v802 = vadd.f32 0.0, %v801
  %v803 = vpop.f32.mrb[0].mxu0
  %v804 = vpop.f32.mrb[0].mxu0
  %v805 = vadd.f32 0.0, %v804
  %v806 = vpop.f32.mrb[0].mxu0
  %807 = vmatprep.mubr.bf16.mxu0 %v551
  %808 = vmatmul.mubr.bf16.gmra.mrb[0].mxu0 %v347
  %v809 = vpop.f32.mrb[0].mxu0
  %v810 = vadd.f32 0.0, %v809
  %v811 = vpop.f32.mrb[0].mxu0
  %v812 = vpop.f32.mrb[0].mxu0
  %v813 = vadd.f32 0.0, %v812
  %v814 = vpop.f32.mrb[0].mxu0
  %815 = vmatprep.mubr.bf16.mxu0 %v554
  %816 = vmatmul.mubr.bf16.gmra.mrb[0].mxu0 %v349
  %v817 = vpop.f32.mrb[0].mxu0
  %v818 = vadd.f32 0.0, %v817
  %v819 = vpop.f32.mrb[0].mxu0
  %v820 = vpop.f32.mrb[0].mxu0
  %v821 = vadd.f32 0.0, %v820
  %v822 = vpop.f32.mrb[0].mxu0
  %823 = vmatprep.mubr.bf16.mxu0 %v557
  %824 = vmatmul.mubr.bf16.gmra.mrb[0].mxu0 %v351
  %v825 = vpop.f32.mrb[0].mxu0
  %v826 = vadd.f32 0.0, %v825
  %v827 = vpop.f32.mrb[0].mxu0
  %v828 = vpop.f32.mrb[0].mxu0
  %v829 = vadd.f32 0.0, %v828
  %v830 = vpop.f32.mrb[0].mxu0
  %831 = vmatprep.mubr.bf16.mxu0 %v560
  %832 = vmatmul.mubr.bf16.gmra.mrb[0].mxu0 %v353
  %v833 = vpop.f32.mrb[0].mxu0
  %v834 = vadd.f32 0.0, %v833
  %v835 = vpop.f32.mrb[0].mxu0
  %v836 = vpop.f32.mrb[0].mxu0
  %v837 = vadd.f32 0.0, %v836
  %v838 = vpop.f32.mrb[0].mxu0
  %839 = vmatprep.mubr.bf16.mxu0 %v563
  %840 = vmatmul.mubr.bf16.gmra.mrb[0].mxu0 %v355
  %v841 = vpop.f32.mrb[0].mxu0
  %v842 = vadd.f32 0.0, %v841
  %v843 = vpop.f32.mrb[0].mxu0
  %v844 = vpop.f32.mrb[0].mxu0
  %v845 = vadd.f32 0.0, %v844
  %v846 = vpop.f32.mrb[0].mxu0
  %847 = vmatprep.mubr.bf16.mxu0 %v566
  %848 = vmatmul.mubr.bf16.gmra.mrb[0].mxu0 %v357
  %v849 = vpop.f32.mrb[0].mxu0
  %v850 = vadd.f32 0.0, %v849
  %v851 = vpop.f32.mrb[0].mxu0
  %v852 = vpop.f32.mrb[0].mxu0
  %v853 = vadd.f32 0.0, %v852
  %v854 = vpop.f32.mrb[0].mxu0
  %855 = vmatprep.mubr.bf16.mxu0 %v569
  %856 = vmatmul.mubr.bf16.gmra.mrb[0].mxu0 %v359
  %v857 = vpop.f32.mrb[0].mxu0
  %v858 = vadd.f32 0.0, %v857
  %v859 = vpop.f32.mrb[0].mxu0
  %v860 = vpop.f32.mrb[0].mxu0
  %v861 = vadd.f32 0.0, %v860
  %v862 = vpop.f32.mrb[0].mxu0
  %863 = vdwg.mxu0
  %864 = vst [vmem:[%s2] sm:$0xff] %v610
  %865 = vst [vmem:[%s2 + $0x8] sm:$0xff] %v613
  %866 = vst [vmem:[%s2 + $0x10] sm:$0xff] %v618
  %867 = vst [vmem:[%s2 + $0x18] sm:$0xff] %v621
  %868 = vst [vmem:[%s2 + $0x20] sm:$0xff] %v626
  %869 = vst [vmem:[%s2 + $0x28] sm:$0xff] %v629
  %870 = vst [vmem:[%s2 + $0x30] sm:$0xff] %v634
  %871 = vst [vmem:[%s2 + $0x38] sm:$0xff] %v637
  %872 = vst [vmem:[%s2 + $0x40] sm:$0xff] %v642
  %873 = vst [vmem:[%s2 + $0x48] sm:$0xff] %v645
  %874 = vst [vmem:[%s2 + $0x50] sm:$0xff] %v650
  %875 = vst [vmem:[%s2 + $0x58] sm:$0xff] %v653
  %876 = vst [vmem:[%s2 + $0x60] sm:$0xff] %v658
  %877 = vst [vmem:[%s2 + $0x68] sm:$0xff] %v661
  %878 = vst [vmem:[%s2 + $0x70] sm:$0xff] %v666
  %879 = vst [vmem:[%s2 + $0x78] sm:$0xff] %v669
  %880 = vst [vmem:[%s2 + $0x80] sm:$0xff] %v674
  %881 = vst [vmem:[%s2 + $0x88] sm:$0xff] %v677
  %882 = vst [vmem:[%s2 + $0x90] sm:$0xff] %v682
  %883 = vst [vmem:[%s2 + $0x98] sm:$0xff] %v685
  %884 = vst [vmem:[%s2 + $0xa0] sm:$0xff] %v690
  %885 = vst [vmem:[%s2 + $0xa8] sm:$0xff] %v693
  %886 = vst [vmem:[%s2 + $0xb0] sm:$0xff] %v698
  %887 = vst [vmem:[%s2 + $0xb8] sm:$0xff] %v701
  %888 = vst [vmem:[%s2 + $0xc0] sm:$0xff] %v706
  %889 = vst [vmem:[%s2 + $0xc8] sm:$0xff] %v709
  %890 = vst [vmem:[%s2 + $0xd0] sm:$0xff] %v714
  %891 = vst [vmem:[%s2 + $0xd8] sm:$0xff] %v717
  %892 = vst [vmem:[%s2 + $0xe0] sm:$0xff] %v722
  %893 = vst [vmem:[%s2 + $0xe8] sm:$0xff] %v725
  %894 = vst [vmem:[%s2 + $0xf0] sm:$0xff] %v730
  %895 = vst [vmem:[%s2 + $0xf8] sm:$0xff] %v733
  %896 = vst [vmem:[%s2 + $0x100] sm:$0xff] %v738
  %897 = vst [vmem:[%s2 + $0x108] sm:$0xff] %v741
  %898 = vst [vmem:[%s2 + $0x110] sm:$0xff] %v746
  %899 = vst [vmem:[%s2 + $0x118] sm:$0xff] %v749
  %900 = vst [vmem:[%s2 + $0x120] sm:$0xff] %v754
  %901 = vst [vmem:[%s2 + $0x128] sm:$0xff] %v757
  %902 = vst [vmem:[%s2 + $0x130] sm:$0xff] %v762
  %903 = vst [vmem:[%s2 + $0x138] sm:$0xff] %v765
  %904 = vst [vmem:[%s2 + $0x140] sm:$0xff] %v770
  %905 = vst [vmem:[%s2 + $0x148] sm:$0xff] %v773
  %906 = vst [vmem:[%s2 + $0x150] sm:$0xff] %v778
  %907 = vst [vmem:[%s2 + $0x158] sm:$0xff] %v781
  %908 = vst [vmem:[%s2 + $0x160] sm:$0xff] %v786
  %909 = vst [vmem:[%s2 + $0x168] sm:$0xff] %v789
  %910 = vst [vmem:[%s2 + $0x170] sm:$0xff] %v794
  %911 = vst [vmem:[%s2 + $0x178] sm:$0xff] %v797
  %912 = vst [vmem:[%s2 + $0x180] sm:$0xff] %v802
  %913 = vst [vmem:[%s2 + $0x188] sm:$0xff] %v805
  %914 = vst [vmem:[%s2 + $0x190] sm:$0xff] %v810
  %915 = vst [vmem:[%s2 + $0x198] sm:$0xff] %v813
  %916 = vst [vmem:[%s2 + $0x1a0] sm:$0xff] %v818
  %917 = vst [vmem:[%s2 + $0x1a8] sm:$0xff] %v821
  %918 = vst [vmem:[%s2 + $0x1b0] sm:$0xff] %v826
  %919 = vst [vmem:[%s2 + $0x1b8] sm:$0xff] %v829
  %920 = vst [vmem:[%s2 + $0x1c0] sm:$0xff] %v834
  %921 = vst [vmem:[%s2 + $0x1c8] sm:$0xff] %v837
  %922 = vst [vmem:[%s2 + $0x1d0] sm:$0xff] %v842
  %923 = vst [vmem:[%s2 + $0x1d8] sm:$0xff] %v845
  %924 = vst [vmem:[%s2 + $0x1e0] sm:$0xff] %v850
  %925 = vst [vmem:[%s2 + $0x1e8] sm:$0xff] %v853
  %926 = vst [vmem:[%s2 + $0x1f0] sm:$0xff] %v858
  %927 = vst [vmem:[%s2 + $0x1f8] sm:$0xff] %v861
  %p928 = scmp.eq.s32.totalorder 0, 0
  // Predicated region
  $region10: #{_lambda_.22} parent=0 // pred_check
    %p929 = pneg %p928
  $region11: #{_lambda_.22} parent=0 // pred_check_branch
    %931 = sbr.rel (%p929) target = $region13
  $region12: #{_lambda_.22} parent=0 // pred_region
    %932 = vst [vmem:[%s3] sm:$0x3] 0.0
  $region13: #{_lambda_.22} parent=0 // pred_fallthru
    _
  %v933 = vadd.f32 %v610, %v613
  %v934 = vadd.f32 %v933, %v618
  %v935 = vadd.f32 %v934, %v621
  %v936 = vadd.f32 %v935, %v626
  %v937 = vadd.f32 %v936, %v629
  %v938 = vadd.f32 %v937, %v634
  %v939 = vadd.f32 %v938, %v637
  %v940 = vadd.f32 %v939, %v642
  %v941 = vadd.f32 %v940, %v645
  %v942 = vadd.f32 %v941, %v650
  %v943 = vadd.f32 %v942, %v653
  %v944 = vadd.f32 %v943, %v658
  %v945 = vadd.f32 %v944, %v661
  %v946 = vadd.f32 %v945, %v666
  %v947 = vadd.f32 %v946, %v669
  %v948 = vadd.f32 %v947, %v674
  %v949 = vadd.f32 %v948, %v677
  %v950 = vadd.f32 %v949, %v682
  %v951 = vadd.f32 %v950, %v685
  %v952 = vadd.f32 %v951, %v690
  %v953 = vadd.f32 %v952, %v693
  %v954 = vadd.f32 %v953, %v698
  %v955 = vadd.f32 %v954, %v701
  %v956 = vadd.f32 %v955, %v706
  %v957 = vadd.f32 %v956, %v709
  %v958 = vadd.f32 %v957, %v714
  %v959 = vadd.f32 %v958, %v717
  %v960 = vadd.f32 %v959, %v722
  %v961 = vadd.f32 %v960, %v725
  %v962 = vadd.f32 %v961, %v730
  %v963 = vadd.f32 %v962, %v733
  %v964 = vadd.f32 %v963, %v738
  %v965 = vadd.f32 %v964, %v741
  %v966 = vadd.f32 %v965, %v746
  %v967 = vadd.f32 %v966, %v749
  %v968 = vadd.f32 %v967, %v754
  %v969 = vadd.f32 %v968, %v757
  %v970 = vadd.f32 %v969, %v762
  %v971 = vadd.f32 %v970, %v765
  %v972 = vadd.f32 %v971, %v770
  %v973 = vadd.f32 %v972, %v773
  %v974 = vadd.f32 %v973, %v778
  %v975 = vadd.f32 %v974, %v781
  %v976 = vadd.f32 %v975, %v786
  %v977 = vadd.f32 %v976, %v789
  %v978 = vadd.f32 %v977, %v794
  %v979 = vadd.f32 %v978, %v797
  %v980 = vadd.f32 %v979, %v802
  %v981 = vadd.f32 %v980, %v805
  %v982 = vadd.f32 %v981, %v810
  %v983 = vadd.f32 %v982, %v813
  %v984 = vadd.f32 %v983, %v818
  %v985 = vadd.f32 %v984, %v821
  %v986 = vadd.f32 %v985, %v826
  %v987 = vadd.f32 %v986, %v829
  %v988 = vadd.f32 %v987, %v834
  %v989 = vadd.f32 %v988, %v837
  %v990 = vadd.f32 %v989, %v842
  %v991 = vadd.f32 %v990, %v845
  %v992 = vadd.f32 %v991, %v850
  %v993 = vadd.f32 %v992, %v853
  %v994 = vadd.f32 %v993, %v858
  %v995 = vadd.f32 %v994, %v861
  %v996 = vrot.slane %v995, 4
  %v997 = vadd.f32 %v995, %v996
  %v998 = vrot.slane %v997, 2
  %v999 = vadd.f32 %v997, %v998
  %v1000 = vrot.slane %v999, 1
  %v1001 = vadd.f32 %v999, %v1000
  %v1002 = vmul.f32 %v610, %v610
  %v1003 = vmul.f32 %v613, %v613
  %v1004 = vmul.f32 %v618, %v618
  %v1005 = vmul.f32 %v621, %v621
  %v1006 = vmul.f32 %v626, %v626
  %v1007 = vmul.f32 %v629, %v629
  %v1008 = vmul.f32 %v634, %v634
  %v1009 = vmul.f32 %v637, %v637
  %v1010 = vmul.f32 %v642, %v642
  %v1011 = vmul.f32 %v645, %v645
  %v1012 = vmul.f32 %v650, %v650
  %v1013 = vmul.f32 %v653, %v653
  %v1014 = vmul.f32 %v658, %v658
  %v1015 = vmul.f32 %v661, %v661
  %v1016 = vmul.f32 %v666, %v666
  %v1017 = vmul.f32 %v669, %v669
  %v1018 = vmul.f32 %v674, %v674
  %v1019 = vmul.f32 %v677, %v677
  %v1020 = vmul.f32 %v682, %v682
  %v1021 = vmul.f32 %v685, %v685
  %v1022 = vmul.f32 %v690, %v690
  %v1023 = vmul.f32 %v693, %v693
  %v1024 = vmul.f32 %v698, %v698
  %v1025 = vmul.f32 %v701, %v701
  %v1026 = vmul.f32 %v706, %v706
  %v1027 = vmul.f32 %v709, %v709
  %v1028 = vmul.f32 %v714, %v714
  %v1029 = vmul.f32 %v717, %v717
  %v1030 = vmul.f32 %v722, %v722
  %v1031 = vmul.f32 %v725, %v725
  %v1032 = vmul.f32 %v730, %v730
  %v1033 = vmul.f32 %v733, %v733
  %v1034 = vmul.f32 %v738, %v738
  %v1035 = vmul.f32 %v741, %v741
  %v1036 = vmul.f32 %v746, %v746
  %v1037 = vmul.f32 %v749, %v749
  %v1038 = vmul.f32 %v754, %v754
  %v1039 = vmul.f32 %v757, %v757
  %v1040 = vmul.f32 %v762, %v762
  %v1041 = vmul.f32 %v765, %v765
  %v1042 = vmul.f32 %v770, %v770
  %v1043 = vmul.f32 %v773, %v773
  %v1044 = vmul.f32 %v778, %v778
  %v1045 = vmul.f32 %v781, %v781
  %v1046 = vmul.f32 %v786, %v786
  %v1047 = vmul.f32 %v789, %v789
  %v1048 = vmul.f32 %v794, %v794
  %v1049 = vmul.f32 %v797, %v797
  %v1050 = vmul.f32 %v802, %v802
  %v1051 = vmul.f32 %v805, %v805
  %v1052 = vmul.f32 %v810, %v810
  %v1053 = vmul.f32 %v813, %v813
  %v1054 = vmul.f32 %v818, %v818
  %v1055 = vmul.f32 %v821, %v821
  %v1056 = vmul.f32 %v826, %v826
  %v1057 = vmul.f32 %v829, %v829
  %v1058 = vmul.f32 %v834, %v834
  %v1059 = vmul.f32 %v837, %v837
  %v1060 = vmul.f32 %v842, %v842
  %v1061 = vmul.f32 %v845, %v845
  %v1062 = vmul.f32 %v850, %v850
  %v1063 = vmul.f32 %v853, %v853
  %v1064 = vmul.f32 %v858, %v858
  %v1065 = vmul.f32 %v861, %v861
  %v1066 = vadd.f32 %v1002, %v1003
  %v1067 = vadd.f32 %v1066, %v1004
  %v1068 = vadd.f32 %v1067, %v1005
  %v1069 = vadd.f32 %v1068, %v1006
  %v1070 = vadd.f32 %v1069, %v1007
  %v1071 = vadd.f32 %v1070, %v1008
  %v1072 = vadd.f32 %v1071, %v1009
  %v1073 = vadd.f32 %v1072, %v1010
  %v1074 = vadd.f32 %v1073, %v1011
  %v1075 = vadd.f32 %v1074, %v1012
  %v1076 = vadd.f32 %v1075, %v1013
  %v1077 = vadd.f32 %v1076, %v1014
  %v1078 = vadd.f32 %v1077, %v1015
  %v1079 = vadd.f32 %v1078, %v1016
  %v1080 = vadd.f32 %v1079, %v1017
  %v1081 = vadd.f32 %v1080, %v1018
  %v1082 = vadd.f32 %v1081, %v1019
  %v1083 = vadd.f32 %v1082, %v1020
  %v1084 = vadd.f32 %v1083, %v1021
  %v1085 = vadd.f32 %v1084, %v1022
  %v1086 = vadd.f32 %v1085, %v1023
  %v1087 = vadd.f32 %v1086, %v1024
  %v1088 = vadd.f32 %v1087, %v1025
  %v1089 = vadd.f32 %v1088, %v1026
  %v1090 = vadd.f32 %v1089, %v1027
  %v1091 = vadd.f32 %v1090, %v1028
  %v1092 = vadd.f32 %v1091, %v1029
  %v1093 = vadd.f32 %v1092, %v1030
  %v1094 = vadd.f32 %v1093, %v1031
  %v1095 = vadd.f32 %v1094, %v1032
  %v1096 = vadd.f32 %v1095, %v1033
  %v1097 = vadd.f32 %v1096, %v1034
  %v1098 = vadd.f32 %v1097, %v1035
  %v1099 = vadd.f32 %v1098, %v1036
  %v1100 = vadd.f32 %v1099, %v1037
  %v1101 = vadd.f32 %v1100, %v1038
  %v1102 = vadd.f32 %v1101, %v1039
  %v1103 = vadd.f32 %v1102, %v1040
  %v1104 = vadd.f32 %v1103, %v1041
  %v1105 = vadd.f32 %v1104, %v1042
  %v1106 = vadd.f32 %v1105, %v1043
  %v1107 = vadd.f32 %v1106, %v1044
  %v1108 = vadd.f32 %v1107, %v1045
  %v1109 = vadd.f32 %v1108, %v1046
  %v1110 = vadd.f32 %v1109, %v1047
  %v1111 = vadd.f32 %v1110, %v1048
  %v1112 = vadd.f32 %v1111, %v1049
  %v1113 = vadd.f32 %v1112, %v1050
  %v1114 = vadd.f32 %v1113, %v1051
  %v1115 = vadd.f32 %v1114, %v1052
  %v1116 = vadd.f32 %v1115, %v1053
  %v1117 = vadd.f32 %v1116, %v1054
  %v1118 = vadd.f32 %v1117, %v1055
  %v1119 = vadd.f32 %v1118, %v1056
  %v1120 = vadd.f32 %v1119, %v1057
  %v1121 = vadd.f32 %v1120, %v1058
  %v1122 = vadd.f32 %v1121, %v1059
  %v1123 = vadd.f32 %v1122, %v1060
  %v1124 = vadd.f32 %v1123, %v1061
  %v1125 = vadd.f32 %v1124, %v1062
  %v1126 = vadd.f32 %v1125, %v1063
  %v1127 = vadd.f32 %v1126, %v1064
  %v1128 = vadd.f32 %v1127, %v1065
  %v1129 = vrot.slane %v1128, 4
  %v1130 = vadd.f32 %v1128, %v1129
  %v1131 = vrot.slane %v1130, 2
  %v1132 = vadd.f32 %v1130, %v1131
  %v1133 = vrot.slane %v1132, 1
  %v1134 = vadd.f32 %v1132, %v1133
  %v1135 = vld [vmem:[%s3] sm:$0x3]
  %vm1136 = vcmask 1040384
  %v1137 = vsel %vm1136, %v1001, %v1134
  %v1138 = vadd.f32 %v1135, %v1137
  %1139 = vst [vmem:[%s3] sm:$0x3] %v1138
  // Predicated region
  $region14: #{_lambda_.22} parent=0 // pred_check
    _
  $region15: #{_lambda_.22} parent=0 // pred_check_branch
    %1141 = sbr.rel (0) target = $region17
  $region16: #{_lambda_.22} parent=0 // pred_region
    _
  $region17: #{_lambda_.22} parent=0 // pred_fallthru
    _
  // Predicated region
  $region18: #{_lambda_.22} parent=0 // pred_check
    _
  $region19: #{_lambda_.22} parent=0 // pred_check_branch
    %1143 = sbr.rel (0) target = $region21
  $region20: #{_lambda_.22} parent=0 // pred_region
    _
  $region21: #{_lambda_.22} parent=0 // pred_fallthru
    _
  // Predicated region
  $region22: #{_lambda_.22} parent=0 // pred_check
    _
  $region23: #{_lambda_.22} parent=0 // pred_check_branch
    %1145 = sbr.rel (0) target = $region25
  $region24: #{_lambda_.22} parent=0 // pred_region
    _
  $region25: #{_lambda_.22} parent=0 // pred_fallthru
    _
  // Predicated region
  $region26: #{_lambda_.22} parent=0 // pred_check
    _
  $region27: #{_lambda_.22} parent=0 // pred_check_branch
    %1147 = sbr.rel (0) target = $region29
  $region28: #{_lambda_.22} parent=0 // pred_region
    _
  $region29: #{_lambda_.22} parent=0 // pred_fallthru
    _

// kernel: _lambda_.25
$region0: #{_lambda_.25}
  #allocation0 [shape = 'u32[]', space=smem, size = 0x4, offset = 0x4, fixed_abs, tag = 'smem constant byte address 0x4 - core index']
  #allocation1 [shape = 'u32[144,128]{1,0:T(1,128)}', space=vmem, size = 0x12000, scoped, tag = 'internal scratch']
  %s0 = inlined_call_operand.vmem [shape: f32[2,7,768], index: 0, kind: input, shape index: {}]
  %s1 = inlined_call_operand.vmem [shape: f32[4,768], index: 1, kind: input, shape index: {}]
  %s2 = inlined_call_operand.vmem [shape: f32[2,7,768], index: 2, kind: output, shape index: {}]
  %s3 = sld [smem:[#allocation0]]
  $region41: #{_lambda_.25} parent=0
    _
  %s5 = ssub.s32 1, %s3
  %s6 = scalar_select 0, %s5, %s3
  loop: start=0, step=1, limit=4
  $region2: #{_lambda_.25} parent=0 // loop_pre_header
    _
  $region3: #{_lambda_.25} parent=0 // loop_header
    %s8 = sphi 0, %s12
    %p9 = scmp.ge.s32.totalorder %s8, 4
    %s18 = sphi 0, %s20
    %s21 = sphi 0, %s18
    %s22 = sphi 0, %s21
    %s38 = sphi 0, %s22
    %s42 = sphi 0, %s42
    %s44 = sphi 0, %s42
    %s45 = sphi 0, %s44
    %s59 = sphi 0, %s45
    %s65 = sphi 0, %s67
    %s68 = sphi 0, %s65
    %s69 = sphi 0, %s68
    %s85 = sphi 0, %s69
  $region4: #{_lambda_.25} parent=0 // loop_header_branch
    %11 = sbr.rel (%p9) target = $region8
  $region5: #{_lambda_.25} parent=0 // loop_body
    %s13 = ssub.s32 %s8, 1
    %s14 = ssub.s32 %s8, 2
    %s15 = sadd.s32 %s8, 1
    %s16 = ssub.s32 %s8, %s15
    %p17 = scmp.eq.s32.totalorder %s16, 0
    %s19 = sadd.s32 %s18, 1
    %s20 = scalar_select %p17, %s18, %s19
    %p23 = pneg %p17
    %p24 = scmp.eq.s32.totalorder %s8, 1
    %p25 = por %p23, %p24
    %p26 = scmp.ne.s32.totalorder %s18, %s21
    %p27 = scmp.eq.s32.totalorder %s8, 0
    %p28 = por %p26, %p27
    %p29 = scmp.ne.s32.totalorder %s18, %s21
    %p30 = scmp.eq.s32.totalorder %s13, 1
    %p31 = por %p29, %p30
    %p32 = scmp.ne.s32.totalorder %s21, %s22
    %p33 = scmp.eq.s32.totalorder %s13, 0
    %p34 = por %p32, %p33
    %p35 = scmp.ne.s32.totalorder %s21, %s22
    %p36 = scmp.eq.s32.totalorder %s14, 1
    %p37 = por %p35, %p36
    %p39 = scmp.ne.s32.totalorder %s22, %s38
    %p40 = scmp.eq.s32.totalorder %s14, 0
    %p41 = por %p39, %p40
    %s43 = sadd.s32 %s42, 1
    %p46 = scmp.eq.s32.totalorder %s8, 1
    %p47 = scmp.ne.s32.totalorder %s42, %s44
    %p48 = scmp.eq.s32.totalorder %s8, 0
    %p49 = por %p47, %p48
    %p50 = scmp.ne.s32.totalorder %s42, %s44
    %p51 = scmp.eq.s32.totalorder %s13, 1
    %p52 = por %p50, %p51
    %p53 = scmp.ne.s32.totalorder %s44, %s45
    %p54 = scmp.eq.s32.totalorder %s13, 0
    %p55 = por %p53, %p54
    %p56 = scmp.ne.s32.totalorder %s44, %s45
    %p57 = scmp.eq.s32.totalorder %s14, 1
    %p58 = por %p56, %p57
    %p60 = scmp.ne.s32.totalorder %s45, %s59
    %p61 = scmp.eq.s32.totalorder %s14, 0
    %p62 = por %p60, %p61
    %s63 = ssub.s32 %s8, %s15
    %p64 = scmp.eq.s32.totalorder %s63, 0
    %s66 = sadd.s32 %s65, 1
    %s67 = scalar_select %p64, %s65, %s66
    %p70 = pneg %p64
    %p71 = scmp.eq.s32.totalorder %s8, 1
    %p72 = por %p70, %p71
    %p73 = scmp.ne.s32.totalorder %s65, %s68
    %p74 = scmp.eq.s32.totalorder %s8, 0
    %p75 = por %p73, %p74
    %p76 = scmp.ne.s32.totalorder %s65, %s68
    %p77 = scmp.eq.s32.totalorder %s13, 1
    %p78 = por %p76, %p77
    %p79 = scmp.ne.s32.totalorder %s68, %s69
    %p80 = scmp.eq.s32.totalorder %s13, 0
    %p81 = por %p79, %p80
    %p82 = scmp.ne.s32.totalorder %s68, %s69
    %p83 = scmp.eq.s32.totalorder %s14, 1
    %p84 = por %p82, %p83
    %p86 = scmp.ne.s32.totalorder %s69, %s85
    %p87 = scmp.eq.s32.totalorder %s14, 0
    %p88 = por %p86, %p87
    %p89 = scmp.le.s32.totalorder 1, %s8
    %p90 = scmp.lt.s32.totalorder %s8, 3
    %p91 = pnand %p89, %p90
    %p92 = pneg %p91
    // Predicated region
    $region9: #{_lambda_.25} parent=5 // pred_check
      _
    $region10: #{_lambda_.25} parent=5 // pred_check_branch
      %94 = sbr.rel (%p91) target = $region12
    $region11: #{_lambda_.25} parent=5 // pred_region
      %s95 = ssub.s32 %s8, 1
      // Predicated region
      $region13: #{_lambda_.25} parent=11 // pred_check
        %p96 = pneg %p55
      $region14: #{_lambda_.25} parent=11 // pred_check_branch
        %98 = sbr.rel (%p96) target = $region16
      $region15: #{_lambda_.25} parent=11 // pred_region
        _
      $region16: #{_lambda_.25} parent=11 // pred_fallthru
        _
    $region12: #{_lambda_.25} parent=5 // pred_fallthru
      _
    %p99 = scmp.lt.s32.totalorder %s8, 2
    // Predicated region
    $region17: #{_lambda_.25} parent=5 // pred_check
      %p100 = pneg %p99
    $region18: #{_lambda_.25} parent=5 // pred_check_branch
      %102 = sbr.rel (%p100) target = $region20
    $region19: #{_lambda_.25} parent=5 // pred_region
      // Predicated region
      $region21: #{_lambda_.25} parent=19 // pred_check
        %p103 = pneg %p28
      $region22: #{_lambda_.25} parent=19 // pred_check_branch
        %105 = sbr.rel (%p103) target = $region24
      $region23: #{_lambda_.25} parent=19 // pred_region
        %p106 = scmp.lt.s32.totalorder %s8, 1
        %s107 = scalar_select %p106, %s8, 1
        %s108 = smul.addr %s107, 6
        %s109 = smul.addr %s108, 8
        %s110 = scalar_lea.vmem %s0, %s109
      $region24: #{_lambda_.25} parent=19 // pred_fallthru
        _
    $region20: #{_lambda_.25} parent=5 // pred_fallthru
      _
    %p111 = scmp.le.s32.totalorder 1, %s8
    %p112 = scmp.lt.s32.totalorder %s8, 3
    %p113 = pnand %p111, %p112
    %p114 = pneg %p113
    // Predicated region
    $region25: #{_lambda_.25} parent=5 // pred_check
      _
    $region26: #{_lambda_.25} parent=5 // pred_check_branch
      %116 = sbr.rel (%p113) target = $region28
    $region27: #{_lambda_.25} parent=5 // pred_region
      %s117 = ssub.s32 %s8, 1
      %p118 = scmp.lt.s32.totalorder %s13, 1
      %s119 = scalar_select %p118, %s13, 1
      %s120 = smul.addr %s119, 6
      %s121 = smul.addr %s120, 8
      %s122 = scalar_lea.vmem %s0, %s121
      %p123 = pneg %p34
      %p124 = pneg %p31
      %p125 = pneg %p55
      %p126 = pneg %p52
      %p127 = pneg %p81
      %p128 = pneg %p78
      %p129 = scmp.lt.s32.totalorder %s13, 1
      %s130 = scalar_select %p129, %s13, 1
      %s131 = smul.addr %s130, 6
      %s132 = smul.addr %s131, 8
      %s133 = scalar_lea.vmem %s2, %s132
      %p134 = scmp.lt.s32.totalorder %s13, 1
      %s135 = scalar_select %p134, %s13, 1
      %s136 = smul.addr %s135, 6
      %s137 = smul.addr %s136, 8
      %s138 = scalar_lea.vmem %s0, %s137
      %p139 = scmp.lt.s32.totalorder %s13, 1
      %s140 = scalar_select %p139, %s13, 1
      %s141 = smul.addr %s140, 6
      %s142 = smul.addr %s141, 8
      %s143 = scalar_lea.vmem %s2, %s142
      %v144 = vld [vmem:[%s138] sm:$0x7f]
      %v145 = vld [vmem:[%s138 + $0x8] sm:$0x7f]
      %v146 = vld [vmem:[%s138 + $0x10] sm:$0x7f]
      %v147 = vld [vmem:[%s138 + $0x18] sm:$0x7f]
      %v148 = vld [vmem:[%s138 + $0x20] sm:$0x7f]
      %v149 = vld [vmem:[%s138 + $0x28] sm:$0x7f]
      %v150 = vld [vmem:[%s1] sm:$0xff]
      %v151 = vld [vmem:[%s1 + $0x8] sm:$0xff]
      %v152 = vld [vmem:[%s1 + $0x10] sm:$0xff]
      %v153 = vxor.u32 %v144, 2147483648
      %v154 = vxor.u32 %v145, 2147483648
      %v155 = vxor.u32 %v146, 2147483648
      %v156 = vxor.u32 %v147, 2147483648
      %v157 = vxor.u32 %v148, 2147483648
      %v158 = vxor.u32 %v149, 2147483648
      %v159 = vmul.f32 %v153, 1.442695
      %v160 = vpow.pop %v159
      %v161 = vmul.f32 %v154, 1.442695
      %v162 = vpow.pop %v161
      %v163 = vmul.f32 %v155, 1.442695
      %v164 = vpow.pop %v163
      %v165 = vmul.f32 %v156, 1.442695
      %v166 = vpow.pop %v165
      %v167 = vmul.f32 %v157, 1.442695
      %v168 = vpow.pop %v167
      %v169 = vmul.f32 %v158, 1.442695
      %v170 = vpow.pop %v169
      %v171 = vadd.f32 %v160, 1.0
      %v172 = vadd.f32 %v162, 1.0
      %v173 = vadd.f32 %v164, 1.0
      %v174 = vadd.f32 %v166, 1.0
      %v175 = vadd.f32 %v168, 1.0
      %v176 = vadd.f32 %v170, 1.0
      %v177 = vrcp.pop %v171
      %v178 = vmul.f32 1.0, %v177
      %v179 = vrcp.pop %v172
      %v180 = vmul.f32 1.0, %v179
      %v181 = vrcp.pop %v173
      %v182 = vmul.f32 1.0, %v181
      %v183 = vrcp.pop %v174
      %v184 = vmul.f32 1.0, %v183
      %v185 = vrcp.pop %v175
      %v186 = vmul.f32 1.0, %v185
      %v187 = vrcp.pop %v176
      %v188 = vmul.f32 1.0, %v187
      %v192 = vcombine.high %v150, %v150
      %v193 = vcombine.high %v151, %v151
      %v194 = vcombine.high %v152, %v152
      %v198 = vadd.f32 %v178, %v150
      %v199 = vadd.f32 %v180, %v192
      %v200 = vadd.f32 %v182, %v151
      %v201 = vadd.f32 %v184, %v193
      %v202 = vadd.f32 %v186, %v152
      %v203 = vadd.f32 %v188, %v194
      %204 = vst [vmem:[%s143] sm:$0x3] %v198
      %205 = vst [vmem:[%s143 + $0x8] sm:$0x3] %v199
      %206 = vst [vmem:[%s143 + $0x10] sm:$0x3] %v200
      %207 = vst [vmem:[%s143 + $0x18] sm:$0x3] %v201
      %208 = vst [vmem:[%s143 + $0x20] sm:$0x3] %v202
      %209 = vst [vmem:[%s143 + $0x28] sm:$0x3] %v203
      %v210 = vmul.f32 %v144, 1.442695
      %v211 = vpow.pop %v210
      %v212 = vmul.f32 %v145, 1.442695
      %v213 = vpow.pop %v212
      %v214 = vmul.f32 %v146, 1.442695
      %v215 = vpow.pop %v214
      %v216 = vmul.f32 %v147, 1.442695
      %v217 = vpow.pop %v216
      %v218 = vmul.f32 %v148, 1.442695
      %v219 = vpow.pop %v218
      %v220 = vmul.f32 %v149, 1.442695
      %v221 = vpow.pop %v220
      %v222 = vmul.f32 %v211, %v150
      %v223 = vmul.f32 %v213, %v192
      %v224 = vmul.f32 %v215, %v151
      %v225 = vmul.f32 %v217, %v193
      %v226 = vmul.f32 %v219, %v152
      %v227 = vmul.f32 %v221, %v194
      %228 = vst [vmem:[%s143] sm:$0xc] %v222
      %229 = vst [vmem:[%s143 + $0x8] sm:$0xc] %v223
      %230 = vst [vmem:[%s143 + $0x10] sm:$0xc] %v224
      %231 = vst [vmem:[%s143 + $0x18] sm:$0xc] %v225
      %232 = vst [vmem:[%s143 + $0x20] sm:$0xc] %v226
      %233 = vst [vmem:[%s143 + $0x28] sm:$0xc] %v227
      %234 = vst [vmem:[%s143] sm:$0x70] %v178
      %235 = vst [vmem:[%s143 + $0x8] sm:$0x70] %v180
      %236 = vst [vmem:[%s143 + $0x10] sm:$0x70] %v182
      %237 = vst [vmem:[%s143 + $0x18] sm:$0x70] %v184
      %238 = vst [vmem:[%s143 + $0x20] sm:$0x70] %v186
      %239 = vst [vmem:[%s143 + $0x28] sm:$0x70] %v188
      %p240 = scmp.lt.s32.totalorder %s13, 1
      %s241 = scalar_select %p240, %s13, 1
      %s242 = smul.addr %s241, 6
      %s243 = smul.addr %s242, 8
      %s244 = scalar_lea.vmem %s2, %s243
      // Predicated region
      $region29: #{_lambda_.25} parent=27 // pred_check
        %p245 = pneg %p78
      $region30: #{_lambda_.25} parent=27 // pred_check_branch
        %247 = sbr.rel (%p245) target = $region32
      $region31: #{_lambda_.25} parent=27 // pred_region
        _
      $region32: #{_lambda_.25} parent=27 // pred_fallthru
        _
    $region28: #{_lambda_.25} parent=5 // pred_fallthru
      _
    %p248 = scmp.le.s32.totalorder 2, %s8
    // Predicated region
    $region33: #{_lambda_.25} parent=5 // pred_check
      %p249 = pneg %p248
    $region34: #{_lambda_.25} parent=5 // pred_check_branch
      %251 = sbr.rel (%p249) target = $region36
    $region35: #{_lambda_.25} parent=5 // pred_region
      %s252 = ssub.s32 %s8, 2
      // Predicated region
      $region37: #{_lambda_.25} parent=35 // pred_check
        %p253 = pneg %p84
      $region38: #{_lambda_.25} parent=35 // pred_check_branch
        %255 = sbr.rel (%p253) target = $region40
      $region39: #{_lambda_.25} parent=35 // pred_region
        %p256 = scmp.lt.s32.totalorder %s14, 1
        %s257 = scalar_select %p256, %s14, 1
        %s258 = smul.addr %s257, 6
        %s259 = smul.addr %s258, 8
        %s260 = scalar_lea.vmem %s2, %s259
      $region40: #{_lambda_.25} parent=35 // pred_fallthru
        _
    $region36: #{_lambda_.25} parent=5 // pred_fallthru
      _
  $region6: #{_lambda_.25} parent=0 // loop_footer
    %s12 = sadd.s32 1, %s8
  $region7: #{_lambda_.25} parent=0 // loop_footer_branch
    %7 = sbr.rel target = $region3
  $region8: #{_lambda_.25} parent=0 // loop_exit
    _

</llo_original>
